<compile_context>
chip_gen: v5e
topology: v5e:2x2
jax: 0.10.0
libtpu: 0.0.40
codegen_flags: <defaults>
</compile_context>

<pallas_src>
import numpy as np
import jax
import jax.numpy as jnp
from jax import lax
from jax.experimental import pallas as pl
from jax.experimental.pallas import tpu as pltpu

# ----------------------------- config (small, consistent with module) -------
MAPPING_SIZE = 8                 # module default is 64; small synthetic size
SCALES = (1.0, 10.0, 20.0)       # training_params['scale']
HIDDEN = 32                      # module uses 256; small synthetic size
OUT_DIM = 2
NUM_LAYERS = 5                   # [in, H, H, H, H, 2] -> 5 linear layers
P_X = 2.0                        # P_x normalization constant (synthetic)
MU, SIGMA = 1.0, 0.1             # RWF defaults
TWO_PI = 2.0 * np.pi

FOURIER_F = MAPPING_SIZE * len(SCALES)      # 24
IN_DIM = 2 * FOURIER_F + 1                  # 49 (= 2*mapping*len(scale) + 1)

MAX_TILE_N = 2048                # lane-tile over the batch dimension
HIGHEST = lax.Precision.HIGHEST  # full-f32 MXU passes (explicit, per review)


# ----------------------------- Pallas kernel --------------------------------
def pinn_kernel(x_ref, bx_ref, l0_ref, hid_ref, outw_ref, out_ref):
    # x block is (2, T): row 0 = t, row 1 = theta.  Batch lives in the lanes.
    x = x_ref[...]
    t = x[0:1, :]                                   # (1, T)
    theta = x[1:2, :]                               # (1, T)

    # Fourier features.  The (2*pi/P_x) scale is pre-folded into bx on host.
    proj = bx_ref[...] * theta                      # (F, 1) * (1, T) -> (F, T)
    feats = jnp.concatenate([jnp.cos(proj), jnp.sin(proj)], axis=0)   # (2F, T)

    # Layer 0: single merged matmul over the [cos; sin] slab.
    # l0 pack columns: [W1_cs (2F) | w1_t (1) | b1 (1)]
    l0 = l0_ref[...]                                # (H, 2F + 2)
    w1_cs = l0[:, 0:2 * FOURIER_F]                  # (H, 2F)
    w1_t = l0[:, 2 * FOURIER_F:2 * FOURIER_F + 1]   # (H, 1)
    b1 = l0[:, 2 * FOURIER_F + 1:2 * FOURIER_F + 2]  # (H, 1)
    h = jnp.tanh(
        jnp.dot(w1_cs, feats, preferred_element_type=jnp.float32,
                precision=HIGHEST)
        + w1_t * t + b1)                            # (H, T)

    # Hidden layers 1..3 (tanh).  hid pack is (3, H, H+1) = [W | b].
    for i in range(3):
        w = hid_ref[i, :, 0:HIDDEN]                 # (H, H)
        b = hid_ref[i, :, HIDDEN:HIDDEN + 1]        # (H, 1)
        h = jnp.tanh(
            jnp.dot(w, h, preferred_element_type=jnp.float32,
                    precision=HIGHEST) + b)

    # Output layer 4 (linear): (2, H) @ (H, T) -> (2, T), lane-dense store.
    wo = outw_ref[:, 0:HIDDEN]                      # (2, H)
    bo = outw_ref[:, HIDDEN:HIDDEN + 1]             # (2, 1)
    out_ref[...] = (jnp.dot(wo, h, preferred_element_type=jnp.float32,
                            precision=HIGHEST) + bo)


# ----------------------------- tile selection --------------------------------
def _choose_tile(n):
    """Pick a lane tile (multiple of 128) and padded N.

    Single grid step whenever the 128-padded batch fits in MAX_TILE_N.
    Otherwise split into an EVEN number of steps (v7x has 2 TensorCores
    sharding the 'parallel' axis; odd step counts imbalance them).
    """
    np128 = -(-n // 128) * 128
    if np128 <= MAX_TILE_N:
        return np128, np128
    steps = -(-np128 // MAX_TILE_N)
    if steps % 2:
        steps += 1
    tile = -(-np128 // steps)
    tile = -(-tile // 128) * 128
    return tile, tile * steps


# ----------------------------- one-time parameter packing --------------------
def prepare_params(params):
    """Hoisted prep: fold scales, split W1, pack 13 params into 4 operands."""
    B_x, Ws, bs = params
    # Fold (2*pi/P_x) into B_x; column layout (F, 1) for lane-broadcast mul.
    bx_col = jnp.transpose((TWO_PI / P_X) * B_x)                     # (F, 1)

    # W1 is (H, 1+2F) with columns [t | cos-block | sin-block].
    W1 = Ws[0]
    l0_pack = jnp.concatenate(
        [W1[:, 1:], W1[:, 0:1], bs[0][:, None]], axis=1)             # (H, 2F+2)

    hid_pack = jnp.stack(
        [jnp.concatenate([Ws[i], bs[i][:, None]], axis=1)
         for i in range(1, 4)], axis=0)                              # (3, H, H+1)

    out_pack = jnp.concatenate([Ws[4], bs[4][:, None]], axis=1)      # (2, H+1)
    return bx_col, l0_pack, hid_pack, out_pack


# ----------------------------- jitted host wrapper ---------------------------
@jax.jit
def pinn_forward_pallas(x, packed):
    """x: (N, 2) float32 with columns [t, theta].  Returns (N, 2) float32."""
    bx_col, l0_pack, hid_pack, out_pack = packed
    N = x.shape[0]
    tile_n, n_pad = _choose_tile(N)

    # Batch-in-lanes layout: (2, N_pad), row 0 = t, row 1 = theta.
    # TODO(synk): for very large collocation sets, accept x pre-transposed /
    # pre-padded as (2, N) and consume the (2, N) output directly downstream
    # to avoid this HBM round trip.
    x_t = jnp.transpose(x)
    if n_pad != N:
        x_t = jnp.pad(x_t, ((0, 0), (0, n_pad - N)))

    weight_specs = [
        pl.BlockSpec(bx_col.shape, lambda i: (0, 0)),
        pl.BlockSpec(l0_pack.shape, lambda i: (0, 0)),
        pl.BlockSpec(hid_pack.shape, lambda i: (0, 0, 0)),
        pl.BlockSpec(out_pack.shape, lambda i: (0, 0)),
    ]

    out_t = pl.pallas_call(
        pinn_kernel,
        out_shape=jax.ShapeDtypeStruct((OUT_DIM, n_pad), jnp.float32),
        grid=(n_pad // tile_n,),
        in_specs=[pl.BlockSpec((2, tile_n), lambda i: (0, i))] + weight_specs,
        out_specs=pl.BlockSpec((OUT_DIM, tile_n), lambda i: (0, i)),
        compiler_params=pltpu.CompilerParams(
            dimension_semantics=("parallel",)),
    )(x_t, bx_col, l0_pack, hid_pack, out_pack)

    # Padded tail columns contain finite garbage; slice before any use.
    return jnp.transpose(out_t[:, :N])              # (N, OUT_DIM)


# ----------------------------- deterministic parameter init -----------------
def xavier_normal(key, out_features, in_features):
    std = np.sqrt(2.0 / (in_features + out_features))
    return jax.random.normal(key, (out_features, in_features), jnp.float32) * std


def init_params(key):
    dims = [IN_DIM] + [HIDDEN] * 4 + [OUT_DIM]
    keys = jax.random.split(key, 1 + 3 * NUM_LAYERS)

    # FourierFeatureEmbedding.B_x : concat of scale * randn(1, mapping_size)
    bx_keys = jax.random.split(keys[0], len(SCALES))
    B_x = jnp.concatenate(
        [s * jax.random.normal(k, (1, MAPPING_SIZE), jnp.float32)
         for s, k in zip(SCALES, bx_keys)], axis=1)        # (1, F)

    Ws, bs = [], []
    for i in range(NUM_LAYERS):
        kv = keys[1 + 3 * i]
        ks = keys[2 + 3 * i]
        kb = keys[3 + 3 * i]
        V = xavier_normal(kv, dims[i + 1], dims[i])                  # (out, in)
        s = jax.random.normal(ks, (dims[i + 1],), jnp.float32) * SIGMA + MU
        W_eff = jnp.exp(s)[:, None] * V                              # diag(exp(s)) @ V
        Ws.append(W_eff)                                             # (out, in)
        # module inits bias to zero; use small random bias to exercise the add
        bs.append(0.01 * jax.random.normal(kb, (dims[i + 1],), jnp.float32))
    return B_x, tuple(Ws), tuple(bs)


# ----------------------------- pure-JAX reference ----------------------------
def pinn_forward_ref(x, params):
    B_x, Ws, bs = params
    theta = x[:, 1:2]
    proj = jnp.dot(TWO_PI * theta / P_X, B_x, precision=HIGHEST)     # (N, F)
    x_f = jnp.concatenate([jnp.cos(proj), jnp.sin(proj)], axis=1)
    h = jnp.concatenate([x[:, 0:1], x_f], axis=1)                    # (N, 1+2F)
    for i in range(NUM_LAYERS - 1):
        h = jnp.tanh(jnp.dot(h, Ws[i].T, precision=HIGHEST) + bs[i])
    return jnp.dot(h, Ws[-1].T, precision=HIGHEST) + bs[-1]


# ----------------------------- main ------------------------------------------
if __name__ == "__main__":
    key = jax.random.PRNGKey(0)
    k_param, k_x = jax.random.split(key)

    params = init_params(k_param)
    packed = prepare_params(params)          # one-time hoisted weight prep

    N = 300                                  # collocation points (t, theta)
    x = jax.random.uniform(k_x, (N, 2), jnp.float32, minval=-1.0, maxval=1.0)

    out = pinn_forward_pallas(x, packed)
    out = jax.block_until_ready(out)

    ref = pinn_forward_ref(x, params)
    assert out.shape == (N, OUT_DIM)
    max_err = float(jnp.max(jnp.abs(out - ref)))
    assert jnp.allclose(out, ref, atol=1e-4, rtol=1e-4), (
        f"mismatch vs JAX reference (max abs err = {max_err:.3e})")

    print("KERNEL_OK")
</pallas_src>

<mosaic_0001>
module attributes {stable_mosaic.version = 11 : i64} {
  func.func @pinn_kernel(%arg0: i32, %arg1: memref<2x384xf32, #tpu.memory_space<vmem>>, %arg2: memref<24x1xf32, #tpu.memory_space<vmem>>, %arg3: memref<32x50xf32, #tpu.memory_space<vmem>>, %arg4: memref<3x32x33xf32, #tpu.memory_space<vmem>>, %arg5: memref<2x33xf32, #tpu.memory_space<vmem>>, %arg6: memref<2x384xf32, #tpu.memory_space<vmem>>) attributes {dimension_semantics = [#tpu.dimension_semantics<parallel>], iteration_bounds = array<i64: 1>, scalar_prefetch = 0 : i64, scratch_operands = 0 : i64, tpu.core_type = #tpu.core_type<tc>, window_params = [{transform_indices = @transform_0, window_bounds = array<i64: 2, 384>}, {pipeline_mode = #tpu.pipeline_mode<synchronous>, transform_indices = @transform_1, window_bounds = array<i64: 24, 1>}, {pipeline_mode = #tpu.pipeline_mode<synchronous>, transform_indices = @transform_2, window_bounds = array<i64: 32, 50>}, {pipeline_mode = #tpu.pipeline_mode<synchronous>, transform_indices = @transform_3, window_bounds = array<i64: 3, 32, 33>}, {pipeline_mode = #tpu.pipeline_mode<synchronous>, transform_indices = @transform_4, window_bounds = array<i64: 2, 33>}, {transform_indices = @transform_5, window_bounds = array<i64: 2, 384>}]} {
    %c0 = arith.constant 0 : index
    %c0_0 = arith.constant 0 : index
    %0 = vector.load %arg1[%c0, %c0_0] : memref<2x384xf32, #tpu.memory_space<vmem>>, vector<2x384xf32>
    %1 = vector.extract_strided_slice %0 {offsets = [0, 0], sizes = [1, 384], strides = [1, 1]} : vector<2x384xf32> to vector<1x384xf32>
    %2 = vector.extract_strided_slice %0 {offsets = [1, 0], sizes = [1, 384], strides = [1, 1]} : vector<2x384xf32> to vector<1x384xf32>
    %c0_1 = arith.constant 0 : index
    %c0_2 = arith.constant 0 : index
    %3 = vector.load %arg2[%c0_1, %c0_2] : memref<24x1xf32, #tpu.memory_space<vmem>>, vector<24x1xf32>
    %4 = vector.broadcast %3 : vector<24x1xf32> to vector<24x384xf32>
    %5 = vector.broadcast %2 : vector<1x384xf32> to vector<24x384xf32>
    %6 = arith.mulf %4, %5 : vector<24x384xf32>
    %7 = math.cos %6 : vector<24x384xf32>
    %8 = math.sin %6 : vector<24x384xf32>
    %9 = tpu.concatenate %7, %8 in 0 : vector<24x384xf32>, vector<24x384xf32> -> vector<48x384xf32>
    %c0_3 = arith.constant 0 : index
    %c0_4 = arith.constant 0 : index
    %10 = vector.load %arg3[%c0_3, %c0_4] : memref<32x50xf32, #tpu.memory_space<vmem>>, vector<32x50xf32>
    %11 = vector.extract_strided_slice %10 {offsets = [0, 0], sizes = [32, 48], strides = [1, 1]} : vector<32x50xf32> to vector<32x48xf32>
    %12 = vector.extract_strided_slice %10 {offsets = [0, 48], sizes = [32, 1], strides = [1, 1]} : vector<32x50xf32> to vector<32x1xf32>
    %13 = vector.extract_strided_slice %10 {offsets = [0, 49], sizes = [32, 1], strides = [1, 1]} : vector<32x50xf32> to vector<32x1xf32>
    %cst = arith.constant dense<0.000000e+00> : vector<32x384xf32>
    %14 = tpu.matmul %11, %9, %cst {dimension_numbers = #tpu.dot_dimension_numbers<[1], [0], [0], [1], [0, 0, 1, 1], [], []>, precision = #tpu.contract_precision<fp32>} : vector<32x48xf32>, vector<48x384xf32>, vector<32x384xf32> -> vector<32x384xf32>
    %15 = vector.broadcast %12 : vector<32x1xf32> to vector<32x384xf32>
    %16 = vector.broadcast %1 : vector<1x384xf32> to vector<32x384xf32>
    %17 = arith.mulf %15, %16 : vector<32x384xf32>
    %18 = arith.addf %14, %17 : vector<32x384xf32>
    %19 = vector.broadcast %13 : vector<32x1xf32> to vector<32x384xf32>
    %20 = arith.addf %18, %19 : vector<32x384xf32>
    %21 = math.tanh %20 : vector<32x384xf32>
    %c0_5 = arith.constant 0 : index
    %c0_6 = arith.constant 0 : index
    %c0_7 = arith.constant 0 : index
    %22 = vector.load %arg4[%c0_5, %c0_6, %c0_7] : memref<3x32x33xf32, #tpu.memory_space<vmem>>, vector<1x32x32xf32>
    %23 = vector.shape_cast %22 : vector<1x32x32xf32> to vector<32x32xf32>
    %c0_8 = arith.constant 0 : index
    %c0_9 = arith.constant 0 : index
    %c32 = arith.constant 32 : index
    %24 = vector.load %arg4[%c0_8, %c0_9, %c32] : memref<3x32x33xf32, #tpu.memory_space<vmem>>, vector<1x32x1xf32>
    %25 = vector.shape_cast %24 : vector<1x32x1xf32> to vector<32x1xf32>
    %cst_10 = arith.constant dense<0.000000e+00> : vector<32x384xf32>
    %26 = tpu.matmul %23, %21, %cst_10 {dimension_numbers = #tpu.dot_dimension_numbers<[1], [0], [0], [1], [0, 0, 1, 1], [], []>, precision = #tpu.contract_precision<fp32>} : vector<32x32xf32>, vector<32x384xf32>, vector<32x384xf32> -> vector<32x384xf32>
    %27 = vector.broadcast %25 : vector<32x1xf32> to vector<32x384xf32>
    %28 = arith.addf %26, %27 : vector<32x384xf32>
    %29 = math.tanh %28 : vector<32x384xf32>
    %c1 = arith.constant 1 : index
    %c0_11 = arith.constant 0 : index
    %c0_12 = arith.constant 0 : index
    %30 = vector.load %arg4[%c1, %c0_11, %c0_12] : memref<3x32x33xf32, #tpu.memory_space<vmem>>, vector<1x32x32xf32>
    %31 = vector.shape_cast %30 : vector<1x32x32xf32> to vector<32x32xf32>
    %c1_13 = arith.constant 1 : index
    %c0_14 = arith.constant 0 : index
    %c32_15 = arith.constant 32 : index
    %32 = vector.load %arg4[%c1_13, %c0_14, %c32_15] : memref<3x32x33xf32, #tpu.memory_space<vmem>>, vector<1x32x1xf32>
    %33 = vector.shape_cast %32 : vector<1x32x1xf32> to vector<32x1xf32>
    %cst_16 = arith.constant dense<0.000000e+00> : vector<32x384xf32>
    %34 = tpu.matmul %31, %29, %cst_16 {dimension_numbers = #tpu.dot_dimension_numbers<[1], [0], [0], [1], [0, 0, 1, 1], [], []>, precision = #tpu.contract_precision<fp32>} : vector<32x32xf32>, vector<32x384xf32>, vector<32x384xf32> -> vector<32x384xf32>
    %35 = vector.broadcast %33 : vector<32x1xf32> to vector<32x384xf32>
    %36 = arith.addf %34, %35 : vector<32x384xf32>
    %37 = math.tanh %36 : vector<32x384xf32>
    %c2 = arith.constant 2 : index
    %c0_17 = arith.constant 0 : index
    %c0_18 = arith.constant 0 : index
    %38 = vector.load %arg4[%c2, %c0_17, %c0_18] : memref<3x32x33xf32, #tpu.memory_space<vmem>>, vector<1x32x32xf32>
    %39 = vector.shape_cast %38 : vector<1x32x32xf32> to vector<32x32xf32>
    %c2_19 = arith.constant 2 : index
    %c0_20 = arith.constant 0 : index
    %c32_21 = arith.constant 32 : index
    %40 = vector.load %arg4[%c2_19, %c0_20, %c32_21] : memref<3x32x33xf32, #tpu.memory_space<vmem>>, vector<1x32x1xf32>
    %41 = vector.shape_cast %40 : vector<1x32x1xf32> to vector<32x1xf32>
    %cst_22 = arith.constant dense<0.000000e+00> : vector<32x384xf32>
    %42 = tpu.matmul %39, %37, %cst_22 {dimension_numbers = #tpu.dot_dimension_numbers<[1], [0], [0], [1], [0, 0, 1, 1], [], []>, precision = #tpu.contract_precision<fp32>} : vector<32x32xf32>, vector<32x384xf32>, vector<32x384xf32> -> vector<32x384xf32>
    %43 = vector.broadcast %41 : vector<32x1xf32> to vector<32x384xf32>
    %44 = arith.addf %42, %43 : vector<32x384xf32>
    %45 = math.tanh %44 : vector<32x384xf32>
    %c0_23 = arith.constant 0 : index
    %c0_24 = arith.constant 0 : index
    %46 = vector.load %arg5[%c0_23, %c0_24] : memref<2x33xf32, #tpu.memory_space<vmem>>, vector<2x32xf32>
    %c0_25 = arith.constant 0 : index
    %c32_26 = arith.constant 32 : index
    %47 = vector.load %arg5[%c0_25, %c32_26] : memref<2x33xf32, #tpu.memory_space<vmem>>, vector<2x1xf32>
    %cst_27 = arith.constant dense<0.000000e+00> : vector<2x384xf32>
    %48 = tpu.matmul %46, %45, %cst_27 {dimension_numbers = #tpu.dot_dimension_numbers<[1], [0], [0], [1], [0, 0, 1, 1], [], []>, precision = #tpu.contract_precision<fp32>} : vector<2x32xf32>, vector<32x384xf32>, vector<2x384xf32> -> vector<2x384xf32>
    %49 = vector.broadcast %47 : vector<2x1xf32> to vector<2x384xf32>
    %50 = arith.addf %48, %49 : vector<2x384xf32>
    %c0_28 = arith.constant 0 : index
    %c0_29 = arith.constant 0 : index
    %51 = vector.load %arg6[%c0_28, %c0_29] : memref<2x384xf32, #tpu.memory_space<vmem>>, vector<2x384xf32>
    tpu.vector_store %arg6[%c0_28, %c0_29], %50 {strides = array<i32>} : memref<2x384xf32, #tpu.memory_space<vmem>>, vector<2x384xf32>,
    return
  }
  func.func @transform_0(%arg0: i32) -> (i32, i32) {
    %c0_i32 = arith.constant 0 : i32
    %c0_i32_0 = arith.constant 0 : i32
    return %c0_i32, %arg0 : i32, i32
  }
  func.func @transform_1(%arg0: i32) -> (i32, i32) {
    %c0_i32 = arith.constant 0 : i32
    %c0_i32_0 = arith.constant 0 : i32
    %c0_i32_1 = arith.constant 0 : i32
    return %c0_i32, %c0_i32_0 : i32, i32
  }
  func.func @transform_2(%arg0: i32) -> (i32, i32) {
    %c0_i32 = arith.constant 0 : i32
    %c0_i32_0 = arith.constant 0 : i32
    %c0_i32_1 = arith.constant 0 : i32
    return %c0_i32, %c0_i32_0 : i32, i32
  }
  func.func @transform_3(%arg0: i32) -> (i32, i32, i32) {
    %c0_i32 = arith.constant 0 : i32
    %c0_i32_0 = arith.constant 0 : i32
    %c0_i32_1 = arith.constant 0 : i32
    %c0_i32_2 = arith.constant 0 : i32
    return %c0_i32, %c0_i32_0, %c0_i32_1 : i32, i32, i32
  }
  func.func @transform_4(%arg0: i32) -> (i32, i32) {
    %c0_i32 = arith.constant 0 : i32
    %c0_i32_0 = arith.constant 0 : i32
    %c0_i32_1 = arith.constant 0 : i32
    return %c0_i32, %c0_i32_0 : i32, i32
  }
  func.func @transform_5(%arg0: i32) -> (i32, i32) {
    %c0_i32 = arith.constant 0 : i32
    %c0_i32_0 = arith.constant 0 : i32
    return %c0_i32, %arg0 : i32, i32
  }
}

</mosaic_0001>

<llo_original>
// kernel: pinn_forward_pallas.1
$region0: #{pinn_forward_pallas.1}
  #allocation0 [shape = 'u32[]', space=smem, size = 0x4, offset = 0x4, fixed_abs, tag = 'smem constant byte address 0x4 - core index']
  #allocation1 [shape = 'u32[72,128]{1,0:T(1,128)}', space=vmem, size = 0x9000, scoped, tag = 'internal scratch']
  %s0 = inlined_call_operand.vmem [shape: f32[2,384], index: 0, kind: input, shape index: {}]
  %s1 = inlined_call_operand.vmem [shape: f32[24,1], index: 1, kind: input, shape index: {}]
  %s2 = inlined_call_operand.vmem [shape: f32[32,50], index: 2, kind: input, shape index: {}]
  %s3 = inlined_call_operand.hbm [shape: f32[3,32,33], index: 3, kind: input, shape index: {}]
  %s4 = inlined_call_operand.vmem [shape: f32[2,33], index: 4, kind: input, shape index: {}]
  %s5 = inlined_call_operand.vmem [shape: f32[2,384], index: 5, kind: output, shape index: {}]
  %s6 = sld [smem:[#allocation0]]
  $region34: #{pinn_forward_pallas.1} parent=0
    _
  %s8 = ssub.s32 1, %s6
  %s9 = scalar_select 0, %s8, %s6
  $region1: #{pinn_forward_pallas.1} parent=0
    #allocation2 [shape = 'u8[49152]{0}', space=vmem, size = 0xc000, scoped, tag = 'input window, operand 3, single buffered']
    #allocation3 [shape = 's32[1]{0}', space=sflag, size = 0x4, scoped, tag = 'scoped memory for pinn_forward_pallas.1']
    %10 = vsyncpa [#allocation3], 0
    // Predicated region
    $region2: #{pinn_forward_pallas.1} parent=1 // pred_check
      _
    $region3: #{pinn_forward_pallas.1} parent=1 // pred_check_branch
      %12 = sbr.rel (0) target = $region5
    $region4: #{pinn_forward_pallas.1} parent=1 // pred_region
      _
    $region5: #{pinn_forward_pallas.1} parent=1 // pred_fallthru
      _
    // Predicated region
    $region6: #{pinn_forward_pallas.1} parent=1 // pred_check
      _
    $region7: #{pinn_forward_pallas.1} parent=1 // pred_check_branch
      %14 = sbr.rel (0) target = $region9
    $region8: #{pinn_forward_pallas.1} parent=1 // pred_region
      _
    $region9: #{pinn_forward_pallas.1} parent=1 // pred_fallthru
      _
    // Predicated region
    $region10: #{pinn_forward_pallas.1} parent=1 // pred_check
      _
    $region11: #{pinn_forward_pallas.1} parent=1 // pred_check_branch
      %16 = sbr.rel (0) target = $region13
    $region12: #{pinn_forward_pallas.1} parent=1 // pred_region
      _
    $region13: #{pinn_forward_pallas.1} parent=1 // pred_fallthru
      _
    // Predicated region
    $region14: #{pinn_forward_pallas.1} parent=1 // pred_check
      _
    $region15: #{pinn_forward_pallas.1} parent=1 // pred_check_branch
      %18 = sbr.rel (0) target = $region17
    $region16: #{pinn_forward_pallas.1} parent=1 // pred_region
      %20 = vsyncadd [#allocation3], 0
      %s21 = sshll.u32 %s3, 4
      %s22 = int_to_ptr.hbm [resolvable:$true] %s21
      %s23 = sshll.u32 [#allocation2], 4
      %s24 = int_to_ptr.vmem [resolvable:$true] %s23
      %29 = dma.hbm_to_vmem [thread:$0]  %s22, 1536, %s24, [#allocation3], 128, 128, 8
    $region17: #{pinn_forward_pallas.1} parent=1 // pred_fallthru
      _
    // Predicated region
    $region18: #{pinn_forward_pallas.1} parent=1 // pred_check
      _
    $region19: #{pinn_forward_pallas.1} parent=1 // pred_check_branch
      %31 = sbr.rel (0) target = $region21
    $region20: #{pinn_forward_pallas.1} parent=1 // pred_region
      _
    $region21: #{pinn_forward_pallas.1} parent=1 // pred_fallthru
      _
    // Predicated region
    $region22: #{pinn_forward_pallas.1} parent=1 // pred_check
      _
    $region23: #{pinn_forward_pallas.1} parent=1 // pred_check_branch
      %33 = sbr.rel (0) target = $region25
    $region24: #{pinn_forward_pallas.1} parent=1 // pred_region
      %35 = dma.done [#allocation3], 1536
    $region25: #{pinn_forward_pallas.1} parent=1 // pred_fallthru
      _
    %v36 = vld [vmem:[%s0] sm:$0x3f]
    %v37 = vld [vmem:[%s1] sm:$0xff]
    %v38 = vld [vmem:[%s1 + $0x8] sm:$0xff]
    %v39 = vld [vmem:[%s1 + $0x10] sm:$0xff]
    %41 = vset.pattern.permute.xlu0 0
    %42 = vperm.xlu0 %41, %v37
    %v43 = vpop.permute.xlu0 %42
    %46 = vset.pattern.permute.xlu0 0
    %47 = vperm.xlu0 %46, %v38
    %v48 = vpop.permute.xlu0 %47
    %51 = vset.pattern.permute.xlu0 0
    %52 = vperm.xlu0 %51, %v39
    %v53 = vpop.permute.xlu0 %52
    %v56 = vperm.slane %v36, 1
    %v57 = vperm.slane %v36, 3
    %v58 = vperm.slane %v36, 5
    %v62 = vperm.slane %v56, 1
    %v63 = vperm.slane %v57, 1
    %v64 = vperm.slane %v58, 1
    %v65 = vmul.f32 %v43, %v62
    %v66 = vmul.f32 %v43, %v63
    %v67 = vmul.f32 %v43, %v64
    %v68 = vmul.f32 %v48, %v62
    %v69 = vmul.f32 %v48, %v63
    %v70 = vmul.f32 %v48, %v64
    %v71 = vmul.f32 %v53, %v62
    %v72 = vmul.f32 %v53, %v63
    %v73 = vmul.f32 %v53, %v64
    %v74 = vand.u32 2147483647, %v65
    %vm75 = vcmp.le.f32.partialorder %v74, 0.7853982
    %vm76 = vcmp.lt.s32.totalorder %v65, 0
    %v77 = vand.u32 %v65, 2139095040
    %v78 = vshrl.u32 %v77, 23
    %v79 = vsub.s32 %v78, 127
    %v80 = vand.u32 2147483647, %v65
    %v81 = vand.u32 %v80, 8388607
    %v82 = vor.u32 %v81, 8388608
    %v83 = vsub.s32 0, %v82
    %v84 = vadd.s32 %v79, 1
    %vm85 = vcmp.gt.s32.totalorder %v84, 0
    %v86 = vsel %vm85, %v84, 0
    %v87 = vshrl.u32 %v86, 5
    %v88 = vand.u32 %v86, 31
    %v89 = vsub.s32 32, %v88
    %v90 = vshrl.u32 683565275, %v89
    %v91 = vshll.u32 683565275, %v88
    %v92 = vshrl.u32 2475754826, %v89
    %v93 = vor.u32 %v91, %v92
    %v94 = vshll.u32 2475754826, %v88
    %v95 = vshrl.u32 2131351028, %v89
    %v96 = vor.u32 %v94, %v95
    %v97 = vshll.u32 2131351028, %v88
    %v98 = vshrl.u32 2102212464, %v89
    %v99 = vor.u32 %v97, %v98
    %v100 = vshll.u32 2102212464, %v88
    %v101 = vshrl.u32 920167782, %v89
    %v102 = vor.u32 %v100, %v101
    %v103 = vshll.u32 920167782, %v88
    %v104 = vshrl.u32 1326507024, %v89
    %v105 = vor.u32 %v103, %v104
    %vm106 = vcmp.lt.s32.totalorder %v87, 1
    %vm107 = vcmp.lt.s32.totalorder %v87, 2
    %vm108 = vcmp.lt.s32.totalorder %v87, 3
    %vm109 = vcmp.lt.s32.totalorder %v87, 4
    %v110 = vsel %vm106, %v90, %v93
    %v111 = vsel %vm109, %v99, 2102212464
    %v112 = vsel %vm108, %v96, %v111
    %v113 = vsel %vm107, %v110, %v112
    %v114 = vsel %vm106, %v93, %v96
    %v115 = vsel %vm109, %v102, 920167782
    %v116 = vsel %vm108, %v99, %v115
    %v117 = vsel %vm107, %v114, %v116
    %v118 = vsel %vm106, %v96, %v99
    %v119 = vsel %vm109, %v105, 1326507024
    %v120 = vsel %vm108, %v102, %v119
    %v121 = vsel %vm107, %v118, %v120
    %v122 = vshll.u32 %v82, 8
    %v123 = vand.u32 %v122, 65535
    %v124 = vshrl.u32 %v122, 16
    %v125 = vand.u32 %v121, 65535
    %v126 = vshrl.u32 %v121, 16
    %v127 = vmul.u32 %v123, %v125
    %v128 = vmul.u32 %v123, %v126
    %v129 = vmul.u32 %v124, %v125
    %v130 = vmul.u32 %v124, %v126
    %v131 = vshll.u32 %v128, 16
    %v132 = vshrl.u32 %v128, 16
    %v133 = vshll.u32 %v129, 16
    %v134 = vshrl.u32 %v129, 16
    %vm135 = vc.u32 %v127, %v131
    %v136 = vsel %vm135, 1, 0
    %v137 = vadd.s32 %v127, %v131
    %v138 = vadd.s32 %v130, %v136
    %vm139 = vc.u32 %v137, %v133
    %v140 = vsel %vm139, 1, 0
    %v141 = vadd.s32 %v137, %v133
    %v142 = vadd.s32 %v138, %v140
    %v143 = vadd.s32 %v142, %v132
    %v144 = vadd.s32 %v143, %v134
    %v145 = vand.u32 %v122, 65535
    %v146 = vshrl.u32 %v122, 16
    %v147 = vand.u32 %v117, 65535
    %v148 = vshrl.u32 %v117, 16
    %v149 = vmul.u32 %v145, %v147
    %v150 = vmul.u32 %v145, %v148
    %v151 = vmul.u32 %v146, %v147
    %v152 = vmul.u32 %v146, %v148
    %v153 = vshll.u32 %v150, 16
    %v154 = vshrl.u32 %v150, 16
    %v155 = vshll.u32 %v151, 16
    %v156 = vshrl.u32 %v151, 16
    %vm157 = vc.u32 %v149, %v153
    %v158 = vsel %vm157, 1, 0
    %v159 = vadd.s32 %v149, %v153
    %v160 = vadd.s32 %v152, %v158
    %vm161 = vc.u32 %v159, %v155
    %v162 = vsel %vm161, 1, 0
    %v163 = vadd.s32 %v159, %v155
    %v164 = vadd.s32 %v160, %v162
    %v165 = vadd.s32 %v164, %v154
    %v166 = vadd.s32 %v165, %v156
    %v167 = vmul.u32 %v122, %v113
    %v168 = vadd.s32 %v144, %v163
    %vm169 = vc.u32 %v144, %v163
    %v170 = vadd.s32 %v166, 1
    %v171 = vsel %vm169, %v170, %v166
    %v172 = vadd.s32 %v167, %v171
    %v173 = vadd.s32 %v172, 536870912
    %v174 = vshrl.u32 %v173, 30
    %v175 = vshll.u32 %v174, 30
    %v176 = vsub.s32 %v172, %v175
    %vm177 = vcmp.lt.s32.totalorder %v176, 0
    %v178 = vsub.s32 0, %v176
    %v179 = vsel %vm177, %v178, %v176
    %v180 = vclz %v179
    %v181 = vsub.s32 %v180, 2
    %vm182 = vcmp.gt.s32.totalorder 0, %v181
    %v183 = vsel %vm182, 0, %v181
    %v184 = vsub.s32 32, %v183
    %v185 = vshll.u32 %v176, %v183
    %v186 = vshrl.u32 %v168, %v184
    %v187 = vor.u32 %v185, %v186
    %v188 = vsub.s32 4294967266, %v183
    %v189 = vadd.s32 %v188, 127
    %v190 = vshll.u32 %v189, 23
    %v191 = vor.u32 4788187, %v190
    %v192 = vand.u32 2147483647, %v191
    %v194 = vcvt.s32.f32 %v187
    %v195 = vmul.f32 %v194, %v192
    %v196 = vxor.u32 %v195, 2147483648
    %v197 = vsel %vm76, %v196, %v195
    %v198 = vsub.s32 4, %v174
    %v199 = vsel %vm76, %v198, %v174
    %v200 = vsel %vm75, %v65, %v197
    %v201 = vsel %vm75, 0, %v199
    %v202 = vmul.f32 %v200, %v200
    %v203 = vmul.f32 %v202, -0.001358992
    %v204 = vadd.f32 %v203, 0.041655596
    %v205 = vmul.f32 %v202, %v204
    %v206 = vadd.f32 %v205, -0.4999988
    %v207 = vmul.f32 %v202, %v206
    %v208 = vadd.f32 1.0, %v207
    %v209 = vmul.f32 %v200, %v200
    %v210 = vmul.f32 %v209, -0.00019511016
    %v211 = vadd.f32 %v210, 0.008332121
    %v212 = vmul.f32 %v209, %v211
    %v213 = vadd.f32 %v212, -0.16666654
    %v214 = vmul.f32 %v209, %v213
    %v215 = vadd.f32 %v214, 1.0
    %v216 = vmul.f32 %v215, %v200
    %vm217 = vweird.f32 %v65
    %v218 = vand.u32 %v201, 3
    %vm219 = vcmp.lt.s32.totalorder %v218, 2
    %vm220 = vcmp.eq.s32.totalorder %v218, 0
    %v221 = vxor.u32 %v216, 2147483648
    %v222 = vsel %vm220, %v208, %v221
    %vm223 = vcmp.eq.s32.totalorder %v218, 2
    %v224 = vxor.u32 %v208, 2147483648
    %v225 = vsel %vm223, %v224, %v216
    %v226 = vsel %vm219, %v222, %v225
    %v227 = vsel %vm217, nan, %v226
    %v228 = vand.u32 2147483647, %v66
    %vm229 = vcmp.le.f32.partialorder %v228, 0.7853982
    %vm230 = vcmp.lt.s32.totalorder %v66, 0
    %v231 = vand.u32 %v66, 2139095040
    %v232 = vshrl.u32 %v231, 23
    %v233 = vsub.s32 %v232, 127
    %v234 = vand.u32 2147483647, %v66
    %v235 = vand.u32 %v234, 8388607
    %v236 = vor.u32 %v235, 8388608
    %v237 = vsub.s32 0, %v236
    %v238 = vadd.s32 %v233, 1
    %vm239 = vcmp.gt.s32.totalorder %v238, 0
    %v240 = vsel %vm239, %v238, 0
    %v241 = vshrl.u32 %v240, 5
    %v242 = vand.u32 %v240, 31
    %v243 = vsub.s32 32, %v242
    %v244 = vshrl.u32 683565275, %v243
    %v245 = vshll.u32 683565275, %v242
    %v246 = vshrl.u32 2475754826, %v243
    %v247 = vor.u32 %v245, %v246
    %v248 = vshll.u32 2475754826, %v242
    %v249 = vshrl.u32 2131351028, %v243
    %v250 = vor.u32 %v248, %v249
    %v251 = vshll.u32 2131351028, %v242
    %v252 = vshrl.u32 2102212464, %v243
    %v253 = vor.u32 %v251, %v252
    %v254 = vshll.u32 2102212464, %v242
    %v255 = vshrl.u32 920167782, %v243
    %v256 = vor.u32 %v254, %v255
    %v257 = vshll.u32 920167782, %v242
    %v258 = vshrl.u32 1326507024, %v243
    %v259 = vor.u32 %v257, %v258
    %vm260 = vcmp.lt.s32.totalorder %v241, 1
    %vm261 = vcmp.lt.s32.totalorder %v241, 2
    %vm262 = vcmp.lt.s32.totalorder %v241, 3
    %vm263 = vcmp.lt.s32.totalorder %v241, 4
    %v264 = vsel %vm260, %v244, %v247
    %v265 = vsel %vm263, %v253, 2102212464
    %v266 = vsel %vm262, %v250, %v265
    %v267 = vsel %vm261, %v264, %v266
    %v268 = vsel %vm260, %v247, %v250
    %v269 = vsel %vm263, %v256, 920167782
    %v270 = vsel %vm262, %v253, %v269
    %v271 = vsel %vm261, %v268, %v270
    %v272 = vsel %vm260, %v250, %v253
    %v273 = vsel %vm263, %v259, 1326507024
    %v274 = vsel %vm262, %v256, %v273
    %v275 = vsel %vm261, %v272, %v274
    %v276 = vshll.u32 %v236, 8
    %v277 = vand.u32 %v276, 65535
    %v278 = vshrl.u32 %v276, 16
    %v279 = vand.u32 %v275, 65535
    %v280 = vshrl.u32 %v275, 16
    %v281 = vmul.u32 %v277, %v279
    %v282 = vmul.u32 %v277, %v280
    %v283 = vmul.u32 %v278, %v279
    %v284 = vmul.u32 %v278, %v280
    %v285 = vshll.u32 %v282, 16
    %v286 = vshrl.u32 %v282, 16
    %v287 = vshll.u32 %v283, 16
    %v288 = vshrl.u32 %v283, 16
    %vm289 = vc.u32 %v281, %v285
    %v290 = vsel %vm289, 1, 0
    %v291 = vadd.s32 %v281, %v285
    %v292 = vadd.s32 %v284, %v290
    %vm293 = vc.u32 %v291, %v287
    %v294 = vsel %vm293, 1, 0
    %v295 = vadd.s32 %v291, %v287
    %v296 = vadd.s32 %v292, %v294
    %v297 = vadd.s32 %v296, %v286
    %v298 = vadd.s32 %v297, %v288
    %v299 = vand.u32 %v276, 65535
    %v300 = vshrl.u32 %v276, 16
    %v301 = vand.u32 %v271, 65535
    %v302 = vshrl.u32 %v271, 16
    %v303 = vmul.u32 %v299, %v301
    %v304 = vmul.u32 %v299, %v302
    %v305 = vmul.u32 %v300, %v301
    %v306 = vmul.u32 %v300, %v302
    %v307 = vshll.u32 %v304, 16
    %v308 = vshrl.u32 %v304, 16
    %v309 = vshll.u32 %v305, 16
    %v310 = vshrl.u32 %v305, 16
    %vm311 = vc.u32 %v303, %v307
    %v312 = vsel %vm311, 1, 0
    %v313 = vadd.s32 %v303, %v307
    %v314 = vadd.s32 %v306, %v312
    %vm315 = vc.u32 %v313, %v309
    %v316 = vsel %vm315, 1, 0
    %v317 = vadd.s32 %v313, %v309
    %v318 = vadd.s32 %v314, %v316
    %v319 = vadd.s32 %v318, %v308
    %v320 = vadd.s32 %v319, %v310
    %v321 = vmul.u32 %v276, %v267
    %v322 = vadd.s32 %v298, %v317
    %vm323 = vc.u32 %v298, %v317
    %v324 = vadd.s32 %v320, 1
    %v325 = vsel %vm323, %v324, %v320
    %v326 = vadd.s32 %v321, %v325
    %v327 = vadd.s32 %v326, 536870912
    %v328 = vshrl.u32 %v327, 30
    %v329 = vshll.u32 %v328, 30
    %v330 = vsub.s32 %v326, %v329
    %vm331 = vcmp.lt.s32.totalorder %v330, 0
    %v332 = vsub.s32 0, %v330
    %v333 = vsel %vm331, %v332, %v330
    %v334 = vclz %v333
    %v335 = vsub.s32 %v334, 2
    %vm336 = vcmp.gt.s32.totalorder 0, %v335
    %v337 = vsel %vm336, 0, %v335
    %v338 = vsub.s32 32, %v337
    %v339 = vshll.u32 %v330, %v337
    %v340 = vshrl.u32 %v322, %v338
    %v341 = vor.u32 %v339, %v340
    %v342 = vsub.s32 4294967266, %v337
    %v343 = vadd.s32 %v342, 127
    %v344 = vshll.u32 %v343, 23
    %v345 = vor.u32 4788187, %v344
    %v346 = vand.u32 2147483647, %v345
    %v348 = vcvt.s32.f32 %v341
    %v349 = vmul.f32 %v348, %v346
    %v350 = vxor.u32 %v349, 2147483648
    %v351 = vsel %vm230, %v350, %v349
    %v352 = vsub.s32 4, %v328
    %v353 = vsel %vm230, %v352, %v328
    %v354 = vsel %vm229, %v66, %v351
    %v355 = vsel %vm229, 0, %v353
    %v356 = vmul.f32 %v354, %v354
    %v357 = vmul.f32 %v356, -0.001358992
    %v358 = vadd.f32 %v357, 0.041655596
    %v359 = vmul.f32 %v356, %v358
    %v360 = vadd.f32 %v359, -0.4999988
    %v361 = vmul.f32 %v356, %v360
    %v362 = vadd.f32 1.0, %v361
    %v363 = vmul.f32 %v354, %v354
    %v364 = vmul.f32 %v363, -0.00019511016
    %v365 = vadd.f32 %v364, 0.008332121
    %v366 = vmul.f32 %v363, %v365
    %v367 = vadd.f32 %v366, -0.16666654
    %v368 = vmul.f32 %v363, %v367
    %v369 = vadd.f32 %v368, 1.0
    %v370 = vmul.f32 %v369, %v354
    %vm371 = vweird.f32 %v66
    %v372 = vand.u32 %v355, 3
    %vm373 = vcmp.lt.s32.totalorder %v372, 2
    %vm374 = vcmp.eq.s32.totalorder %v372, 0
    %v375 = vxor.u32 %v370, 2147483648
    %v376 = vsel %vm374, %v362, %v375
    %vm377 = vcmp.eq.s32.totalorder %v372, 2
    %v378 = vxor.u32 %v362, 2147483648
    %v379 = vsel %vm377, %v378, %v370
    %v380 = vsel %vm373, %v376, %v379
    %v381 = vsel %vm371, nan, %v380
    %v382 = vand.u32 2147483647, %v67
    %vm383 = vcmp.le.f32.partialorder %v382, 0.7853982
    %vm384 = vcmp.lt.s32.totalorder %v67, 0
    %v385 = vand.u32 %v67, 2139095040
    %v386 = vshrl.u32 %v385, 23
    %v387 = vsub.s32 %v386, 127
    %v388 = vand.u32 2147483647, %v67
    %v389 = vand.u32 %v388, 8388607
    %v390 = vor.u32 %v389, 8388608
    %v391 = vsub.s32 0, %v390
    %v392 = vadd.s32 %v387, 1
    %vm393 = vcmp.gt.s32.totalorder %v392, 0
    %v394 = vsel %vm393, %v392, 0
    %v395 = vshrl.u32 %v394, 5
    %v396 = vand.u32 %v394, 31
    %v397 = vsub.s32 32, %v396
    %v398 = vshrl.u32 683565275, %v397
    %v399 = vshll.u32 683565275, %v396
    %v400 = vshrl.u32 2475754826, %v397
    %v401 = vor.u32 %v399, %v400
    %v402 = vshll.u32 2475754826, %v396
    %v403 = vshrl.u32 2131351028, %v397
    %v404 = vor.u32 %v402, %v403
    %v405 = vshll.u32 2131351028, %v396
    %v406 = vshrl.u32 2102212464, %v397
    %v407 = vor.u32 %v405, %v406
    %v408 = vshll.u32 2102212464, %v396
    %v409 = vshrl.u32 920167782, %v397
    %v410 = vor.u32 %v408, %v409
    %v411 = vshll.u32 920167782, %v396
    %v412 = vshrl.u32 1326507024, %v397
    %v413 = vor.u32 %v411, %v412
    %vm414 = vcmp.lt.s32.totalorder %v395, 1
    %vm415 = vcmp.lt.s32.totalorder %v395, 2
    %vm416 = vcmp.lt.s32.totalorder %v395, 3
    %vm417 = vcmp.lt.s32.totalorder %v395, 4
    %v418 = vsel %vm414, %v398, %v401
    %v419 = vsel %vm417, %v407, 2102212464
    %v420 = vsel %vm416, %v404, %v419
    %v421 = vsel %vm415, %v418, %v420
    %v422 = vsel %vm414, %v401, %v404
    %v423 = vsel %vm417, %v410, 920167782
    %v424 = vsel %vm416, %v407, %v423
    %v425 = vsel %vm415, %v422, %v424
    %v426 = vsel %vm414, %v404, %v407
    %v427 = vsel %vm417, %v413, 1326507024
    %v428 = vsel %vm416, %v410, %v427
    %v429 = vsel %vm415, %v426, %v428
    %v430 = vshll.u32 %v390, 8
    %v431 = vand.u32 %v430, 65535
    %v432 = vshrl.u32 %v430, 16
    %v433 = vand.u32 %v429, 65535
    %v434 = vshrl.u32 %v429, 16
    %v435 = vmul.u32 %v431, %v433
    %v436 = vmul.u32 %v431, %v434
    %v437 = vmul.u32 %v432, %v433
    %v438 = vmul.u32 %v432, %v434
    %v439 = vshll.u32 %v436, 16
    %v440 = vshrl.u32 %v436, 16
    %v441 = vshll.u32 %v437, 16
    %v442 = vshrl.u32 %v437, 16
    %vm443 = vc.u32 %v435, %v439
    %v444 = vsel %vm443, 1, 0
    %v445 = vadd.s32 %v435, %v439
    %v446 = vadd.s32 %v438, %v444
    %vm447 = vc.u32 %v445, %v441
    %v448 = vsel %vm447, 1, 0
    %v449 = vadd.s32 %v445, %v441
    %v450 = vadd.s32 %v446, %v448
    %v451 = vadd.s32 %v450, %v440
    %v452 = vadd.s32 %v451, %v442
    %v453 = vand.u32 %v430, 65535
    %v454 = vshrl.u32 %v430, 16
    %v455 = vand.u32 %v425, 65535
    %v456 = vshrl.u32 %v425, 16
    %v457 = vmul.u32 %v453, %v455
    %v458 = vmul.u32 %v453, %v456
    %v459 = vmul.u32 %v454, %v455
    %v460 = vmul.u32 %v454, %v456
    %v461 = vshll.u32 %v458, 16
    %v462 = vshrl.u32 %v458, 16
    %v463 = vshll.u32 %v459, 16
    %v464 = vshrl.u32 %v459, 16
    %vm465 = vc.u32 %v457, %v461
    %v466 = vsel %vm465, 1, 0
    %v467 = vadd.s32 %v457, %v461
    %v468 = vadd.s32 %v460, %v466
    %vm469 = vc.u32 %v467, %v463
    %v470 = vsel %vm469, 1, 0
    %v471 = vadd.s32 %v467, %v463
    %v472 = vadd.s32 %v468, %v470
    %v473 = vadd.s32 %v472, %v462
    %v474 = vadd.s32 %v473, %v464
    %v475 = vmul.u32 %v430, %v421
    %v476 = vadd.s32 %v452, %v471
    %vm477 = vc.u32 %v452, %v471
    %v478 = vadd.s32 %v474, 1
    %v479 = vsel %vm477, %v478, %v474
    %v480 = vadd.s32 %v475, %v479
    %v481 = vadd.s32 %v480, 536870912
    %v482 = vshrl.u32 %v481, 30
    %v483 = vshll.u32 %v482, 30
    %v484 = vsub.s32 %v480, %v483
    %vm485 = vcmp.lt.s32.totalorder %v484, 0
    %v486 = vsub.s32 0, %v484
    %v487 = vsel %vm485, %v486, %v484
    %v488 = vclz %v487
    %v489 = vsub.s32 %v488, 2
    %vm490 = vcmp.gt.s32.totalorder 0, %v489
    %v491 = vsel %vm490, 0, %v489
    %v492 = vsub.s32 32, %v491
    %v493 = vshll.u32 %v484, %v491
    %v494 = vshrl.u32 %v476, %v492
    %v495 = vor.u32 %v493, %v494
    %v496 = vsub.s32 4294967266, %v491
    %v497 = vadd.s32 %v496, 127
    %v498 = vshll.u32 %v497, 23
    %v499 = vor.u32 4788187, %v498
    %v500 = vand.u32 2147483647, %v499
    %v502 = vcvt.s32.f32 %v495
    %v503 = vmul.f32 %v502, %v500
    %v504 = vxor.u32 %v503, 2147483648
    %v505 = vsel %vm384, %v504, %v503
    %v506 = vsub.s32 4, %v482
    %v507 = vsel %vm384, %v506, %v482
    %v508 = vsel %vm383, %v67, %v505
    %v509 = vsel %vm383, 0, %v507
    %v510 = vmul.f32 %v508, %v508
    %v511 = vmul.f32 %v510, -0.001358992
    %v512 = vadd.f32 %v511, 0.041655596
    %v513 = vmul.f32 %v510, %v512
    %v514 = vadd.f32 %v513, -0.4999988
    %v515 = vmul.f32 %v510, %v514
    %v516 = vadd.f32 1.0, %v515
    %v517 = vmul.f32 %v508, %v508
    %v518 = vmul.f32 %v517, -0.00019511016
    %v519 = vadd.f32 %v518, 0.008332121
    %v520 = vmul.f32 %v517, %v519
    %v521 = vadd.f32 %v520, -0.16666654
    %v522 = vmul.f32 %v517, %v521
    %v523 = vadd.f32 %v522, 1.0
    %v524 = vmul.f32 %v523, %v508
    %vm525 = vweird.f32 %v67
    %v526 = vand.u32 %v509, 3
    %vm527 = vcmp.lt.s32.totalorder %v526, 2
    %vm528 = vcmp.eq.s32.totalorder %v526, 0
    %v529 = vxor.u32 %v524, 2147483648
    %v530 = vsel %vm528, %v516, %v529
    %vm531 = vcmp.eq.s32.totalorder %v526, 2
    %v532 = vxor.u32 %v516, 2147483648
    %v533 = vsel %vm531, %v532, %v524
    %v534 = vsel %vm527, %v530, %v533
    %v535 = vsel %vm525, nan, %v534
    %v536 = vand.u32 2147483647, %v68
    %vm537 = vcmp.le.f32.partialorder %v536, 0.7853982
    %vm538 = vcmp.lt.s32.totalorder %v68, 0
    %v539 = vand.u32 %v68, 2139095040
    %v540 = vshrl.u32 %v539, 23
    %v541 = vsub.s32 %v540, 127
    %v542 = vand.u32 2147483647, %v68
    %v543 = vand.u32 %v542, 8388607
    %v544 = vor.u32 %v543, 8388608
    %v545 = vsub.s32 0, %v544
    %v546 = vadd.s32 %v541, 1
    %vm547 = vcmp.gt.s32.totalorder %v546, 0
    %v548 = vsel %vm547, %v546, 0
    %v549 = vshrl.u32 %v548, 5
    %v550 = vand.u32 %v548, 31
    %v551 = vsub.s32 32, %v550
    %v552 = vshrl.u32 683565275, %v551
    %v553 = vshll.u32 683565275, %v550
    %v554 = vshrl.u32 2475754826, %v551
    %v555 = vor.u32 %v553, %v554
    %v556 = vshll.u32 2475754826, %v550
    %v557 = vshrl.u32 2131351028, %v551
    %v558 = vor.u32 %v556, %v557
    %v559 = vshll.u32 2131351028, %v550
    %v560 = vshrl.u32 2102212464, %v551
    %v561 = vor.u32 %v559, %v560
    %v562 = vshll.u32 2102212464, %v550
    %v563 = vshrl.u32 920167782, %v551
    %v564 = vor.u32 %v562, %v563
    %v565 = vshll.u32 920167782, %v550
    %v566 = vshrl.u32 1326507024, %v551
    %v567 = vor.u32 %v565, %v566
    %vm568 = vcmp.lt.s32.totalorder %v549, 1
    %vm569 = vcmp.lt.s32.totalorder %v549, 2
    %vm570 = vcmp.lt.s32.totalorder %v549, 3
    %vm571 = vcmp.lt.s32.totalorder %v549, 4
    %v572 = vsel %vm568, %v552, %v555
    %v573 = vsel %vm571, %v561, 2102212464
    %v574 = vsel %vm570, %v558, %v573
    %v575 = vsel %vm569, %v572, %v574
    %v576 = vsel %vm568, %v555, %v558
    %v577 = vsel %vm571, %v564, 920167782
    %v578 = vsel %vm570, %v561, %v577
    %v579 = vsel %vm569, %v576, %v578
    %v580 = vsel %vm568, %v558, %v561
    %v581 = vsel %vm571, %v567, 1326507024
    %v582 = vsel %vm570, %v564, %v581
    %v583 = vsel %vm569, %v580, %v582
    %v584 = vshll.u32 %v544, 8
    %v585 = vand.u32 %v584, 65535
    %v586 = vshrl.u32 %v584, 16
    %v587 = vand.u32 %v583, 65535
    %v588 = vshrl.u32 %v583, 16
    %v589 = vmul.u32 %v585, %v587
    %v590 = vmul.u32 %v585, %v588
    %v591 = vmul.u32 %v586, %v587
    %v592 = vmul.u32 %v586, %v588
    %v593 = vshll.u32 %v590, 16
    %v594 = vshrl.u32 %v590, 16
    %v595 = vshll.u32 %v591, 16
    %v596 = vshrl.u32 %v591, 16
    %vm597 = vc.u32 %v589, %v593
    %v598 = vsel %vm597, 1, 0
    %v599 = vadd.s32 %v589, %v593
    %v600 = vadd.s32 %v592, %v598
    %vm601 = vc.u32 %v599, %v595
    %v602 = vsel %vm601, 1, 0
    %v603 = vadd.s32 %v599, %v595
    %v604 = vadd.s32 %v600, %v602
    %v605 = vadd.s32 %v604, %v594
    %v606 = vadd.s32 %v605, %v596
    %v607 = vand.u32 %v584, 65535
    %v608 = vshrl.u32 %v584, 16
    %v609 = vand.u32 %v579, 65535
    %v610 = vshrl.u32 %v579, 16
    %v611 = vmul.u32 %v607, %v609
    %v612 = vmul.u32 %v607, %v610
    %v613 = vmul.u32 %v608, %v609
    %v614 = vmul.u32 %v608, %v610
    %v615 = vshll.u32 %v612, 16
    %v616 = vshrl.u32 %v612, 16
    %v617 = vshll.u32 %v613, 16
    %v618 = vshrl.u32 %v613, 16
    %vm619 = vc.u32 %v611, %v615
    %v620 = vsel %vm619, 1, 0
    %v621 = vadd.s32 %v611, %v615
    %v622 = vadd.s32 %v614, %v620
    %vm623 = vc.u32 %v621, %v617
    %v624 = vsel %vm623, 1, 0
    %v625 = vadd.s32 %v621, %v617
    %v626 = vadd.s32 %v622, %v624
    %v627 = vadd.s32 %v626, %v616
    %v628 = vadd.s32 %v627, %v618
    %v629 = vmul.u32 %v584, %v575
    %v630 = vadd.s32 %v606, %v625
    %vm631 = vc.u32 %v606, %v625
    %v632 = vadd.s32 %v628, 1
    %v633 = vsel %vm631, %v632, %v628
    %v634 = vadd.s32 %v629, %v633
    %v635 = vadd.s32 %v634, 536870912
    %v636 = vshrl.u32 %v635, 30
    %v637 = vshll.u32 %v636, 30
    %v638 = vsub.s32 %v634, %v637
    %vm639 = vcmp.lt.s32.totalorder %v638, 0
    %v640 = vsub.s32 0, %v638
    %v641 = vsel %vm639, %v640, %v638
    %v642 = vclz %v641
    %v643 = vsub.s32 %v642, 2
    %vm644 = vcmp.gt.s32.totalorder 0, %v643
    %v645 = vsel %vm644, 0, %v643
    %v646 = vsub.s32 32, %v645
    %v647 = vshll.u32 %v638, %v645
    %v648 = vshrl.u32 %v630, %v646
    %v649 = vor.u32 %v647, %v648
    %v650 = vsub.s32 4294967266, %v645
    %v651 = vadd.s32 %v650, 127
    %v652 = vshll.u32 %v651, 23
    %v653 = vor.u32 4788187, %v652
    %v654 = vand.u32 2147483647, %v653
    %v656 = vcvt.s32.f32 %v649
    %v657 = vmul.f32 %v656, %v654
    %v658 = vxor.u32 %v657, 2147483648
    %v659 = vsel %vm538, %v658, %v657
    %v660 = vsub.s32 4, %v636
    %v661 = vsel %vm538, %v660, %v636
    %v662 = vsel %vm537, %v68, %v659
    %v663 = vsel %vm537, 0, %v661
    %v664 = vmul.f32 %v662, %v662
    %v665 = vmul.f32 %v664, -0.001358992
    %v666 = vadd.f32 %v665, 0.041655596
    %v667 = vmul.f32 %v664, %v666
    %v668 = vadd.f32 %v667, -0.4999988
    %v669 = vmul.f32 %v664, %v668
    %v670 = vadd.f32 1.0, %v669
    %v671 = vmul.f32 %v662, %v662
    %v672 = vmul.f32 %v671, -0.00019511016
    %v673 = vadd.f32 %v672, 0.008332121
    %v674 = vmul.f32 %v671, %v673
    %v675 = vadd.f32 %v674, -0.16666654
    %v676 = vmul.f32 %v671, %v675
    %v677 = vadd.f32 %v676, 1.0
    %v678 = vmul.f32 %v677, %v662
    %vm679 = vweird.f32 %v68
    %v680 = vand.u32 %v663, 3
    %vm681 = vcmp.lt.s32.totalorder %v680, 2
    %vm682 = vcmp.eq.s32.totalorder %v680, 0
    %v683 = vxor.u32 %v678, 2147483648
    %v684 = vsel %vm682, %v670, %v683
    %vm685 = vcmp.eq.s32.totalorder %v680, 2
    %v686 = vxor.u32 %v670, 2147483648
    %v687 = vsel %vm685, %v686, %v678
    %v688 = vsel %vm681, %v684, %v687
    %v689 = vsel %vm679, nan, %v688
    %v690 = vand.u32 2147483647, %v69
    %vm691 = vcmp.le.f32.partialorder %v690, 0.7853982
    %vm692 = vcmp.lt.s32.totalorder %v69, 0
    %v693 = vand.u32 %v69, 2139095040
    %v694 = vshrl.u32 %v693, 23
    %v695 = vsub.s32 %v694, 127
    %v696 = vand.u32 2147483647, %v69
    %v697 = vand.u32 %v696, 8388607
    %v698 = vor.u32 %v697, 8388608
    %v699 = vsub.s32 0, %v698
    %v700 = vadd.s32 %v695, 1
    %vm701 = vcmp.gt.s32.totalorder %v700, 0
    %v702 = vsel %vm701, %v700, 0
    %v703 = vshrl.u32 %v702, 5
    %v704 = vand.u32 %v702, 31
    %v705 = vsub.s32 32, %v704
    %v706 = vshrl.u32 683565275, %v705
    %v707 = vshll.u32 683565275, %v704
    %v708 = vshrl.u32 2475754826, %v705
    %v709 = vor.u32 %v707, %v708
    %v710 = vshll.u32 2475754826, %v704
    %v711 = vshrl.u32 2131351028, %v705
    %v712 = vor.u32 %v710, %v711
    %v713 = vshll.u32 2131351028, %v704
    %v714 = vshrl.u32 2102212464, %v705
    %v715 = vor.u32 %v713, %v714
    %v716 = vshll.u32 2102212464, %v704
    %v717 = vshrl.u32 920167782, %v705
    %v718 = vor.u32 %v716, %v717
    %v719 = vshll.u32 920167782, %v704
    %v720 = vshrl.u32 1326507024, %v705
    %v721 = vor.u32 %v719, %v720
    %vm722 = vcmp.lt.s32.totalorder %v703, 1
    %vm723 = vcmp.lt.s32.totalorder %v703, 2
    %vm724 = vcmp.lt.s32.totalorder %v703, 3
    %vm725 = vcmp.lt.s32.totalorder %v703, 4
    %v726 = vsel %vm722, %v706, %v709
    %v727 = vsel %vm725, %v715, 2102212464
    %v728 = vsel %vm724, %v712, %v727
    %v729 = vsel %vm723, %v726, %v728
    %v730 = vsel %vm722, %v709, %v712
    %v731 = vsel %vm725, %v718, 920167782
    %v732 = vsel %vm724, %v715, %v731
    %v733 = vsel %vm723, %v730, %v732
    %v734 = vsel %vm722, %v712, %v715
    %v735 = vsel %vm725, %v721, 1326507024
    %v736 = vsel %vm724, %v718, %v735
    %v737 = vsel %vm723, %v734, %v736
    %v738 = vshll.u32 %v698, 8
    %v739 = vand.u32 %v738, 65535
    %v740 = vshrl.u32 %v738, 16
    %v741 = vand.u32 %v737, 65535
    %v742 = vshrl.u32 %v737, 16
    %v743 = vmul.u32 %v739, %v741
    %v744 = vmul.u32 %v739, %v742
    %v745 = vmul.u32 %v740, %v741
    %v746 = vmul.u32 %v740, %v742
    %v747 = vshll.u32 %v744, 16
    %v748 = vshrl.u32 %v744, 16
    %v749 = vshll.u32 %v745, 16
    %v750 = vshrl.u32 %v745, 16
    %vm751 = vc.u32 %v743, %v747
    %v752 = vsel %vm751, 1, 0
    %v753 = vadd.s32 %v743, %v747
    %v754 = vadd.s32 %v746, %v752
    %vm755 = vc.u32 %v753, %v749
    %v756 = vsel %vm755, 1, 0
    %v757 = vadd.s32 %v753, %v749
    %v758 = vadd.s32 %v754, %v756
    %v759 = vadd.s32 %v758, %v748
    %v760 = vadd.s32 %v759, %v750
    %v761 = vand.u32 %v738, 65535
    %v762 = vshrl.u32 %v738, 16
    %v763 = vand.u32 %v733, 65535
    %v764 = vshrl.u32 %v733, 16
    %v765 = vmul.u32 %v761, %v763
    %v766 = vmul.u32 %v761, %v764
    %v767 = vmul.u32 %v762, %v763
    %v768 = vmul.u32 %v762, %v764
    %v769 = vshll.u32 %v766, 16
    %v770 = vshrl.u32 %v766, 16
    %v771 = vshll.u32 %v767, 16
    %v772 = vshrl.u32 %v767, 16
    %vm773 = vc.u32 %v765, %v769
    %v774 = vsel %vm773, 1, 0
    %v775 = vadd.s32 %v765, %v769
    %v776 = vadd.s32 %v768, %v774
    %vm777 = vc.u32 %v775, %v771
    %v778 = vsel %vm777, 1, 0
    %v779 = vadd.s32 %v775, %v771
    %v780 = vadd.s32 %v776, %v778
    %v781 = vadd.s32 %v780, %v770
    %v782 = vadd.s32 %v781, %v772
    %v783 = vmul.u32 %v738, %v729
    %v784 = vadd.s32 %v760, %v779
    %vm785 = vc.u32 %v760, %v779
    %v786 = vadd.s32 %v782, 1
    %v787 = vsel %vm785, %v786, %v782
    %v788 = vadd.s32 %v783, %v787
    %v789 = vadd.s32 %v788, 536870912
    %v790 = vshrl.u32 %v789, 30
    %v791 = vshll.u32 %v790, 30
    %v792 = vsub.s32 %v788, %v791
    %vm793 = vcmp.lt.s32.totalorder %v792, 0
    %v794 = vsub.s32 0, %v792
    %v795 = vsel %vm793, %v794, %v792
    %v796 = vclz %v795
    %v797 = vsub.s32 %v796, 2
    %vm798 = vcmp.gt.s32.totalorder 0, %v797
    %v799 = vsel %vm798, 0, %v797
    %v800 = vsub.s32 32, %v799
    %v801 = vshll.u32 %v792, %v799
    %v802 = vshrl.u32 %v784, %v800
    %v803 = vor.u32 %v801, %v802
    %v804 = vsub.s32 4294967266, %v799
    %v805 = vadd.s32 %v804, 127
    %v806 = vshll.u32 %v805, 23
    %v807 = vor.u32 4788187, %v806
    %v808 = vand.u32 2147483647, %v807
    %v810 = vcvt.s32.f32 %v803
    %v811 = vmul.f32 %v810, %v808
    %v812 = vxor.u32 %v811, 2147483648
    %v813 = vsel %vm692, %v812, %v811
    %v814 = vsub.s32 4, %v790
    %v815 = vsel %vm692, %v814, %v790
    %v816 = vsel %vm691, %v69, %v813
    %v817 = vsel %vm691, 0, %v815
    %v818 = vmul.f32 %v816, %v816
    %v819 = vmul.f32 %v818, -0.001358992
    %v820 = vadd.f32 %v819, 0.041655596
    %v821 = vmul.f32 %v818, %v820
    %v822 = vadd.f32 %v821, -0.4999988
    %v823 = vmul.f32 %v818, %v822
    %v824 = vadd.f32 1.0, %v823
    %v825 = vmul.f32 %v816, %v816
    %v826 = vmul.f32 %v825, -0.00019511016
    %v827 = vadd.f32 %v826, 0.008332121
    %v828 = vmul.f32 %v825, %v827
    %v829 = vadd.f32 %v828, -0.16666654
    %v830 = vmul.f32 %v825, %v829
    %v831 = vadd.f32 %v830, 1.0
    %v832 = vmul.f32 %v831, %v816
    %vm833 = vweird.f32 %v69
    %v834 = vand.u32 %v817, 3
    %vm835 = vcmp.lt.s32.totalorder %v834, 2
    %vm836 = vcmp.eq.s32.totalorder %v834, 0
    %v837 = vxor.u32 %v832, 2147483648
    %v838 = vsel %vm836, %v824, %v837
    %vm839 = vcmp.eq.s32.totalorder %v834, 2
    %v840 = vxor.u32 %v824, 2147483648
    %v841 = vsel %vm839, %v840, %v832
    %v842 = vsel %vm835, %v838, %v841
    %v843 = vsel %vm833, nan, %v842
    %v844 = vand.u32 2147483647, %v70
    %vm845 = vcmp.le.f32.partialorder %v844, 0.7853982
    %vm846 = vcmp.lt.s32.totalorder %v70, 0
    %v847 = vand.u32 %v70, 2139095040
    %v848 = vshrl.u32 %v847, 23
    %v849 = vsub.s32 %v848, 127
    %v850 = vand.u32 2147483647, %v70
    %v851 = vand.u32 %v850, 8388607
    %v852 = vor.u32 %v851, 8388608
    %v853 = vsub.s32 0, %v852
    %v854 = vadd.s32 %v849, 1
    %vm855 = vcmp.gt.s32.totalorder %v854, 0
    %v856 = vsel %vm855, %v854, 0
    %v857 = vshrl.u32 %v856, 5
    %v858 = vand.u32 %v856, 31
    %v859 = vsub.s32 32, %v858
    %v860 = vshrl.u32 683565275, %v859
    %v861 = vshll.u32 683565275, %v858
    %v862 = vshrl.u32 2475754826, %v859
    %v863 = vor.u32 %v861, %v862
    %v864 = vshll.u32 2475754826, %v858
    %v865 = vshrl.u32 2131351028, %v859
    %v866 = vor.u32 %v864, %v865
    %v867 = vshll.u32 2131351028, %v858
    %v868 = vshrl.u32 2102212464, %v859
    %v869 = vor.u32 %v867, %v868
    %v870 = vshll.u32 2102212464, %v858
    %v871 = vshrl.u32 920167782, %v859
    %v872 = vor.u32 %v870, %v871
    %v873 = vshll.u32 920167782, %v858
    %v874 = vshrl.u32 1326507024, %v859
    %v875 = vor.u32 %v873, %v874
    %vm876 = vcmp.lt.s32.totalorder %v857, 1
    %vm877 = vcmp.lt.s32.totalorder %v857, 2
    %vm878 = vcmp.lt.s32.totalorder %v857, 3
    %vm879 = vcmp.lt.s32.totalorder %v857, 4
    %v880 = vsel %vm876, %v860, %v863
    %v881 = vsel %vm879, %v869, 2102212464
    %v882 = vsel %vm878, %v866, %v881
    %v883 = vsel %vm877, %v880, %v882
    %v884 = vsel %vm876, %v863, %v866
    %v885 = vsel %vm879, %v872, 920167782
    %v886 = vsel %vm878, %v869, %v885
    %v887 = vsel %vm877, %v884, %v886
    %v888 = vsel %vm876, %v866, %v869
    %v889 = vsel %vm879, %v875, 1326507024
    %v890 = vsel %vm878, %v872, %v889
    %v891 = vsel %vm877, %v888, %v890
    %v892 = vshll.u32 %v852, 8
    %v893 = vand.u32 %v892, 65535
    %v894 = vshrl.u32 %v892, 16
    %v895 = vand.u32 %v891, 65535
    %v896 = vshrl.u32 %v891, 16
    %v897 = vmul.u32 %v893, %v895
    %v898 = vmul.u32 %v893, %v896
    %v899 = vmul.u32 %v894, %v895
    %v900 = vmul.u32 %v894, %v896
    %v901 = vshll.u32 %v898, 16
    %v902 = vshrl.u32 %v898, 16
    %v903 = vshll.u32 %v899, 16
    %v904 = vshrl.u32 %v899, 16
    %vm905 = vc.u32 %v897, %v901
    %v906 = vsel %vm905, 1, 0
    %v907 = vadd.s32 %v897, %v901
    %v908 = vadd.s32 %v900, %v906
    %vm909 = vc.u32 %v907, %v903
    %v910 = vsel %vm909, 1, 0
    %v911 = vadd.s32 %v907, %v903
    %v912 = vadd.s32 %v908, %v910
    %v913 = vadd.s32 %v912, %v902
    %v914 = vadd.s32 %v913, %v904
    %v915 = vand.u32 %v892, 65535
    %v916 = vshrl.u32 %v892, 16
    %v917 = vand.u32 %v887, 65535
    %v918 = vshrl.u32 %v887, 16
    %v919 = vmul.u32 %v915, %v917
    %v920 = vmul.u32 %v915, %v918
    %v921 = vmul.u32 %v916, %v917
    %v922 = vmul.u32 %v916, %v918
    %v923 = vshll.u32 %v920, 16
    %v924 = vshrl.u32 %v920, 16
    %v925 = vshll.u32 %v921, 16
    %v926 = vshrl.u32 %v921, 16
    %vm927 = vc.u32 %v919, %v923
    %v928 = vsel %vm927, 1, 0
    %v929 = vadd.s32 %v919, %v923
    %v930 = vadd.s32 %v922, %v928
    %vm931 = vc.u32 %v929, %v925
    %v932 = vsel %vm931, 1, 0
    %v933 = vadd.s32 %v929, %v925
    %v934 = vadd.s32 %v930, %v932
    %v935 = vadd.s32 %v934, %v924
    %v936 = vadd.s32 %v935, %v926
    %v937 = vmul.u32 %v892, %v883
    %v938 = vadd.s32 %v914, %v933
    %vm939 = vc.u32 %v914, %v933
    %v940 = vadd.s32 %v936, 1
    %v941 = vsel %vm939, %v940, %v936
    %v942 = vadd.s32 %v937, %v941
    %v943 = vadd.s32 %v942, 536870912
    %v944 = vshrl.u32 %v943, 30
    %v945 = vshll.u32 %v944, 30
    %v946 = vsub.s32 %v942, %v945
    %vm947 = vcmp.lt.s32.totalorder %v946, 0
    %v948 = vsub.s32 0, %v946
    %v949 = vsel %vm947, %v948, %v946
    %v950 = vclz %v949
    %v951 = vsub.s32 %v950, 2
    %vm952 = vcmp.gt.s32.totalorder 0, %v951
    %v953 = vsel %vm952, 0, %v951
    %v954 = vsub.s32 32, %v953
    %v955 = vshll.u32 %v946, %v953
    %v956 = vshrl.u32 %v938, %v954
    %v957 = vor.u32 %v955, %v956
    %v958 = vsub.s32 4294967266, %v953
    %v959 = vadd.s32 %v958, 127
    %v960 = vshll.u32 %v959, 23
    %v961 = vor.u32 4788187, %v960
    %v962 = vand.u32 2147483647, %v961
    %v964 = vcvt.s32.f32 %v957
    %v965 = vmul.f32 %v964, %v962
    %v966 = vxor.u32 %v965, 2147483648
    %v967 = vsel %vm846, %v966, %v965
    %v968 = vsub.s32 4, %v944
    %v969 = vsel %vm846, %v968, %v944
    %v970 = vsel %vm845, %v70, %v967
    %v971 = vsel %vm845, 0, %v969
    %v972 = vmul.f32 %v970, %v970
    %v973 = vmul.f32 %v972, -0.001358992
    %v974 = vadd.f32 %v973, 0.041655596
    %v975 = vmul.f32 %v972, %v974
    %v976 = vadd.f32 %v975, -0.4999988
    %v977 = vmul.f32 %v972, %v976
    %v978 = vadd.f32 1.0, %v977
    %v979 = vmul.f32 %v970, %v970
    %v980 = vmul.f32 %v979, -0.00019511016
    %v981 = vadd.f32 %v980, 0.008332121
    %v982 = vmul.f32 %v979, %v981
    %v983 = vadd.f32 %v982, -0.16666654
    %v984 = vmul.f32 %v979, %v983
    %v985 = vadd.f32 %v984, 1.0
    %v986 = vmul.f32 %v985, %v970
    %vm987 = vweird.f32 %v70
    %v988 = vand.u32 %v971, 3
    %vm989 = vcmp.lt.s32.totalorder %v988, 2
    %vm990 = vcmp.eq.s32.totalorder %v988, 0
    %v991 = vxor.u32 %v986, 2147483648
    %v992 = vsel %vm990, %v978, %v991
    %vm993 = vcmp.eq.s32.totalorder %v988, 2
    %v994 = vxor.u32 %v978, 2147483648
    %v995 = vsel %vm993, %v994, %v986
    %v996 = vsel %vm989, %v992, %v995
    %v997 = vsel %vm987, nan, %v996
    %v998 = vand.u32 2147483647, %v71
    %vm999 = vcmp.le.f32.partialorder %v998, 0.7853982
    %vm1000 = vcmp.lt.s32.totalorder %v71, 0
    %v1001 = vand.u32 %v71, 2139095040
    %v1002 = vshrl.u32 %v1001, 23
    %v1003 = vsub.s32 %v1002, 127
    %v1004 = vand.u32 2147483647, %v71
    %v1005 = vand.u32 %v1004, 8388607
    %v1006 = vor.u32 %v1005, 8388608
    %v1007 = vsub.s32 0, %v1006
    %v1008 = vadd.s32 %v1003, 1
    %vm1009 = vcmp.gt.s32.totalorder %v1008, 0
    %v1010 = vsel %vm1009, %v1008, 0
    %v1011 = vshrl.u32 %v1010, 5
    %v1012 = vand.u32 %v1010, 31
    %v1013 = vsub.s32 32, %v1012
    %v1014 = vshrl.u32 683565275, %v1013
    %v1015 = vshll.u32 683565275, %v1012
    %v1016 = vshrl.u32 2475754826, %v1013
    %v1017 = vor.u32 %v1015, %v1016
    %v1018 = vshll.u32 2475754826, %v1012
    %v1019 = vshrl.u32 2131351028, %v1013
    %v1020 = vor.u32 %v1018, %v1019
    %v1021 = vshll.u32 2131351028, %v1012
    %v1022 = vshrl.u32 2102212464, %v1013
    %v1023 = vor.u32 %v1021, %v1022
    %v1024 = vshll.u32 2102212464, %v1012
    %v1025 = vshrl.u32 920167782, %v1013
    %v1026 = vor.u32 %v1024, %v1025
    %v1027 = vshll.u32 920167782, %v1012
    %v1028 = vshrl.u32 1326507024, %v1013
    %v1029 = vor.u32 %v1027, %v1028
    %vm1030 = vcmp.lt.s32.totalorder %v1011, 1
    %vm1031 = vcmp.lt.s32.totalorder %v1011, 2
    %vm1032 = vcmp.lt.s32.totalorder %v1011, 3
    %vm1033 = vcmp.lt.s32.totalorder %v1011, 4
    %v1034 = vsel %vm1030, %v1014, %v1017
    %v1035 = vsel %vm1033, %v1023, 2102212464
    %v1036 = vsel %vm1032, %v1020, %v1035
    %v1037 = vsel %vm1031, %v1034, %v1036
    %v1038 = vsel %vm1030, %v1017, %v1020
    %v1039 = vsel %vm1033, %v1026, 920167782
    %v1040 = vsel %vm1032, %v1023, %v1039
    %v1041 = vsel %vm1031, %v1038, %v1040
    %v1042 = vsel %vm1030, %v1020, %v1023
    %v1043 = vsel %vm1033, %v1029, 1326507024
    %v1044 = vsel %vm1032, %v1026, %v1043
    %v1045 = vsel %vm1031, %v1042, %v1044
    %v1046 = vshll.u32 %v1006, 8
    %v1047 = vand.u32 %v1046, 65535
    %v1048 = vshrl.u32 %v1046, 16
    %v1049 = vand.u32 %v1045, 65535
    %v1050 = vshrl.u32 %v1045, 16
    %v1051 = vmul.u32 %v1047, %v1049
    %v1052 = vmul.u32 %v1047, %v1050
    %v1053 = vmul.u32 %v1048, %v1049
    %v1054 = vmul.u32 %v1048, %v1050
    %v1055 = vshll.u32 %v1052, 16
    %v1056 = vshrl.u32 %v1052, 16
    %v1057 = vshll.u32 %v1053, 16
    %v1058 = vshrl.u32 %v1053, 16
    %vm1059 = vc.u32 %v1051, %v1055
    %v1060 = vsel %vm1059, 1, 0
    %v1061 = vadd.s32 %v1051, %v1055
    %v1062 = vadd.s32 %v1054, %v1060
    %vm1063 = vc.u32 %v1061, %v1057
    %v1064 = vsel %vm1063, 1, 0
    %v1065 = vadd.s32 %v1061, %v1057
    %v1066 = vadd.s32 %v1062, %v1064
    %v1067 = vadd.s32 %v1066, %v1056
    %v1068 = vadd.s32 %v1067, %v1058
    %v1069 = vand.u32 %v1046, 65535
    %v1070 = vshrl.u32 %v1046, 16
    %v1071 = vand.u32 %v1041, 65535
    %v1072 = vshrl.u32 %v1041, 16
    %v1073 = vmul.u32 %v1069, %v1071
    %v1074 = vmul.u32 %v1069, %v1072
    %v1075 = vmul.u32 %v1070, %v1071
    %v1076 = vmul.u32 %v1070, %v1072
    %v1077 = vshll.u32 %v1074, 16
    %v1078 = vshrl.u32 %v1074, 16
    %v1079 = vshll.u32 %v1075, 16
    %v1080 = vshrl.u32 %v1075, 16
    %vm1081 = vc.u32 %v1073, %v1077
    %v1082 = vsel %vm1081, 1, 0
    %v1083 = vadd.s32 %v1073, %v1077
    %v1084 = vadd.s32 %v1076, %v1082
    %vm1085 = vc.u32 %v1083, %v1079
    %v1086 = vsel %vm1085, 1, 0
    %v1087 = vadd.s32 %v1083, %v1079
    %v1088 = vadd.s32 %v1084, %v1086
    %v1089 = vadd.s32 %v1088, %v1078
    %v1090 = vadd.s32 %v1089, %v1080
    %v1091 = vmul.u32 %v1046, %v1037
    %v1092 = vadd.s32 %v1068, %v1087
    %vm1093 = vc.u32 %v1068, %v1087
    %v1094 = vadd.s32 %v1090, 1
    %v1095 = vsel %vm1093, %v1094, %v1090
    %v1096 = vadd.s32 %v1091, %v1095
    %v1097 = vadd.s32 %v1096, 536870912
    %v1098 = vshrl.u32 %v1097, 30
    %v1099 = vshll.u32 %v1098, 30
    %v1100 = vsub.s32 %v1096, %v1099
    %vm1101 = vcmp.lt.s32.totalorder %v1100, 0
    %v1102 = vsub.s32 0, %v1100
    %v1103 = vsel %vm1101, %v1102, %v1100
    %v1104 = vclz %v1103
    %v1105 = vsub.s32 %v1104, 2
    %vm1106 = vcmp.gt.s32.totalorder 0, %v1105
    %v1107 = vsel %vm1106, 0, %v1105
    %v1108 = vsub.s32 32, %v1107
    %v1109 = vshll.u32 %v1100, %v1107
    %v1110 = vshrl.u32 %v1092, %v1108
    %v1111 = vor.u32 %v1109, %v1110
    %v1112 = vsub.s32 4294967266, %v1107
    %v1113 = vadd.s32 %v1112, 127
    %v1114 = vshll.u32 %v1113, 23
    %v1115 = vor.u32 4788187, %v1114
    %v1116 = vand.u32 2147483647, %v1115
    %v1118 = vcvt.s32.f32 %v1111
    %v1119 = vmul.f32 %v1118, %v1116
    %v1120 = vxor.u32 %v1119, 2147483648
    %v1121 = vsel %vm1000, %v1120, %v1119
    %v1122 = vsub.s32 4, %v1098
    %v1123 = vsel %vm1000, %v1122, %v1098
    %v1124 = vsel %vm999, %v71, %v1121
    %v1125 = vsel %vm999, 0, %v1123
    %v1126 = vmul.f32 %v1124, %v1124
    %v1127 = vmul.f32 %v1126, -0.001358992
    %v1128 = vadd.f32 %v1127, 0.041655596
    %v1129 = vmul.f32 %v1126, %v1128
    %v1130 = vadd.f32 %v1129, -0.4999988
    %v1131 = vmul.f32 %v1126, %v1130
    %v1132 = vadd.f32 1.0, %v1131
    %v1133 = vmul.f32 %v1124, %v1124
    %v1134 = vmul.f32 %v1133, -0.00019511016
    %v1135 = vadd.f32 %v1134, 0.008332121
    %v1136 = vmul.f32 %v1133, %v1135
    %v1137 = vadd.f32 %v1136, -0.16666654
    %v1138 = vmul.f32 %v1133, %v1137
    %v1139 = vadd.f32 %v1138, 1.0
    %v1140 = vmul.f32 %v1139, %v1124
    %vm1141 = vweird.f32 %v71
    %v1142 = vand.u32 %v1125, 3
    %vm1143 = vcmp.lt.s32.totalorder %v1142, 2
    %vm1144 = vcmp.eq.s32.totalorder %v1142, 0
    %v1145 = vxor.u32 %v1140, 2147483648
    %v1146 = vsel %vm1144, %v1132, %v1145
    %vm1147 = vcmp.eq.s32.totalorder %v1142, 2
    %v1148 = vxor.u32 %v1132, 2147483648
    %v1149 = vsel %vm1147, %v1148, %v1140
    %v1150 = vsel %vm1143, %v1146, %v1149
    %v1151 = vsel %vm1141, nan, %v1150
    %v1152 = vand.u32 2147483647, %v72
    %vm1153 = vcmp.le.f32.partialorder %v1152, 0.7853982
    %vm1154 = vcmp.lt.s32.totalorder %v72, 0
    %v1155 = vand.u32 %v72, 2139095040
    %v1156 = vshrl.u32 %v1155, 23
    %v1157 = vsub.s32 %v1156, 127
    %v1158 = vand.u32 2147483647, %v72
    %v1159 = vand.u32 %v1158, 8388607
    %v1160 = vor.u32 %v1159, 8388608
    %v1161 = vsub.s32 0, %v1160
    %v1162 = vadd.s32 %v1157, 1
    %vm1163 = vcmp.gt.s32.totalorder %v1162, 0
    %v1164 = vsel %vm1163, %v1162, 0
    %v1165 = vshrl.u32 %v1164, 5
    %v1166 = vand.u32 %v1164, 31
    %v1167 = vsub.s32 32, %v1166
    %v1168 = vshrl.u32 683565275, %v1167
    %v1169 = vshll.u32 683565275, %v1166
    %v1170 = vshrl.u32 2475754826, %v1167
    %v1171 = vor.u32 %v1169, %v1170
    %v1172 = vshll.u32 2475754826, %v1166
    %v1173 = vshrl.u32 2131351028, %v1167
    %v1174 = vor.u32 %v1172, %v1173
    %v1175 = vshll.u32 2131351028, %v1166
    %v1176 = vshrl.u32 2102212464, %v1167
    %v1177 = vor.u32 %v1175, %v1176
    %v1178 = vshll.u32 2102212464, %v1166
    %v1179 = vshrl.u32 920167782, %v1167
    %v1180 = vor.u32 %v1178, %v1179
    %v1181 = vshll.u32 920167782, %v1166
    %v1182 = vshrl.u32 1326507024, %v1167
    %v1183 = vor.u32 %v1181, %v1182
    %vm1184 = vcmp.lt.s32.totalorder %v1165, 1
    %vm1185 = vcmp.lt.s32.totalorder %v1165, 2
    %vm1186 = vcmp.lt.s32.totalorder %v1165, 3
    %vm1187 = vcmp.lt.s32.totalorder %v1165, 4
    %v1188 = vsel %vm1184, %v1168, %v1171
    %v1189 = vsel %vm1187, %v1177, 2102212464
    %v1190 = vsel %vm1186, %v1174, %v1189
    %v1191 = vsel %vm1185, %v1188, %v1190
    %v1192 = vsel %vm1184, %v1171, %v1174
    %v1193 = vsel %vm1187, %v1180, 920167782
    %v1194 = vsel %vm1186, %v1177, %v1193
    %v1195 = vsel %vm1185, %v1192, %v1194
    %v1196 = vsel %vm1184, %v1174, %v1177
    %v1197 = vsel %vm1187, %v1183, 1326507024
    %v1198 = vsel %vm1186, %v1180, %v1197
    %v1199 = vsel %vm1185, %v1196, %v1198
    %v1200 = vshll.u32 %v1160, 8
    %v1201 = vand.u32 %v1200, 65535
    %v1202 = vshrl.u32 %v1200, 16
    %v1203 = vand.u32 %v1199, 65535
    %v1204 = vshrl.u32 %v1199, 16
    %v1205 = vmul.u32 %v1201, %v1203
    %v1206 = vmul.u32 %v1201, %v1204
    %v1207 = vmul.u32 %v1202, %v1203
    %v1208 = vmul.u32 %v1202, %v1204
    %v1209 = vshll.u32 %v1206, 16
    %v1210 = vshrl.u32 %v1206, 16
    %v1211 = vshll.u32 %v1207, 16
    %v1212 = vshrl.u32 %v1207, 16
    %vm1213 = vc.u32 %v1205, %v1209
    %v1214 = vsel %vm1213, 1, 0
    %v1215 = vadd.s32 %v1205, %v1209
    %v1216 = vadd.s32 %v1208, %v1214
    %vm1217 = vc.u32 %v1215, %v1211
    %v1218 = vsel %vm1217, 1, 0
    %v1219 = vadd.s32 %v1215, %v1211
    %v1220 = vadd.s32 %v1216, %v1218
    %v1221 = vadd.s32 %v1220, %v1210
    %v1222 = vadd.s32 %v1221, %v1212
    %v1223 = vand.u32 %v1200, 65535
    %v1224 = vshrl.u32 %v1200, 16
    %v1225 = vand.u32 %v1195, 65535
    %v1226 = vshrl.u32 %v1195, 16
    %v1227 = vmul.u32 %v1223, %v1225
    %v1228 = vmul.u32 %v1223, %v1226
    %v1229 = vmul.u32 %v1224, %v1225
    %v1230 = vmul.u32 %v1224, %v1226
    %v1231 = vshll.u32 %v1228, 16
    %v1232 = vshrl.u32 %v1228, 16
    %v1233 = vshll.u32 %v1229, 16
    %v1234 = vshrl.u32 %v1229, 16
    %vm1235 = vc.u32 %v1227, %v1231
    %v1236 = vsel %vm1235, 1, 0
    %v1237 = vadd.s32 %v1227, %v1231
    %v1238 = vadd.s32 %v1230, %v1236
    %vm1239 = vc.u32 %v1237, %v1233
    %v1240 = vsel %vm1239, 1, 0
    %v1241 = vadd.s32 %v1237, %v1233
    %v1242 = vadd.s32 %v1238, %v1240
    %v1243 = vadd.s32 %v1242, %v1232
    %v1244 = vadd.s32 %v1243, %v1234
    %v1245 = vmul.u32 %v1200, %v1191
    %v1246 = vadd.s32 %v1222, %v1241
    %vm1247 = vc.u32 %v1222, %v1241
    %v1248 = vadd.s32 %v1244, 1
    %v1249 = vsel %vm1247, %v1248, %v1244
    %v1250 = vadd.s32 %v1245, %v1249
    %v1251 = vadd.s32 %v1250, 536870912
    %v1252 = vshrl.u32 %v1251, 30
    %v1253 = vshll.u32 %v1252, 30
    %v1254 = vsub.s32 %v1250, %v1253
    %vm1255 = vcmp.lt.s32.totalorder %v1254, 0
    %v1256 = vsub.s32 0, %v1254
    %v1257 = vsel %vm1255, %v1256, %v1254
    %v1258 = vclz %v1257
    %v1259 = vsub.s32 %v1258, 2
    %vm1260 = vcmp.gt.s32.totalorder 0, %v1259
    %v1261 = vsel %vm1260, 0, %v1259
    %v1262 = vsub.s32 32, %v1261
    %v1263 = vshll.u32 %v1254, %v1261
    %v1264 = vshrl.u32 %v1246, %v1262
    %v1265 = vor.u32 %v1263, %v1264
    %v1266 = vsub.s32 4294967266, %v1261
    %v1267 = vadd.s32 %v1266, 127
    %v1268 = vshll.u32 %v1267, 23
    %v1269 = vor.u32 4788187, %v1268
    %v1270 = vand.u32 2147483647, %v1269
    %v1272 = vcvt.s32.f32 %v1265
    %v1273 = vmul.f32 %v1272, %v1270
    %v1274 = vxor.u32 %v1273, 2147483648
    %v1275 = vsel %vm1154, %v1274, %v1273
    %v1276 = vsub.s32 4, %v1252
    %v1277 = vsel %vm1154, %v1276, %v1252
    %v1278 = vsel %vm1153, %v72, %v1275
    %v1279 = vsel %vm1153, 0, %v1277
    %v1280 = vmul.f32 %v1278, %v1278
    %v1281 = vmul.f32 %v1280, -0.001358992
    %v1282 = vadd.f32 %v1281, 0.041655596
    %v1283 = vmul.f32 %v1280, %v1282
    %v1284 = vadd.f32 %v1283, -0.4999988
    %v1285 = vmul.f32 %v1280, %v1284
    %v1286 = vadd.f32 1.0, %v1285
    %v1287 = vmul.f32 %v1278, %v1278
    %v1288 = vmul.f32 %v1287, -0.00019511016
    %v1289 = vadd.f32 %v1288, 0.008332121
    %v1290 = vmul.f32 %v1287, %v1289
    %v1291 = vadd.f32 %v1290, -0.16666654
    %v1292 = vmul.f32 %v1287, %v1291
    %v1293 = vadd.f32 %v1292, 1.0
    %v1294 = vmul.f32 %v1293, %v1278
    %vm1295 = vweird.f32 %v72
    %v1296 = vand.u32 %v1279, 3
    %vm1297 = vcmp.lt.s32.totalorder %v1296, 2
    %vm1298 = vcmp.eq.s32.totalorder %v1296, 0
    %v1299 = vxor.u32 %v1294, 2147483648
    %v1300 = vsel %vm1298, %v1286, %v1299
    %vm1301 = vcmp.eq.s32.totalorder %v1296, 2
    %v1302 = vxor.u32 %v1286, 2147483648
    %v1303 = vsel %vm1301, %v1302, %v1294
    %v1304 = vsel %vm1297, %v1300, %v1303
    %v1305 = vsel %vm1295, nan, %v1304
    %v1306 = vand.u32 2147483647, %v73
    %vm1307 = vcmp.le.f32.partialorder %v1306, 0.7853982
    %vm1308 = vcmp.lt.s32.totalorder %v73, 0
    %v1309 = vand.u32 %v73, 2139095040
    %v1310 = vshrl.u32 %v1309, 23
    %v1311 = vsub.s32 %v1310, 127
    %v1312 = vand.u32 2147483647, %v73
    %v1313 = vand.u32 %v1312, 8388607
    %v1314 = vor.u32 %v1313, 8388608
    %v1315 = vsub.s32 0, %v1314
    %v1316 = vadd.s32 %v1311, 1
    %vm1317 = vcmp.gt.s32.totalorder %v1316, 0
    %v1318 = vsel %vm1317, %v1316, 0
    %v1319 = vshrl.u32 %v1318, 5
    %v1320 = vand.u32 %v1318, 31
    %v1321 = vsub.s32 32, %v1320
    %v1322 = vshrl.u32 683565275, %v1321
    %v1323 = vshll.u32 683565275, %v1320
    %v1324 = vshrl.u32 2475754826, %v1321
    %v1325 = vor.u32 %v1323, %v1324
    %v1326 = vshll.u32 2475754826, %v1320
    %v1327 = vshrl.u32 2131351028, %v1321
    %v1328 = vor.u32 %v1326, %v1327
    %v1329 = vshll.u32 2131351028, %v1320
    %v1330 = vshrl.u32 2102212464, %v1321
    %v1331 = vor.u32 %v1329, %v1330
    %v1332 = vshll.u32 2102212464, %v1320
    %v1333 = vshrl.u32 920167782, %v1321
    %v1334 = vor.u32 %v1332, %v1333
    %v1335 = vshll.u32 920167782, %v1320
    %v1336 = vshrl.u32 1326507024, %v1321
    %v1337 = vor.u32 %v1335, %v1336
    %vm1338 = vcmp.lt.s32.totalorder %v1319, 1
    %vm1339 = vcmp.lt.s32.totalorder %v1319, 2
    %vm1340 = vcmp.lt.s32.totalorder %v1319, 3
    %vm1341 = vcmp.lt.s32.totalorder %v1319, 4
    %v1342 = vsel %vm1338, %v1322, %v1325
    %v1343 = vsel %vm1341, %v1331, 2102212464
    %v1344 = vsel %vm1340, %v1328, %v1343
    %v1345 = vsel %vm1339, %v1342, %v1344
    %v1346 = vsel %vm1338, %v1325, %v1328
    %v1347 = vsel %vm1341, %v1334, 920167782
    %v1348 = vsel %vm1340, %v1331, %v1347
    %v1349 = vsel %vm1339, %v1346, %v1348
    %v1350 = vsel %vm1338, %v1328, %v1331
    %v1351 = vsel %vm1341, %v1337, 1326507024
    %v1352 = vsel %vm1340, %v1334, %v1351
    %v1353 = vsel %vm1339, %v1350, %v1352
    %v1354 = vshll.u32 %v1314, 8
    %v1355 = vand.u32 %v1354, 65535
    %v1356 = vshrl.u32 %v1354, 16
    %v1357 = vand.u32 %v1353, 65535
    %v1358 = vshrl.u32 %v1353, 16
    %v1359 = vmul.u32 %v1355, %v1357
    %v1360 = vmul.u32 %v1355, %v1358
    %v1361 = vmul.u32 %v1356, %v1357
    %v1362 = vmul.u32 %v1356, %v1358
    %v1363 = vshll.u32 %v1360, 16
    %v1364 = vshrl.u32 %v1360, 16
    %v1365 = vshll.u32 %v1361, 16
    %v1366 = vshrl.u32 %v1361, 16
    %vm1367 = vc.u32 %v1359, %v1363
    %v1368 = vsel %vm1367, 1, 0
    %v1369 = vadd.s32 %v1359, %v1363
    %v1370 = vadd.s32 %v1362, %v1368
    %vm1371 = vc.u32 %v1369, %v1365
    %v1372 = vsel %vm1371, 1, 0
    %v1373 = vadd.s32 %v1369, %v1365
    %v1374 = vadd.s32 %v1370, %v1372
    %v1375 = vadd.s32 %v1374, %v1364
    %v1376 = vadd.s32 %v1375, %v1366
    %v1377 = vand.u32 %v1354, 65535
    %v1378 = vshrl.u32 %v1354, 16
    %v1379 = vand.u32 %v1349, 65535
    %v1380 = vshrl.u32 %v1349, 16
    %v1381 = vmul.u32 %v1377, %v1379
    %v1382 = vmul.u32 %v1377, %v1380
    %v1383 = vmul.u32 %v1378, %v1379
    %v1384 = vmul.u32 %v1378, %v1380
    %v1385 = vshll.u32 %v1382, 16
    %v1386 = vshrl.u32 %v1382, 16
    %v1387 = vshll.u32 %v1383, 16
    %v1388 = vshrl.u32 %v1383, 16
    %vm1389 = vc.u32 %v1381, %v1385
    %v1390 = vsel %vm1389, 1, 0
    %v1391 = vadd.s32 %v1381, %v1385
    %v1392 = vadd.s32 %v1384, %v1390
    %vm1393 = vc.u32 %v1391, %v1387
    %v1394 = vsel %vm1393, 1, 0
    %v1395 = vadd.s32 %v1391, %v1387
    %v1396 = vadd.s32 %v1392, %v1394
    %v1397 = vadd.s32 %v1396, %v1386
    %v1398 = vadd.s32 %v1397, %v1388
    %v1399 = vmul.u32 %v1354, %v1345
    %v1400 = vadd.s32 %v1376, %v1395
    %vm1401 = vc.u32 %v1376, %v1395
    %v1402 = vadd.s32 %v1398, 1
    %v1403 = vsel %vm1401, %v1402, %v1398
    %v1404 = vadd.s32 %v1399, %v1403
    %v1405 = vadd.s32 %v1404, 536870912
    %v1406 = vshrl.u32 %v1405, 30
    %v1407 = vshll.u32 %v1406, 30
    %v1408 = vsub.s32 %v1404, %v1407
    %vm1409 = vcmp.lt.s32.totalorder %v1408, 0
    %v1410 = vsub.s32 0, %v1408
    %v1411 = vsel %vm1409, %v1410, %v1408
    %v1412 = vclz %v1411
    %v1413 = vsub.s32 %v1412, 2
    %vm1414 = vcmp.gt.s32.totalorder 0, %v1413
    %v1415 = vsel %vm1414, 0, %v1413
    %v1416 = vsub.s32 32, %v1415
    %v1417 = vshll.u32 %v1408, %v1415
    %v1418 = vshrl.u32 %v1400, %v1416
    %v1419 = vor.u32 %v1417, %v1418
    %v1420 = vsub.s32 4294967266, %v1415
    %v1421 = vadd.s32 %v1420, 127
    %v1422 = vshll.u32 %v1421, 23
    %v1423 = vor.u32 4788187, %v1422
    %v1424 = vand.u32 2147483647, %v1423
    %v1426 = vcvt.s32.f32 %v1419
    %v1427 = vmul.f32 %v1426, %v1424
    %v1428 = vxor.u32 %v1427, 2147483648
    %v1429 = vsel %vm1308, %v1428, %v1427
    %v1430 = vsub.s32 4, %v1406
    %v1431 = vsel %vm1308, %v1430, %v1406
    %v1432 = vsel %vm1307, %v73, %v1429
    %v1433 = vsel %vm1307, 0, %v1431
    %v1434 = vmul.f32 %v1432, %v1432
    %v1435 = vmul.f32 %v1434, -0.001358992
    %v1436 = vadd.f32 %v1435, 0.041655596
    %v1437 = vmul.f32 %v1434, %v1436
    %v1438 = vadd.f32 %v1437, -0.4999988
    %v1439 = vmul.f32 %v1434, %v1438
    %v1440 = vadd.f32 1.0, %v1439
    %v1441 = vmul.f32 %v1432, %v1432
    %v1442 = vmul.f32 %v1441, -0.00019511016
    %v1443 = vadd.f32 %v1442, 0.008332121
    %v1444 = vmul.f32 %v1441, %v1443
    %v1445 = vadd.f32 %v1444, -0.16666654
    %v1446 = vmul.f32 %v1441, %v1445
    %v1447 = vadd.f32 %v1446, 1.0
    %v1448 = vmul.f32 %v1447, %v1432
    %vm1449 = vweird.f32 %v73
    %v1450 = vand.u32 %v1433, 3
    %vm1451 = vcmp.lt.s32.totalorder %v1450, 2
    %vm1452 = vcmp.eq.s32.totalorder %v1450, 0
    %v1453 = vxor.u32 %v1448, 2147483648
    %v1454 = vsel %vm1452, %v1440, %v1453
    %vm1455 = vcmp.eq.s32.totalorder %v1450, 2
    %v1456 = vxor.u32 %v1440, 2147483648
    %v1457 = vsel %vm1455, %v1456, %v1448
    %v1458 = vsel %vm1451, %v1454, %v1457
    %v1459 = vsel %vm1449, nan, %v1458
    %v1460 = vand.u32 2147483647, %v65
    %vm1461 = vcmp.le.f32.partialorder %v1460, 0.7853982
    %vm1462 = vcmp.lt.s32.totalorder %v65, 0
    %v1463 = vand.u32 %v65, 2139095040
    %v1464 = vshrl.u32 %v1463, 23
    %v1465 = vsub.s32 %v1464, 127
    %v1466 = vand.u32 2147483647, %v65
    %v1467 = vand.u32 %v1466, 8388607
    %v1468 = vor.u32 %v1467, 8388608
    %v1469 = vsub.s32 0, %v1468
    %v1470 = vadd.s32 %v1465, 1
    %vm1471 = vcmp.gt.s32.totalorder %v1470, 0
    %v1472 = vsel %vm1471, %v1470, 0
    %v1473 = vshrl.u32 %v1472, 5
    %v1474 = vand.u32 %v1472, 31
    %v1475 = vsub.s32 32, %v1474
    %v1476 = vshrl.u32 683565275, %v1475
    %v1477 = vshll.u32 683565275, %v1474
    %v1478 = vshrl.u32 2475754826, %v1475
    %v1479 = vor.u32 %v1477, %v1478
    %v1480 = vshll.u32 2475754826, %v1474
    %v1481 = vshrl.u32 2131351028, %v1475
    %v1482 = vor.u32 %v1480, %v1481
    %v1483 = vshll.u32 2131351028, %v1474
    %v1484 = vshrl.u32 2102212464, %v1475
    %v1485 = vor.u32 %v1483, %v1484
    %v1486 = vshll.u32 2102212464, %v1474
    %v1487 = vshrl.u32 920167782, %v1475
    %v1488 = vor.u32 %v1486, %v1487
    %v1489 = vshll.u32 920167782, %v1474
    %v1490 = vshrl.u32 1326507024, %v1475
    %v1491 = vor.u32 %v1489, %v1490
    %vm1492 = vcmp.lt.s32.totalorder %v1473, 1
    %vm1493 = vcmp.lt.s32.totalorder %v1473, 2
    %vm1494 = vcmp.lt.s32.totalorder %v1473, 3
    %vm1495 = vcmp.lt.s32.totalorder %v1473, 4
    %v1496 = vsel %vm1492, %v1476, %v1479
    %v1497 = vsel %vm1495, %v1485, 2102212464
    %v1498 = vsel %vm1494, %v1482, %v1497
    %v1499 = vsel %vm1493, %v1496, %v1498
    %v1500 = vsel %vm1492, %v1479, %v1482
    %v1501 = vsel %vm1495, %v1488, 920167782
    %v1502 = vsel %vm1494, %v1485, %v1501
    %v1503 = vsel %vm1493, %v1500, %v1502
    %v1504 = vsel %vm1492, %v1482, %v1485
    %v1505 = vsel %vm1495, %v1491, 1326507024
    %v1506 = vsel %vm1494, %v1488, %v1505
    %v1507 = vsel %vm1493, %v1504, %v1506
    %v1508 = vshll.u32 %v1468, 8
    %v1509 = vand.u32 %v1508, 65535
    %v1510 = vshrl.u32 %v1508, 16
    %v1511 = vand.u32 %v1507, 65535
    %v1512 = vshrl.u32 %v1507, 16
    %v1513 = vmul.u32 %v1509, %v1511
    %v1514 = vmul.u32 %v1509, %v1512
    %v1515 = vmul.u32 %v1510, %v1511
    %v1516 = vmul.u32 %v1510, %v1512
    %v1517 = vshll.u32 %v1514, 16
    %v1518 = vshrl.u32 %v1514, 16
    %v1519 = vshll.u32 %v1515, 16
    %v1520 = vshrl.u32 %v1515, 16
    %vm1521 = vc.u32 %v1513, %v1517
    %v1522 = vsel %vm1521, 1, 0
    %v1523 = vadd.s32 %v1513, %v1517
    %v1524 = vadd.s32 %v1516, %v1522
    %vm1525 = vc.u32 %v1523, %v1519
    %v1526 = vsel %vm1525, 1, 0
    %v1527 = vadd.s32 %v1523, %v1519
    %v1528 = vadd.s32 %v1524, %v1526
    %v1529 = vadd.s32 %v1528, %v1518
    %v1530 = vadd.s32 %v1529, %v1520
    %v1531 = vand.u32 %v1508, 65535
    %v1532 = vshrl.u32 %v1508, 16
    %v1533 = vand.u32 %v1503, 65535
    %v1534 = vshrl.u32 %v1503, 16
    %v1535 = vmul.u32 %v1531, %v1533
    %v1536 = vmul.u32 %v1531, %v1534
    %v1537 = vmul.u32 %v1532, %v1533
    %v1538 = vmul.u32 %v1532, %v1534
    %v1539 = vshll.u32 %v1536, 16
    %v1540 = vshrl.u32 %v1536, 16
    %v1541 = vshll.u32 %v1537, 16
    %v1542 = vshrl.u32 %v1537, 16
    %vm1543 = vc.u32 %v1535, %v1539
    %v1544 = vsel %vm1543, 1, 0
    %v1545 = vadd.s32 %v1535, %v1539
    %v1546 = vadd.s32 %v1538, %v1544
    %vm1547 = vc.u32 %v1545, %v1541
    %v1548 = vsel %vm1547, 1, 0
    %v1549 = vadd.s32 %v1545, %v1541
    %v1550 = vadd.s32 %v1546, %v1548
    %v1551 = vadd.s32 %v1550, %v1540
    %v1552 = vadd.s32 %v1551, %v1542
    %v1553 = vmul.u32 %v1508, %v1499
    %v1554 = vadd.s32 %v1530, %v1549
    %vm1555 = vc.u32 %v1530, %v1549
    %v1556 = vadd.s32 %v1552, 1
    %v1557 = vsel %vm1555, %v1556, %v1552
    %v1558 = vadd.s32 %v1553, %v1557
    %v1559 = vadd.s32 %v1558, 536870912
    %v1560 = vshrl.u32 %v1559, 30
    %v1561 = vshll.u32 %v1560, 30
    %v1562 = vsub.s32 %v1558, %v1561
    %vm1563 = vcmp.lt.s32.totalorder %v1562, 0
    %v1564 = vsub.s32 0, %v1562
    %v1565 = vsel %vm1563, %v1564, %v1562
    %v1566 = vclz %v1565
    %v1567 = vsub.s32 %v1566, 2
    %vm1568 = vcmp.gt.s32.totalorder 0, %v1567
    %v1569 = vsel %vm1568, 0, %v1567
    %v1570 = vsub.s32 32, %v1569
    %v1571 = vshll.u32 %v1562, %v1569
    %v1572 = vshrl.u32 %v1554, %v1570
    %v1573 = vor.u32 %v1571, %v1572
    %v1574 = vsub.s32 4294967266, %v1569
    %v1575 = vadd.s32 %v1574, 127
    %v1576 = vshll.u32 %v1575, 23
    %v1577 = vor.u32 4788187, %v1576
    %v1578 = vand.u32 2147483647, %v1577
    %v1580 = vcvt.s32.f32 %v1573
    %v1581 = vmul.f32 %v1580, %v1578
    %v1582 = vxor.u32 %v1581, 2147483648
    %v1583 = vsel %vm1462, %v1582, %v1581
    %v1584 = vsub.s32 4, %v1560
    %v1585 = vsel %vm1462, %v1584, %v1560
    %v1586 = vsel %vm1461, %v65, %v1583
    %v1587 = vsel %vm1461, 0, %v1585
    %v1588 = vmul.f32 %v1586, %v1586
    %v1589 = vmul.f32 %v1588, -0.001358992
    %v1590 = vadd.f32 %v1589, 0.041655596
    %v1591 = vmul.f32 %v1588, %v1590
    %v1592 = vadd.f32 %v1591, -0.4999988
    %v1593 = vmul.f32 %v1588, %v1592
    %v1594 = vadd.f32 1.0, %v1593
    %v1595 = vmul.f32 %v1586, %v1586
    %v1596 = vmul.f32 %v1595, -0.00019511016
    %v1597 = vadd.f32 %v1596, 0.008332121
    %v1598 = vmul.f32 %v1595, %v1597
    %v1599 = vadd.f32 %v1598, -0.16666654
    %v1600 = vmul.f32 %v1595, %v1599
    %v1601 = vadd.f32 %v1600, 1.0
    %v1602 = vmul.f32 %v1601, %v1586
    %vm1603 = vweird.f32 %v65
    %v1604 = vadd.s32 %v1587, 3
    %v1605 = vand.u32 %v1604, 3
    %vm1606 = vcmp.lt.s32.totalorder %v1605, 2
    %vm1607 = vcmp.eq.s32.totalorder %v1605, 0
    %v1608 = vxor.u32 %v1602, 2147483648
    %v1609 = vsel %vm1607, %v1594, %v1608
    %vm1610 = vcmp.eq.s32.totalorder %v1605, 2
    %v1611 = vxor.u32 %v1594, 2147483648
    %v1612 = vsel %vm1610, %v1611, %v1602
    %v1613 = vsel %vm1606, %v1609, %v1612
    %v1614 = vsel %vm1603, nan, %v1613
    %v1615 = vand.u32 2147483647, %v66
    %vm1616 = vcmp.le.f32.partialorder %v1615, 0.7853982
    %vm1617 = vcmp.lt.s32.totalorder %v66, 0
    %v1618 = vand.u32 %v66, 2139095040
    %v1619 = vshrl.u32 %v1618, 23
    %v1620 = vsub.s32 %v1619, 127
    %v1621 = vand.u32 2147483647, %v66
    %v1622 = vand.u32 %v1621, 8388607
    %v1623 = vor.u32 %v1622, 8388608
    %v1624 = vsub.s32 0, %v1623
    %v1625 = vadd.s32 %v1620, 1
    %vm1626 = vcmp.gt.s32.totalorder %v1625, 0
    %v1627 = vsel %vm1626, %v1625, 0
    %v1628 = vshrl.u32 %v1627, 5
    %v1629 = vand.u32 %v1627, 31
    %v1630 = vsub.s32 32, %v1629
    %v1631 = vshrl.u32 683565275, %v1630
    %v1632 = vshll.u32 683565275, %v1629
    %v1633 = vshrl.u32 2475754826, %v1630
    %v1634 = vor.u32 %v1632, %v1633
    %v1635 = vshll.u32 2475754826, %v1629
    %v1636 = vshrl.u32 2131351028, %v1630
    %v1637 = vor.u32 %v1635, %v1636
    %v1638 = vshll.u32 2131351028, %v1629
    %v1639 = vshrl.u32 2102212464, %v1630
    %v1640 = vor.u32 %v1638, %v1639
    %v1641 = vshll.u32 2102212464, %v1629
    %v1642 = vshrl.u32 920167782, %v1630
    %v1643 = vor.u32 %v1641, %v1642
    %v1644 = vshll.u32 920167782, %v1629
    %v1645 = vshrl.u32 1326507024, %v1630
    %v1646 = vor.u32 %v1644, %v1645
    %vm1647 = vcmp.lt.s32.totalorder %v1628, 1
    %vm1648 = vcmp.lt.s32.totalorder %v1628, 2
    %vm1649 = vcmp.lt.s32.totalorder %v1628, 3
    %vm1650 = vcmp.lt.s32.totalorder %v1628, 4
    %v1651 = vsel %vm1647, %v1631, %v1634
    %v1652 = vsel %vm1650, %v1640, 2102212464
    %v1653 = vsel %vm1649, %v1637, %v1652
    %v1654 = vsel %vm1648, %v1651, %v1653
    %v1655 = vsel %vm1647, %v1634, %v1637
    %v1656 = vsel %vm1650, %v1643, 920167782
    %v1657 = vsel %vm1649, %v1640, %v1656
    %v1658 = vsel %vm1648, %v1655, %v1657
    %v1659 = vsel %vm1647, %v1637, %v1640
    %v1660 = vsel %vm1650, %v1646, 1326507024
    %v1661 = vsel %vm1649, %v1643, %v1660
    %v1662 = vsel %vm1648, %v1659, %v1661
    %v1663 = vshll.u32 %v1623, 8
    %v1664 = vand.u32 %v1663, 65535
    %v1665 = vshrl.u32 %v1663, 16
    %v1666 = vand.u32 %v1662, 65535
    %v1667 = vshrl.u32 %v1662, 16
    %v1668 = vmul.u32 %v1664, %v1666
    %v1669 = vmul.u32 %v1664, %v1667
    %v1670 = vmul.u32 %v1665, %v1666
    %v1671 = vmul.u32 %v1665, %v1667
    %v1672 = vshll.u32 %v1669, 16
    %v1673 = vshrl.u32 %v1669, 16
    %v1674 = vshll.u32 %v1670, 16
    %v1675 = vshrl.u32 %v1670, 16
    %vm1676 = vc.u32 %v1668, %v1672
    %v1677 = vsel %vm1676, 1, 0
    %v1678 = vadd.s32 %v1668, %v1672
    %v1679 = vadd.s32 %v1671, %v1677
    %vm1680 = vc.u32 %v1678, %v1674
    %v1681 = vsel %vm1680, 1, 0
    %v1682 = vadd.s32 %v1678, %v1674
    %v1683 = vadd.s32 %v1679, %v1681
    %v1684 = vadd.s32 %v1683, %v1673
    %v1685 = vadd.s32 %v1684, %v1675
    %v1686 = vand.u32 %v1663, 65535
    %v1687 = vshrl.u32 %v1663, 16
    %v1688 = vand.u32 %v1658, 65535
    %v1689 = vshrl.u32 %v1658, 16
    %v1690 = vmul.u32 %v1686, %v1688
    %v1691 = vmul.u32 %v1686, %v1689
    %v1692 = vmul.u32 %v1687, %v1688
    %v1693 = vmul.u32 %v1687, %v1689
    %v1694 = vshll.u32 %v1691, 16
    %v1695 = vshrl.u32 %v1691, 16
    %v1696 = vshll.u32 %v1692, 16
    %v1697 = vshrl.u32 %v1692, 16
    %vm1698 = vc.u32 %v1690, %v1694
    %v1699 = vsel %vm1698, 1, 0
    %v1700 = vadd.s32 %v1690, %v1694
    %v1701 = vadd.s32 %v1693, %v1699
    %vm1702 = vc.u32 %v1700, %v1696
    %v1703 = vsel %vm1702, 1, 0
    %v1704 = vadd.s32 %v1700, %v1696
    %v1705 = vadd.s32 %v1701, %v1703
    %v1706 = vadd.s32 %v1705, %v1695
    %v1707 = vadd.s32 %v1706, %v1697
    %v1708 = vmul.u32 %v1663, %v1654
    %v1709 = vadd.s32 %v1685, %v1704
    %vm1710 = vc.u32 %v1685, %v1704
    %v1711 = vadd.s32 %v1707, 1
    %v1712 = vsel %vm1710, %v1711, %v1707
    %v1713 = vadd.s32 %v1708, %v1712
    %v1714 = vadd.s32 %v1713, 536870912
    %v1715 = vshrl.u32 %v1714, 30
    %v1716 = vshll.u32 %v1715, 30
    %v1717 = vsub.s32 %v1713, %v1716
    %vm1718 = vcmp.lt.s32.totalorder %v1717, 0
    %v1719 = vsub.s32 0, %v1717
    %v1720 = vsel %vm1718, %v1719, %v1717
    %v1721 = vclz %v1720
    %v1722 = vsub.s32 %v1721, 2
    %vm1723 = vcmp.gt.s32.totalorder 0, %v1722
    %v1724 = vsel %vm1723, 0, %v1722
    %v1725 = vsub.s32 32, %v1724
    %v1726 = vshll.u32 %v1717, %v1724
    %v1727 = vshrl.u32 %v1709, %v1725
    %v1728 = vor.u32 %v1726, %v1727
    %v1729 = vsub.s32 4294967266, %v1724
    %v1730 = vadd.s32 %v1729, 127
    %v1731 = vshll.u32 %v1730, 23
    %v1732 = vor.u32 4788187, %v1731
    %v1733 = vand.u32 2147483647, %v1732
    %v1735 = vcvt.s32.f32 %v1728
    %v1736 = vmul.f32 %v1735, %v1733
    %v1737 = vxor.u32 %v1736, 2147483648
    %v1738 = vsel %vm1617, %v1737, %v1736
    %v1739 = vsub.s32 4, %v1715
    %v1740 = vsel %vm1617, %v1739, %v1715
    %v1741 = vsel %vm1616, %v66, %v1738
    %v1742 = vsel %vm1616, 0, %v1740
    %v1743 = vmul.f32 %v1741, %v1741
    %v1744 = vmul.f32 %v1743, -0.001358992
    %v1745 = vadd.f32 %v1744, 0.041655596
    %v1746 = vmul.f32 %v1743, %v1745
    %v1747 = vadd.f32 %v1746, -0.4999988
    %v1748 = vmul.f32 %v1743, %v1747
    %v1749 = vadd.f32 1.0, %v1748
    %v1750 = vmul.f32 %v1741, %v1741
    %v1751 = vmul.f32 %v1750, -0.00019511016
    %v1752 = vadd.f32 %v1751, 0.008332121
    %v1753 = vmul.f32 %v1750, %v1752
    %v1754 = vadd.f32 %v1753, -0.16666654
    %v1755 = vmul.f32 %v1750, %v1754
    %v1756 = vadd.f32 %v1755, 1.0
    %v1757 = vmul.f32 %v1756, %v1741
    %vm1758 = vweird.f32 %v66
    %v1759 = vadd.s32 %v1742, 3
    %v1760 = vand.u32 %v1759, 3
    %vm1761 = vcmp.lt.s32.totalorder %v1760, 2
    %vm1762 = vcmp.eq.s32.totalorder %v1760, 0
    %v1763 = vxor.u32 %v1757, 2147483648
    %v1764 = vsel %vm1762, %v1749, %v1763
    %vm1765 = vcmp.eq.s32.totalorder %v1760, 2
    %v1766 = vxor.u32 %v1749, 2147483648
    %v1767 = vsel %vm1765, %v1766, %v1757
    %v1768 = vsel %vm1761, %v1764, %v1767
    %v1769 = vsel %vm1758, nan, %v1768
    %v1770 = vand.u32 2147483647, %v67
    %vm1771 = vcmp.le.f32.partialorder %v1770, 0.7853982
    %vm1772 = vcmp.lt.s32.totalorder %v67, 0
    %v1773 = vand.u32 %v67, 2139095040
    %v1774 = vshrl.u32 %v1773, 23
    %v1775 = vsub.s32 %v1774, 127
    %v1776 = vand.u32 2147483647, %v67
    %v1777 = vand.u32 %v1776, 8388607
    %v1778 = vor.u32 %v1777, 8388608
    %v1779 = vsub.s32 0, %v1778
    %v1780 = vadd.s32 %v1775, 1
    %vm1781 = vcmp.gt.s32.totalorder %v1780, 0
    %v1782 = vsel %vm1781, %v1780, 0
    %v1783 = vshrl.u32 %v1782, 5
    %v1784 = vand.u32 %v1782, 31
    %v1785 = vsub.s32 32, %v1784
    %v1786 = vshrl.u32 683565275, %v1785
    %v1787 = vshll.u32 683565275, %v1784
    %v1788 = vshrl.u32 2475754826, %v1785
    %v1789 = vor.u32 %v1787, %v1788
    %v1790 = vshll.u32 2475754826, %v1784
    %v1791 = vshrl.u32 2131351028, %v1785
    %v1792 = vor.u32 %v1790, %v1791
    %v1793 = vshll.u32 2131351028, %v1784
    %v1794 = vshrl.u32 2102212464, %v1785
    %v1795 = vor.u32 %v1793, %v1794
    %v1796 = vshll.u32 2102212464, %v1784
    %v1797 = vshrl.u32 920167782, %v1785
    %v1798 = vor.u32 %v1796, %v1797
    %v1799 = vshll.u32 920167782, %v1784
    %v1800 = vshrl.u32 1326507024, %v1785
    %v1801 = vor.u32 %v1799, %v1800
    %vm1802 = vcmp.lt.s32.totalorder %v1783, 1
    %vm1803 = vcmp.lt.s32.totalorder %v1783, 2
    %vm1804 = vcmp.lt.s32.totalorder %v1783, 3
    %vm1805 = vcmp.lt.s32.totalorder %v1783, 4
    %v1806 = vsel %vm1802, %v1786, %v1789
    %v1807 = vsel %vm1805, %v1795, 2102212464
    %v1808 = vsel %vm1804, %v1792, %v1807
    %v1809 = vsel %vm1803, %v1806, %v1808
    %v1810 = vsel %vm1802, %v1789, %v1792
    %v1811 = vsel %vm1805, %v1798, 920167782
    %v1812 = vsel %vm1804, %v1795, %v1811
    %v1813 = vsel %vm1803, %v1810, %v1812
    %v1814 = vsel %vm1802, %v1792, %v1795
    %v1815 = vsel %vm1805, %v1801, 1326507024
    %v1816 = vsel %vm1804, %v1798, %v1815
    %v1817 = vsel %vm1803, %v1814, %v1816
    %v1818 = vshll.u32 %v1778, 8
    %v1819 = vand.u32 %v1818, 65535
    %v1820 = vshrl.u32 %v1818, 16
    %v1821 = vand.u32 %v1817, 65535
    %v1822 = vshrl.u32 %v1817, 16
    %v1823 = vmul.u32 %v1819, %v1821
    %v1824 = vmul.u32 %v1819, %v1822
    %v1825 = vmul.u32 %v1820, %v1821
    %v1826 = vmul.u32 %v1820, %v1822
    %v1827 = vshll.u32 %v1824, 16
    %v1828 = vshrl.u32 %v1824, 16
    %v1829 = vshll.u32 %v1825, 16
    %v1830 = vshrl.u32 %v1825, 16
    %vm1831 = vc.u32 %v1823, %v1827
    %v1832 = vsel %vm1831, 1, 0
    %v1833 = vadd.s32 %v1823, %v1827
    %v1834 = vadd.s32 %v1826, %v1832
    %vm1835 = vc.u32 %v1833, %v1829
    %v1836 = vsel %vm1835, 1, 0
    %v1837 = vadd.s32 %v1833, %v1829
    %v1838 = vadd.s32 %v1834, %v1836
    %v1839 = vadd.s32 %v1838, %v1828
    %v1840 = vadd.s32 %v1839, %v1830
    %v1841 = vand.u32 %v1818, 65535
    %v1842 = vshrl.u32 %v1818, 16
    %v1843 = vand.u32 %v1813, 65535
    %v1844 = vshrl.u32 %v1813, 16
    %v1845 = vmul.u32 %v1841, %v1843
    %v1846 = vmul.u32 %v1841, %v1844
    %v1847 = vmul.u32 %v1842, %v1843
    %v1848 = vmul.u32 %v1842, %v1844
    %v1849 = vshll.u32 %v1846, 16
    %v1850 = vshrl.u32 %v1846, 16
    %v1851 = vshll.u32 %v1847, 16
    %v1852 = vshrl.u32 %v1847, 16
    %vm1853 = vc.u32 %v1845, %v1849
    %v1854 = vsel %vm1853, 1, 0
    %v1855 = vadd.s32 %v1845, %v1849
    %v1856 = vadd.s32 %v1848, %v1854
    %vm1857 = vc.u32 %v1855, %v1851
    %v1858 = vsel %vm1857, 1, 0
    %v1859 = vadd.s32 %v1855, %v1851
    %v1860 = vadd.s32 %v1856, %v1858
    %v1861 = vadd.s32 %v1860, %v1850
    %v1862 = vadd.s32 %v1861, %v1852
    %v1863 = vmul.u32 %v1818, %v1809
    %v1864 = vadd.s32 %v1840, %v1859
    %vm1865 = vc.u32 %v1840, %v1859
    %v1866 = vadd.s32 %v1862, 1
    %v1867 = vsel %vm1865, %v1866, %v1862
    %v1868 = vadd.s32 %v1863, %v1867
    %v1869 = vadd.s32 %v1868, 536870912
    %v1870 = vshrl.u32 %v1869, 30
    %v1871 = vshll.u32 %v1870, 30
    %v1872 = vsub.s32 %v1868, %v1871
    %vm1873 = vcmp.lt.s32.totalorder %v1872, 0
    %v1874 = vsub.s32 0, %v1872
    %v1875 = vsel %vm1873, %v1874, %v1872
    %v1876 = vclz %v1875
    %v1877 = vsub.s32 %v1876, 2
    %vm1878 = vcmp.gt.s32.totalorder 0, %v1877
    %v1879 = vsel %vm1878, 0, %v1877
    %v1880 = vsub.s32 32, %v1879
    %v1881 = vshll.u32 %v1872, %v1879
    %v1882 = vshrl.u32 %v1864, %v1880
    %v1883 = vor.u32 %v1881, %v1882
    %v1884 = vsub.s32 4294967266, %v1879
    %v1885 = vadd.s32 %v1884, 127
    %v1886 = vshll.u32 %v1885, 23
    %v1887 = vor.u32 4788187, %v1886
    %v1888 = vand.u32 2147483647, %v1887
    %v1890 = vcvt.s32.f32 %v1883
    %v1891 = vmul.f32 %v1890, %v1888
    %v1892 = vxor.u32 %v1891, 2147483648
    %v1893 = vsel %vm1772, %v1892, %v1891
    %v1894 = vsub.s32 4, %v1870
    %v1895 = vsel %vm1772, %v1894, %v1870
    %v1896 = vsel %vm1771, %v67, %v1893
    %v1897 = vsel %vm1771, 0, %v1895
    %v1898 = vmul.f32 %v1896, %v1896
    %v1899 = vmul.f32 %v1898, -0.001358992
    %v1900 = vadd.f32 %v1899, 0.041655596
    %v1901 = vmul.f32 %v1898, %v1900
    %v1902 = vadd.f32 %v1901, -0.4999988
    %v1903 = vmul.f32 %v1898, %v1902
    %v1904 = vadd.f32 1.0, %v1903
    %v1905 = vmul.f32 %v1896, %v1896
    %v1906 = vmul.f32 %v1905, -0.00019511016
    %v1907 = vadd.f32 %v1906, 0.008332121
    %v1908 = vmul.f32 %v1905, %v1907
    %v1909 = vadd.f32 %v1908, -0.16666654
    %v1910 = vmul.f32 %v1905, %v1909
    %v1911 = vadd.f32 %v1910, 1.0
    %v1912 = vmul.f32 %v1911, %v1896
    %vm1913 = vweird.f32 %v67
    %v1914 = vadd.s32 %v1897, 3
    %v1915 = vand.u32 %v1914, 3
    %vm1916 = vcmp.lt.s32.totalorder %v1915, 2
    %vm1917 = vcmp.eq.s32.totalorder %v1915, 0
    %v1918 = vxor.u32 %v1912, 2147483648
    %v1919 = vsel %vm1917, %v1904, %v1918
    %vm1920 = vcmp.eq.s32.totalorder %v1915, 2
    %v1921 = vxor.u32 %v1904, 2147483648
    %v1922 = vsel %vm1920, %v1921, %v1912
    %v1923 = vsel %vm1916, %v1919, %v1922
    %v1924 = vsel %vm1913, nan, %v1923
    %v1925 = vand.u32 2147483647, %v68
    %vm1926 = vcmp.le.f32.partialorder %v1925, 0.7853982
    %vm1927 = vcmp.lt.s32.totalorder %v68, 0
    %v1928 = vand.u32 %v68, 2139095040
    %v1929 = vshrl.u32 %v1928, 23
    %v1930 = vsub.s32 %v1929, 127
    %v1931 = vand.u32 2147483647, %v68
    %v1932 = vand.u32 %v1931, 8388607
    %v1933 = vor.u32 %v1932, 8388608
    %v1934 = vsub.s32 0, %v1933
    %v1935 = vadd.s32 %v1930, 1
    %vm1936 = vcmp.gt.s32.totalorder %v1935, 0
    %v1937 = vsel %vm1936, %v1935, 0
    %v1938 = vshrl.u32 %v1937, 5
    %v1939 = vand.u32 %v1937, 31
    %v1940 = vsub.s32 32, %v1939
    %v1941 = vshrl.u32 683565275, %v1940
    %v1942 = vshll.u32 683565275, %v1939
    %v1943 = vshrl.u32 2475754826, %v1940
    %v1944 = vor.u32 %v1942, %v1943
    %v1945 = vshll.u32 2475754826, %v1939
    %v1946 = vshrl.u32 2131351028, %v1940
    %v1947 = vor.u32 %v1945, %v1946
    %v1948 = vshll.u32 2131351028, %v1939
    %v1949 = vshrl.u32 2102212464, %v1940
    %v1950 = vor.u32 %v1948, %v1949
    %v1951 = vshll.u32 2102212464, %v1939
    %v1952 = vshrl.u32 920167782, %v1940
    %v1953 = vor.u32 %v1951, %v1952
    %v1954 = vshll.u32 920167782, %v1939
    %v1955 = vshrl.u32 1326507024, %v1940
    %v1956 = vor.u32 %v1954, %v1955
    %vm1957 = vcmp.lt.s32.totalorder %v1938, 1
    %vm1958 = vcmp.lt.s32.totalorder %v1938, 2
    %vm1959 = vcmp.lt.s32.totalorder %v1938, 3
    %vm1960 = vcmp.lt.s32.totalorder %v1938, 4
    %v1961 = vsel %vm1957, %v1941, %v1944
    %v1962 = vsel %vm1960, %v1950, 2102212464
    %v1963 = vsel %vm1959, %v1947, %v1962
    %v1964 = vsel %vm1958, %v1961, %v1963
    %v1965 = vsel %vm1957, %v1944, %v1947
    %v1966 = vsel %vm1960, %v1953, 920167782
    %v1967 = vsel %vm1959, %v1950, %v1966
    %v1968 = vsel %vm1958, %v1965, %v1967
    %v1969 = vsel %vm1957, %v1947, %v1950
    %v1970 = vsel %vm1960, %v1956, 1326507024
    %v1971 = vsel %vm1959, %v1953, %v1970
    %v1972 = vsel %vm1958, %v1969, %v1971
    %v1973 = vshll.u32 %v1933, 8
    %v1974 = vand.u32 %v1973, 65535
    %v1975 = vshrl.u32 %v1973, 16
    %v1976 = vand.u32 %v1972, 65535
    %v1977 = vshrl.u32 %v1972, 16
    %v1978 = vmul.u32 %v1974, %v1976
    %v1979 = vmul.u32 %v1974, %v1977
    %v1980 = vmul.u32 %v1975, %v1976
    %v1981 = vmul.u32 %v1975, %v1977
    %v1982 = vshll.u32 %v1979, 16
    %v1983 = vshrl.u32 %v1979, 16
    %v1984 = vshll.u32 %v1980, 16
    %v1985 = vshrl.u32 %v1980, 16
    %vm1986 = vc.u32 %v1978, %v1982
    %v1987 = vsel %vm1986, 1, 0
    %v1988 = vadd.s32 %v1978, %v1982
    %v1989 = vadd.s32 %v1981, %v1987
    %vm1990 = vc.u32 %v1988, %v1984
    %v1991 = vsel %vm1990, 1, 0
    %v1992 = vadd.s32 %v1988, %v1984
    %v1993 = vadd.s32 %v1989, %v1991
    %v1994 = vadd.s32 %v1993, %v1983
    %v1995 = vadd.s32 %v1994, %v1985
    %v1996 = vand.u32 %v1973, 65535
    %v1997 = vshrl.u32 %v1973, 16
    %v1998 = vand.u32 %v1968, 65535
    %v1999 = vshrl.u32 %v1968, 16
    %v2000 = vmul.u32 %v1996, %v1998
    %v2001 = vmul.u32 %v1996, %v1999
    %v2002 = vmul.u32 %v1997, %v1998
    %v2003 = vmul.u32 %v1997, %v1999
    %v2004 = vshll.u32 %v2001, 16
    %v2005 = vshrl.u32 %v2001, 16
    %v2006 = vshll.u32 %v2002, 16
    %v2007 = vshrl.u32 %v2002, 16
    %vm2008 = vc.u32 %v2000, %v2004
    %v2009 = vsel %vm2008, 1, 0
    %v2010 = vadd.s32 %v2000, %v2004
    %v2011 = vadd.s32 %v2003, %v2009
    %vm2012 = vc.u32 %v2010, %v2006
    %v2013 = vsel %vm2012, 1, 0
    %v2014 = vadd.s32 %v2010, %v2006
    %v2015 = vadd.s32 %v2011, %v2013
    %v2016 = vadd.s32 %v2015, %v2005
    %v2017 = vadd.s32 %v2016, %v2007
    %v2018 = vmul.u32 %v1973, %v1964
    %v2019 = vadd.s32 %v1995, %v2014
    %vm2020 = vc.u32 %v1995, %v2014
    %v2021 = vadd.s32 %v2017, 1
    %v2022 = vsel %vm2020, %v2021, %v2017
    %v2023 = vadd.s32 %v2018, %v2022
    %v2024 = vadd.s32 %v2023, 536870912
    %v2025 = vshrl.u32 %v2024, 30
    %v2026 = vshll.u32 %v2025, 30
    %v2027 = vsub.s32 %v2023, %v2026
    %vm2028 = vcmp.lt.s32.totalorder %v2027, 0
    %v2029 = vsub.s32 0, %v2027
    %v2030 = vsel %vm2028, %v2029, %v2027
    %v2031 = vclz %v2030
    %v2032 = vsub.s32 %v2031, 2
    %vm2033 = vcmp.gt.s32.totalorder 0, %v2032
    %v2034 = vsel %vm2033, 0, %v2032
    %v2035 = vsub.s32 32, %v2034
    %v2036 = vshll.u32 %v2027, %v2034
    %v2037 = vshrl.u32 %v2019, %v2035
    %v2038 = vor.u32 %v2036, %v2037
    %v2039 = vsub.s32 4294967266, %v2034
    %v2040 = vadd.s32 %v2039, 127
    %v2041 = vshll.u32 %v2040, 23
    %v2042 = vor.u32 4788187, %v2041
    %v2043 = vand.u32 2147483647, %v2042
    %v2045 = vcvt.s32.f32 %v2038
    %v2046 = vmul.f32 %v2045, %v2043
    %v2047 = vxor.u32 %v2046, 2147483648
    %v2048 = vsel %vm1927, %v2047, %v2046
    %v2049 = vsub.s32 4, %v2025
    %v2050 = vsel %vm1927, %v2049, %v2025
    %v2051 = vsel %vm1926, %v68, %v2048
    %v2052 = vsel %vm1926, 0, %v2050
    %v2053 = vmul.f32 %v2051, %v2051
    %v2054 = vmul.f32 %v2053, -0.001358992
    %v2055 = vadd.f32 %v2054, 0.041655596
    %v2056 = vmul.f32 %v2053, %v2055
    %v2057 = vadd.f32 %v2056, -0.4999988
    %v2058 = vmul.f32 %v2053, %v2057
    %v2059 = vadd.f32 1.0, %v2058
    %v2060 = vmul.f32 %v2051, %v2051
    %v2061 = vmul.f32 %v2060, -0.00019511016
    %v2062 = vadd.f32 %v2061, 0.008332121
    %v2063 = vmul.f32 %v2060, %v2062
    %v2064 = vadd.f32 %v2063, -0.16666654
    %v2065 = vmul.f32 %v2060, %v2064
    %v2066 = vadd.f32 %v2065, 1.0
    %v2067 = vmul.f32 %v2066, %v2051
    %vm2068 = vweird.f32 %v68
    %v2069 = vadd.s32 %v2052, 3
    %v2070 = vand.u32 %v2069, 3
    %vm2071 = vcmp.lt.s32.totalorder %v2070, 2
    %vm2072 = vcmp.eq.s32.totalorder %v2070, 0
    %v2073 = vxor.u32 %v2067, 2147483648
    %v2074 = vsel %vm2072, %v2059, %v2073
    %vm2075 = vcmp.eq.s32.totalorder %v2070, 2
    %v2076 = vxor.u32 %v2059, 2147483648
    %v2077 = vsel %vm2075, %v2076, %v2067
    %v2078 = vsel %vm2071, %v2074, %v2077
    %v2079 = vsel %vm2068, nan, %v2078
    %v2080 = vand.u32 2147483647, %v69
    %vm2081 = vcmp.le.f32.partialorder %v2080, 0.7853982
    %vm2082 = vcmp.lt.s32.totalorder %v69, 0
    %v2083 = vand.u32 %v69, 2139095040
    %v2084 = vshrl.u32 %v2083, 23
    %v2085 = vsub.s32 %v2084, 127
    %v2086 = vand.u32 2147483647, %v69
    %v2087 = vand.u32 %v2086, 8388607
    %v2088 = vor.u32 %v2087, 8388608
    %v2089 = vsub.s32 0, %v2088
    %v2090 = vadd.s32 %v2085, 1
    %vm2091 = vcmp.gt.s32.totalorder %v2090, 0
    %v2092 = vsel %vm2091, %v2090, 0
    %v2093 = vshrl.u32 %v2092, 5
    %v2094 = vand.u32 %v2092, 31
    %v2095 = vsub.s32 32, %v2094
    %v2096 = vshrl.u32 683565275, %v2095
    %v2097 = vshll.u32 683565275, %v2094
    %v2098 = vshrl.u32 2475754826, %v2095
    %v2099 = vor.u32 %v2097, %v2098
    %v2100 = vshll.u32 2475754826, %v2094
    %v2101 = vshrl.u32 2131351028, %v2095
    %v2102 = vor.u32 %v2100, %v2101
    %v2103 = vshll.u32 2131351028, %v2094
    %v2104 = vshrl.u32 2102212464, %v2095
    %v2105 = vor.u32 %v2103, %v2104
    %v2106 = vshll.u32 2102212464, %v2094
    %v2107 = vshrl.u32 920167782, %v2095
    %v2108 = vor.u32 %v2106, %v2107
    %v2109 = vshll.u32 920167782, %v2094
    %v2110 = vshrl.u32 1326507024, %v2095
    %v2111 = vor.u32 %v2109, %v2110
    %vm2112 = vcmp.lt.s32.totalorder %v2093, 1
    %vm2113 = vcmp.lt.s32.totalorder %v2093, 2
    %vm2114 = vcmp.lt.s32.totalorder %v2093, 3
    %vm2115 = vcmp.lt.s32.totalorder %v2093, 4
    %v2116 = vsel %vm2112, %v2096, %v2099
    %v2117 = vsel %vm2115, %v2105, 2102212464
    %v2118 = vsel %vm2114, %v2102, %v2117
    %v2119 = vsel %vm2113, %v2116, %v2118
    %v2120 = vsel %vm2112, %v2099, %v2102
    %v2121 = vsel %vm2115, %v2108, 920167782
    %v2122 = vsel %vm2114, %v2105, %v2121
    %v2123 = vsel %vm2113, %v2120, %v2122
    %v2124 = vsel %vm2112, %v2102, %v2105
    %v2125 = vsel %vm2115, %v2111, 1326507024
    %v2126 = vsel %vm2114, %v2108, %v2125
    %v2127 = vsel %vm2113, %v2124, %v2126
    %v2128 = vshll.u32 %v2088, 8
    %v2129 = vand.u32 %v2128, 65535
    %v2130 = vshrl.u32 %v2128, 16
    %v2131 = vand.u32 %v2127, 65535
    %v2132 = vshrl.u32 %v2127, 16
    %v2133 = vmul.u32 %v2129, %v2131
    %v2134 = vmul.u32 %v2129, %v2132
    %v2135 = vmul.u32 %v2130, %v2131
    %v2136 = vmul.u32 %v2130, %v2132
    %v2137 = vshll.u32 %v2134, 16
    %v2138 = vshrl.u32 %v2134, 16
    %v2139 = vshll.u32 %v2135, 16
    %v2140 = vshrl.u32 %v2135, 16
    %vm2141 = vc.u32 %v2133, %v2137
    %v2142 = vsel %vm2141, 1, 0
    %v2143 = vadd.s32 %v2133, %v2137
    %v2144 = vadd.s32 %v2136, %v2142
    %vm2145 = vc.u32 %v2143, %v2139
    %v2146 = vsel %vm2145, 1, 0
    %v2147 = vadd.s32 %v2143, %v2139
    %v2148 = vadd.s32 %v2144, %v2146
    %v2149 = vadd.s32 %v2148, %v2138
    %v2150 = vadd.s32 %v2149, %v2140
    %v2151 = vand.u32 %v2128, 65535
    %v2152 = vshrl.u32 %v2128, 16
    %v2153 = vand.u32 %v2123, 65535
    %v2154 = vshrl.u32 %v2123, 16
    %v2155 = vmul.u32 %v2151, %v2153
    %v2156 = vmul.u32 %v2151, %v2154
    %v2157 = vmul.u32 %v2152, %v2153
    %v2158 = vmul.u32 %v2152, %v2154
    %v2159 = vshll.u32 %v2156, 16
    %v2160 = vshrl.u32 %v2156, 16
    %v2161 = vshll.u32 %v2157, 16
    %v2162 = vshrl.u32 %v2157, 16
    %vm2163 = vc.u32 %v2155, %v2159
    %v2164 = vsel %vm2163, 1, 0
    %v2165 = vadd.s32 %v2155, %v2159
    %v2166 = vadd.s32 %v2158, %v2164
    %vm2167 = vc.u32 %v2165, %v2161
    %v2168 = vsel %vm2167, 1, 0
    %v2169 = vadd.s32 %v2165, %v2161
    %v2170 = vadd.s32 %v2166, %v2168
    %v2171 = vadd.s32 %v2170, %v2160
    %v2172 = vadd.s32 %v2171, %v2162
    %v2173 = vmul.u32 %v2128, %v2119
    %v2174 = vadd.s32 %v2150, %v2169
    %vm2175 = vc.u32 %v2150, %v2169
    %v2176 = vadd.s32 %v2172, 1
    %v2177 = vsel %vm2175, %v2176, %v2172
    %v2178 = vadd.s32 %v2173, %v2177
    %v2179 = vadd.s32 %v2178, 536870912
    %v2180 = vshrl.u32 %v2179, 30
    %v2181 = vshll.u32 %v2180, 30
    %v2182 = vsub.s32 %v2178, %v2181
    %vm2183 = vcmp.lt.s32.totalorder %v2182, 0
    %v2184 = vsub.s32 0, %v2182
    %v2185 = vsel %vm2183, %v2184, %v2182
    %v2186 = vclz %v2185
    %v2187 = vsub.s32 %v2186, 2
    %vm2188 = vcmp.gt.s32.totalorder 0, %v2187
    %v2189 = vsel %vm2188, 0, %v2187
    %v2190 = vsub.s32 32, %v2189
    %v2191 = vshll.u32 %v2182, %v2189
    %v2192 = vshrl.u32 %v2174, %v2190
    %v2193 = vor.u32 %v2191, %v2192
    %v2194 = vsub.s32 4294967266, %v2189
    %v2195 = vadd.s32 %v2194, 127
    %v2196 = vshll.u32 %v2195, 23
    %v2197 = vor.u32 4788187, %v2196
    %v2198 = vand.u32 2147483647, %v2197
    %v2200 = vcvt.s32.f32 %v2193
    %v2201 = vmul.f32 %v2200, %v2198
    %v2202 = vxor.u32 %v2201, 2147483648
    %v2203 = vsel %vm2082, %v2202, %v2201
    %v2204 = vsub.s32 4, %v2180
    %v2205 = vsel %vm2082, %v2204, %v2180
    %v2206 = vsel %vm2081, %v69, %v2203
    %v2207 = vsel %vm2081, 0, %v2205
    %v2208 = vmul.f32 %v2206, %v2206
    %v2209 = vmul.f32 %v2208, -0.001358992
    %v2210 = vadd.f32 %v2209, 0.041655596
    %v2211 = vmul.f32 %v2208, %v2210
    %v2212 = vadd.f32 %v2211, -0.4999988
    %v2213 = vmul.f32 %v2208, %v2212
    %v2214 = vadd.f32 1.0, %v2213
    %v2215 = vmul.f32 %v2206, %v2206
    %v2216 = vmul.f32 %v2215, -0.00019511016
    %v2217 = vadd.f32 %v2216, 0.008332121
    %v2218 = vmul.f32 %v2215, %v2217
    %v2219 = vadd.f32 %v2218, -0.16666654
    %v2220 = vmul.f32 %v2215, %v2219
    %v2221 = vadd.f32 %v2220, 1.0
    %v2222 = vmul.f32 %v2221, %v2206
    %vm2223 = vweird.f32 %v69
    %v2224 = vadd.s32 %v2207, 3
    %v2225 = vand.u32 %v2224, 3
    %vm2226 = vcmp.lt.s32.totalorder %v2225, 2
    %vm2227 = vcmp.eq.s32.totalorder %v2225, 0
    %v2228 = vxor.u32 %v2222, 2147483648
    %v2229 = vsel %vm2227, %v2214, %v2228
    %vm2230 = vcmp.eq.s32.totalorder %v2225, 2
    %v2231 = vxor.u32 %v2214, 2147483648
    %v2232 = vsel %vm2230, %v2231, %v2222
    %v2233 = vsel %vm2226, %v2229, %v2232
    %v2234 = vsel %vm2223, nan, %v2233
    %v2235 = vand.u32 2147483647, %v70
    %vm2236 = vcmp.le.f32.partialorder %v2235, 0.7853982
    %vm2237 = vcmp.lt.s32.totalorder %v70, 0
    %v2238 = vand.u32 %v70, 2139095040
    %v2239 = vshrl.u32 %v2238, 23
    %v2240 = vsub.s32 %v2239, 127
    %v2241 = vand.u32 2147483647, %v70
    %v2242 = vand.u32 %v2241, 8388607
    %v2243 = vor.u32 %v2242, 8388608
    %v2244 = vsub.s32 0, %v2243
    %v2245 = vadd.s32 %v2240, 1
    %vm2246 = vcmp.gt.s32.totalorder %v2245, 0
    %v2247 = vsel %vm2246, %v2245, 0
    %v2248 = vshrl.u32 %v2247, 5
    %v2249 = vand.u32 %v2247, 31
    %v2250 = vsub.s32 32, %v2249
    %v2251 = vshrl.u32 683565275, %v2250
    %v2252 = vshll.u32 683565275, %v2249
    %v2253 = vshrl.u32 2475754826, %v2250
    %v2254 = vor.u32 %v2252, %v2253
    %v2255 = vshll.u32 2475754826, %v2249
    %v2256 = vshrl.u32 2131351028, %v2250
    %v2257 = vor.u32 %v2255, %v2256
    %v2258 = vshll.u32 2131351028, %v2249
    %v2259 = vshrl.u32 2102212464, %v2250
    %v2260 = vor.u32 %v2258, %v2259
    %v2261 = vshll.u32 2102212464, %v2249
    %v2262 = vshrl.u32 920167782, %v2250
    %v2263 = vor.u32 %v2261, %v2262
    %v2264 = vshll.u32 920167782, %v2249
    %v2265 = vshrl.u32 1326507024, %v2250
    %v2266 = vor.u32 %v2264, %v2265
    %vm2267 = vcmp.lt.s32.totalorder %v2248, 1
    %vm2268 = vcmp.lt.s32.totalorder %v2248, 2
    %vm2269 = vcmp.lt.s32.totalorder %v2248, 3
    %vm2270 = vcmp.lt.s32.totalorder %v2248, 4
    %v2271 = vsel %vm2267, %v2251, %v2254
    %v2272 = vsel %vm2270, %v2260, 2102212464
    %v2273 = vsel %vm2269, %v2257, %v2272
    %v2274 = vsel %vm2268, %v2271, %v2273
    %v2275 = vsel %vm2267, %v2254, %v2257
    %v2276 = vsel %vm2270, %v2263, 920167782
    %v2277 = vsel %vm2269, %v2260, %v2276
    %v2278 = vsel %vm2268, %v2275, %v2277
    %v2279 = vsel %vm2267, %v2257, %v2260
    %v2280 = vsel %vm2270, %v2266, 1326507024
    %v2281 = vsel %vm2269, %v2263, %v2280
    %v2282 = vsel %vm2268, %v2279, %v2281
    %v2283 = vshll.u32 %v2243, 8
    %v2284 = vand.u32 %v2283, 65535
    %v2285 = vshrl.u32 %v2283, 16
    %v2286 = vand.u32 %v2282, 65535
    %v2287 = vshrl.u32 %v2282, 16
    %v2288 = vmul.u32 %v2284, %v2286
    %v2289 = vmul.u32 %v2284, %v2287
    %v2290 = vmul.u32 %v2285, %v2286
    %v2291 = vmul.u32 %v2285, %v2287
    %v2292 = vshll.u32 %v2289, 16
    %v2293 = vshrl.u32 %v2289, 16
    %v2294 = vshll.u32 %v2290, 16
    %v2295 = vshrl.u32 %v2290, 16
    %vm2296 = vc.u32 %v2288, %v2292
    %v2297 = vsel %vm2296, 1, 0
    %v2298 = vadd.s32 %v2288, %v2292
    %v2299 = vadd.s32 %v2291, %v2297
    %vm2300 = vc.u32 %v2298, %v2294
    %v2301 = vsel %vm2300, 1, 0
    %v2302 = vadd.s32 %v2298, %v2294
    %v2303 = vadd.s32 %v2299, %v2301
    %v2304 = vadd.s32 %v2303, %v2293
    %v2305 = vadd.s32 %v2304, %v2295
    %v2306 = vand.u32 %v2283, 65535
    %v2307 = vshrl.u32 %v2283, 16
    %v2308 = vand.u32 %v2278, 65535
    %v2309 = vshrl.u32 %v2278, 16
    %v2310 = vmul.u32 %v2306, %v2308
    %v2311 = vmul.u32 %v2306, %v2309
    %v2312 = vmul.u32 %v2307, %v2308
    %v2313 = vmul.u32 %v2307, %v2309
    %v2314 = vshll.u32 %v2311, 16
    %v2315 = vshrl.u32 %v2311, 16
    %v2316 = vshll.u32 %v2312, 16
    %v2317 = vshrl.u32 %v2312, 16
    %vm2318 = vc.u32 %v2310, %v2314
    %v2319 = vsel %vm2318, 1, 0
    %v2320 = vadd.s32 %v2310, %v2314
    %v2321 = vadd.s32 %v2313, %v2319
    %vm2322 = vc.u32 %v2320, %v2316
    %v2323 = vsel %vm2322, 1, 0
    %v2324 = vadd.s32 %v2320, %v2316
    %v2325 = vadd.s32 %v2321, %v2323
    %v2326 = vadd.s32 %v2325, %v2315
    %v2327 = vadd.s32 %v2326, %v2317
    %v2328 = vmul.u32 %v2283, %v2274
    %v2329 = vadd.s32 %v2305, %v2324
    %vm2330 = vc.u32 %v2305, %v2324
    %v2331 = vadd.s32 %v2327, 1
    %v2332 = vsel %vm2330, %v2331, %v2327
    %v2333 = vadd.s32 %v2328, %v2332
    %v2334 = vadd.s32 %v2333, 536870912
    %v2335 = vshrl.u32 %v2334, 30
    %v2336 = vshll.u32 %v2335, 30
    %v2337 = vsub.s32 %v2333, %v2336
    %vm2338 = vcmp.lt.s32.totalorder %v2337, 0
    %v2339 = vsub.s32 0, %v2337
    %v2340 = vsel %vm2338, %v2339, %v2337
    %v2341 = vclz %v2340
    %v2342 = vsub.s32 %v2341, 2
    %vm2343 = vcmp.gt.s32.totalorder 0, %v2342
    %v2344 = vsel %vm2343, 0, %v2342
    %v2345 = vsub.s32 32, %v2344
    %v2346 = vshll.u32 %v2337, %v2344
    %v2347 = vshrl.u32 %v2329, %v2345
    %v2348 = vor.u32 %v2346, %v2347
    %v2349 = vsub.s32 4294967266, %v2344
    %v2350 = vadd.s32 %v2349, 127
    %v2351 = vshll.u32 %v2350, 23
    %v2352 = vor.u32 4788187, %v2351
    %v2353 = vand.u32 2147483647, %v2352
    %v2355 = vcvt.s32.f32 %v2348
    %v2356 = vmul.f32 %v2355, %v2353
    %v2357 = vxor.u32 %v2356, 2147483648
    %v2358 = vsel %vm2237, %v2357, %v2356
    %v2359 = vsub.s32 4, %v2335
    %v2360 = vsel %vm2237, %v2359, %v2335
    %v2361 = vsel %vm2236, %v70, %v2358
    %v2362 = vsel %vm2236, 0, %v2360
    %v2363 = vmul.f32 %v2361, %v2361
    %v2364 = vmul.f32 %v2363, -0.001358992
    %v2365 = vadd.f32 %v2364, 0.041655596
    %v2366 = vmul.f32 %v2363, %v2365
    %v2367 = vadd.f32 %v2366, -0.4999988
    %v2368 = vmul.f32 %v2363, %v2367
    %v2369 = vadd.f32 1.0, %v2368
    %v2370 = vmul.f32 %v2361, %v2361
    %v2371 = vmul.f32 %v2370, -0.00019511016
    %v2372 = vadd.f32 %v2371, 0.008332121
    %v2373 = vmul.f32 %v2370, %v2372
    %v2374 = vadd.f32 %v2373, -0.16666654
    %v2375 = vmul.f32 %v2370, %v2374
    %v2376 = vadd.f32 %v2375, 1.0
    %v2377 = vmul.f32 %v2376, %v2361
    %vm2378 = vweird.f32 %v70
    %v2379 = vadd.s32 %v2362, 3
    %v2380 = vand.u32 %v2379, 3
    %vm2381 = vcmp.lt.s32.totalorder %v2380, 2
    %vm2382 = vcmp.eq.s32.totalorder %v2380, 0
    %v2383 = vxor.u32 %v2377, 2147483648
    %v2384 = vsel %vm2382, %v2369, %v2383
    %vm2385 = vcmp.eq.s32.totalorder %v2380, 2
    %v2386 = vxor.u32 %v2369, 2147483648
    %v2387 = vsel %vm2385, %v2386, %v2377
    %v2388 = vsel %vm2381, %v2384, %v2387
    %v2389 = vsel %vm2378, nan, %v2388
    %v2390 = vand.u32 2147483647, %v71
    %vm2391 = vcmp.le.f32.partialorder %v2390, 0.7853982
    %vm2392 = vcmp.lt.s32.totalorder %v71, 0
    %v2393 = vand.u32 %v71, 2139095040
    %v2394 = vshrl.u32 %v2393, 23
    %v2395 = vsub.s32 %v2394, 127
    %v2396 = vand.u32 2147483647, %v71
    %v2397 = vand.u32 %v2396, 8388607
    %v2398 = vor.u32 %v2397, 8388608
    %v2399 = vsub.s32 0, %v2398
    %v2400 = vadd.s32 %v2395, 1
    %vm2401 = vcmp.gt.s32.totalorder %v2400, 0
    %v2402 = vsel %vm2401, %v2400, 0
    %v2403 = vshrl.u32 %v2402, 5
    %v2404 = vand.u32 %v2402, 31
    %v2405 = vsub.s32 32, %v2404
    %v2406 = vshrl.u32 683565275, %v2405
    %v2407 = vshll.u32 683565275, %v2404
    %v2408 = vshrl.u32 2475754826, %v2405
    %v2409 = vor.u32 %v2407, %v2408
    %v2410 = vshll.u32 2475754826, %v2404
    %v2411 = vshrl.u32 2131351028, %v2405
    %v2412 = vor.u32 %v2410, %v2411
    %v2413 = vshll.u32 2131351028, %v2404
    %v2414 = vshrl.u32 2102212464, %v2405
    %v2415 = vor.u32 %v2413, %v2414
    %v2416 = vshll.u32 2102212464, %v2404
    %v2417 = vshrl.u32 920167782, %v2405
    %v2418 = vor.u32 %v2416, %v2417
    %v2419 = vshll.u32 920167782, %v2404
    %v2420 = vshrl.u32 1326507024, %v2405
    %v2421 = vor.u32 %v2419, %v2420
    %vm2422 = vcmp.lt.s32.totalorder %v2403, 1
    %vm2423 = vcmp.lt.s32.totalorder %v2403, 2
    %vm2424 = vcmp.lt.s32.totalorder %v2403, 3
    %vm2425 = vcmp.lt.s32.totalorder %v2403, 4
    %v2426 = vsel %vm2422, %v2406, %v2409
    %v2427 = vsel %vm2425, %v2415, 2102212464
    %v2428 = vsel %vm2424, %v2412, %v2427
    %v2429 = vsel %vm2423, %v2426, %v2428
    %v2430 = vsel %vm2422, %v2409, %v2412
    %v2431 = vsel %vm2425, %v2418, 920167782
    %v2432 = vsel %vm2424, %v2415, %v2431
    %v2433 = vsel %vm2423, %v2430, %v2432
    %v2434 = vsel %vm2422, %v2412, %v2415
    %v2435 = vsel %vm2425, %v2421, 1326507024
    %v2436 = vsel %vm2424, %v2418, %v2435
    %v2437 = vsel %vm2423, %v2434, %v2436
    %v2438 = vshll.u32 %v2398, 8
    %v2439 = vand.u32 %v2438, 65535
    %v2440 = vshrl.u32 %v2438, 16
    %v2441 = vand.u32 %v2437, 65535
    %v2442 = vshrl.u32 %v2437, 16
    %v2443 = vmul.u32 %v2439, %v2441
    %v2444 = vmul.u32 %v2439, %v2442
    %v2445 = vmul.u32 %v2440, %v2441
    %v2446 = vmul.u32 %v2440, %v2442
    %v2447 = vshll.u32 %v2444, 16
    %v2448 = vshrl.u32 %v2444, 16
    %v2449 = vshll.u32 %v2445, 16
    %v2450 = vshrl.u32 %v2445, 16
    %vm2451 = vc.u32 %v2443, %v2447
    %v2452 = vsel %vm2451, 1, 0
    %v2453 = vadd.s32 %v2443, %v2447
    %v2454 = vadd.s32 %v2446, %v2452
    %vm2455 = vc.u32 %v2453, %v2449
    %v2456 = vsel %vm2455, 1, 0
    %v2457 = vadd.s32 %v2453, %v2449
    %v2458 = vadd.s32 %v2454, %v2456
    %v2459 = vadd.s32 %v2458, %v2448
    %v2460 = vadd.s32 %v2459, %v2450
    %v2461 = vand.u32 %v2438, 65535
    %v2462 = vshrl.u32 %v2438, 16
    %v2463 = vand.u32 %v2433, 65535
    %v2464 = vshrl.u32 %v2433, 16
    %v2465 = vmul.u32 %v2461, %v2463
    %v2466 = vmul.u32 %v2461, %v2464
    %v2467 = vmul.u32 %v2462, %v2463
    %v2468 = vmul.u32 %v2462, %v2464
    %v2469 = vshll.u32 %v2466, 16
    %v2470 = vshrl.u32 %v2466, 16
    %v2471 = vshll.u32 %v2467, 16
    %v2472 = vshrl.u32 %v2467, 16
    %vm2473 = vc.u32 %v2465, %v2469
    %v2474 = vsel %vm2473, 1, 0
    %v2475 = vadd.s32 %v2465, %v2469
    %v2476 = vadd.s32 %v2468, %v2474
    %vm2477 = vc.u32 %v2475, %v2471
    %v2478 = vsel %vm2477, 1, 0
    %v2479 = vadd.s32 %v2475, %v2471
    %v2480 = vadd.s32 %v2476, %v2478
    %v2481 = vadd.s32 %v2480, %v2470
    %v2482 = vadd.s32 %v2481, %v2472
    %v2483 = vmul.u32 %v2438, %v2429
    %v2484 = vadd.s32 %v2460, %v2479
    %vm2485 = vc.u32 %v2460, %v2479
    %v2486 = vadd.s32 %v2482, 1
    %v2487 = vsel %vm2485, %v2486, %v2482
    %v2488 = vadd.s32 %v2483, %v2487
    %v2489 = vadd.s32 %v2488, 536870912
    %v2490 = vshrl.u32 %v2489, 30
    %v2491 = vshll.u32 %v2490, 30
    %v2492 = vsub.s32 %v2488, %v2491
    %vm2493 = vcmp.lt.s32.totalorder %v2492, 0
    %v2494 = vsub.s32 0, %v2492
    %v2495 = vsel %vm2493, %v2494, %v2492
    %v2496 = vclz %v2495
    %v2497 = vsub.s32 %v2496, 2
    %vm2498 = vcmp.gt.s32.totalorder 0, %v2497
    %v2499 = vsel %vm2498, 0, %v2497
    %v2500 = vsub.s32 32, %v2499
    %v2501 = vshll.u32 %v2492, %v2499
    %v2502 = vshrl.u32 %v2484, %v2500
    %v2503 = vor.u32 %v2501, %v2502
    %v2504 = vsub.s32 4294967266, %v2499
    %v2505 = vadd.s32 %v2504, 127
    %v2506 = vshll.u32 %v2505, 23
    %v2507 = vor.u32 4788187, %v2506
    %v2508 = vand.u32 2147483647, %v2507
    %v2510 = vcvt.s32.f32 %v2503
    %v2511 = vmul.f32 %v2510, %v2508
    %v2512 = vxor.u32 %v2511, 2147483648
    %v2513 = vsel %vm2392, %v2512, %v2511
    %v2514 = vsub.s32 4, %v2490
    %v2515 = vsel %vm2392, %v2514, %v2490
    %v2516 = vsel %vm2391, %v71, %v2513
    %v2517 = vsel %vm2391, 0, %v2515
    %v2518 = vmul.f32 %v2516, %v2516
    %v2519 = vmul.f32 %v2518, -0.001358992
    %v2520 = vadd.f32 %v2519, 0.041655596
    %v2521 = vmul.f32 %v2518, %v2520
    %v2522 = vadd.f32 %v2521, -0.4999988
    %v2523 = vmul.f32 %v2518, %v2522
    %v2524 = vadd.f32 1.0, %v2523
    %v2525 = vmul.f32 %v2516, %v2516
    %v2526 = vmul.f32 %v2525, -0.00019511016
    %v2527 = vadd.f32 %v2526, 0.008332121
    %v2528 = vmul.f32 %v2525, %v2527
    %v2529 = vadd.f32 %v2528, -0.16666654
    %v2530 = vmul.f32 %v2525, %v2529
    %v2531 = vadd.f32 %v2530, 1.0
    %v2532 = vmul.f32 %v2531, %v2516
    %vm2533 = vweird.f32 %v71
    %v2534 = vadd.s32 %v2517, 3
    %v2535 = vand.u32 %v2534, 3
    %vm2536 = vcmp.lt.s32.totalorder %v2535, 2
    %vm2537 = vcmp.eq.s32.totalorder %v2535, 0
    %v2538 = vxor.u32 %v2532, 2147483648
    %v2539 = vsel %vm2537, %v2524, %v2538
    %vm2540 = vcmp.eq.s32.totalorder %v2535, 2
    %v2541 = vxor.u32 %v2524, 2147483648
    %v2542 = vsel %vm2540, %v2541, %v2532
    %v2543 = vsel %vm2536, %v2539, %v2542
    %v2544 = vsel %vm2533, nan, %v2543
    %v2545 = vand.u32 2147483647, %v72
    %vm2546 = vcmp.le.f32.partialorder %v2545, 0.7853982
    %vm2547 = vcmp.lt.s32.totalorder %v72, 0
    %v2548 = vand.u32 %v72, 2139095040
    %v2549 = vshrl.u32 %v2548, 23
    %v2550 = vsub.s32 %v2549, 127
    %v2551 = vand.u32 2147483647, %v72
    %v2552 = vand.u32 %v2551, 8388607
    %v2553 = vor.u32 %v2552, 8388608
    %v2554 = vsub.s32 0, %v2553
    %v2555 = vadd.s32 %v2550, 1
    %vm2556 = vcmp.gt.s32.totalorder %v2555, 0
    %v2557 = vsel %vm2556, %v2555, 0
    %v2558 = vshrl.u32 %v2557, 5
    %v2559 = vand.u32 %v2557, 31
    %v2560 = vsub.s32 32, %v2559
    %v2561 = vshrl.u32 683565275, %v2560
    %v2562 = vshll.u32 683565275, %v2559
    %v2563 = vshrl.u32 2475754826, %v2560
    %v2564 = vor.u32 %v2562, %v2563
    %v2565 = vshll.u32 2475754826, %v2559
    %v2566 = vshrl.u32 2131351028, %v2560
    %v2567 = vor.u32 %v2565, %v2566
    %v2568 = vshll.u32 2131351028, %v2559
    %v2569 = vshrl.u32 2102212464, %v2560
    %v2570 = vor.u32 %v2568, %v2569
    %v2571 = vshll.u32 2102212464, %v2559
    %v2572 = vshrl.u32 920167782, %v2560
    %v2573 = vor.u32 %v2571, %v2572
    %v2574 = vshll.u32 920167782, %v2559
    %v2575 = vshrl.u32 1326507024, %v2560
    %v2576 = vor.u32 %v2574, %v2575
    %vm2577 = vcmp.lt.s32.totalorder %v2558, 1
    %vm2578 = vcmp.lt.s32.totalorder %v2558, 2
    %vm2579 = vcmp.lt.s32.totalorder %v2558, 3
    %vm2580 = vcmp.lt.s32.totalorder %v2558, 4
    %v2581 = vsel %vm2577, %v2561, %v2564
    %v2582 = vsel %vm2580, %v2570, 2102212464
    %v2583 = vsel %vm2579, %v2567, %v2582
    %v2584 = vsel %vm2578, %v2581, %v2583
    %v2585 = vsel %vm2577, %v2564, %v2567
    %v2586 = vsel %vm2580, %v2573, 920167782
    %v2587 = vsel %vm2579, %v2570, %v2586
    %v2588 = vsel %vm2578, %v2585, %v2587
    %v2589 = vsel %vm2577, %v2567, %v2570
    %v2590 = vsel %vm2580, %v2576, 1326507024
    %v2591 = vsel %vm2579, %v2573, %v2590
    %v2592 = vsel %vm2578, %v2589, %v2591
    %v2593 = vshll.u32 %v2553, 8
    %v2594 = vand.u32 %v2593, 65535
    %v2595 = vshrl.u32 %v2593, 16
    %v2596 = vand.u32 %v2592, 65535
    %v2597 = vshrl.u32 %v2592, 16
    %v2598 = vmul.u32 %v2594, %v2596
    %v2599 = vmul.u32 %v2594, %v2597
    %v2600 = vmul.u32 %v2595, %v2596
    %v2601 = vmul.u32 %v2595, %v2597
    %v2602 = vshll.u32 %v2599, 16
    %v2603 = vshrl.u32 %v2599, 16
    %v2604 = vshll.u32 %v2600, 16
    %v2605 = vshrl.u32 %v2600, 16
    %vm2606 = vc.u32 %v2598, %v2602
    %v2607 = vsel %vm2606, 1, 0
    %v2608 = vadd.s32 %v2598, %v2602
    %v2609 = vadd.s32 %v2601, %v2607
    %vm2610 = vc.u32 %v2608, %v2604
    %v2611 = vsel %vm2610, 1, 0
    %v2612 = vadd.s32 %v2608, %v2604
    %v2613 = vadd.s32 %v2609, %v2611
    %v2614 = vadd.s32 %v2613, %v2603
    %v2615 = vadd.s32 %v2614, %v2605
    %v2616 = vand.u32 %v2593, 65535
    %v2617 = vshrl.u32 %v2593, 16
    %v2618 = vand.u32 %v2588, 65535
    %v2619 = vshrl.u32 %v2588, 16
    %v2620 = vmul.u32 %v2616, %v2618
    %v2621 = vmul.u32 %v2616, %v2619
    %v2622 = vmul.u32 %v2617, %v2618
    %v2623 = vmul.u32 %v2617, %v2619
    %v2624 = vshll.u32 %v2621, 16
    %v2625 = vshrl.u32 %v2621, 16
    %v2626 = vshll.u32 %v2622, 16
    %v2627 = vshrl.u32 %v2622, 16
    %vm2628 = vc.u32 %v2620, %v2624
    %v2629 = vsel %vm2628, 1, 0
    %v2630 = vadd.s32 %v2620, %v2624
    %v2631 = vadd.s32 %v2623, %v2629
    %vm2632 = vc.u32 %v2630, %v2626
    %v2633 = vsel %vm2632, 1, 0
    %v2634 = vadd.s32 %v2630, %v2626
    %v2635 = vadd.s32 %v2631, %v2633
    %v2636 = vadd.s32 %v2635, %v2625
    %v2637 = vadd.s32 %v2636, %v2627
    %v2638 = vmul.u32 %v2593, %v2584
    %v2639 = vadd.s32 %v2615, %v2634
    %vm2640 = vc.u32 %v2615, %v2634
    %v2641 = vadd.s32 %v2637, 1
    %v2642 = vsel %vm2640, %v2641, %v2637
    %v2643 = vadd.s32 %v2638, %v2642
    %v2644 = vadd.s32 %v2643, 536870912
    %v2645 = vshrl.u32 %v2644, 30
    %v2646 = vshll.u32 %v2645, 30
    %v2647 = vsub.s32 %v2643, %v2646
    %vm2648 = vcmp.lt.s32.totalorder %v2647, 0
    %v2649 = vsub.s32 0, %v2647
    %v2650 = vsel %vm2648, %v2649, %v2647
    %v2651 = vclz %v2650
    %v2652 = vsub.s32 %v2651, 2
    %vm2653 = vcmp.gt.s32.totalorder 0, %v2652
    %v2654 = vsel %vm2653, 0, %v2652
    %v2655 = vsub.s32 32, %v2654
    %v2656 = vshll.u32 %v2647, %v2654
    %v2657 = vshrl.u32 %v2639, %v2655
    %v2658 = vor.u32 %v2656, %v2657
    %v2659 = vsub.s32 4294967266, %v2654
    %v2660 = vadd.s32 %v2659, 127
    %v2661 = vshll.u32 %v2660, 23
    %v2662 = vor.u32 4788187, %v2661
    %v2663 = vand.u32 2147483647, %v2662
    %v2665 = vcvt.s32.f32 %v2658
    %v2666 = vmul.f32 %v2665, %v2663
    %v2667 = vxor.u32 %v2666, 2147483648
    %v2668 = vsel %vm2547, %v2667, %v2666
    %v2669 = vsub.s32 4, %v2645
    %v2670 = vsel %vm2547, %v2669, %v2645
    %v2671 = vsel %vm2546, %v72, %v2668
    %v2672 = vsel %vm2546, 0, %v2670
    %v2673 = vmul.f32 %v2671, %v2671
    %v2674 = vmul.f32 %v2673, -0.001358992
    %v2675 = vadd.f32 %v2674, 0.041655596
    %v2676 = vmul.f32 %v2673, %v2675
    %v2677 = vadd.f32 %v2676, -0.4999988
    %v2678 = vmul.f32 %v2673, %v2677
    %v2679 = vadd.f32 1.0, %v2678
    %v2680 = vmul.f32 %v2671, %v2671
    %v2681 = vmul.f32 %v2680, -0.00019511016
    %v2682 = vadd.f32 %v2681, 0.008332121
    %v2683 = vmul.f32 %v2680, %v2682
    %v2684 = vadd.f32 %v2683, -0.16666654
    %v2685 = vmul.f32 %v2680, %v2684
    %v2686 = vadd.f32 %v2685, 1.0
    %v2687 = vmul.f32 %v2686, %v2671
    %vm2688 = vweird.f32 %v72
    %v2689 = vadd.s32 %v2672, 3
    %v2690 = vand.u32 %v2689, 3
    %vm2691 = vcmp.lt.s32.totalorder %v2690, 2
    %vm2692 = vcmp.eq.s32.totalorder %v2690, 0
    %v2693 = vxor.u32 %v2687, 2147483648
    %v2694 = vsel %vm2692, %v2679, %v2693
    %vm2695 = vcmp.eq.s32.totalorder %v2690, 2
    %v2696 = vxor.u32 %v2679, 2147483648
    %v2697 = vsel %vm2695, %v2696, %v2687
    %v2698 = vsel %vm2691, %v2694, %v2697
    %v2699 = vsel %vm2688, nan, %v2698
    %v2700 = vand.u32 2147483647, %v73
    %vm2701 = vcmp.le.f32.partialorder %v2700, 0.7853982
    %vm2702 = vcmp.lt.s32.totalorder %v73, 0
    %v2703 = vand.u32 %v73, 2139095040
    %v2704 = vshrl.u32 %v2703, 23
    %v2705 = vsub.s32 %v2704, 127
    %v2706 = vand.u32 2147483647, %v73
    %v2707 = vand.u32 %v2706, 8388607
    %v2708 = vor.u32 %v2707, 8388608
    %v2709 = vsub.s32 0, %v2708
    %v2710 = vadd.s32 %v2705, 1
    %vm2711 = vcmp.gt.s32.totalorder %v2710, 0
    %v2712 = vsel %vm2711, %v2710, 0
    %v2713 = vshrl.u32 %v2712, 5
    %v2714 = vand.u32 %v2712, 31
    %v2715 = vsub.s32 32, %v2714
    %v2716 = vshrl.u32 683565275, %v2715
    %v2717 = vshll.u32 683565275, %v2714
    %v2718 = vshrl.u32 2475754826, %v2715
    %v2719 = vor.u32 %v2717, %v2718
    %v2720 = vshll.u32 2475754826, %v2714
    %v2721 = vshrl.u32 2131351028, %v2715
    %v2722 = vor.u32 %v2720, %v2721
    %v2723 = vshll.u32 2131351028, %v2714
    %v2724 = vshrl.u32 2102212464, %v2715
    %v2725 = vor.u32 %v2723, %v2724
    %v2726 = vshll.u32 2102212464, %v2714
    %v2727 = vshrl.u32 920167782, %v2715
    %v2728 = vor.u32 %v2726, %v2727
    %v2729 = vshll.u32 920167782, %v2714
    %v2730 = vshrl.u32 1326507024, %v2715
    %v2731 = vor.u32 %v2729, %v2730
    %vm2732 = vcmp.lt.s32.totalorder %v2713, 1
    %vm2733 = vcmp.lt.s32.totalorder %v2713, 2
    %vm2734 = vcmp.lt.s32.totalorder %v2713, 3
    %vm2735 = vcmp.lt.s32.totalorder %v2713, 4
    %v2736 = vsel %vm2732, %v2716, %v2719
    %v2737 = vsel %vm2735, %v2725, 2102212464
    %v2738 = vsel %vm2734, %v2722, %v2737
    %v2739 = vsel %vm2733, %v2736, %v2738
    %v2740 = vsel %vm2732, %v2719, %v2722
    %v2741 = vsel %vm2735, %v2728, 920167782
    %v2742 = vsel %vm2734, %v2725, %v2741
    %v2743 = vsel %vm2733, %v2740, %v2742
    %v2744 = vsel %vm2732, %v2722, %v2725
    %v2745 = vsel %vm2735, %v2731, 1326507024
    %v2746 = vsel %vm2734, %v2728, %v2745
    %v2747 = vsel %vm2733, %v2744, %v2746
    %v2748 = vshll.u32 %v2708, 8
    %v2749 = vand.u32 %v2748, 65535
    %v2750 = vshrl.u32 %v2748, 16
    %v2751 = vand.u32 %v2747, 65535
    %v2752 = vshrl.u32 %v2747, 16
    %v2753 = vmul.u32 %v2749, %v2751
    %v2754 = vmul.u32 %v2749, %v2752
    %v2755 = vmul.u32 %v2750, %v2751
    %v2756 = vmul.u32 %v2750, %v2752
    %v2757 = vshll.u32 %v2754, 16
    %v2758 = vshrl.u32 %v2754, 16
    %v2759 = vshll.u32 %v2755, 16
    %v2760 = vshrl.u32 %v2755, 16
    %vm2761 = vc.u32 %v2753, %v2757
    %v2762 = vsel %vm2761, 1, 0
    %v2763 = vadd.s32 %v2753, %v2757
    %v2764 = vadd.s32 %v2756, %v2762
    %vm2765 = vc.u32 %v2763, %v2759
    %v2766 = vsel %vm2765, 1, 0
    %v2767 = vadd.s32 %v2763, %v2759
    %v2768 = vadd.s32 %v2764, %v2766
    %v2769 = vadd.s32 %v2768, %v2758
    %v2770 = vadd.s32 %v2769, %v2760
    %v2771 = vand.u32 %v2748, 65535
    %v2772 = vshrl.u32 %v2748, 16
    %v2773 = vand.u32 %v2743, 65535
    %v2774 = vshrl.u32 %v2743, 16
    %v2775 = vmul.u32 %v2771, %v2773
    %v2776 = vmul.u32 %v2771, %v2774
    %v2777 = vmul.u32 %v2772, %v2773
    %v2778 = vmul.u32 %v2772, %v2774
    %v2779 = vshll.u32 %v2776, 16
    %v2780 = vshrl.u32 %v2776, 16
    %v2781 = vshll.u32 %v2777, 16
    %v2782 = vshrl.u32 %v2777, 16
    %vm2783 = vc.u32 %v2775, %v2779
    %v2784 = vsel %vm2783, 1, 0
    %v2785 = vadd.s32 %v2775, %v2779
    %v2786 = vadd.s32 %v2778, %v2784
    %vm2787 = vc.u32 %v2785, %v2781
    %v2788 = vsel %vm2787, 1, 0
    %v2789 = vadd.s32 %v2785, %v2781
    %v2790 = vadd.s32 %v2786, %v2788
    %v2791 = vadd.s32 %v2790, %v2780
    %v2792 = vadd.s32 %v2791, %v2782
    %v2793 = vmul.u32 %v2748, %v2739
    %v2794 = vadd.s32 %v2770, %v2789
    %vm2795 = vc.u32 %v2770, %v2789
    %v2796 = vadd.s32 %v2792, 1
    %v2797 = vsel %vm2795, %v2796, %v2792
    %v2798 = vadd.s32 %v2793, %v2797
    %v2799 = vadd.s32 %v2798, 536870912
    %v2800 = vshrl.u32 %v2799, 30
    %v2801 = vshll.u32 %v2800, 30
    %v2802 = vsub.s32 %v2798, %v2801
    %vm2803 = vcmp.lt.s32.totalorder %v2802, 0
    %v2804 = vsub.s32 0, %v2802
    %v2805 = vsel %vm2803, %v2804, %v2802
    %v2806 = vclz %v2805
    %v2807 = vsub.s32 %v2806, 2
    %vm2808 = vcmp.gt.s32.totalorder 0, %v2807
    %v2809 = vsel %vm2808, 0, %v2807
    %v2810 = vsub.s32 32, %v2809
    %v2811 = vshll.u32 %v2802, %v2809
    %v2812 = vshrl.u32 %v2794, %v2810
    %v2813 = vor.u32 %v2811, %v2812
    %v2814 = vsub.s32 4294967266, %v2809
    %v2815 = vadd.s32 %v2814, 127
    %v2816 = vshll.u32 %v2815, 23
    %v2817 = vor.u32 4788187, %v2816
    %v2818 = vand.u32 2147483647, %v2817
    %v2820 = vcvt.s32.f32 %v2813
    %v2821 = vmul.f32 %v2820, %v2818
    %v2822 = vxor.u32 %v2821, 2147483648
    %v2823 = vsel %vm2702, %v2822, %v2821
    %v2824 = vsub.s32 4, %v2800
    %v2825 = vsel %vm2702, %v2824, %v2800
    %v2826 = vsel %vm2701, %v73, %v2823
    %v2827 = vsel %vm2701, 0, %v2825
    %v2828 = vmul.f32 %v2826, %v2826
    %v2829 = vmul.f32 %v2828, -0.001358992
    %v2830 = vadd.f32 %v2829, 0.041655596
    %v2831 = vmul.f32 %v2828, %v2830
    %v2832 = vadd.f32 %v2831, -0.4999988
    %v2833 = vmul.f32 %v2828, %v2832
    %v2834 = vadd.f32 1.0, %v2833
    %v2835 = vmul.f32 %v2826, %v2826
    %v2836 = vmul.f32 %v2835, -0.00019511016
    %v2837 = vadd.f32 %v2836, 0.008332121
    %v2838 = vmul.f32 %v2835, %v2837
    %v2839 = vadd.f32 %v2838, -0.16666654
    %v2840 = vmul.f32 %v2835, %v2839
    %v2841 = vadd.f32 %v2840, 1.0
    %v2842 = vmul.f32 %v2841, %v2826
    %vm2843 = vweird.f32 %v73
    %v2844 = vadd.s32 %v2827, 3
    %v2845 = vand.u32 %v2844, 3
    %vm2846 = vcmp.lt.s32.totalorder %v2845, 2
    %vm2847 = vcmp.eq.s32.totalorder %v2845, 0
    %v2848 = vxor.u32 %v2842, 2147483648
    %v2849 = vsel %vm2847, %v2834, %v2848
    %vm2850 = vcmp.eq.s32.totalorder %v2845, 2
    %v2851 = vxor.u32 %v2834, 2147483648
    %v2852 = vsel %vm2850, %v2851, %v2842
    %v2853 = vsel %vm2846, %v2849, %v2852
    %v2854 = vsel %vm2843, nan, %v2853
    %v2855 = vld [vmem:[%s2] sm:$0xff]
    %v2856 = vld [vmem:[%s2 + $0x8] sm:$0xff]
    %v2857 = vld [vmem:[%s2 + $0x10] sm:$0xff]
    %v2858 = vld [vmem:[%s2 + $0x18] sm:$0xff]
    %2860 = vset.pattern.permute.xlu0 48
    %2861 = vperm.xlu0 %2860, %v2855
    %v2862 = vpop.permute.xlu0 %2861
    %2865 = vset.pattern.permute.xlu0 48
    %2866 = vperm.xlu0 %2865, %v2856
    %v2867 = vpop.permute.xlu0 %2866
    %2870 = vset.pattern.permute.xlu0 48
    %2871 = vperm.xlu0 %2870, %v2857
    %v2872 = vpop.permute.xlu0 %2871
    %2875 = vset.pattern.permute.xlu0 48
    %2876 = vperm.xlu0 %2875, %v2858
    %v2877 = vpop.permute.xlu0 %2876
    %v2879 = vperm.slane %v36, 0
    %v2880 = vperm.slane %v36, 2
    %v2881 = vperm.slane %v36, 4
    %v2885 = vperm.slane %v2879, 0
    %v2886 = vperm.slane %v2880, 0
    %v2887 = vperm.slane %v2881, 0
    %v2888 = vmul.f32 %v2862, %v2885
    %v2889 = vmul.f32 %v2862, %v2886
    %v2890 = vmul.f32 %v2862, %v2887
    %v2891 = vmul.f32 %v2867, %v2885
    %v2892 = vmul.f32 %v2867, %v2886
    %v2893 = vmul.f32 %v2867, %v2887
    %v2894 = vmul.f32 %v2872, %v2885
    %v2895 = vmul.f32 %v2872, %v2886
    %v2896 = vmul.f32 %v2872, %v2887
    %v2897 = vmul.f32 %v2877, %v2885
    %v2898 = vmul.f32 %v2877, %v2886
    %v2899 = vmul.f32 %v2877, %v2887
    %vm2900 = vcmask 392192
    %v2901 = vsel %vm2900, %v2855, 0
    %v2903 = vsel %vm2900, %v2856, 0
    %v2905 = vsel %vm2900, %v2857, 0
    %v2907 = vsel %vm2900, %v2858, 0
    %2909 = vmatpush.msra.mxu0 0.0
    %2910 = vmatpush.msra.mxu0 0.0
    %2911 = vmatpush.msra.mxu0 0.0
    %2912 = vmatpush.msra.mxu0 0.0
    %2913 = vmatpush.msra.mxu0 0.0
    %2914 = vmatpush.msra.mxu0 0.0
    %2915 = vmatpush.msra.mxu0 0.0
    %2916 = vmatpush.msra.mxu0 0.0
    %2917 = vmatpush.msra.mxu0 0.0
    %2918 = vmatpush.msra.mxu0 0.0
    %v2919 = vand.u32 %v2544, 4294901760
    %2920 = vmatpush.msra.mxu0 %v2919
    %v2921 = vand.u32 %v2079, 4294901760
    %2922 = vmatpush.msra.mxu0 %v2921
    %v2923 = vand.u32 %v1614, 4294901760
    %2924 = vmatpush.msra.mxu0 %v2923
    %v2925 = vand.u32 %v1151, 4294901760
    %2926 = vmatpush.msra.mxu0 %v2925
    %v2927 = vand.u32 %v689, 4294901760
    %2928 = vmatpush.msra.mxu0 %v2927
    %v2929 = vand.u32 %v227, 4294901760
    %2930 = vmatpush.msra.mxu0 %v2929
    %v2931 = vand.u32 %v2901, 4294901760
    %v2932 = vsub.f32 %v2901, %v2931
    %v2933 = vand.u32 %v2932, 4294901760
    %v2934 = vsub.f32 %v2932, %v2933
    %v2935 = vand.u32 %v2934, 4294901760
    %2936 = vmatmul.f32.gmra.mxu0 %v2935
    %v2937 = vpop.f32.mrf.mxu0
    %v2938 = vadd.f32 %v2888, %v2937
    %v2939 = vand.u32 %v2903, 4294901760
    %v2940 = vsub.f32 %v2903, %v2939
    %v2941 = vand.u32 %v2940, 4294901760
    %v2942 = vsub.f32 %v2940, %v2941
    %v2943 = vand.u32 %v2942, 4294901760
    %2944 = vmatmul.f32.gmra.mxu0 %v2943
    %v2945 = vpop.f32.mrf.mxu0
    %v2946 = vadd.f32 %v2891, %v2945
    %v2947 = vand.u32 %v2905, 4294901760
    %v2948 = vsub.f32 %v2905, %v2947
    %v2949 = vand.u32 %v2948, 4294901760
    %v2950 = vsub.f32 %v2948, %v2949
    %v2951 = vand.u32 %v2950, 4294901760
    %2952 = vmatmul.f32.gmra.mxu0 %v2951
    %v2953 = vpop.f32.mrf.mxu0
    %v2954 = vadd.f32 %v2894, %v2953
    %v2955 = vand.u32 %v2907, 4294901760
    %v2956 = vsub.f32 %v2907, %v2955
    %v2957 = vand.u32 %v2956, 4294901760
    %v2958 = vsub.f32 %v2956, %v2957
    %v2959 = vand.u32 %v2958, 4294901760
    %2960 = vmatmul.f32.gmra.mxu0 %v2959
    %v2961 = vpop.f32.mrf.mxu0
    %v2962 = vadd.f32 %v2897, %v2961
    %2963 = vdwg.mxu0
    %2964 = vmatpush.msra.mxu0 0.0
    %2965 = vmatpush.msra.mxu0 0.0
    %2966 = vmatpush.msra.mxu0 0.0
    %2967 = vmatpush.msra.mxu0 0.0
    %2968 = vmatpush.msra.mxu0 0.0
    %2969 = vmatpush.msra.mxu0 0.0
    %2970 = vmatpush.msra.mxu0 0.0
    %2971 = vmatpush.msra.mxu0 0.0
    %2972 = vmatpush.msra.mxu0 0.0
    %2973 = vmatpush.msra.mxu0 0.0
    %v2974 = vand.u32 %v2544, 4294901760
    %v2975 = vsub.f32 %v2544, %v2974
    %v2976 = vand.u32 %v2975, 4294901760
    %v2977 = vsub.f32 %v2975, %v2976
    %v2978 = vand.u32 %v2977, 4294901760
    %2979 = vmatpush.msra.mxu0 %v2978
    %v2980 = vand.u32 %v2079, 4294901760
    %v2981 = vsub.f32 %v2079, %v2980
    %v2982 = vand.u32 %v2981, 4294901760
    %v2983 = vsub.f32 %v2981, %v2982
    %v2984 = vand.u32 %v2983, 4294901760
    %2985 = vmatpush.msra.mxu0 %v2984
    %v2986 = vand.u32 %v1614, 4294901760
    %v2987 = vsub.f32 %v1614, %v2986
    %v2988 = vand.u32 %v2987, 4294901760
    %v2989 = vsub.f32 %v2987, %v2988
    %v2990 = vand.u32 %v2989, 4294901760
    %2991 = vmatpush.msra.mxu0 %v2990
    %v2992 = vand.u32 %v1151, 4294901760
    %v2993 = vsub.f32 %v1151, %v2992
    %v2994 = vand.u32 %v2993, 4294901760
    %v2995 = vsub.f32 %v2993, %v2994
    %v2996 = vand.u32 %v2995, 4294901760
    %2997 = vmatpush.msra.mxu0 %v2996
    %v2998 = vand.u32 %v689, 4294901760
    %v2999 = vsub.f32 %v689, %v2998
    %v3000 = vand.u32 %v2999, 4294901760
    %v3001 = vsub.f32 %v2999, %v3000
    %v3002 = vand.u32 %v3001, 4294901760
    %3003 = vmatpush.msra.mxu0 %v3002
    %v3004 = vand.u32 %v227, 4294901760
    %v3005 = vsub.f32 %v227, %v3004
    %v3006 = vand.u32 %v3005, 4294901760
    %v3007 = vsub.f32 %v3005, %v3006
    %v3008 = vand.u32 %v3007, 4294901760
    %3009 = vmatpush.msra.mxu0 %v3008
    %v3010 = vand.u32 %v2901, 4294901760
    %3011 = vmatmul.f32.gmra.mxu0 %v3010
    %v3012 = vpop.f32.mrf.mxu0
    %v3013 = vadd.f32 %v2938, %v3012
    %v3014 = vand.u32 %v2903, 4294901760
    %3015 = vmatmul.f32.gmra.mxu0 %v3014
    %v3016 = vpop.f32.mrf.mxu0
    %v3017 = vadd.f32 %v2946, %v3016
    %v3018 = vand.u32 %v2905, 4294901760
    %3019 = vmatmul.f32.gmra.mxu0 %v3018
    %v3020 = vpop.f32.mrf.mxu0
    %v3021 = vadd.f32 %v2954, %v3020
    %v3022 = vand.u32 %v2907, 4294901760
    %3023 = vmatmul.f32.gmra.mxu0 %v3022
    %v3024 = vpop.f32.mrf.mxu0
    %v3025 = vadd.f32 %v2962, %v3024
    %3026 = vdwg.mxu0
    %3027 = vmatpush.msra.mxu0 0.0
    %3028 = vmatpush.msra.mxu0 0.0
    %3029 = vmatpush.msra.mxu0 0.0
    %3030 = vmatpush.msra.mxu0 0.0
    %3031 = vmatpush.msra.mxu0 0.0
    %3032 = vmatpush.msra.mxu0 0.0
    %3033 = vmatpush.msra.mxu0 0.0
    %3034 = vmatpush.msra.mxu0 0.0
    %3035 = vmatpush.msra.mxu0 0.0
    %3036 = vmatpush.msra.mxu0 0.0
    %v3037 = vand.u32 %v2544, 4294901760
    %v3038 = vsub.f32 %v2544, %v3037
    %3039 = vmatpush.msra.mxu0 %v3038
    %v3040 = vand.u32 %v2079, 4294901760
    %v3041 = vsub.f32 %v2079, %v3040
    %3042 = vmatpush.msra.mxu0 %v3041
    %v3043 = vand.u32 %v1614, 4294901760
    %v3044 = vsub.f32 %v1614, %v3043
    %3045 = vmatpush.msra.mxu0 %v3044
    %v3046 = vand.u32 %v1151, 4294901760
    %v3047 = vsub.f32 %v1151, %v3046
    %3048 = vmatpush.msra.mxu0 %v3047
    %v3049 = vand.u32 %v689, 4294901760
    %v3050 = vsub.f32 %v689, %v3049
    %3051 = vmatpush.msra.mxu0 %v3050
    %v3052 = vand.u32 %v227, 4294901760
    %v3053 = vsub.f32 %v227, %v3052
    %3054 = vmatpush.msra.mxu0 %v3053
    %v3055 = vand.u32 %v2901, 4294901760
    %v3056 = vsub.f32 %v2901, %v3055
    %3057 = vmatmul.f32.gmra.mxu0 %v3056
    %v3058 = vpop.f32.mrf.mxu0
    %v3059 = vadd.f32 %v3013, %v3058
    %v3060 = vand.u32 %v2903, 4294901760
    %v3061 = vsub.f32 %v2903, %v3060
    %3062 = vmatmul.f32.gmra.mxu0 %v3061
    %v3063 = vpop.f32.mrf.mxu0
    %v3064 = vadd.f32 %v3017, %v3063
    %v3065 = vand.u32 %v2905, 4294901760
    %v3066 = vsub.f32 %v2905, %v3065
    %3067 = vmatmul.f32.gmra.mxu0 %v3066
    %v3068 = vpop.f32.mrf.mxu0
    %v3069 = vadd.f32 %v3021, %v3068
    %v3070 = vand.u32 %v2907, 4294901760
    %v3071 = vsub.f32 %v2907, %v3070
    %3072 = vmatmul.f32.gmra.mxu0 %v3071
    %v3073 = vpop.f32.mrf.mxu0
    %v3074 = vadd.f32 %v3025, %v3073
    %3075 = vdwg.mxu0
    %3076 = vmatpush.msra.mxu0 0.0
    %3077 = vmatpush.msra.mxu0 0.0
    %3078 = vmatpush.msra.mxu0 0.0
    %3079 = vmatpush.msra.mxu0 0.0
    %3080 = vmatpush.msra.mxu0 0.0
    %3081 = vmatpush.msra.mxu0 0.0
    %3082 = vmatpush.msra.mxu0 0.0
    %3083 = vmatpush.msra.mxu0 0.0
    %3084 = vmatpush.msra.mxu0 0.0
    %3085 = vmatpush.msra.mxu0 0.0
    %v3086 = vand.u32 %v2544, 4294901760
    %3087 = vmatpush.msra.mxu0 %v3086
    %v3088 = vand.u32 %v2079, 4294901760
    %3089 = vmatpush.msra.mxu0 %v3088
    %v3090 = vand.u32 %v1614, 4294901760
    %3091 = vmatpush.msra.mxu0 %v3090
    %v3092 = vand.u32 %v1151, 4294901760
    %3093 = vmatpush.msra.mxu0 %v3092
    %v3094 = vand.u32 %v689, 4294901760
    %3095 = vmatpush.msra.mxu0 %v3094
    %v3096 = vand.u32 %v227, 4294901760
    %3097 = vmatpush.msra.mxu0 %v3096
    %v3098 = vand.u32 %v2901, 4294901760
    %v3099 = vsub.f32 %v2901, %v3098
    %v3100 = vand.u32 %v3099, 4294901760
    %3101 = vmatmul.f32.gmra.mxu0 %v3100
    %v3102 = vpop.f32.mrf.mxu0
    %v3103 = vadd.f32 %v3059, %v3102
    %v3104 = vand.u32 %v2903, 4294901760
    %v3105 = vsub.f32 %v2903, %v3104
    %v3106 = vand.u32 %v3105, 4294901760
    %3107 = vmatmul.f32.gmra.mxu0 %v3106
    %v3108 = vpop.f32.mrf.mxu0
    %v3109 = vadd.f32 %v3064, %v3108
    %v3110 = vand.u32 %v2905, 4294901760
    %v3111 = vsub.f32 %v2905, %v3110
    %v3112 = vand.u32 %v3111, 4294901760
    %3113 = vmatmul.f32.gmra.mxu0 %v3112
    %v3114 = vpop.f32.mrf.mxu0
    %v3115 = vadd.f32 %v3069, %v3114
    %v3116 = vand.u32 %v2907, 4294901760
    %v3117 = vsub.f32 %v2907, %v3116
    %v3118 = vand.u32 %v3117, 4294901760
    %3119 = vmatmul.f32.gmra.mxu0 %v3118
    %v3120 = vpop.f32.mrf.mxu0
    %v3121 = vadd.f32 %v3074, %v3120
    %3122 = vdwg.mxu0
    %3123 = vmatpush.msra.mxu0 0.0
    %3124 = vmatpush.msra.mxu0 0.0
    %3125 = vmatpush.msra.mxu0 0.0
    %3126 = vmatpush.msra.mxu0 0.0
    %3127 = vmatpush.msra.mxu0 0.0
    %3128 = vmatpush.msra.mxu0 0.0
    %3129 = vmatpush.msra.mxu0 0.0
    %3130 = vmatpush.msra.mxu0 0.0
    %3131 = vmatpush.msra.mxu0 0.0
    %3132 = vmatpush.msra.mxu0 0.0
    %v3133 = vand.u32 %v2544, 4294901760
    %v3134 = vsub.f32 %v2544, %v3133
    %v3135 = vand.u32 %v3134, 4294901760
    %3136 = vmatpush.msra.mxu0 %v3135
    %v3137 = vand.u32 %v2079, 4294901760
    %v3138 = vsub.f32 %v2079, %v3137
    %v3139 = vand.u32 %v3138, 4294901760
    %3140 = vmatpush.msra.mxu0 %v3139
    %v3141 = vand.u32 %v1614, 4294901760
    %v3142 = vsub.f32 %v1614, %v3141
    %v3143 = vand.u32 %v3142, 4294901760
    %3144 = vmatpush.msra.mxu0 %v3143
    %v3145 = vand.u32 %v1151, 4294901760
    %v3146 = vsub.f32 %v1151, %v3145
    %v3147 = vand.u32 %v3146, 4294901760
    %3148 = vmatpush.msra.mxu0 %v3147
    %v3149 = vand.u32 %v689, 4294901760
    %v3150 = vsub.f32 %v689, %v3149
    %v3151 = vand.u32 %v3150, 4294901760
    %3152 = vmatpush.msra.mxu0 %v3151
    %v3153 = vand.u32 %v227, 4294901760
    %v3154 = vsub.f32 %v227, %v3153
    %v3155 = vand.u32 %v3154, 4294901760
    %3156 = vmatpush.msra.mxu0 %v3155
    %v3157 = vand.u32 %v2901, 4294901760
    %3158 = vmatmul.f32.gmra.mxu0 %v3157
    %v3159 = vpop.f32.mrf.mxu0
    %v3160 = vadd.f32 %v3103, %v3159
    %v3161 = vand.u32 %v2903, 4294901760
    %3162 = vmatmul.f32.gmra.mxu0 %v3161
    %v3163 = vpop.f32.mrf.mxu0
    %v3164 = vadd.f32 %v3109, %v3163
    %v3165 = vand.u32 %v2905, 4294901760
    %3166 = vmatmul.f32.gmra.mxu0 %v3165
    %v3167 = vpop.f32.mrf.mxu0
    %v3168 = vadd.f32 %v3115, %v3167
    %v3169 = vand.u32 %v2907, 4294901760
    %3170 = vmatmul.f32.gmra.mxu0 %v3169
    %v3171 = vpop.f32.mrf.mxu0
    %v3172 = vadd.f32 %v3121, %v3171
    %3173 = vdwg.mxu0
    %3174 = vmatpush.msra.mxu0 0.0
    %3175 = vmatpush.msra.mxu0 0.0
    %3176 = vmatpush.msra.mxu0 0.0
    %3177 = vmatpush.msra.mxu0 0.0
    %3178 = vmatpush.msra.mxu0 0.0
    %3179 = vmatpush.msra.mxu0 0.0
    %3180 = vmatpush.msra.mxu0 0.0
    %3181 = vmatpush.msra.mxu0 0.0
    %3182 = vmatpush.msra.mxu0 0.0
    %3183 = vmatpush.msra.mxu0 0.0
    %v3184 = vand.u32 %v2544, 4294901760
    %3185 = vmatpush.msra.mxu0 %v3184
    %v3186 = vand.u32 %v2079, 4294901760
    %3187 = vmatpush.msra.mxu0 %v3186
    %v3188 = vand.u32 %v1614, 4294901760
    %3189 = vmatpush.msra.mxu0 %v3188
    %v3190 = vand.u32 %v1151, 4294901760
    %3191 = vmatpush.msra.mxu0 %v3190
    %v3192 = vand.u32 %v689, 4294901760
    %3193 = vmatpush.msra.mxu0 %v3192
    %v3194 = vand.u32 %v227, 4294901760
    %3195 = vmatpush.msra.mxu0 %v3194
    %v3196 = vand.u32 %v2901, 4294901760
    %3197 = vmatmul.f32.gmra.mxu0 %v3196
    %v3198 = vpop.f32.mrf.mxu0
    %v3199 = vadd.f32 %v3160, %v3198
    %v3200 = vand.u32 %v2903, 4294901760
    %3201 = vmatmul.f32.gmra.mxu0 %v3200
    %v3202 = vpop.f32.mrf.mxu0
    %v3203 = vadd.f32 %v3164, %v3202
    %v3204 = vand.u32 %v2905, 4294901760
    %3205 = vmatmul.f32.gmra.mxu0 %v3204
    %v3206 = vpop.f32.mrf.mxu0
    %v3207 = vadd.f32 %v3168, %v3206
    %v3208 = vand.u32 %v2907, 4294901760
    %3209 = vmatmul.f32.gmra.mxu0 %v3208
    %v3210 = vpop.f32.mrf.mxu0
    %v3211 = vadd.f32 %v3172, %v3210
    %3212 = vdwg.mxu0
    %3213 = vmatpush.msra.mxu0 0.0
    %3214 = vmatpush.msra.mxu0 0.0
    %3215 = vmatpush.msra.mxu0 0.0
    %3216 = vmatpush.msra.mxu0 0.0
    %3217 = vmatpush.msra.mxu0 0.0
    %3218 = vmatpush.msra.mxu0 0.0
    %3219 = vmatpush.msra.mxu0 0.0
    %3220 = vmatpush.msra.mxu0 0.0
    %3221 = vmatpush.msra.mxu0 0.0
    %3222 = vmatpush.msra.mxu0 0.0
    %v3223 = vand.u32 %v2699, 4294901760
    %3224 = vmatpush.msra.mxu0 %v3223
    %v3225 = vand.u32 %v2234, 4294901760
    %3226 = vmatpush.msra.mxu0 %v3225
    %v3227 = vand.u32 %v1769, 4294901760
    %3228 = vmatpush.msra.mxu0 %v3227
    %v3229 = vand.u32 %v1305, 4294901760
    %3230 = vmatpush.msra.mxu0 %v3229
    %v3231 = vand.u32 %v843, 4294901760
    %3232 = vmatpush.msra.mxu0 %v3231
    %v3233 = vand.u32 %v381, 4294901760
    %3234 = vmatpush.msra.mxu0 %v3233
    %v3235 = vand.u32 %v2901, 4294901760
    %v3236 = vsub.f32 %v2901, %v3235
    %v3237 = vand.u32 %v3236, 4294901760
    %v3238 = vsub.f32 %v3236, %v3237
    %v3239 = vand.u32 %v3238, 4294901760
    %3240 = vmatmul.f32.gmra.mxu0 %v3239
    %v3241 = vpop.f32.mrf.mxu0
    %v3242 = vadd.f32 %v2889, %v3241
    %v3243 = vand.u32 %v2903, 4294901760
    %v3244 = vsub.f32 %v2903, %v3243
    %v3245 = vand.u32 %v3244, 4294901760
    %v3246 = vsub.f32 %v3244, %v3245
    %v3247 = vand.u32 %v3246, 4294901760
    %3248 = vmatmul.f32.gmra.mxu0 %v3247
    %v3249 = vpop.f32.mrf.mxu0
    %v3250 = vadd.f32 %v2892, %v3249
    %v3251 = vand.u32 %v2905, 4294901760
    %v3252 = vsub.f32 %v2905, %v3251
    %v3253 = vand.u32 %v3252, 4294901760
    %v3254 = vsub.f32 %v3252, %v3253
    %v3255 = vand.u32 %v3254, 4294901760
    %3256 = vmatmul.f32.gmra.mxu0 %v3255
    %v3257 = vpop.f32.mrf.mxu0
    %v3258 = vadd.f32 %v2895, %v3257
    %v3259 = vand.u32 %v2907, 4294901760
    %v3260 = vsub.f32 %v2907, %v3259
    %v3261 = vand.u32 %v3260, 4294901760
    %v3262 = vsub.f32 %v3260, %v3261
    %v3263 = vand.u32 %v3262, 4294901760
    %3264 = vmatmul.f32.gmra.mxu0 %v3263
    %v3265 = vpop.f32.mrf.mxu0
    %v3266 = vadd.f32 %v2898, %v3265
    %3267 = vdwg.mxu0
    %3268 = vmatpush.msra.mxu0 0.0
    %3269 = vmatpush.msra.mxu0 0.0
    %3270 = vmatpush.msra.mxu0 0.0
    %3271 = vmatpush.msra.mxu0 0.0
    %3272 = vmatpush.msra.mxu0 0.0
    %3273 = vmatpush.msra.mxu0 0.0
    %3274 = vmatpush.msra.mxu0 0.0
    %3275 = vmatpush.msra.mxu0 0.0
    %3276 = vmatpush.msra.mxu0 0.0
    %3277 = vmatpush.msra.mxu0 0.0
    %v3278 = vand.u32 %v2699, 4294901760
    %v3279 = vsub.f32 %v2699, %v3278
    %v3280 = vand.u32 %v3279, 4294901760
    %v3281 = vsub.f32 %v3279, %v3280
    %v3282 = vand.u32 %v3281, 4294901760
    %3283 = vmatpush.msra.mxu0 %v3282
    %v3284 = vand.u32 %v2234, 4294901760
    %v3285 = vsub.f32 %v2234, %v3284
    %v3286 = vand.u32 %v3285, 4294901760
    %v3287 = vsub.f32 %v3285, %v3286
    %v3288 = vand.u32 %v3287, 4294901760
    %3289 = vmatpush.msra.mxu0 %v3288
    %v3290 = vand.u32 %v1769, 4294901760
    %v3291 = vsub.f32 %v1769, %v3290
    %v3292 = vand.u32 %v3291, 4294901760
    %v3293 = vsub.f32 %v3291, %v3292
    %v3294 = vand.u32 %v3293, 4294901760
    %3295 = vmatpush.msra.mxu0 %v3294
    %v3296 = vand.u32 %v1305, 4294901760
    %v3297 = vsub.f32 %v1305, %v3296
    %v3298 = vand.u32 %v3297, 4294901760
    %v3299 = vsub.f32 %v3297, %v3298
    %v3300 = vand.u32 %v3299, 4294901760
    %3301 = vmatpush.msra.mxu0 %v3300
    %v3302 = vand.u32 %v843, 4294901760
    %v3303 = vsub.f32 %v843, %v3302
    %v3304 = vand.u32 %v3303, 4294901760
    %v3305 = vsub.f32 %v3303, %v3304
    %v3306 = vand.u32 %v3305, 4294901760
    %3307 = vmatpush.msra.mxu0 %v3306
    %v3308 = vand.u32 %v381, 4294901760
    %v3309 = vsub.f32 %v381, %v3308
    %v3310 = vand.u32 %v3309, 4294901760
    %v3311 = vsub.f32 %v3309, %v3310
    %v3312 = vand.u32 %v3311, 4294901760
    %3313 = vmatpush.msra.mxu0 %v3312
    %v3314 = vand.u32 %v2901, 4294901760
    %3315 = vmatmul.f32.gmra.mxu0 %v3314
    %v3316 = vpop.f32.mrf.mxu0
    %v3317 = vadd.f32 %v3242, %v3316
    %v3318 = vand.u32 %v2903, 4294901760
    %3319 = vmatmul.f32.gmra.mxu0 %v3318
    %v3320 = vpop.f32.mrf.mxu0
    %v3321 = vadd.f32 %v3250, %v3320
    %v3322 = vand.u32 %v2905, 4294901760
    %3323 = vmatmul.f32.gmra.mxu0 %v3322
    %v3324 = vpop.f32.mrf.mxu0
    %v3325 = vadd.f32 %v3258, %v3324
    %v3326 = vand.u32 %v2907, 4294901760
    %3327 = vmatmul.f32.gmra.mxu0 %v3326
    %v3328 = vpop.f32.mrf.mxu0
    %v3329 = vadd.f32 %v3266, %v3328
    %3330 = vdwg.mxu0
    %3331 = vmatpush.msra.mxu0 0.0
    %3332 = vmatpush.msra.mxu0 0.0
    %3333 = vmatpush.msra.mxu0 0.0
    %3334 = vmatpush.msra.mxu0 0.0
    %3335 = vmatpush.msra.mxu0 0.0
    %3336 = vmatpush.msra.mxu0 0.0
    %3337 = vmatpush.msra.mxu0 0.0
    %3338 = vmatpush.msra.mxu0 0.0
    %3339 = vmatpush.msra.mxu0 0.0
    %3340 = vmatpush.msra.mxu0 0.0
    %v3341 = vand.u32 %v2699, 4294901760
    %v3342 = vsub.f32 %v2699, %v3341
    %3343 = vmatpush.msra.mxu0 %v3342
    %v3344 = vand.u32 %v2234, 4294901760
    %v3345 = vsub.f32 %v2234, %v3344
    %3346 = vmatpush.msra.mxu0 %v3345
    %v3347 = vand.u32 %v1769, 4294901760
    %v3348 = vsub.f32 %v1769, %v3347
    %3349 = vmatpush.msra.mxu0 %v3348
    %v3350 = vand.u32 %v1305, 4294901760
    %v3351 = vsub.f32 %v1305, %v3350
    %3352 = vmatpush.msra.mxu0 %v3351
    %v3353 = vand.u32 %v843, 4294901760
    %v3354 = vsub.f32 %v843, %v3353
    %3355 = vmatpush.msra.mxu0 %v3354
    %v3356 = vand.u32 %v381, 4294901760
    %v3357 = vsub.f32 %v381, %v3356
    %3358 = vmatpush.msra.mxu0 %v3357
    %v3359 = vand.u32 %v2901, 4294901760
    %v3360 = vsub.f32 %v2901, %v3359
    %3361 = vmatmul.f32.gmra.mxu0 %v3360
    %v3362 = vpop.f32.mrf.mxu0
    %v3363 = vadd.f32 %v3317, %v3362
    %v3364 = vand.u32 %v2903, 4294901760
    %v3365 = vsub.f32 %v2903, %v3364
    %3366 = vmatmul.f32.gmra.mxu0 %v3365
    %v3367 = vpop.f32.mrf.mxu0
    %v3368 = vadd.f32 %v3321, %v3367
    %v3369 = vand.u32 %v2905, 4294901760
    %v3370 = vsub.f32 %v2905, %v3369
    %3371 = vmatmul.f32.gmra.mxu0 %v3370
    %v3372 = vpop.f32.mrf.mxu0
    %v3373 = vadd.f32 %v3325, %v3372
    %v3374 = vand.u32 %v2907, 4294901760
    %v3375 = vsub.f32 %v2907, %v3374
    %3376 = vmatmul.f32.gmra.mxu0 %v3375
    %v3377 = vpop.f32.mrf.mxu0
    %v3378 = vadd.f32 %v3329, %v3377
    %3379 = vdwg.mxu0
    %3380 = vmatpush.msra.mxu0 0.0
    %3381 = vmatpush.msra.mxu0 0.0
    %3382 = vmatpush.msra.mxu0 0.0
    %3383 = vmatpush.msra.mxu0 0.0
    %3384 = vmatpush.msra.mxu0 0.0
    %3385 = vmatpush.msra.mxu0 0.0
    %3386 = vmatpush.msra.mxu0 0.0
    %3387 = vmatpush.msra.mxu0 0.0
    %3388 = vmatpush.msra.mxu0 0.0
    %3389 = vmatpush.msra.mxu0 0.0
    %v3390 = vand.u32 %v2699, 4294901760
    %3391 = vmatpush.msra.mxu0 %v3390
    %v3392 = vand.u32 %v2234, 4294901760
    %3393 = vmatpush.msra.mxu0 %v3392
    %v3394 = vand.u32 %v1769, 4294901760
    %3395 = vmatpush.msra.mxu0 %v3394
    %v3396 = vand.u32 %v1305, 4294901760
    %3397 = vmatpush.msra.mxu0 %v3396
    %v3398 = vand.u32 %v843, 4294901760
    %3399 = vmatpush.msra.mxu0 %v3398
    %v3400 = vand.u32 %v381, 4294901760
    %3401 = vmatpush.msra.mxu0 %v3400
    %v3402 = vand.u32 %v2901, 4294901760
    %v3403 = vsub.f32 %v2901, %v3402
    %v3404 = vand.u32 %v3403, 4294901760
    %3405 = vmatmul.f32.gmra.mxu0 %v3404
    %v3406 = vpop.f32.mrf.mxu0
    %v3407 = vadd.f32 %v3363, %v3406
    %v3408 = vand.u32 %v2903, 4294901760
    %v3409 = vsub.f32 %v2903, %v3408
    %v3410 = vand.u32 %v3409, 4294901760
    %3411 = vmatmul.f32.gmra.mxu0 %v3410
    %v3412 = vpop.f32.mrf.mxu0
    %v3413 = vadd.f32 %v3368, %v3412
    %v3414 = vand.u32 %v2905, 4294901760
    %v3415 = vsub.f32 %v2905, %v3414
    %v3416 = vand.u32 %v3415, 4294901760
    %3417 = vmatmul.f32.gmra.mxu0 %v3416
    %v3418 = vpop.f32.mrf.mxu0
    %v3419 = vadd.f32 %v3373, %v3418
    %v3420 = vand.u32 %v2907, 4294901760
    %v3421 = vsub.f32 %v2907, %v3420
    %v3422 = vand.u32 %v3421, 4294901760
    %3423 = vmatmul.f32.gmra.mxu0 %v3422
    %v3424 = vpop.f32.mrf.mxu0
    %v3425 = vadd.f32 %v3378, %v3424
    %3426 = vdwg.mxu0
    %3427 = vmatpush.msra.mxu0 0.0
    %3428 = vmatpush.msra.mxu0 0.0
    %3429 = vmatpush.msra.mxu0 0.0
    %3430 = vmatpush.msra.mxu0 0.0
    %3431 = vmatpush.msra.mxu0 0.0
    %3432 = vmatpush.msra.mxu0 0.0
    %3433 = vmatpush.msra.mxu0 0.0
    %3434 = vmatpush.msra.mxu0 0.0
    %3435 = vmatpush.msra.mxu0 0.0
    %3436 = vmatpush.msra.mxu0 0.0
    %v3437 = vand.u32 %v2699, 4294901760
    %v3438 = vsub.f32 %v2699, %v3437
    %v3439 = vand.u32 %v3438, 4294901760
    %3440 = vmatpush.msra.mxu0 %v3439
    %v3441 = vand.u32 %v2234, 4294901760
    %v3442 = vsub.f32 %v2234, %v3441
    %v3443 = vand.u32 %v3442, 4294901760
    %3444 = vmatpush.msra.mxu0 %v3443
    %v3445 = vand.u32 %v1769, 4294901760
    %v3446 = vsub.f32 %v1769, %v3445
    %v3447 = vand.u32 %v3446, 4294901760
    %3448 = vmatpush.msra.mxu0 %v3447
    %v3449 = vand.u32 %v1305, 4294901760
    %v3450 = vsub.f32 %v1305, %v3449
    %v3451 = vand.u32 %v3450, 4294901760
    %3452 = vmatpush.msra.mxu0 %v3451
    %v3453 = vand.u32 %v843, 4294901760
    %v3454 = vsub.f32 %v843, %v3453
    %v3455 = vand.u32 %v3454, 4294901760
    %3456 = vmatpush.msra.mxu0 %v3455
    %v3457 = vand.u32 %v381, 4294901760
    %v3458 = vsub.f32 %v381, %v3457
    %v3459 = vand.u32 %v3458, 4294901760
    %3460 = vmatpush.msra.mxu0 %v3459
    %v3461 = vand.u32 %v2901, 4294901760
    %3462 = vmatmul.f32.gmra.mxu0 %v3461
    %v3463 = vpop.f32.mrf.mxu0
    %v3464 = vadd.f32 %v3407, %v3463
    %v3465 = vand.u32 %v2903, 4294901760
    %3466 = vmatmul.f32.gmra.mxu0 %v3465
    %v3467 = vpop.f32.mrf.mxu0
    %v3468 = vadd.f32 %v3413, %v3467
    %v3469 = vand.u32 %v2905, 4294901760
    %3470 = vmatmul.f32.gmra.mxu0 %v3469
    %v3471 = vpop.f32.mrf.mxu0
    %v3472 = vadd.f32 %v3419, %v3471
    %v3473 = vand.u32 %v2907, 4294901760
    %3474 = vmatmul.f32.gmra.mxu0 %v3473
    %v3475 = vpop.f32.mrf.mxu0
    %v3476 = vadd.f32 %v3425, %v3475
    %3477 = vdwg.mxu0
    %3478 = vmatpush.msra.mxu0 0.0
    %3479 = vmatpush.msra.mxu0 0.0
    %3480 = vmatpush.msra.mxu0 0.0
    %3481 = vmatpush.msra.mxu0 0.0
    %3482 = vmatpush.msra.mxu0 0.0
    %3483 = vmatpush.msra.mxu0 0.0
    %3484 = vmatpush.msra.mxu0 0.0
    %3485 = vmatpush.msra.mxu0 0.0
    %3486 = vmatpush.msra.mxu0 0.0
    %3487 = vmatpush.msra.mxu0 0.0
    %v3488 = vand.u32 %v2699, 4294901760
    %3489 = vmatpush.msra.mxu0 %v3488
    %v3490 = vand.u32 %v2234, 4294901760
    %3491 = vmatpush.msra.mxu0 %v3490
    %v3492 = vand.u32 %v1769, 4294901760
    %3493 = vmatpush.msra.mxu0 %v3492
    %v3494 = vand.u32 %v1305, 4294901760
    %3495 = vmatpush.msra.mxu0 %v3494
    %v3496 = vand.u32 %v843, 4294901760
    %3497 = vmatpush.msra.mxu0 %v3496
    %v3498 = vand.u32 %v381, 4294901760
    %3499 = vmatpush.msra.mxu0 %v3498
    %v3500 = vand.u32 %v2901, 4294901760
    %3501 = vmatmul.f32.gmra.mxu0 %v3500
    %v3502 = vpop.f32.mrf.mxu0
    %v3503 = vadd.f32 %v3464, %v3502
    %v3504 = vand.u32 %v2903, 4294901760
    %3505 = vmatmul.f32.gmra.mxu0 %v3504
    %v3506 = vpop.f32.mrf.mxu0
    %v3507 = vadd.f32 %v3468, %v3506
    %v3508 = vand.u32 %v2905, 4294901760
    %3509 = vmatmul.f32.gmra.mxu0 %v3508
    %v3510 = vpop.f32.mrf.mxu0
    %v3511 = vadd.f32 %v3472, %v3510
    %v3512 = vand.u32 %v2907, 4294901760
    %3513 = vmatmul.f32.gmra.mxu0 %v3512
    %v3514 = vpop.f32.mrf.mxu0
    %v3515 = vadd.f32 %v3476, %v3514
    %3516 = vdwg.mxu0
    %3517 = vmatpush.msra.mxu0 0.0
    %3518 = vmatpush.msra.mxu0 0.0
    %3519 = vmatpush.msra.mxu0 0.0
    %3520 = vmatpush.msra.mxu0 0.0
    %3521 = vmatpush.msra.mxu0 0.0
    %3522 = vmatpush.msra.mxu0 0.0
    %3523 = vmatpush.msra.mxu0 0.0
    %3524 = vmatpush.msra.mxu0 0.0
    %3525 = vmatpush.msra.mxu0 0.0
    %3526 = vmatpush.msra.mxu0 0.0
    %v3527 = vand.u32 %v2854, 4294901760
    %3528 = vmatpush.msra.mxu0 %v3527
    %v3529 = vand.u32 %v2389, 4294901760
    %3530 = vmatpush.msra.mxu0 %v3529
    %v3531 = vand.u32 %v1924, 4294901760
    %3532 = vmatpush.msra.mxu0 %v3531
    %v3533 = vand.u32 %v1459, 4294901760
    %3534 = vmatpush.msra.mxu0 %v3533
    %v3535 = vand.u32 %v997, 4294901760
    %3536 = vmatpush.msra.mxu0 %v3535
    %v3537 = vand.u32 %v535, 4294901760
    %3538 = vmatpush.msra.mxu0 %v3537
    %v3539 = vand.u32 %v2901, 4294901760
    %v3540 = vsub.f32 %v2901, %v3539
    %v3541 = vand.u32 %v3540, 4294901760
    %v3542 = vsub.f32 %v3540, %v3541
    %v3543 = vand.u32 %v3542, 4294901760
    %3544 = vmatmul.f32.gmra.mxu0 %v3543
    %v3545 = vpop.f32.mrf.mxu0
    %v3546 = vadd.f32 %v2890, %v3545
    %v3547 = vand.u32 %v2903, 4294901760
    %v3548 = vsub.f32 %v2903, %v3547
    %v3549 = vand.u32 %v3548, 4294901760
    %v3550 = vsub.f32 %v3548, %v3549
    %v3551 = vand.u32 %v3550, 4294901760
    %3552 = vmatmul.f32.gmra.mxu0 %v3551
    %v3553 = vpop.f32.mrf.mxu0
    %v3554 = vadd.f32 %v2893, %v3553
    %v3555 = vand.u32 %v2905, 4294901760
    %v3556 = vsub.f32 %v2905, %v3555
    %v3557 = vand.u32 %v3556, 4294901760
    %v3558 = vsub.f32 %v3556, %v3557
    %v3559 = vand.u32 %v3558, 4294901760
    %3560 = vmatmul.f32.gmra.mxu0 %v3559
    %v3561 = vpop.f32.mrf.mxu0
    %v3562 = vadd.f32 %v2896, %v3561
    %v3563 = vand.u32 %v2907, 4294901760
    %v3564 = vsub.f32 %v2907, %v3563
    %v3565 = vand.u32 %v3564, 4294901760
    %v3566 = vsub.f32 %v3564, %v3565
    %v3567 = vand.u32 %v3566, 4294901760
    %3568 = vmatmul.f32.gmra.mxu0 %v3567
    %v3569 = vpop.f32.mrf.mxu0
    %v3570 = vadd.f32 %v2899, %v3569
    %3571 = vdwg.mxu0
    %3572 = vmatpush.msra.mxu0 0.0
    %3573 = vmatpush.msra.mxu0 0.0
    %3574 = vmatpush.msra.mxu0 0.0
    %3575 = vmatpush.msra.mxu0 0.0
    %3576 = vmatpush.msra.mxu0 0.0
    %3577 = vmatpush.msra.mxu0 0.0
    %3578 = vmatpush.msra.mxu0 0.0
    %3579 = vmatpush.msra.mxu0 0.0
    %3580 = vmatpush.msra.mxu0 0.0
    %3581 = vmatpush.msra.mxu0 0.0
    %v3582 = vand.u32 %v2854, 4294901760
    %v3583 = vsub.f32 %v2854, %v3582
    %v3584 = vand.u32 %v3583, 4294901760
    %v3585 = vsub.f32 %v3583, %v3584
    %v3586 = vand.u32 %v3585, 4294901760
    %3587 = vmatpush.msra.mxu0 %v3586
    %v3588 = vand.u32 %v2389, 4294901760
    %v3589 = vsub.f32 %v2389, %v3588
    %v3590 = vand.u32 %v3589, 4294901760
    %v3591 = vsub.f32 %v3589, %v3590
    %v3592 = vand.u32 %v3591, 4294901760
    %3593 = vmatpush.msra.mxu0 %v3592
    %v3594 = vand.u32 %v1924, 4294901760
    %v3595 = vsub.f32 %v1924, %v3594
    %v3596 = vand.u32 %v3595, 4294901760
    %v3597 = vsub.f32 %v3595, %v3596
    %v3598 = vand.u32 %v3597, 4294901760
    %3599 = vmatpush.msra.mxu0 %v3598
    %v3600 = vand.u32 %v1459, 4294901760
    %v3601 = vsub.f32 %v1459, %v3600
    %v3602 = vand.u32 %v3601, 4294901760
    %v3603 = vsub.f32 %v3601, %v3602
    %v3604 = vand.u32 %v3603, 4294901760
    %3605 = vmatpush.msra.mxu0 %v3604
    %v3606 = vand.u32 %v997, 4294901760
    %v3607 = vsub.f32 %v997, %v3606
    %v3608 = vand.u32 %v3607, 4294901760
    %v3609 = vsub.f32 %v3607, %v3608
    %v3610 = vand.u32 %v3609, 4294901760
    %3611 = vmatpush.msra.mxu0 %v3610
    %v3612 = vand.u32 %v535, 4294901760
    %v3613 = vsub.f32 %v535, %v3612
    %v3614 = vand.u32 %v3613, 4294901760
    %v3615 = vsub.f32 %v3613, %v3614
    %v3616 = vand.u32 %v3615, 4294901760
    %3617 = vmatpush.msra.mxu0 %v3616
    %v3618 = vand.u32 %v2901, 4294901760
    %3619 = vmatmul.f32.gmra.mxu0 %v3618
    %v3620 = vpop.f32.mrf.mxu0
    %v3621 = vadd.f32 %v3546, %v3620
    %v3622 = vand.u32 %v2903, 4294901760
    %3623 = vmatmul.f32.gmra.mxu0 %v3622
    %v3624 = vpop.f32.mrf.mxu0
    %v3625 = vadd.f32 %v3554, %v3624
    %v3626 = vand.u32 %v2905, 4294901760
    %3627 = vmatmul.f32.gmra.mxu0 %v3626
    %v3628 = vpop.f32.mrf.mxu0
    %v3629 = vadd.f32 %v3562, %v3628
    %v3630 = vand.u32 %v2907, 4294901760
    %3631 = vmatmul.f32.gmra.mxu0 %v3630
    %v3632 = vpop.f32.mrf.mxu0
    %v3633 = vadd.f32 %v3570, %v3632
    %3634 = vdwg.mxu0
    %3635 = vmatpush.msra.mxu0 0.0
    %3636 = vmatpush.msra.mxu0 0.0
    %3637 = vmatpush.msra.mxu0 0.0
    %3638 = vmatpush.msra.mxu0 0.0
    %3639 = vmatpush.msra.mxu0 0.0
    %3640 = vmatpush.msra.mxu0 0.0
    %3641 = vmatpush.msra.mxu0 0.0
    %3642 = vmatpush.msra.mxu0 0.0
    %3643 = vmatpush.msra.mxu0 0.0
    %3644 = vmatpush.msra.mxu0 0.0
    %v3645 = vand.u32 %v2854, 4294901760
    %v3646 = vsub.f32 %v2854, %v3645
    %3647 = vmatpush.msra.mxu0 %v3646
    %v3648 = vand.u32 %v2389, 4294901760
    %v3649 = vsub.f32 %v2389, %v3648
    %3650 = vmatpush.msra.mxu0 %v3649
    %v3651 = vand.u32 %v1924, 4294901760
    %v3652 = vsub.f32 %v1924, %v3651
    %3653 = vmatpush.msra.mxu0 %v3652
    %v3654 = vand.u32 %v1459, 4294901760
    %v3655 = vsub.f32 %v1459, %v3654
    %3656 = vmatpush.msra.mxu0 %v3655
    %v3657 = vand.u32 %v997, 4294901760
    %v3658 = vsub.f32 %v997, %v3657
    %3659 = vmatpush.msra.mxu0 %v3658
    %v3660 = vand.u32 %v535, 4294901760
    %v3661 = vsub.f32 %v535, %v3660
    %3662 = vmatpush.msra.mxu0 %v3661
    %v3663 = vand.u32 %v2901, 4294901760
    %v3664 = vsub.f32 %v2901, %v3663
    %3665 = vmatmul.f32.gmra.mxu0 %v3664
    %v3666 = vpop.f32.mrf.mxu0
    %v3667 = vadd.f32 %v3621, %v3666
    %v3668 = vand.u32 %v2903, 4294901760
    %v3669 = vsub.f32 %v2903, %v3668
    %3670 = vmatmul.f32.gmra.mxu0 %v3669
    %v3671 = vpop.f32.mrf.mxu0
    %v3672 = vadd.f32 %v3625, %v3671
    %v3673 = vand.u32 %v2905, 4294901760
    %v3674 = vsub.f32 %v2905, %v3673
    %3675 = vmatmul.f32.gmra.mxu0 %v3674
    %v3676 = vpop.f32.mrf.mxu0
    %v3677 = vadd.f32 %v3629, %v3676
    %v3678 = vand.u32 %v2907, 4294901760
    %v3679 = vsub.f32 %v2907, %v3678
    %3680 = vmatmul.f32.gmra.mxu0 %v3679
    %v3681 = vpop.f32.mrf.mxu0
    %v3682 = vadd.f32 %v3633, %v3681
    %3683 = vdwg.mxu0
    %3684 = vmatpush.msra.mxu0 0.0
    %3685 = vmatpush.msra.mxu0 0.0
    %3686 = vmatpush.msra.mxu0 0.0
    %3687 = vmatpush.msra.mxu0 0.0
    %3688 = vmatpush.msra.mxu0 0.0
    %3689 = vmatpush.msra.mxu0 0.0
    %3690 = vmatpush.msra.mxu0 0.0
    %3691 = vmatpush.msra.mxu0 0.0
    %3692 = vmatpush.msra.mxu0 0.0
    %3693 = vmatpush.msra.mxu0 0.0
    %v3694 = vand.u32 %v2854, 4294901760
    %3695 = vmatpush.msra.mxu0 %v3694
    %v3696 = vand.u32 %v2389, 4294901760
    %3697 = vmatpush.msra.mxu0 %v3696
    %v3698 = vand.u32 %v1924, 4294901760
    %3699 = vmatpush.msra.mxu0 %v3698
    %v3700 = vand.u32 %v1459, 4294901760
    %3701 = vmatpush.msra.mxu0 %v3700
    %v3702 = vand.u32 %v997, 4294901760
    %3703 = vmatpush.msra.mxu0 %v3702
    %v3704 = vand.u32 %v535, 4294901760
    %3705 = vmatpush.msra.mxu0 %v3704
    %v3706 = vand.u32 %v2901, 4294901760
    %v3707 = vsub.f32 %v2901, %v3706
    %v3708 = vand.u32 %v3707, 4294901760
    %3709 = vmatmul.f32.gmra.mxu0 %v3708
    %v3710 = vpop.f32.mrf.mxu0
    %v3711 = vadd.f32 %v3667, %v3710
    %v3712 = vand.u32 %v2903, 4294901760
    %v3713 = vsub.f32 %v2903, %v3712
    %v3714 = vand.u32 %v3713, 4294901760
    %3715 = vmatmul.f32.gmra.mxu0 %v3714
    %v3716 = vpop.f32.mrf.mxu0
    %v3717 = vadd.f32 %v3672, %v3716
    %v3718 = vand.u32 %v2905, 4294901760
    %v3719 = vsub.f32 %v2905, %v3718
    %v3720 = vand.u32 %v3719, 4294901760
    %3721 = vmatmul.f32.gmra.mxu0 %v3720
    %v3722 = vpop.f32.mrf.mxu0
    %v3723 = vadd.f32 %v3677, %v3722
    %v3724 = vand.u32 %v2907, 4294901760
    %v3725 = vsub.f32 %v2907, %v3724
    %v3726 = vand.u32 %v3725, 4294901760
    %3727 = vmatmul.f32.gmra.mxu0 %v3726
    %v3728 = vpop.f32.mrf.mxu0
    %v3729 = vadd.f32 %v3682, %v3728
    %3730 = vdwg.mxu0
    %3731 = vmatpush.msra.mxu0 0.0
    %3732 = vmatpush.msra.mxu0 0.0
    %3733 = vmatpush.msra.mxu0 0.0
    %3734 = vmatpush.msra.mxu0 0.0
    %3735 = vmatpush.msra.mxu0 0.0
    %3736 = vmatpush.msra.mxu0 0.0
    %3737 = vmatpush.msra.mxu0 0.0
    %3738 = vmatpush.msra.mxu0 0.0
    %3739 = vmatpush.msra.mxu0 0.0
    %3740 = vmatpush.msra.mxu0 0.0
    %v3741 = vand.u32 %v2854, 4294901760
    %v3742 = vsub.f32 %v2854, %v3741
    %v3743 = vand.u32 %v3742, 4294901760
    %3744 = vmatpush.msra.mxu0 %v3743
    %v3745 = vand.u32 %v2389, 4294901760
    %v3746 = vsub.f32 %v2389, %v3745
    %v3747 = vand.u32 %v3746, 4294901760
    %3748 = vmatpush.msra.mxu0 %v3747
    %v3749 = vand.u32 %v1924, 4294901760
    %v3750 = vsub.f32 %v1924, %v3749
    %v3751 = vand.u32 %v3750, 4294901760
    %3752 = vmatpush.msra.mxu0 %v3751
    %v3753 = vand.u32 %v1459, 4294901760
    %v3754 = vsub.f32 %v1459, %v3753
    %v3755 = vand.u32 %v3754, 4294901760
    %3756 = vmatpush.msra.mxu0 %v3755
    %v3757 = vand.u32 %v997, 4294901760
    %v3758 = vsub.f32 %v997, %v3757
    %v3759 = vand.u32 %v3758, 4294901760
    %3760 = vmatpush.msra.mxu0 %v3759
    %v3761 = vand.u32 %v535, 4294901760
    %v3762 = vsub.f32 %v535, %v3761
    %v3763 = vand.u32 %v3762, 4294901760
    %3764 = vmatpush.msra.mxu0 %v3763
    %v3765 = vand.u32 %v2901, 4294901760
    %3766 = vmatmul.f32.gmra.mxu0 %v3765
    %v3767 = vpop.f32.mrf.mxu0
    %v3768 = vadd.f32 %v3711, %v3767
    %v3769 = vand.u32 %v2903, 4294901760
    %3770 = vmatmul.f32.gmra.mxu0 %v3769
    %v3771 = vpop.f32.mrf.mxu0
    %v3772 = vadd.f32 %v3717, %v3771
    %v3773 = vand.u32 %v2905, 4294901760
    %3774 = vmatmul.f32.gmra.mxu0 %v3773
    %v3775 = vpop.f32.mrf.mxu0
    %v3776 = vadd.f32 %v3723, %v3775
    %v3777 = vand.u32 %v2907, 4294901760
    %3778 = vmatmul.f32.gmra.mxu0 %v3777
    %v3779 = vpop.f32.mrf.mxu0
    %v3780 = vadd.f32 %v3729, %v3779
    %3781 = vdwg.mxu0
    %3782 = vmatpush.msra.mxu0 0.0
    %3783 = vmatpush.msra.mxu0 0.0
    %3784 = vmatpush.msra.mxu0 0.0
    %3785 = vmatpush.msra.mxu0 0.0
    %3786 = vmatpush.msra.mxu0 0.0
    %3787 = vmatpush.msra.mxu0 0.0
    %3788 = vmatpush.msra.mxu0 0.0
    %3789 = vmatpush.msra.mxu0 0.0
    %3790 = vmatpush.msra.mxu0 0.0
    %3791 = vmatpush.msra.mxu0 0.0
    %v3792 = vand.u32 %v2854, 4294901760
    %3793 = vmatpush.msra.mxu0 %v3792
    %v3794 = vand.u32 %v2389, 4294901760
    %3795 = vmatpush.msra.mxu0 %v3794
    %v3796 = vand.u32 %v1924, 4294901760
    %3797 = vmatpush.msra.mxu0 %v3796
    %v3798 = vand.u32 %v1459, 4294901760
    %3799 = vmatpush.msra.mxu0 %v3798
    %v3800 = vand.u32 %v997, 4294901760
    %3801 = vmatpush.msra.mxu0 %v3800
    %v3802 = vand.u32 %v535, 4294901760
    %3803 = vmatpush.msra.mxu0 %v3802
    %v3804 = vand.u32 %v2901, 4294901760
    %3805 = vmatmul.f32.gmra.mxu0 %v3804
    %v3806 = vpop.f32.mrf.mxu0
    %v3807 = vadd.f32 %v3768, %v3806
    %v3808 = vand.u32 %v2903, 4294901760
    %3809 = vmatmul.f32.gmra.mxu0 %v3808
    %v3810 = vpop.f32.mrf.mxu0
    %v3811 = vadd.f32 %v3772, %v3810
    %v3812 = vand.u32 %v2905, 4294901760
    %3813 = vmatmul.f32.gmra.mxu0 %v3812
    %v3814 = vpop.f32.mrf.mxu0
    %v3815 = vadd.f32 %v3776, %v3814
    %v3816 = vand.u32 %v2907, 4294901760
    %3817 = vmatmul.f32.gmra.mxu0 %v3816
    %v3818 = vpop.f32.mrf.mxu0
    %v3819 = vadd.f32 %v3780, %v3818
    %3820 = vdwg.mxu0
    %3821 = vset.pattern.permute.xlu0 49
    %3822 = vperm.xlu0 %3821, %v2855
    %v3823 = vpop.permute.xlu0 %3822
    %3825 = vset.pattern.permute.xlu0 49
    %3826 = vperm.xlu0 %3825, %v2856
    %v3827 = vpop.permute.xlu0 %3826
    %3829 = vset.pattern.permute.xlu0 49
    %3830 = vperm.xlu0 %3829, %v2857
    %v3831 = vpop.permute.xlu0 %3830
    %3833 = vset.pattern.permute.xlu0 49
    %3834 = vperm.xlu0 %3833, %v2858
    %v3835 = vpop.permute.xlu0 %3834
    %v3837 = vadd.f32 %v3199, %v3823
    %v3838 = vadd.f32 %v3503, %v3823
    %v3839 = vadd.f32 %v3807, %v3823
    %v3840 = vadd.f32 %v3203, %v3827
    %v3841 = vadd.f32 %v3507, %v3827
    %v3842 = vadd.f32 %v3811, %v3827
    %v3843 = vadd.f32 %v3207, %v3831
    %v3844 = vadd.f32 %v3511, %v3831
    %v3845 = vadd.f32 %v3815, %v3831
    %v3846 = vadd.f32 %v3211, %v3835
    %v3847 = vadd.f32 %v3515, %v3835
    %v3848 = vadd.f32 %v3819, %v3835
    %v3849 = vtanh.pop %v3837
    %v3850 = vtanh.pop %v3838
    %v3851 = vtanh.pop %v3839
    %v3852 = vtanh.pop %v3840
    %v3853 = vtanh.pop %v3841
    %v3854 = vtanh.pop %v3842
    %v3855 = vtanh.pop %v3843
    %v3856 = vtanh.pop %v3844
    %v3857 = vtanh.pop %v3845
    %v3858 = vtanh.pop %v3846
    %v3859 = vtanh.pop %v3847
    %v3860 = vtanh.pop %v3848
    %v3861 = vld [vmem:[#allocation2] sm:$0xff]
    %v3862 = vld [vmem:[#allocation2 + $0x8] sm:$0xff]
    %v3863 = vld [vmem:[#allocation2 + $0x10] sm:$0xff]
    %v3864 = vld [vmem:[#allocation2 + $0x18] sm:$0xff]
    %3866 = vset.pattern.permute.xlu0 32
    %3867 = vperm.xlu0 %3866, %v3861
    %v3868 = vpop.permute.xlu0 %3867
    %3871 = vset.pattern.permute.xlu0 32
    %3872 = vperm.xlu0 %3871, %v3862
    %v3873 = vpop.permute.xlu0 %3872
    %3876 = vset.pattern.permute.xlu0 32
    %3877 = vperm.xlu0 %3876, %v3863
    %v3878 = vpop.permute.xlu0 %3877
    %3881 = vset.pattern.permute.xlu0 32
    %3882 = vperm.xlu0 %3881, %v3864
    %v3883 = vpop.permute.xlu0 %3882
    %vm3885 = vcmask 261120
    %v3886 = vsel %vm3885, %v3861, 0
    %v3888 = vsel %vm3885, %v3862, 0
    %v3890 = vsel %vm3885, %v3863, 0
    %v3892 = vsel %vm3885, %v3864, 0
    %3894 = vmatpush.msra.mxu0 0.0
    %3895 = vmatpush.msra.mxu0 0.0
    %3896 = vmatpush.msra.mxu0 0.0
    %3897 = vmatpush.msra.mxu0 0.0
    %3898 = vmatpush.msra.mxu0 0.0
    %3899 = vmatpush.msra.mxu0 0.0
    %3900 = vmatpush.msra.mxu0 0.0
    %3901 = vmatpush.msra.mxu0 0.0
    %3902 = vmatpush.msra.mxu0 0.0
    %3903 = vmatpush.msra.mxu0 0.0
    %3904 = vmatpush.msra.mxu0 0.0
    %3905 = vmatpush.msra.mxu0 0.0
    %v3906 = vand.u32 %v3858, 4294901760
    %3907 = vmatpush.msra.mxu0 %v3906
    %v3908 = vand.u32 %v3855, 4294901760
    %3909 = vmatpush.msra.mxu0 %v3908
    %v3910 = vand.u32 %v3852, 4294901760
    %3911 = vmatpush.msra.mxu0 %v3910
    %v3912 = vand.u32 %v3849, 4294901760
    %3913 = vmatpush.msra.mxu0 %v3912
    %v3914 = vand.u32 %v3886, 4294901760
    %v3915 = vsub.f32 %v3886, %v3914
    %v3916 = vand.u32 %v3915, 4294901760
    %v3917 = vsub.f32 %v3915, %v3916
    %v3918 = vand.u32 %v3917, 4294901760
    %3919 = vmatmul.f32.gmra.mxu0 %v3918
    %v3920 = vpop.f32.mrf.mxu0
    %v3921 = vadd.f32 %v3868, %v3920
    %v3922 = vand.u32 %v3888, 4294901760
    %v3923 = vsub.f32 %v3888, %v3922
    %v3924 = vand.u32 %v3923, 4294901760
    %v3925 = vsub.f32 %v3923, %v3924
    %v3926 = vand.u32 %v3925, 4294901760
    %3927 = vmatmul.f32.gmra.mxu0 %v3926
    %v3928 = vpop.f32.mrf.mxu0
    %v3929 = vadd.f32 %v3873, %v3928
    %v3930 = vand.u32 %v3890, 4294901760
    %v3931 = vsub.f32 %v3890, %v3930
    %v3932 = vand.u32 %v3931, 4294901760
    %v3933 = vsub.f32 %v3931, %v3932
    %v3934 = vand.u32 %v3933, 4294901760
    %3935 = vmatmul.f32.gmra.mxu0 %v3934
    %v3936 = vpop.f32.mrf.mxu0
    %v3937 = vadd.f32 %v3878, %v3936
    %v3938 = vand.u32 %v3892, 4294901760
    %v3939 = vsub.f32 %v3892, %v3938
    %v3940 = vand.u32 %v3939, 4294901760
    %v3941 = vsub.f32 %v3939, %v3940
    %v3942 = vand.u32 %v3941, 4294901760
    %3943 = vmatmul.f32.gmra.mxu0 %v3942
    %v3944 = vpop.f32.mrf.mxu0
    %v3945 = vadd.f32 %v3883, %v3944
    %3946 = vdwg.mxu0
    %3947 = vmatpush.msra.mxu0 0.0
    %3948 = vmatpush.msra.mxu0 0.0
    %3949 = vmatpush.msra.mxu0 0.0
    %3950 = vmatpush.msra.mxu0 0.0
    %3951 = vmatpush.msra.mxu0 0.0
    %3952 = vmatpush.msra.mxu0 0.0
    %3953 = vmatpush.msra.mxu0 0.0
    %3954 = vmatpush.msra.mxu0 0.0
    %3955 = vmatpush.msra.mxu0 0.0
    %3956 = vmatpush.msra.mxu0 0.0
    %3957 = vmatpush.msra.mxu0 0.0
    %3958 = vmatpush.msra.mxu0 0.0
    %v3959 = vand.u32 %v3858, 4294901760
    %v3960 = vsub.f32 %v3858, %v3959
    %v3961 = vand.u32 %v3960, 4294901760
    %v3962 = vsub.f32 %v3960, %v3961
    %v3963 = vand.u32 %v3962, 4294901760
    %3964 = vmatpush.msra.mxu0 %v3963
    %v3965 = vand.u32 %v3855, 4294901760
    %v3966 = vsub.f32 %v3855, %v3965
    %v3967 = vand.u32 %v3966, 4294901760
    %v3968 = vsub.f32 %v3966, %v3967
    %v3969 = vand.u32 %v3968, 4294901760
    %3970 = vmatpush.msra.mxu0 %v3969
    %v3971 = vand.u32 %v3852, 4294901760
    %v3972 = vsub.f32 %v3852, %v3971
    %v3973 = vand.u32 %v3972, 4294901760
    %v3974 = vsub.f32 %v3972, %v3973
    %v3975 = vand.u32 %v3974, 4294901760
    %3976 = vmatpush.msra.mxu0 %v3975
    %v3977 = vand.u32 %v3849, 4294901760
    %v3978 = vsub.f32 %v3849, %v3977
    %v3979 = vand.u32 %v3978, 4294901760
    %v3980 = vsub.f32 %v3978, %v3979
    %v3981 = vand.u32 %v3980, 4294901760
    %3982 = vmatpush.msra.mxu0 %v3981
    %v3983 = vand.u32 %v3886, 4294901760
    %3984 = vmatmul.f32.gmra.mxu0 %v3983
    %v3985 = vpop.f32.mrf.mxu0
    %v3986 = vadd.f32 %v3921, %v3985
    %v3987 = vand.u32 %v3888, 4294901760
    %3988 = vmatmul.f32.gmra.mxu0 %v3987
    %v3989 = vpop.f32.mrf.mxu0
    %v3990 = vadd.f32 %v3929, %v3989
    %v3991 = vand.u32 %v3890, 4294901760
    %3992 = vmatmul.f32.gmra.mxu0 %v3991
    %v3993 = vpop.f32.mrf.mxu0
    %v3994 = vadd.f32 %v3937, %v3993
    %v3995 = vand.u32 %v3892, 4294901760
    %3996 = vmatmul.f32.gmra.mxu0 %v3995
    %v3997 = vpop.f32.mrf.mxu0
    %v3998 = vadd.f32 %v3945, %v3997
    %3999 = vdwg.mxu0
    %4000 = vmatpush.msra.mxu0 0.0
    %4001 = vmatpush.msra.mxu0 0.0
    %4002 = vmatpush.msra.mxu0 0.0
    %4003 = vmatpush.msra.mxu0 0.0
    %4004 = vmatpush.msra.mxu0 0.0
    %4005 = vmatpush.msra.mxu0 0.0
    %4006 = vmatpush.msra.mxu0 0.0
    %4007 = vmatpush.msra.mxu0 0.0
    %4008 = vmatpush.msra.mxu0 0.0
    %4009 = vmatpush.msra.mxu0 0.0
    %4010 = vmatpush.msra.mxu0 0.0
    %4011 = vmatpush.msra.mxu0 0.0
    %v4012 = vand.u32 %v3858, 4294901760
    %v4013 = vsub.f32 %v3858, %v4012
    %4014 = vmatpush.msra.mxu0 %v4013
    %v4015 = vand.u32 %v3855, 4294901760
    %v4016 = vsub.f32 %v3855, %v4015
    %4017 = vmatpush.msra.mxu0 %v4016
    %v4018 = vand.u32 %v3852, 4294901760
    %v4019 = vsub.f32 %v3852, %v4018
    %4020 = vmatpush.msra.mxu0 %v4019
    %v4021 = vand.u32 %v3849, 4294901760
    %v4022 = vsub.f32 %v3849, %v4021
    %4023 = vmatpush.msra.mxu0 %v4022
    %v4024 = vand.u32 %v3886, 4294901760
    %v4025 = vsub.f32 %v3886, %v4024
    %4026 = vmatmul.f32.gmra.mxu0 %v4025
    %v4027 = vpop.f32.mrf.mxu0
    %v4028 = vadd.f32 %v3986, %v4027
    %v4029 = vand.u32 %v3888, 4294901760
    %v4030 = vsub.f32 %v3888, %v4029
    %4031 = vmatmul.f32.gmra.mxu0 %v4030
    %v4032 = vpop.f32.mrf.mxu0
    %v4033 = vadd.f32 %v3990, %v4032
    %v4034 = vand.u32 %v3890, 4294901760
    %v4035 = vsub.f32 %v3890, %v4034
    %4036 = vmatmul.f32.gmra.mxu0 %v4035
    %v4037 = vpop.f32.mrf.mxu0
    %v4038 = vadd.f32 %v3994, %v4037
    %v4039 = vand.u32 %v3892, 4294901760
    %v4040 = vsub.f32 %v3892, %v4039
    %4041 = vmatmul.f32.gmra.mxu0 %v4040
    %v4042 = vpop.f32.mrf.mxu0
    %v4043 = vadd.f32 %v3998, %v4042
    %4044 = vdwg.mxu0
    %4045 = vmatpush.msra.mxu0 0.0
    %4046 = vmatpush.msra.mxu0 0.0
    %4047 = vmatpush.msra.mxu0 0.0
    %4048 = vmatpush.msra.mxu0 0.0
    %4049 = vmatpush.msra.mxu0 0.0
    %4050 = vmatpush.msra.mxu0 0.0
    %4051 = vmatpush.msra.mxu0 0.0
    %4052 = vmatpush.msra.mxu0 0.0
    %4053 = vmatpush.msra.mxu0 0.0
    %4054 = vmatpush.msra.mxu0 0.0
    %4055 = vmatpush.msra.mxu0 0.0
    %4056 = vmatpush.msra.mxu0 0.0
    %v4057 = vand.u32 %v3858, 4294901760
    %4058 = vmatpush.msra.mxu0 %v4057
    %v4059 = vand.u32 %v3855, 4294901760
    %4060 = vmatpush.msra.mxu0 %v4059
    %v4061 = vand.u32 %v3852, 4294901760
    %4062 = vmatpush.msra.mxu0 %v4061
    %v4063 = vand.u32 %v3849, 4294901760
    %4064 = vmatpush.msra.mxu0 %v4063
    %v4065 = vand.u32 %v3886, 4294901760
    %v4066 = vsub.f32 %v3886, %v4065
    %v4067 = vand.u32 %v4066, 4294901760
    %4068 = vmatmul.f32.gmra.mxu0 %v4067
    %v4069 = vpop.f32.mrf.mxu0
    %v4070 = vadd.f32 %v4028, %v4069
    %v4071 = vand.u32 %v3888, 4294901760
    %v4072 = vsub.f32 %v3888, %v4071
    %v4073 = vand.u32 %v4072, 4294901760
    %4074 = vmatmul.f32.gmra.mxu0 %v4073
    %v4075 = vpop.f32.mrf.mxu0
    %v4076 = vadd.f32 %v4033, %v4075
    %v4077 = vand.u32 %v3890, 4294901760
    %v4078 = vsub.f32 %v3890, %v4077
    %v4079 = vand.u32 %v4078, 4294901760
    %4080 = vmatmul.f32.gmra.mxu0 %v4079
    %v4081 = vpop.f32.mrf.mxu0
    %v4082 = vadd.f32 %v4038, %v4081
    %v4083 = vand.u32 %v3892, 4294901760
    %v4084 = vsub.f32 %v3892, %v4083
    %v4085 = vand.u32 %v4084, 4294901760
    %4086 = vmatmul.f32.gmra.mxu0 %v4085
    %v4087 = vpop.f32.mrf.mxu0
    %v4088 = vadd.f32 %v4043, %v4087
    %4089 = vdwg.mxu0
    %4090 = vmatpush.msra.mxu0 0.0
    %4091 = vmatpush.msra.mxu0 0.0
    %4092 = vmatpush.msra.mxu0 0.0
    %4093 = vmatpush.msra.mxu0 0.0
    %4094 = vmatpush.msra.mxu0 0.0
    %4095 = vmatpush.msra.mxu0 0.0
    %4096 = vmatpush.msra.mxu0 0.0
    %4097 = vmatpush.msra.mxu0 0.0
    %4098 = vmatpush.msra.mxu0 0.0
    %4099 = vmatpush.msra.mxu0 0.0
    %4100 = vmatpush.msra.mxu0 0.0
    %4101 = vmatpush.msra.mxu0 0.0
    %v4102 = vand.u32 %v3858, 4294901760
    %v4103 = vsub.f32 %v3858, %v4102
    %v4104 = vand.u32 %v4103, 4294901760
    %4105 = vmatpush.msra.mxu0 %v4104
    %v4106 = vand.u32 %v3855, 4294901760
    %v4107 = vsub.f32 %v3855, %v4106
    %v4108 = vand.u32 %v4107, 4294901760
    %4109 = vmatpush.msra.mxu0 %v4108
    %v4110 = vand.u32 %v3852, 4294901760
    %v4111 = vsub.f32 %v3852, %v4110
    %v4112 = vand.u32 %v4111, 4294901760
    %4113 = vmatpush.msra.mxu0 %v4112
    %v4114 = vand.u32 %v3849, 4294901760
    %v4115 = vsub.f32 %v3849, %v4114
    %v4116 = vand.u32 %v4115, 4294901760
    %4117 = vmatpush.msra.mxu0 %v4116
    %v4118 = vand.u32 %v3886, 4294901760
    %4119 = vmatmul.f32.gmra.mxu0 %v4118
    %v4120 = vpop.f32.mrf.mxu0
    %v4121 = vadd.f32 %v4070, %v4120
    %v4122 = vand.u32 %v3888, 4294901760
    %4123 = vmatmul.f32.gmra.mxu0 %v4122
    %v4124 = vpop.f32.mrf.mxu0
    %v4125 = vadd.f32 %v4076, %v4124
    %v4126 = vand.u32 %v3890, 4294901760
    %4127 = vmatmul.f32.gmra.mxu0 %v4126
    %v4128 = vpop.f32.mrf.mxu0
    %v4129 = vadd.f32 %v4082, %v4128
    %v4130 = vand.u32 %v3892, 4294901760
    %4131 = vmatmul.f32.gmra.mxu0 %v4130
    %v4132 = vpop.f32.mrf.mxu0
    %v4133 = vadd.f32 %v4088, %v4132
    %4134 = vdwg.mxu0
    %4135 = vmatpush.msra.mxu0 0.0
    %4136 = vmatpush.msra.mxu0 0.0
    %4137 = vmatpush.msra.mxu0 0.0
    %4138 = vmatpush.msra.mxu0 0.0
    %4139 = vmatpush.msra.mxu0 0.0
    %4140 = vmatpush.msra.mxu0 0.0
    %4141 = vmatpush.msra.mxu0 0.0
    %4142 = vmatpush.msra.mxu0 0.0
    %4143 = vmatpush.msra.mxu0 0.0
    %4144 = vmatpush.msra.mxu0 0.0
    %4145 = vmatpush.msra.mxu0 0.0
    %4146 = vmatpush.msra.mxu0 0.0
    %v4147 = vand.u32 %v3858, 4294901760
    %4148 = vmatpush.msra.mxu0 %v4147
    %v4149 = vand.u32 %v3855, 4294901760
    %4150 = vmatpush.msra.mxu0 %v4149
    %v4151 = vand.u32 %v3852, 4294901760
    %4152 = vmatpush.msra.mxu0 %v4151
    %v4153 = vand.u32 %v3849, 4294901760
    %4154 = vmatpush.msra.mxu0 %v4153
    %v4155 = vand.u32 %v3886, 4294901760
    %4156 = vmatmul.f32.gmra.mxu0 %v4155
    %v4157 = vpop.f32.mrf.mxu0
    %v4158 = vadd.f32 %v4121, %v4157
    %v4159 = vand.u32 %v3888, 4294901760
    %4160 = vmatmul.f32.gmra.mxu0 %v4159
    %v4161 = vpop.f32.mrf.mxu0
    %v4162 = vadd.f32 %v4125, %v4161
    %v4163 = vand.u32 %v3890, 4294901760
    %4164 = vmatmul.f32.gmra.mxu0 %v4163
    %v4165 = vpop.f32.mrf.mxu0
    %v4166 = vadd.f32 %v4129, %v4165
    %v4167 = vand.u32 %v3892, 4294901760
    %4168 = vmatmul.f32.gmra.mxu0 %v4167
    %v4169 = vpop.f32.mrf.mxu0
    %v4170 = vadd.f32 %v4133, %v4169
    %4171 = vdwg.mxu0
    %4172 = vmatpush.msra.mxu0 0.0
    %4173 = vmatpush.msra.mxu0 0.0
    %4174 = vmatpush.msra.mxu0 0.0
    %4175 = vmatpush.msra.mxu0 0.0
    %4176 = vmatpush.msra.mxu0 0.0
    %4177 = vmatpush.msra.mxu0 0.0
    %4178 = vmatpush.msra.mxu0 0.0
    %4179 = vmatpush.msra.mxu0 0.0
    %4180 = vmatpush.msra.mxu0 0.0
    %4181 = vmatpush.msra.mxu0 0.0
    %4182 = vmatpush.msra.mxu0 0.0
    %4183 = vmatpush.msra.mxu0 0.0
    %v4184 = vand.u32 %v3859, 4294901760
    %4185 = vmatpush.msra.mxu0 %v4184
    %v4186 = vand.u32 %v3856, 4294901760
    %4187 = vmatpush.msra.mxu0 %v4186
    %v4188 = vand.u32 %v3853, 4294901760
    %4189 = vmatpush.msra.mxu0 %v4188
    %v4190 = vand.u32 %v3850, 4294901760
    %4191 = vmatpush.msra.mxu0 %v4190
    %v4192 = vand.u32 %v3886, 4294901760
    %v4193 = vsub.f32 %v3886, %v4192
    %v4194 = vand.u32 %v4193, 4294901760
    %v4195 = vsub.f32 %v4193, %v4194
    %v4196 = vand.u32 %v4195, 4294901760
    %4197 = vmatmul.f32.gmra.mxu0 %v4196
    %v4198 = vpop.f32.mrf.mxu0
    %v4199 = vadd.f32 %v3868, %v4198
    %v4200 = vand.u32 %v3888, 4294901760
    %v4201 = vsub.f32 %v3888, %v4200
    %v4202 = vand.u32 %v4201, 4294901760
    %v4203 = vsub.f32 %v4201, %v4202
    %v4204 = vand.u32 %v4203, 4294901760
    %4205 = vmatmul.f32.gmra.mxu0 %v4204
    %v4206 = vpop.f32.mrf.mxu0
    %v4207 = vadd.f32 %v3873, %v4206
    %v4208 = vand.u32 %v3890, 4294901760
    %v4209 = vsub.f32 %v3890, %v4208
    %v4210 = vand.u32 %v4209, 4294901760
    %v4211 = vsub.f32 %v4209, %v4210
    %v4212 = vand.u32 %v4211, 4294901760
    %4213 = vmatmul.f32.gmra.mxu0 %v4212
    %v4214 = vpop.f32.mrf.mxu0
    %v4215 = vadd.f32 %v3878, %v4214
    %v4216 = vand.u32 %v3892, 4294901760
    %v4217 = vsub.f32 %v3892, %v4216
    %v4218 = vand.u32 %v4217, 4294901760
    %v4219 = vsub.f32 %v4217, %v4218
    %v4220 = vand.u32 %v4219, 4294901760
    %4221 = vmatmul.f32.gmra.mxu0 %v4220
    %v4222 = vpop.f32.mrf.mxu0
    %v4223 = vadd.f32 %v3883, %v4222
    %4224 = vdwg.mxu0
    %4225 = vmatpush.msra.mxu0 0.0
    %4226 = vmatpush.msra.mxu0 0.0
    %4227 = vmatpush.msra.mxu0 0.0
    %4228 = vmatpush.msra.mxu0 0.0
    %4229 = vmatpush.msra.mxu0 0.0
    %4230 = vmatpush.msra.mxu0 0.0
    %4231 = vmatpush.msra.mxu0 0.0
    %4232 = vmatpush.msra.mxu0 0.0
    %4233 = vmatpush.msra.mxu0 0.0
    %4234 = vmatpush.msra.mxu0 0.0
    %4235 = vmatpush.msra.mxu0 0.0
    %4236 = vmatpush.msra.mxu0 0.0
    %v4237 = vand.u32 %v3859, 4294901760
    %v4238 = vsub.f32 %v3859, %v4237
    %v4239 = vand.u32 %v4238, 4294901760
    %v4240 = vsub.f32 %v4238, %v4239
    %v4241 = vand.u32 %v4240, 4294901760
    %4242 = vmatpush.msra.mxu0 %v4241
    %v4243 = vand.u32 %v3856, 4294901760
    %v4244 = vsub.f32 %v3856, %v4243
    %v4245 = vand.u32 %v4244, 4294901760
    %v4246 = vsub.f32 %v4244, %v4245
    %v4247 = vand.u32 %v4246, 4294901760
    %4248 = vmatpush.msra.mxu0 %v4247
    %v4249 = vand.u32 %v3853, 4294901760
    %v4250 = vsub.f32 %v3853, %v4249
    %v4251 = vand.u32 %v4250, 4294901760
    %v4252 = vsub.f32 %v4250, %v4251
    %v4253 = vand.u32 %v4252, 4294901760
    %4254 = vmatpush.msra.mxu0 %v4253
    %v4255 = vand.u32 %v3850, 4294901760
    %v4256 = vsub.f32 %v3850, %v4255
    %v4257 = vand.u32 %v4256, 4294901760
    %v4258 = vsub.f32 %v4256, %v4257
    %v4259 = vand.u32 %v4258, 4294901760
    %4260 = vmatpush.msra.mxu0 %v4259
    %v4261 = vand.u32 %v3886, 4294901760
    %4262 = vmatmul.f32.gmra.mxu0 %v4261
    %v4263 = vpop.f32.mrf.mxu0
    %v4264 = vadd.f32 %v4199, %v4263
    %v4265 = vand.u32 %v3888, 4294901760
    %4266 = vmatmul.f32.gmra.mxu0 %v4265
    %v4267 = vpop.f32.mrf.mxu0
    %v4268 = vadd.f32 %v4207, %v4267
    %v4269 = vand.u32 %v3890, 4294901760
    %4270 = vmatmul.f32.gmra.mxu0 %v4269
    %v4271 = vpop.f32.mrf.mxu0
    %v4272 = vadd.f32 %v4215, %v4271
    %v4273 = vand.u32 %v3892, 4294901760
    %4274 = vmatmul.f32.gmra.mxu0 %v4273
    %v4275 = vpop.f32.mrf.mxu0
    %v4276 = vadd.f32 %v4223, %v4275
    %4277 = vdwg.mxu0
    %4278 = vmatpush.msra.mxu0 0.0
    %4279 = vmatpush.msra.mxu0 0.0
    %4280 = vmatpush.msra.mxu0 0.0
    %4281 = vmatpush.msra.mxu0 0.0
    %4282 = vmatpush.msra.mxu0 0.0
    %4283 = vmatpush.msra.mxu0 0.0
    %4284 = vmatpush.msra.mxu0 0.0
    %4285 = vmatpush.msra.mxu0 0.0
    %4286 = vmatpush.msra.mxu0 0.0
    %4287 = vmatpush.msra.mxu0 0.0
    %4288 = vmatpush.msra.mxu0 0.0
    %4289 = vmatpush.msra.mxu0 0.0
    %v4290 = vand.u32 %v3859, 4294901760
    %v4291 = vsub.f32 %v3859, %v4290
    %4292 = vmatpush.msra.mxu0 %v4291
    %v4293 = vand.u32 %v3856, 4294901760
    %v4294 = vsub.f32 %v3856, %v4293
    %4295 = vmatpush.msra.mxu0 %v4294
    %v4296 = vand.u32 %v3853, 4294901760
    %v4297 = vsub.f32 %v3853, %v4296
    %4298 = vmatpush.msra.mxu0 %v4297
    %v4299 = vand.u32 %v3850, 4294901760
    %v4300 = vsub.f32 %v3850, %v4299
    %4301 = vmatpush.msra.mxu0 %v4300
    %v4302 = vand.u32 %v3886, 4294901760
    %v4303 = vsub.f32 %v3886, %v4302
    %4304 = vmatmul.f32.gmra.mxu0 %v4303
    %v4305 = vpop.f32.mrf.mxu0
    %v4306 = vadd.f32 %v4264, %v4305
    %v4307 = vand.u32 %v3888, 4294901760
    %v4308 = vsub.f32 %v3888, %v4307
    %4309 = vmatmul.f32.gmra.mxu0 %v4308
    %v4310 = vpop.f32.mrf.mxu0
    %v4311 = vadd.f32 %v4268, %v4310
    %v4312 = vand.u32 %v3890, 4294901760
    %v4313 = vsub.f32 %v3890, %v4312
    %4314 = vmatmul.f32.gmra.mxu0 %v4313
    %v4315 = vpop.f32.mrf.mxu0
    %v4316 = vadd.f32 %v4272, %v4315
    %v4317 = vand.u32 %v3892, 4294901760
    %v4318 = vsub.f32 %v3892, %v4317
    %4319 = vmatmul.f32.gmra.mxu0 %v4318
    %v4320 = vpop.f32.mrf.mxu0
    %v4321 = vadd.f32 %v4276, %v4320
    %4322 = vdwg.mxu0
    %4323 = vmatpush.msra.mxu0 0.0
    %4324 = vmatpush.msra.mxu0 0.0
    %4325 = vmatpush.msra.mxu0 0.0
    %4326 = vmatpush.msra.mxu0 0.0
    %4327 = vmatpush.msra.mxu0 0.0
    %4328 = vmatpush.msra.mxu0 0.0
    %4329 = vmatpush.msra.mxu0 0.0
    %4330 = vmatpush.msra.mxu0 0.0
    %4331 = vmatpush.msra.mxu0 0.0
    %4332 = vmatpush.msra.mxu0 0.0
    %4333 = vmatpush.msra.mxu0 0.0
    %4334 = vmatpush.msra.mxu0 0.0
    %v4335 = vand.u32 %v3859, 4294901760
    %4336 = vmatpush.msra.mxu0 %v4335
    %v4337 = vand.u32 %v3856, 4294901760
    %4338 = vmatpush.msra.mxu0 %v4337
    %v4339 = vand.u32 %v3853, 4294901760
    %4340 = vmatpush.msra.mxu0 %v4339
    %v4341 = vand.u32 %v3850, 4294901760
    %4342 = vmatpush.msra.mxu0 %v4341
    %v4343 = vand.u32 %v3886, 4294901760
    %v4344 = vsub.f32 %v3886, %v4343
    %v4345 = vand.u32 %v4344, 4294901760
    %4346 = vmatmul.f32.gmra.mxu0 %v4345
    %v4347 = vpop.f32.mrf.mxu0
    %v4348 = vadd.f32 %v4306, %v4347
    %v4349 = vand.u32 %v3888, 4294901760
    %v4350 = vsub.f32 %v3888, %v4349
    %v4351 = vand.u32 %v4350, 4294901760
    %4352 = vmatmul.f32.gmra.mxu0 %v4351
    %v4353 = vpop.f32.mrf.mxu0
    %v4354 = vadd.f32 %v4311, %v4353
    %v4355 = vand.u32 %v3890, 4294901760
    %v4356 = vsub.f32 %v3890, %v4355
    %v4357 = vand.u32 %v4356, 4294901760
    %4358 = vmatmul.f32.gmra.mxu0 %v4357
    %v4359 = vpop.f32.mrf.mxu0
    %v4360 = vadd.f32 %v4316, %v4359
    %v4361 = vand.u32 %v3892, 4294901760
    %v4362 = vsub.f32 %v3892, %v4361
    %v4363 = vand.u32 %v4362, 4294901760
    %4364 = vmatmul.f32.gmra.mxu0 %v4363
    %v4365 = vpop.f32.mrf.mxu0
    %v4366 = vadd.f32 %v4321, %v4365
    %4367 = vdwg.mxu0
    %4368 = vmatpush.msra.mxu0 0.0
    %4369 = vmatpush.msra.mxu0 0.0
    %4370 = vmatpush.msra.mxu0 0.0
    %4371 = vmatpush.msra.mxu0 0.0
    %4372 = vmatpush.msra.mxu0 0.0
    %4373 = vmatpush.msra.mxu0 0.0
    %4374 = vmatpush.msra.mxu0 0.0
    %4375 = vmatpush.msra.mxu0 0.0
    %4376 = vmatpush.msra.mxu0 0.0
    %4377 = vmatpush.msra.mxu0 0.0
    %4378 = vmatpush.msra.mxu0 0.0
    %4379 = vmatpush.msra.mxu0 0.0
    %v4380 = vand.u32 %v3859, 4294901760
    %v4381 = vsub.f32 %v3859, %v4380
    %v4382 = vand.u32 %v4381, 4294901760
    %4383 = vmatpush.msra.mxu0 %v4382
    %v4384 = vand.u32 %v3856, 4294901760
    %v4385 = vsub.f32 %v3856, %v4384
    %v4386 = vand.u32 %v4385, 4294901760
    %4387 = vmatpush.msra.mxu0 %v4386
    %v4388 = vand.u32 %v3853, 4294901760
    %v4389 = vsub.f32 %v3853, %v4388
    %v4390 = vand.u32 %v4389, 4294901760
    %4391 = vmatpush.msra.mxu0 %v4390
    %v4392 = vand.u32 %v3850, 4294901760
    %v4393 = vsub.f32 %v3850, %v4392
    %v4394 = vand.u32 %v4393, 4294901760
    %4395 = vmatpush.msra.mxu0 %v4394
    %v4396 = vand.u32 %v3886, 4294901760
    %4397 = vmatmul.f32.gmra.mxu0 %v4396
    %v4398 = vpop.f32.mrf.mxu0
    %v4399 = vadd.f32 %v4348, %v4398
    %v4400 = vand.u32 %v3888, 4294901760
    %4401 = vmatmul.f32.gmra.mxu0 %v4400
    %v4402 = vpop.f32.mrf.mxu0
    %v4403 = vadd.f32 %v4354, %v4402
    %v4404 = vand.u32 %v3890, 4294901760
    %4405 = vmatmul.f32.gmra.mxu0 %v4404
    %v4406 = vpop.f32.mrf.mxu0
    %v4407 = vadd.f32 %v4360, %v4406
    %v4408 = vand.u32 %v3892, 4294901760
    %4409 = vmatmul.f32.gmra.mxu0 %v4408
    %v4410 = vpop.f32.mrf.mxu0
    %v4411 = vadd.f32 %v4366, %v4410
    %4412 = vdwg.mxu0
    %4413 = vmatpush.msra.mxu0 0.0
    %4414 = vmatpush.msra.mxu0 0.0
    %4415 = vmatpush.msra.mxu0 0.0
    %4416 = vmatpush.msra.mxu0 0.0
    %4417 = vmatpush.msra.mxu0 0.0
    %4418 = vmatpush.msra.mxu0 0.0
    %4419 = vmatpush.msra.mxu0 0.0
    %4420 = vmatpush.msra.mxu0 0.0
    %4421 = vmatpush.msra.mxu0 0.0
    %4422 = vmatpush.msra.mxu0 0.0
    %4423 = vmatpush.msra.mxu0 0.0
    %4424 = vmatpush.msra.mxu0 0.0
    %v4425 = vand.u32 %v3859, 4294901760
    %4426 = vmatpush.msra.mxu0 %v4425
    %v4427 = vand.u32 %v3856, 4294901760
    %4428 = vmatpush.msra.mxu0 %v4427
    %v4429 = vand.u32 %v3853, 4294901760
    %4430 = vmatpush.msra.mxu0 %v4429
    %v4431 = vand.u32 %v3850, 4294901760
    %4432 = vmatpush.msra.mxu0 %v4431
    %v4433 = vand.u32 %v3886, 4294901760
    %4434 = vmatmul.f32.gmra.mxu0 %v4433
    %v4435 = vpop.f32.mrf.mxu0
    %v4436 = vadd.f32 %v4399, %v4435
    %v4437 = vand.u32 %v3888, 4294901760
    %4438 = vmatmul.f32.gmra.mxu0 %v4437
    %v4439 = vpop.f32.mrf.mxu0
    %v4440 = vadd.f32 %v4403, %v4439
    %v4441 = vand.u32 %v3890, 4294901760
    %4442 = vmatmul.f32.gmra.mxu0 %v4441
    %v4443 = vpop.f32.mrf.mxu0
    %v4444 = vadd.f32 %v4407, %v4443
    %v4445 = vand.u32 %v3892, 4294901760
    %4446 = vmatmul.f32.gmra.mxu0 %v4445
    %v4447 = vpop.f32.mrf.mxu0
    %v4448 = vadd.f32 %v4411, %v4447
    %4449 = vdwg.mxu0
    %4450 = vmatpush.msra.mxu0 0.0
    %4451 = vmatpush.msra.mxu0 0.0
    %4452 = vmatpush.msra.mxu0 0.0
    %4453 = vmatpush.msra.mxu0 0.0
    %4454 = vmatpush.msra.mxu0 0.0
    %4455 = vmatpush.msra.mxu0 0.0
    %4456 = vmatpush.msra.mxu0 0.0
    %4457 = vmatpush.msra.mxu0 0.0
    %4458 = vmatpush.msra.mxu0 0.0
    %4459 = vmatpush.msra.mxu0 0.0
    %4460 = vmatpush.msra.mxu0 0.0
    %4461 = vmatpush.msra.mxu0 0.0
    %v4462 = vand.u32 %v3860, 4294901760
    %4463 = vmatpush.msra.mxu0 %v4462
    %v4464 = vand.u32 %v3857, 4294901760
    %4465 = vmatpush.msra.mxu0 %v4464
    %v4466 = vand.u32 %v3854, 4294901760
    %4467 = vmatpush.msra.mxu0 %v4466
    %v4468 = vand.u32 %v3851, 4294901760
    %4469 = vmatpush.msra.mxu0 %v4468
    %v4470 = vand.u32 %v3886, 4294901760
    %v4471 = vsub.f32 %v3886, %v4470
    %v4472 = vand.u32 %v4471, 4294901760
    %v4473 = vsub.f32 %v4471, %v4472
    %v4474 = vand.u32 %v4473, 4294901760
    %4475 = vmatmul.f32.gmra.mxu0 %v4474
    %v4476 = vpop.f32.mrf.mxu0
    %v4477 = vadd.f32 %v3868, %v4476
    %v4478 = vand.u32 %v3888, 4294901760
    %v4479 = vsub.f32 %v3888, %v4478
    %v4480 = vand.u32 %v4479, 4294901760
    %v4481 = vsub.f32 %v4479, %v4480
    %v4482 = vand.u32 %v4481, 4294901760
    %4483 = vmatmul.f32.gmra.mxu0 %v4482
    %v4484 = vpop.f32.mrf.mxu0
    %v4485 = vadd.f32 %v3873, %v4484
    %v4486 = vand.u32 %v3890, 4294901760
    %v4487 = vsub.f32 %v3890, %v4486
    %v4488 = vand.u32 %v4487, 4294901760
    %v4489 = vsub.f32 %v4487, %v4488
    %v4490 = vand.u32 %v4489, 4294901760
    %4491 = vmatmul.f32.gmra.mxu0 %v4490
    %v4492 = vpop.f32.mrf.mxu0
    %v4493 = vadd.f32 %v3878, %v4492
    %v4494 = vand.u32 %v3892, 4294901760
    %v4495 = vsub.f32 %v3892, %v4494
    %v4496 = vand.u32 %v4495, 4294901760
    %v4497 = vsub.f32 %v4495, %v4496
    %v4498 = vand.u32 %v4497, 4294901760
    %4499 = vmatmul.f32.gmra.mxu0 %v4498
    %v4500 = vpop.f32.mrf.mxu0
    %v4501 = vadd.f32 %v3883, %v4500
    %4502 = vdwg.mxu0
    %4503 = vmatpush.msra.mxu0 0.0
    %4504 = vmatpush.msra.mxu0 0.0
    %4505 = vmatpush.msra.mxu0 0.0
    %4506 = vmatpush.msra.mxu0 0.0
    %4507 = vmatpush.msra.mxu0 0.0
    %4508 = vmatpush.msra.mxu0 0.0
    %4509 = vmatpush.msra.mxu0 0.0
    %4510 = vmatpush.msra.mxu0 0.0
    %4511 = vmatpush.msra.mxu0 0.0
    %4512 = vmatpush.msra.mxu0 0.0
    %4513 = vmatpush.msra.mxu0 0.0
    %4514 = vmatpush.msra.mxu0 0.0
    %v4515 = vand.u32 %v3860, 4294901760
    %v4516 = vsub.f32 %v3860, %v4515
    %v4517 = vand.u32 %v4516, 4294901760
    %v4518 = vsub.f32 %v4516, %v4517
    %v4519 = vand.u32 %v4518, 4294901760
    %4520 = vmatpush.msra.mxu0 %v4519
    %v4521 = vand.u32 %v3857, 4294901760
    %v4522 = vsub.f32 %v3857, %v4521
    %v4523 = vand.u32 %v4522, 4294901760
    %v4524 = vsub.f32 %v4522, %v4523
    %v4525 = vand.u32 %v4524, 4294901760
    %4526 = vmatpush.msra.mxu0 %v4525
    %v4527 = vand.u32 %v3854, 4294901760
    %v4528 = vsub.f32 %v3854, %v4527
    %v4529 = vand.u32 %v4528, 4294901760
    %v4530 = vsub.f32 %v4528, %v4529
    %v4531 = vand.u32 %v4530, 4294901760
    %4532 = vmatpush.msra.mxu0 %v4531
    %v4533 = vand.u32 %v3851, 4294901760
    %v4534 = vsub.f32 %v3851, %v4533
    %v4535 = vand.u32 %v4534, 4294901760
    %v4536 = vsub.f32 %v4534, %v4535
    %v4537 = vand.u32 %v4536, 4294901760
    %4538 = vmatpush.msra.mxu0 %v4537
    %v4539 = vand.u32 %v3886, 4294901760
    %4540 = vmatmul.f32.gmra.mxu0 %v4539
    %v4541 = vpop.f32.mrf.mxu0
    %v4542 = vadd.f32 %v4477, %v4541
    %v4543 = vand.u32 %v3888, 4294901760
    %4544 = vmatmul.f32.gmra.mxu0 %v4543
    %v4545 = vpop.f32.mrf.mxu0
    %v4546 = vadd.f32 %v4485, %v4545
    %v4547 = vand.u32 %v3890, 4294901760
    %4548 = vmatmul.f32.gmra.mxu0 %v4547
    %v4549 = vpop.f32.mrf.mxu0
    %v4550 = vadd.f32 %v4493, %v4549
    %v4551 = vand.u32 %v3892, 4294901760
    %4552 = vmatmul.f32.gmra.mxu0 %v4551
    %v4553 = vpop.f32.mrf.mxu0
    %v4554 = vadd.f32 %v4501, %v4553
    %4555 = vdwg.mxu0
    %4556 = vmatpush.msra.mxu0 0.0
    %4557 = vmatpush.msra.mxu0 0.0
    %4558 = vmatpush.msra.mxu0 0.0
    %4559 = vmatpush.msra.mxu0 0.0
    %4560 = vmatpush.msra.mxu0 0.0
    %4561 = vmatpush.msra.mxu0 0.0
    %4562 = vmatpush.msra.mxu0 0.0
    %4563 = vmatpush.msra.mxu0 0.0
    %4564 = vmatpush.msra.mxu0 0.0
    %4565 = vmatpush.msra.mxu0 0.0
    %4566 = vmatpush.msra.mxu0 0.0
    %4567 = vmatpush.msra.mxu0 0.0
    %v4568 = vand.u32 %v3860, 4294901760
    %v4569 = vsub.f32 %v3860, %v4568
    %4570 = vmatpush.msra.mxu0 %v4569
    %v4571 = vand.u32 %v3857, 4294901760
    %v4572 = vsub.f32 %v3857, %v4571
    %4573 = vmatpush.msra.mxu0 %v4572
    %v4574 = vand.u32 %v3854, 4294901760
    %v4575 = vsub.f32 %v3854, %v4574
    %4576 = vmatpush.msra.mxu0 %v4575
    %v4577 = vand.u32 %v3851, 4294901760
    %v4578 = vsub.f32 %v3851, %v4577
    %4579 = vmatpush.msra.mxu0 %v4578
    %v4580 = vand.u32 %v3886, 4294901760
    %v4581 = vsub.f32 %v3886, %v4580
    %4582 = vmatmul.f32.gmra.mxu0 %v4581
    %v4583 = vpop.f32.mrf.mxu0
    %v4584 = vadd.f32 %v4542, %v4583
    %v4585 = vand.u32 %v3888, 4294901760
    %v4586 = vsub.f32 %v3888, %v4585
    %4587 = vmatmul.f32.gmra.mxu0 %v4586
    %v4588 = vpop.f32.mrf.mxu0
    %v4589 = vadd.f32 %v4546, %v4588
    %v4590 = vand.u32 %v3890, 4294901760
    %v4591 = vsub.f32 %v3890, %v4590
    %4592 = vmatmul.f32.gmra.mxu0 %v4591
    %v4593 = vpop.f32.mrf.mxu0
    %v4594 = vadd.f32 %v4550, %v4593
    %v4595 = vand.u32 %v3892, 4294901760
    %v4596 = vsub.f32 %v3892, %v4595
    %4597 = vmatmul.f32.gmra.mxu0 %v4596
    %v4598 = vpop.f32.mrf.mxu0
    %v4599 = vadd.f32 %v4554, %v4598
    %4600 = vdwg.mxu0
    %4601 = vmatpush.msra.mxu0 0.0
    %4602 = vmatpush.msra.mxu0 0.0
    %4603 = vmatpush.msra.mxu0 0.0
    %4604 = vmatpush.msra.mxu0 0.0
    %4605 = vmatpush.msra.mxu0 0.0
    %4606 = vmatpush.msra.mxu0 0.0
    %4607 = vmatpush.msra.mxu0 0.0
    %4608 = vmatpush.msra.mxu0 0.0
    %4609 = vmatpush.msra.mxu0 0.0
    %4610 = vmatpush.msra.mxu0 0.0
    %4611 = vmatpush.msra.mxu0 0.0
    %4612 = vmatpush.msra.mxu0 0.0
    %v4613 = vand.u32 %v3860, 4294901760
    %4614 = vmatpush.msra.mxu0 %v4613
    %v4615 = vand.u32 %v3857, 4294901760
    %4616 = vmatpush.msra.mxu0 %v4615
    %v4617 = vand.u32 %v3854, 4294901760
    %4618 = vmatpush.msra.mxu0 %v4617
    %v4619 = vand.u32 %v3851, 4294901760
    %4620 = vmatpush.msra.mxu0 %v4619
    %v4621 = vand.u32 %v3886, 4294901760
    %v4622 = vsub.f32 %v3886, %v4621
    %v4623 = vand.u32 %v4622, 4294901760
    %4624 = vmatmul.f32.gmra.mxu0 %v4623
    %v4625 = vpop.f32.mrf.mxu0
    %v4626 = vadd.f32 %v4584, %v4625
    %v4627 = vand.u32 %v3888, 4294901760
    %v4628 = vsub.f32 %v3888, %v4627
    %v4629 = vand.u32 %v4628, 4294901760
    %4630 = vmatmul.f32.gmra.mxu0 %v4629
    %v4631 = vpop.f32.mrf.mxu0
    %v4632 = vadd.f32 %v4589, %v4631
    %v4633 = vand.u32 %v3890, 4294901760
    %v4634 = vsub.f32 %v3890, %v4633
    %v4635 = vand.u32 %v4634, 4294901760
    %4636 = vmatmul.f32.gmra.mxu0 %v4635
    %v4637 = vpop.f32.mrf.mxu0
    %v4638 = vadd.f32 %v4594, %v4637
    %v4639 = vand.u32 %v3892, 4294901760
    %v4640 = vsub.f32 %v3892, %v4639
    %v4641 = vand.u32 %v4640, 4294901760
    %4642 = vmatmul.f32.gmra.mxu0 %v4641
    %v4643 = vpop.f32.mrf.mxu0
    %v4644 = vadd.f32 %v4599, %v4643
    %4645 = vdwg.mxu0
    %4646 = vmatpush.msra.mxu0 0.0
    %4647 = vmatpush.msra.mxu0 0.0
    %4648 = vmatpush.msra.mxu0 0.0
    %4649 = vmatpush.msra.mxu0 0.0
    %4650 = vmatpush.msra.mxu0 0.0
    %4651 = vmatpush.msra.mxu0 0.0
    %4652 = vmatpush.msra.mxu0 0.0
    %4653 = vmatpush.msra.mxu0 0.0
    %4654 = vmatpush.msra.mxu0 0.0
    %4655 = vmatpush.msra.mxu0 0.0
    %4656 = vmatpush.msra.mxu0 0.0
    %4657 = vmatpush.msra.mxu0 0.0
    %v4658 = vand.u32 %v3860, 4294901760
    %v4659 = vsub.f32 %v3860, %v4658
    %v4660 = vand.u32 %v4659, 4294901760
    %4661 = vmatpush.msra.mxu0 %v4660
    %v4662 = vand.u32 %v3857, 4294901760
    %v4663 = vsub.f32 %v3857, %v4662
    %v4664 = vand.u32 %v4663, 4294901760
    %4665 = vmatpush.msra.mxu0 %v4664
    %v4666 = vand.u32 %v3854, 4294901760
    %v4667 = vsub.f32 %v3854, %v4666
    %v4668 = vand.u32 %v4667, 4294901760
    %4669 = vmatpush.msra.mxu0 %v4668
    %v4670 = vand.u32 %v3851, 4294901760
    %v4671 = vsub.f32 %v3851, %v4670
    %v4672 = vand.u32 %v4671, 4294901760
    %4673 = vmatpush.msra.mxu0 %v4672
    %v4674 = vand.u32 %v3886, 4294901760
    %4675 = vmatmul.f32.gmra.mxu0 %v4674
    %v4676 = vpop.f32.mrf.mxu0
    %v4677 = vadd.f32 %v4626, %v4676
    %v4678 = vand.u32 %v3888, 4294901760
    %4679 = vmatmul.f32.gmra.mxu0 %v4678
    %v4680 = vpop.f32.mrf.mxu0
    %v4681 = vadd.f32 %v4632, %v4680
    %v4682 = vand.u32 %v3890, 4294901760
    %4683 = vmatmul.f32.gmra.mxu0 %v4682
    %v4684 = vpop.f32.mrf.mxu0
    %v4685 = vadd.f32 %v4638, %v4684
    %v4686 = vand.u32 %v3892, 4294901760
    %4687 = vmatmul.f32.gmra.mxu0 %v4686
    %v4688 = vpop.f32.mrf.mxu0
    %v4689 = vadd.f32 %v4644, %v4688
    %4690 = vdwg.mxu0
    %4691 = vmatpush.msra.mxu0 0.0
    %4692 = vmatpush.msra.mxu0 0.0
    %4693 = vmatpush.msra.mxu0 0.0
    %4694 = vmatpush.msra.mxu0 0.0
    %4695 = vmatpush.msra.mxu0 0.0
    %4696 = vmatpush.msra.mxu0 0.0
    %4697 = vmatpush.msra.mxu0 0.0
    %4698 = vmatpush.msra.mxu0 0.0
    %4699 = vmatpush.msra.mxu0 0.0
    %4700 = vmatpush.msra.mxu0 0.0
    %4701 = vmatpush.msra.mxu0 0.0
    %4702 = vmatpush.msra.mxu0 0.0
    %v4703 = vand.u32 %v3860, 4294901760
    %4704 = vmatpush.msra.mxu0 %v4703
    %v4705 = vand.u32 %v3857, 4294901760
    %4706 = vmatpush.msra.mxu0 %v4705
    %v4707 = vand.u32 %v3854, 4294901760
    %4708 = vmatpush.msra.mxu0 %v4707
    %v4709 = vand.u32 %v3851, 4294901760
    %4710 = vmatpush.msra.mxu0 %v4709
    %v4711 = vand.u32 %v3886, 4294901760
    %4712 = vmatmul.f32.gmra.mxu0 %v4711
    %v4713 = vpop.f32.mrf.mxu0
    %v4714 = vadd.f32 %v4677, %v4713
    %v4715 = vand.u32 %v3888, 4294901760
    %4716 = vmatmul.f32.gmra.mxu0 %v4715
    %v4717 = vpop.f32.mrf.mxu0
    %v4718 = vadd.f32 %v4681, %v4717
    %v4719 = vand.u32 %v3890, 4294901760
    %4720 = vmatmul.f32.gmra.mxu0 %v4719
    %v4721 = vpop.f32.mrf.mxu0
    %v4722 = vadd.f32 %v4685, %v4721
    %v4723 = vand.u32 %v3892, 4294901760
    %4724 = vmatmul.f32.gmra.mxu0 %v4723
    %v4725 = vpop.f32.mrf.mxu0
    %v4726 = vadd.f32 %v4689, %v4725
    %4727 = vdwg.mxu0
    %v4728 = vtanh.pop %v4158
    %v4729 = vtanh.pop %v4436
    %v4730 = vtanh.pop %v4714
    %v4731 = vtanh.pop %v4162
    %v4732 = vtanh.pop %v4440
    %v4733 = vtanh.pop %v4718
    %v4734 = vtanh.pop %v4166
    %v4735 = vtanh.pop %v4444
    %v4736 = vtanh.pop %v4722
    %v4737 = vtanh.pop %v4170
    %v4738 = vtanh.pop %v4448
    %v4739 = vtanh.pop %v4726
    %s4740 = scalar_lea.vmem [#allocation2], 32
    %v4741 = vld [vmem:[%s4740] sm:$0xff]
    %v4742 = vld [vmem:[%s4740 + $0x8] sm:$0xff]
    %v4743 = vld [vmem:[%s4740 + $0x10] sm:$0xff]
    %v4744 = vld [vmem:[%s4740 + $0x18] sm:$0xff]
    %4746 = vset.pattern.permute.xlu0 32
    %4747 = vperm.xlu0 %4746, %v4741
    %v4748 = vpop.permute.xlu0 %4747
    %4751 = vset.pattern.permute.xlu0 32
    %4752 = vperm.xlu0 %4751, %v4742
    %v4753 = vpop.permute.xlu0 %4752
    %4756 = vset.pattern.permute.xlu0 32
    %4757 = vperm.xlu0 %4756, %v4743
    %v4758 = vpop.permute.xlu0 %4757
    %4761 = vset.pattern.permute.xlu0 32
    %4762 = vperm.xlu0 %4761, %v4744
    %v4763 = vpop.permute.xlu0 %4762
    %v4765 = vsel %vm3885, %v4741, 0
    %v4767 = vsel %vm3885, %v4742, 0
    %v4769 = vsel %vm3885, %v4743, 0
    %v4771 = vsel %vm3885, %v4744, 0
    %4773 = vmatpush.msra.mxu0 0.0
    %4774 = vmatpush.msra.mxu0 0.0
    %4775 = vmatpush.msra.mxu0 0.0
    %4776 = vmatpush.msra.mxu0 0.0
    %4777 = vmatpush.msra.mxu0 0.0
    %4778 = vmatpush.msra.mxu0 0.0
    %4779 = vmatpush.msra.mxu0 0.0
    %4780 = vmatpush.msra.mxu0 0.0
    %4781 = vmatpush.msra.mxu0 0.0
    %4782 = vmatpush.msra.mxu0 0.0
    %4783 = vmatpush.msra.mxu0 0.0
    %4784 = vmatpush.msra.mxu0 0.0
    %v4785 = vand.u32 %v4737, 4294901760
    %4786 = vmatpush.msra.mxu0 %v4785
    %v4787 = vand.u32 %v4734, 4294901760
    %4788 = vmatpush.msra.mxu0 %v4787
    %v4789 = vand.u32 %v4731, 4294901760
    %4790 = vmatpush.msra.mxu0 %v4789
    %v4791 = vand.u32 %v4728, 4294901760
    %4792 = vmatpush.msra.mxu0 %v4791
    %v4793 = vand.u32 %v4765, 4294901760
    %v4794 = vsub.f32 %v4765, %v4793
    %v4795 = vand.u32 %v4794, 4294901760
    %v4796 = vsub.f32 %v4794, %v4795
    %v4797 = vand.u32 %v4796, 4294901760
    %4798 = vmatmul.f32.gmra.mxu0 %v4797
    %v4799 = vpop.f32.mrf.mxu0
    %v4800 = vadd.f32 %v4748, %v4799
    %v4801 = vand.u32 %v4767, 4294901760
    %v4802 = vsub.f32 %v4767, %v4801
    %v4803 = vand.u32 %v4802, 4294901760
    %v4804 = vsub.f32 %v4802, %v4803
    %v4805 = vand.u32 %v4804, 4294901760
    %4806 = vmatmul.f32.gmra.mxu0 %v4805
    %v4807 = vpop.f32.mrf.mxu0
    %v4808 = vadd.f32 %v4753, %v4807
    %v4809 = vand.u32 %v4769, 4294901760
    %v4810 = vsub.f32 %v4769, %v4809
    %v4811 = vand.u32 %v4810, 4294901760
    %v4812 = vsub.f32 %v4810, %v4811
    %v4813 = vand.u32 %v4812, 4294901760
    %4814 = vmatmul.f32.gmra.mxu0 %v4813
    %v4815 = vpop.f32.mrf.mxu0
    %v4816 = vadd.f32 %v4758, %v4815
    %v4817 = vand.u32 %v4771, 4294901760
    %v4818 = vsub.f32 %v4771, %v4817
    %v4819 = vand.u32 %v4818, 4294901760
    %v4820 = vsub.f32 %v4818, %v4819
    %v4821 = vand.u32 %v4820, 4294901760
    %4822 = vmatmul.f32.gmra.mxu0 %v4821
    %v4823 = vpop.f32.mrf.mxu0
    %v4824 = vadd.f32 %v4763, %v4823
    %4825 = vdwg.mxu0
    %4826 = vmatpush.msra.mxu0 0.0
    %4827 = vmatpush.msra.mxu0 0.0
    %4828 = vmatpush.msra.mxu0 0.0
    %4829 = vmatpush.msra.mxu0 0.0
    %4830 = vmatpush.msra.mxu0 0.0
    %4831 = vmatpush.msra.mxu0 0.0
    %4832 = vmatpush.msra.mxu0 0.0
    %4833 = vmatpush.msra.mxu0 0.0
    %4834 = vmatpush.msra.mxu0 0.0
    %4835 = vmatpush.msra.mxu0 0.0
    %4836 = vmatpush.msra.mxu0 0.0
    %4837 = vmatpush.msra.mxu0 0.0
    %v4838 = vand.u32 %v4737, 4294901760
    %v4839 = vsub.f32 %v4737, %v4838
    %v4840 = vand.u32 %v4839, 4294901760
    %v4841 = vsub.f32 %v4839, %v4840
    %v4842 = vand.u32 %v4841, 4294901760
    %4843 = vmatpush.msra.mxu0 %v4842
    %v4844 = vand.u32 %v4734, 4294901760
    %v4845 = vsub.f32 %v4734, %v4844
    %v4846 = vand.u32 %v4845, 4294901760
    %v4847 = vsub.f32 %v4845, %v4846
    %v4848 = vand.u32 %v4847, 4294901760
    %4849 = vmatpush.msra.mxu0 %v4848
    %v4850 = vand.u32 %v4731, 4294901760
    %v4851 = vsub.f32 %v4731, %v4850
    %v4852 = vand.u32 %v4851, 4294901760
    %v4853 = vsub.f32 %v4851, %v4852
    %v4854 = vand.u32 %v4853, 4294901760
    %4855 = vmatpush.msra.mxu0 %v4854
    %v4856 = vand.u32 %v4728, 4294901760
    %v4857 = vsub.f32 %v4728, %v4856
    %v4858 = vand.u32 %v4857, 4294901760
    %v4859 = vsub.f32 %v4857, %v4858
    %v4860 = vand.u32 %v4859, 4294901760
    %4861 = vmatpush.msra.mxu0 %v4860
    %v4862 = vand.u32 %v4765, 4294901760
    %4863 = vmatmul.f32.gmra.mxu0 %v4862
    %v4864 = vpop.f32.mrf.mxu0
    %v4865 = vadd.f32 %v4800, %v4864
    %v4866 = vand.u32 %v4767, 4294901760
    %4867 = vmatmul.f32.gmra.mxu0 %v4866
    %v4868 = vpop.f32.mrf.mxu0
    %v4869 = vadd.f32 %v4808, %v4868
    %v4870 = vand.u32 %v4769, 4294901760
    %4871 = vmatmul.f32.gmra.mxu0 %v4870
    %v4872 = vpop.f32.mrf.mxu0
    %v4873 = vadd.f32 %v4816, %v4872
    %v4874 = vand.u32 %v4771, 4294901760
    %4875 = vmatmul.f32.gmra.mxu0 %v4874
    %v4876 = vpop.f32.mrf.mxu0
    %v4877 = vadd.f32 %v4824, %v4876
    %4878 = vdwg.mxu0
    %4879 = vmatpush.msra.mxu0 0.0
    %4880 = vmatpush.msra.mxu0 0.0
    %4881 = vmatpush.msra.mxu0 0.0
    %4882 = vmatpush.msra.mxu0 0.0
    %4883 = vmatpush.msra.mxu0 0.0
    %4884 = vmatpush.msra.mxu0 0.0
    %4885 = vmatpush.msra.mxu0 0.0
    %4886 = vmatpush.msra.mxu0 0.0
    %4887 = vmatpush.msra.mxu0 0.0
    %4888 = vmatpush.msra.mxu0 0.0
    %4889 = vmatpush.msra.mxu0 0.0
    %4890 = vmatpush.msra.mxu0 0.0
    %v4891 = vand.u32 %v4737, 4294901760
    %v4892 = vsub.f32 %v4737, %v4891
    %4893 = vmatpush.msra.mxu0 %v4892
    %v4894 = vand.u32 %v4734, 4294901760
    %v4895 = vsub.f32 %v4734, %v4894
    %4896 = vmatpush.msra.mxu0 %v4895
    %v4897 = vand.u32 %v4731, 4294901760
    %v4898 = vsub.f32 %v4731, %v4897
    %4899 = vmatpush.msra.mxu0 %v4898
    %v4900 = vand.u32 %v4728, 4294901760
    %v4901 = vsub.f32 %v4728, %v4900
    %4902 = vmatpush.msra.mxu0 %v4901
    %v4903 = vand.u32 %v4765, 4294901760
    %v4904 = vsub.f32 %v4765, %v4903
    %4905 = vmatmul.f32.gmra.mxu0 %v4904
    %v4906 = vpop.f32.mrf.mxu0
    %v4907 = vadd.f32 %v4865, %v4906
    %v4908 = vand.u32 %v4767, 4294901760
    %v4909 = vsub.f32 %v4767, %v4908
    %4910 = vmatmul.f32.gmra.mxu0 %v4909
    %v4911 = vpop.f32.mrf.mxu0
    %v4912 = vadd.f32 %v4869, %v4911
    %v4913 = vand.u32 %v4769, 4294901760
    %v4914 = vsub.f32 %v4769, %v4913
    %4915 = vmatmul.f32.gmra.mxu0 %v4914
    %v4916 = vpop.f32.mrf.mxu0
    %v4917 = vadd.f32 %v4873, %v4916
    %v4918 = vand.u32 %v4771, 4294901760
    %v4919 = vsub.f32 %v4771, %v4918
    %4920 = vmatmul.f32.gmra.mxu0 %v4919
    %v4921 = vpop.f32.mrf.mxu0
    %v4922 = vadd.f32 %v4877, %v4921
    %4923 = vdwg.mxu0
    %4924 = vmatpush.msra.mxu0 0.0
    %4925 = vmatpush.msra.mxu0 0.0
    %4926 = vmatpush.msra.mxu0 0.0
    %4927 = vmatpush.msra.mxu0 0.0
    %4928 = vmatpush.msra.mxu0 0.0
    %4929 = vmatpush.msra.mxu0 0.0
    %4930 = vmatpush.msra.mxu0 0.0
    %4931 = vmatpush.msra.mxu0 0.0
    %4932 = vmatpush.msra.mxu0 0.0
    %4933 = vmatpush.msra.mxu0 0.0
    %4934 = vmatpush.msra.mxu0 0.0
    %4935 = vmatpush.msra.mxu0 0.0
    %v4936 = vand.u32 %v4737, 4294901760
    %4937 = vmatpush.msra.mxu0 %v4936
    %v4938 = vand.u32 %v4734, 4294901760
    %4939 = vmatpush.msra.mxu0 %v4938
    %v4940 = vand.u32 %v4731, 4294901760
    %4941 = vmatpush.msra.mxu0 %v4940
    %v4942 = vand.u32 %v4728, 4294901760
    %4943 = vmatpush.msra.mxu0 %v4942
    %v4944 = vand.u32 %v4765, 4294901760
    %v4945 = vsub.f32 %v4765, %v4944
    %v4946 = vand.u32 %v4945, 4294901760
    %4947 = vmatmul.f32.gmra.mxu0 %v4946
    %v4948 = vpop.f32.mrf.mxu0
    %v4949 = vadd.f32 %v4907, %v4948
    %v4950 = vand.u32 %v4767, 4294901760
    %v4951 = vsub.f32 %v4767, %v4950
    %v4952 = vand.u32 %v4951, 4294901760
    %4953 = vmatmul.f32.gmra.mxu0 %v4952
    %v4954 = vpop.f32.mrf.mxu0
    %v4955 = vadd.f32 %v4912, %v4954
    %v4956 = vand.u32 %v4769, 4294901760
    %v4957 = vsub.f32 %v4769, %v4956
    %v4958 = vand.u32 %v4957, 4294901760
    %4959 = vmatmul.f32.gmra.mxu0 %v4958
    %v4960 = vpop.f32.mrf.mxu0
    %v4961 = vadd.f32 %v4917, %v4960
    %v4962 = vand.u32 %v4771, 4294901760
    %v4963 = vsub.f32 %v4771, %v4962
    %v4964 = vand.u32 %v4963, 4294901760
    %4965 = vmatmul.f32.gmra.mxu0 %v4964
    %v4966 = vpop.f32.mrf.mxu0
    %v4967 = vadd.f32 %v4922, %v4966
    %4968 = vdwg.mxu0
    %4969 = vmatpush.msra.mxu0 0.0
    %4970 = vmatpush.msra.mxu0 0.0
    %4971 = vmatpush.msra.mxu0 0.0
    %4972 = vmatpush.msra.mxu0 0.0
    %4973 = vmatpush.msra.mxu0 0.0
    %4974 = vmatpush.msra.mxu0 0.0
    %4975 = vmatpush.msra.mxu0 0.0
    %4976 = vmatpush.msra.mxu0 0.0
    %4977 = vmatpush.msra.mxu0 0.0
    %4978 = vmatpush.msra.mxu0 0.0
    %4979 = vmatpush.msra.mxu0 0.0
    %4980 = vmatpush.msra.mxu0 0.0
    %v4981 = vand.u32 %v4737, 4294901760
    %v4982 = vsub.f32 %v4737, %v4981
    %v4983 = vand.u32 %v4982, 4294901760
    %4984 = vmatpush.msra.mxu0 %v4983
    %v4985 = vand.u32 %v4734, 4294901760
    %v4986 = vsub.f32 %v4734, %v4985
    %v4987 = vand.u32 %v4986, 4294901760
    %4988 = vmatpush.msra.mxu0 %v4987
    %v4989 = vand.u32 %v4731, 4294901760
    %v4990 = vsub.f32 %v4731, %v4989
    %v4991 = vand.u32 %v4990, 4294901760
    %4992 = vmatpush.msra.mxu0 %v4991
    %v4993 = vand.u32 %v4728, 4294901760
    %v4994 = vsub.f32 %v4728, %v4993
    %v4995 = vand.u32 %v4994, 4294901760
    %4996 = vmatpush.msra.mxu0 %v4995
    %v4997 = vand.u32 %v4765, 4294901760
    %4998 = vmatmul.f32.gmra.mxu0 %v4997
    %v4999 = vpop.f32.mrf.mxu0
    %v5000 = vadd.f32 %v4949, %v4999
    %v5001 = vand.u32 %v4767, 4294901760
    %5002 = vmatmul.f32.gmra.mxu0 %v5001
    %v5003 = vpop.f32.mrf.mxu0
    %v5004 = vadd.f32 %v4955, %v5003
    %v5005 = vand.u32 %v4769, 4294901760
    %5006 = vmatmul.f32.gmra.mxu0 %v5005
    %v5007 = vpop.f32.mrf.mxu0
    %v5008 = vadd.f32 %v4961, %v5007
    %v5009 = vand.u32 %v4771, 4294901760
    %5010 = vmatmul.f32.gmra.mxu0 %v5009
    %v5011 = vpop.f32.mrf.mxu0
    %v5012 = vadd.f32 %v4967, %v5011
    %5013 = vdwg.mxu0
    %5014 = vmatpush.msra.mxu0 0.0
    %5015 = vmatpush.msra.mxu0 0.0
    %5016 = vmatpush.msra.mxu0 0.0
    %5017 = vmatpush.msra.mxu0 0.0
    %5018 = vmatpush.msra.mxu0 0.0
    %5019 = vmatpush.msra.mxu0 0.0
    %5020 = vmatpush.msra.mxu0 0.0
    %5021 = vmatpush.msra.mxu0 0.0
    %5022 = vmatpush.msra.mxu0 0.0
    %5023 = vmatpush.msra.mxu0 0.0
    %5024 = vmatpush.msra.mxu0 0.0
    %5025 = vmatpush.msra.mxu0 0.0
    %v5026 = vand.u32 %v4737, 4294901760
    %5027 = vmatpush.msra.mxu0 %v5026
    %v5028 = vand.u32 %v4734, 4294901760
    %5029 = vmatpush.msra.mxu0 %v5028
    %v5030 = vand.u32 %v4731, 4294901760
    %5031 = vmatpush.msra.mxu0 %v5030
    %v5032 = vand.u32 %v4728, 4294901760
    %5033 = vmatpush.msra.mxu0 %v5032
    %v5034 = vand.u32 %v4765, 4294901760
    %5035 = vmatmul.f32.gmra.mxu0 %v5034
    %v5036 = vpop.f32.mrf.mxu0
    %v5037 = vadd.f32 %v5000, %v5036
    %v5038 = vand.u32 %v4767, 4294901760
    %5039 = vmatmul.f32.gmra.mxu0 %v5038
    %v5040 = vpop.f32.mrf.mxu0
    %v5041 = vadd.f32 %v5004, %v5040
    %v5042 = vand.u32 %v4769, 4294901760
    %5043 = vmatmul.f32.gmra.mxu0 %v5042
    %v5044 = vpop.f32.mrf.mxu0
    %v5045 = vadd.f32 %v5008, %v5044
    %v5046 = vand.u32 %v4771, 4294901760
    %5047 = vmatmul.f32.gmra.mxu0 %v5046
    %v5048 = vpop.f32.mrf.mxu0
    %v5049 = vadd.f32 %v5012, %v5048
    %5050 = vdwg.mxu0
    %5051 = vmatpush.msra.mxu0 0.0
    %5052 = vmatpush.msra.mxu0 0.0
    %5053 = vmatpush.msra.mxu0 0.0
    %5054 = vmatpush.msra.mxu0 0.0
    %5055 = vmatpush.msra.mxu0 0.0
    %5056 = vmatpush.msra.mxu0 0.0
    %5057 = vmatpush.msra.mxu0 0.0
    %5058 = vmatpush.msra.mxu0 0.0
    %5059 = vmatpush.msra.mxu0 0.0
    %5060 = vmatpush.msra.mxu0 0.0
    %5061 = vmatpush.msra.mxu0 0.0
    %5062 = vmatpush.msra.mxu0 0.0
    %v5063 = vand.u32 %v4738, 4294901760
    %5064 = vmatpush.msra.mxu0 %v5063
    %v5065 = vand.u32 %v4735, 4294901760
    %5066 = vmatpush.msra.mxu0 %v5065
    %v5067 = vand.u32 %v4732, 4294901760
    %5068 = vmatpush.msra.mxu0 %v5067
    %v5069 = vand.u32 %v4729, 4294901760
    %5070 = vmatpush.msra.mxu0 %v5069
    %v5071 = vand.u32 %v4765, 4294901760
    %v5072 = vsub.f32 %v4765, %v5071
    %v5073 = vand.u32 %v5072, 4294901760
    %v5074 = vsub.f32 %v5072, %v5073
    %v5075 = vand.u32 %v5074, 4294901760
    %5076 = vmatmul.f32.gmra.mxu0 %v5075
    %v5077 = vpop.f32.mrf.mxu0
    %v5078 = vadd.f32 %v4748, %v5077
    %v5079 = vand.u32 %v4767, 4294901760
    %v5080 = vsub.f32 %v4767, %v5079
    %v5081 = vand.u32 %v5080, 4294901760
    %v5082 = vsub.f32 %v5080, %v5081
    %v5083 = vand.u32 %v5082, 4294901760
    %5084 = vmatmul.f32.gmra.mxu0 %v5083
    %v5085 = vpop.f32.mrf.mxu0
    %v5086 = vadd.f32 %v4753, %v5085
    %v5087 = vand.u32 %v4769, 4294901760
    %v5088 = vsub.f32 %v4769, %v5087
    %v5089 = vand.u32 %v5088, 4294901760
    %v5090 = vsub.f32 %v5088, %v5089
    %v5091 = vand.u32 %v5090, 4294901760
    %5092 = vmatmul.f32.gmra.mxu0 %v5091
    %v5093 = vpop.f32.mrf.mxu0
    %v5094 = vadd.f32 %v4758, %v5093
    %v5095 = vand.u32 %v4771, 4294901760
    %v5096 = vsub.f32 %v4771, %v5095
    %v5097 = vand.u32 %v5096, 4294901760
    %v5098 = vsub.f32 %v5096, %v5097
    %v5099 = vand.u32 %v5098, 4294901760
    %5100 = vmatmul.f32.gmra.mxu0 %v5099
    %v5101 = vpop.f32.mrf.mxu0
    %v5102 = vadd.f32 %v4763, %v5101
    %5103 = vdwg.mxu0
    %5104 = vmatpush.msra.mxu0 0.0
    %5105 = vmatpush.msra.mxu0 0.0
    %5106 = vmatpush.msra.mxu0 0.0
    %5107 = vmatpush.msra.mxu0 0.0
    %5108 = vmatpush.msra.mxu0 0.0
    %5109 = vmatpush.msra.mxu0 0.0
    %5110 = vmatpush.msra.mxu0 0.0
    %5111 = vmatpush.msra.mxu0 0.0
    %5112 = vmatpush.msra.mxu0 0.0
    %5113 = vmatpush.msra.mxu0 0.0
    %5114 = vmatpush.msra.mxu0 0.0
    %5115 = vmatpush.msra.mxu0 0.0
    %v5116 = vand.u32 %v4738, 4294901760
    %v5117 = vsub.f32 %v4738, %v5116
    %v5118 = vand.u32 %v5117, 4294901760
    %v5119 = vsub.f32 %v5117, %v5118
    %v5120 = vand.u32 %v5119, 4294901760
    %5121 = vmatpush.msra.mxu0 %v5120
    %v5122 = vand.u32 %v4735, 4294901760
    %v5123 = vsub.f32 %v4735, %v5122
    %v5124 = vand.u32 %v5123, 4294901760
    %v5125 = vsub.f32 %v5123, %v5124
    %v5126 = vand.u32 %v5125, 4294901760
    %5127 = vmatpush.msra.mxu0 %v5126
    %v5128 = vand.u32 %v4732, 4294901760
    %v5129 = vsub.f32 %v4732, %v5128
    %v5130 = vand.u32 %v5129, 4294901760
    %v5131 = vsub.f32 %v5129, %v5130
    %v5132 = vand.u32 %v5131, 4294901760
    %5133 = vmatpush.msra.mxu0 %v5132
    %v5134 = vand.u32 %v4729, 4294901760
    %v5135 = vsub.f32 %v4729, %v5134
    %v5136 = vand.u32 %v5135, 4294901760
    %v5137 = vsub.f32 %v5135, %v5136
    %v5138 = vand.u32 %v5137, 4294901760
    %5139 = vmatpush.msra.mxu0 %v5138
    %v5140 = vand.u32 %v4765, 4294901760
    %5141 = vmatmul.f32.gmra.mxu0 %v5140
    %v5142 = vpop.f32.mrf.mxu0
    %v5143 = vadd.f32 %v5078, %v5142
    %v5144 = vand.u32 %v4767, 4294901760
    %5145 = vmatmul.f32.gmra.mxu0 %v5144
    %v5146 = vpop.f32.mrf.mxu0
    %v5147 = vadd.f32 %v5086, %v5146
    %v5148 = vand.u32 %v4769, 4294901760
    %5149 = vmatmul.f32.gmra.mxu0 %v5148
    %v5150 = vpop.f32.mrf.mxu0
    %v5151 = vadd.f32 %v5094, %v5150
    %v5152 = vand.u32 %v4771, 4294901760
    %5153 = vmatmul.f32.gmra.mxu0 %v5152
    %v5154 = vpop.f32.mrf.mxu0
    %v5155 = vadd.f32 %v5102, %v5154
    %5156 = vdwg.mxu0
    %5157 = vmatpush.msra.mxu0 0.0
    %5158 = vmatpush.msra.mxu0 0.0
    %5159 = vmatpush.msra.mxu0 0.0
    %5160 = vmatpush.msra.mxu0 0.0
    %5161 = vmatpush.msra.mxu0 0.0
    %5162 = vmatpush.msra.mxu0 0.0
    %5163 = vmatpush.msra.mxu0 0.0
    %5164 = vmatpush.msra.mxu0 0.0
    %5165 = vmatpush.msra.mxu0 0.0
    %5166 = vmatpush.msra.mxu0 0.0
    %5167 = vmatpush.msra.mxu0 0.0
    %5168 = vmatpush.msra.mxu0 0.0
    %v5169 = vand.u32 %v4738, 4294901760
    %v5170 = vsub.f32 %v4738, %v5169
    %5171 = vmatpush.msra.mxu0 %v5170
    %v5172 = vand.u32 %v4735, 4294901760
    %v5173 = vsub.f32 %v4735, %v5172
    %5174 = vmatpush.msra.mxu0 %v5173
    %v5175 = vand.u32 %v4732, 4294901760
    %v5176 = vsub.f32 %v4732, %v5175
    %5177 = vmatpush.msra.mxu0 %v5176
    %v5178 = vand.u32 %v4729, 4294901760
    %v5179 = vsub.f32 %v4729, %v5178
    %5180 = vmatpush.msra.mxu0 %v5179
    %v5181 = vand.u32 %v4765, 4294901760
    %v5182 = vsub.f32 %v4765, %v5181
    %5183 = vmatmul.f32.gmra.mxu0 %v5182
    %v5184 = vpop.f32.mrf.mxu0
    %v5185 = vadd.f32 %v5143, %v5184
    %v5186 = vand.u32 %v4767, 4294901760
    %v5187 = vsub.f32 %v4767, %v5186
    %5188 = vmatmul.f32.gmra.mxu0 %v5187
    %v5189 = vpop.f32.mrf.mxu0
    %v5190 = vadd.f32 %v5147, %v5189
    %v5191 = vand.u32 %v4769, 4294901760
    %v5192 = vsub.f32 %v4769, %v5191
    %5193 = vmatmul.f32.gmra.mxu0 %v5192
    %v5194 = vpop.f32.mrf.mxu0
    %v5195 = vadd.f32 %v5151, %v5194
    %v5196 = vand.u32 %v4771, 4294901760
    %v5197 = vsub.f32 %v4771, %v5196
    %5198 = vmatmul.f32.gmra.mxu0 %v5197
    %v5199 = vpop.f32.mrf.mxu0
    %v5200 = vadd.f32 %v5155, %v5199
    %5201 = vdwg.mxu0
    %5202 = vmatpush.msra.mxu0 0.0
    %5203 = vmatpush.msra.mxu0 0.0
    %5204 = vmatpush.msra.mxu0 0.0
    %5205 = vmatpush.msra.mxu0 0.0
    %5206 = vmatpush.msra.mxu0 0.0
    %5207 = vmatpush.msra.mxu0 0.0
    %5208 = vmatpush.msra.mxu0 0.0
    %5209 = vmatpush.msra.mxu0 0.0
    %5210 = vmatpush.msra.mxu0 0.0
    %5211 = vmatpush.msra.mxu0 0.0
    %5212 = vmatpush.msra.mxu0 0.0
    %5213 = vmatpush.msra.mxu0 0.0
    %v5214 = vand.u32 %v4738, 4294901760
    %5215 = vmatpush.msra.mxu0 %v5214
    %v5216 = vand.u32 %v4735, 4294901760
    %5217 = vmatpush.msra.mxu0 %v5216
    %v5218 = vand.u32 %v4732, 4294901760
    %5219 = vmatpush.msra.mxu0 %v5218
    %v5220 = vand.u32 %v4729, 4294901760
    %5221 = vmatpush.msra.mxu0 %v5220
    %v5222 = vand.u32 %v4765, 4294901760
    %v5223 = vsub.f32 %v4765, %v5222
    %v5224 = vand.u32 %v5223, 4294901760
    %5225 = vmatmul.f32.gmra.mxu0 %v5224
    %v5226 = vpop.f32.mrf.mxu0
    %v5227 = vadd.f32 %v5185, %v5226
    %v5228 = vand.u32 %v4767, 4294901760
    %v5229 = vsub.f32 %v4767, %v5228
    %v5230 = vand.u32 %v5229, 4294901760
    %5231 = vmatmul.f32.gmra.mxu0 %v5230
    %v5232 = vpop.f32.mrf.mxu0
    %v5233 = vadd.f32 %v5190, %v5232
    %v5234 = vand.u32 %v4769, 4294901760
    %v5235 = vsub.f32 %v4769, %v5234
    %v5236 = vand.u32 %v5235, 4294901760
    %5237 = vmatmul.f32.gmra.mxu0 %v5236
    %v5238 = vpop.f32.mrf.mxu0
    %v5239 = vadd.f32 %v5195, %v5238
    %v5240 = vand.u32 %v4771, 4294901760
    %v5241 = vsub.f32 %v4771, %v5240
    %v5242 = vand.u32 %v5241, 4294901760
    %5243 = vmatmul.f32.gmra.mxu0 %v5242
    %v5244 = vpop.f32.mrf.mxu0
    %v5245 = vadd.f32 %v5200, %v5244
    %5246 = vdwg.mxu0
    %5247 = vmatpush.msra.mxu0 0.0
    %5248 = vmatpush.msra.mxu0 0.0
    %5249 = vmatpush.msra.mxu0 0.0
    %5250 = vmatpush.msra.mxu0 0.0
    %5251 = vmatpush.msra.mxu0 0.0
    %5252 = vmatpush.msra.mxu0 0.0
    %5253 = vmatpush.msra.mxu0 0.0
    %5254 = vmatpush.msra.mxu0 0.0
    %5255 = vmatpush.msra.mxu0 0.0
    %5256 = vmatpush.msra.mxu0 0.0
    %5257 = vmatpush.msra.mxu0 0.0
    %5258 = vmatpush.msra.mxu0 0.0
    %v5259 = vand.u32 %v4738, 4294901760
    %v5260 = vsub.f32 %v4738, %v5259
    %v5261 = vand.u32 %v5260, 4294901760
    %5262 = vmatpush.msra.mxu0 %v5261
    %v5263 = vand.u32 %v4735, 4294901760
    %v5264 = vsub.f32 %v4735, %v5263
    %v5265 = vand.u32 %v5264, 4294901760
    %5266 = vmatpush.msra.mxu0 %v5265
    %v5267 = vand.u32 %v4732, 4294901760
    %v5268 = vsub.f32 %v4732, %v5267
    %v5269 = vand.u32 %v5268, 4294901760
    %5270 = vmatpush.msra.mxu0 %v5269
    %v5271 = vand.u32 %v4729, 4294901760
    %v5272 = vsub.f32 %v4729, %v5271
    %v5273 = vand.u32 %v5272, 4294901760
    %5274 = vmatpush.msra.mxu0 %v5273
    %v5275 = vand.u32 %v4765, 4294901760
    %5276 = vmatmul.f32.gmra.mxu0 %v5275
    %v5277 = vpop.f32.mrf.mxu0
    %v5278 = vadd.f32 %v5227, %v5277
    %v5279 = vand.u32 %v4767, 4294901760
    %5280 = vmatmul.f32.gmra.mxu0 %v5279
    %v5281 = vpop.f32.mrf.mxu0
    %v5282 = vadd.f32 %v5233, %v5281
    %v5283 = vand.u32 %v4769, 4294901760
    %5284 = vmatmul.f32.gmra.mxu0 %v5283
    %v5285 = vpop.f32.mrf.mxu0
    %v5286 = vadd.f32 %v5239, %v5285
    %v5287 = vand.u32 %v4771, 4294901760
    %5288 = vmatmul.f32.gmra.mxu0 %v5287
    %v5289 = vpop.f32.mrf.mxu0
    %v5290 = vadd.f32 %v5245, %v5289
    %5291 = vdwg.mxu0
    %5292 = vmatpush.msra.mxu0 0.0
    %5293 = vmatpush.msra.mxu0 0.0
    %5294 = vmatpush.msra.mxu0 0.0
    %5295 = vmatpush.msra.mxu0 0.0
    %5296 = vmatpush.msra.mxu0 0.0
    %5297 = vmatpush.msra.mxu0 0.0
    %5298 = vmatpush.msra.mxu0 0.0
    %5299 = vmatpush.msra.mxu0 0.0
    %5300 = vmatpush.msra.mxu0 0.0
    %5301 = vmatpush.msra.mxu0 0.0
    %5302 = vmatpush.msra.mxu0 0.0
    %5303 = vmatpush.msra.mxu0 0.0
    %v5304 = vand.u32 %v4738, 4294901760
    %5305 = vmatpush.msra.mxu0 %v5304
    %v5306 = vand.u32 %v4735, 4294901760
    %5307 = vmatpush.msra.mxu0 %v5306
    %v5308 = vand.u32 %v4732, 4294901760
    %5309 = vmatpush.msra.mxu0 %v5308
    %v5310 = vand.u32 %v4729, 4294901760
    %5311 = vmatpush.msra.mxu0 %v5310
    %v5312 = vand.u32 %v4765, 4294901760
    %5313 = vmatmul.f32.gmra.mxu0 %v5312
    %v5314 = vpop.f32.mrf.mxu0
    %v5315 = vadd.f32 %v5278, %v5314
    %v5316 = vand.u32 %v4767, 4294901760
    %5317 = vmatmul.f32.gmra.mxu0 %v5316
    %v5318 = vpop.f32.mrf.mxu0
    %v5319 = vadd.f32 %v5282, %v5318
    %v5320 = vand.u32 %v4769, 4294901760
    %5321 = vmatmul.f32.gmra.mxu0 %v5320
    %v5322 = vpop.f32.mrf.mxu0
    %v5323 = vadd.f32 %v5286, %v5322
    %v5324 = vand.u32 %v4771, 4294901760
    %5325 = vmatmul.f32.gmra.mxu0 %v5324
    %v5326 = vpop.f32.mrf.mxu0
    %v5327 = vadd.f32 %v5290, %v5326
    %5328 = vdwg.mxu0
    %5329 = vmatpush.msra.mxu0 0.0
    %5330 = vmatpush.msra.mxu0 0.0
    %5331 = vmatpush.msra.mxu0 0.0
    %5332 = vmatpush.msra.mxu0 0.0
    %5333 = vmatpush.msra.mxu0 0.0
    %5334 = vmatpush.msra.mxu0 0.0
    %5335 = vmatpush.msra.mxu0 0.0
    %5336 = vmatpush.msra.mxu0 0.0
    %5337 = vmatpush.msra.mxu0 0.0
    %5338 = vmatpush.msra.mxu0 0.0
    %5339 = vmatpush.msra.mxu0 0.0
    %5340 = vmatpush.msra.mxu0 0.0
    %v5341 = vand.u32 %v4739, 4294901760
    %5342 = vmatpush.msra.mxu0 %v5341
    %v5343 = vand.u32 %v4736, 4294901760
    %5344 = vmatpush.msra.mxu0 %v5343
    %v5345 = vand.u32 %v4733, 4294901760
    %5346 = vmatpush.msra.mxu0 %v5345
    %v5347 = vand.u32 %v4730, 4294901760
    %5348 = vmatpush.msra.mxu0 %v5347
    %v5349 = vand.u32 %v4765, 4294901760
    %v5350 = vsub.f32 %v4765, %v5349
    %v5351 = vand.u32 %v5350, 4294901760
    %v5352 = vsub.f32 %v5350, %v5351
    %v5353 = vand.u32 %v5352, 4294901760
    %5354 = vmatmul.f32.gmra.mxu0 %v5353
    %v5355 = vpop.f32.mrf.mxu0
    %v5356 = vadd.f32 %v4748, %v5355
    %v5357 = vand.u32 %v4767, 4294901760
    %v5358 = vsub.f32 %v4767, %v5357
    %v5359 = vand.u32 %v5358, 4294901760
    %v5360 = vsub.f32 %v5358, %v5359
    %v5361 = vand.u32 %v5360, 4294901760
    %5362 = vmatmul.f32.gmra.mxu0 %v5361
    %v5363 = vpop.f32.mrf.mxu0
    %v5364 = vadd.f32 %v4753, %v5363
    %v5365 = vand.u32 %v4769, 4294901760
    %v5366 = vsub.f32 %v4769, %v5365
    %v5367 = vand.u32 %v5366, 4294901760
    %v5368 = vsub.f32 %v5366, %v5367
    %v5369 = vand.u32 %v5368, 4294901760
    %5370 = vmatmul.f32.gmra.mxu0 %v5369
    %v5371 = vpop.f32.mrf.mxu0
    %v5372 = vadd.f32 %v4758, %v5371
    %v5373 = vand.u32 %v4771, 4294901760
    %v5374 = vsub.f32 %v4771, %v5373
    %v5375 = vand.u32 %v5374, 4294901760
    %v5376 = vsub.f32 %v5374, %v5375
    %v5377 = vand.u32 %v5376, 4294901760
    %5378 = vmatmul.f32.gmra.mxu0 %v5377
    %v5379 = vpop.f32.mrf.mxu0
    %v5380 = vadd.f32 %v4763, %v5379
    %5381 = vdwg.mxu0
    %5382 = vmatpush.msra.mxu0 0.0
    %5383 = vmatpush.msra.mxu0 0.0
    %5384 = vmatpush.msra.mxu0 0.0
    %5385 = vmatpush.msra.mxu0 0.0
    %5386 = vmatpush.msra.mxu0 0.0
    %5387 = vmatpush.msra.mxu0 0.0
    %5388 = vmatpush.msra.mxu0 0.0
    %5389 = vmatpush.msra.mxu0 0.0
    %5390 = vmatpush.msra.mxu0 0.0
    %5391 = vmatpush.msra.mxu0 0.0
    %5392 = vmatpush.msra.mxu0 0.0
    %5393 = vmatpush.msra.mxu0 0.0
    %v5394 = vand.u32 %v4739, 4294901760
    %v5395 = vsub.f32 %v4739, %v5394
    %v5396 = vand.u32 %v5395, 4294901760
    %v5397 = vsub.f32 %v5395, %v5396
    %v5398 = vand.u32 %v5397, 4294901760
    %5399 = vmatpush.msra.mxu0 %v5398
    %v5400 = vand.u32 %v4736, 4294901760
    %v5401 = vsub.f32 %v4736, %v5400
    %v5402 = vand.u32 %v5401, 4294901760
    %v5403 = vsub.f32 %v5401, %v5402
    %v5404 = vand.u32 %v5403, 4294901760
    %5405 = vmatpush.msra.mxu0 %v5404
    %v5406 = vand.u32 %v4733, 4294901760
    %v5407 = vsub.f32 %v4733, %v5406
    %v5408 = vand.u32 %v5407, 4294901760
    %v5409 = vsub.f32 %v5407, %v5408
    %v5410 = vand.u32 %v5409, 4294901760
    %5411 = vmatpush.msra.mxu0 %v5410
    %v5412 = vand.u32 %v4730, 4294901760
    %v5413 = vsub.f32 %v4730, %v5412
    %v5414 = vand.u32 %v5413, 4294901760
    %v5415 = vsub.f32 %v5413, %v5414
    %v5416 = vand.u32 %v5415, 4294901760
    %5417 = vmatpush.msra.mxu0 %v5416
    %v5418 = vand.u32 %v4765, 4294901760
    %5419 = vmatmul.f32.gmra.mxu0 %v5418
    %v5420 = vpop.f32.mrf.mxu0
    %v5421 = vadd.f32 %v5356, %v5420
    %v5422 = vand.u32 %v4767, 4294901760
    %5423 = vmatmul.f32.gmra.mxu0 %v5422
    %v5424 = vpop.f32.mrf.mxu0
    %v5425 = vadd.f32 %v5364, %v5424
    %v5426 = vand.u32 %v4769, 4294901760
    %5427 = vmatmul.f32.gmra.mxu0 %v5426
    %v5428 = vpop.f32.mrf.mxu0
    %v5429 = vadd.f32 %v5372, %v5428
    %v5430 = vand.u32 %v4771, 4294901760
    %5431 = vmatmul.f32.gmra.mxu0 %v5430
    %v5432 = vpop.f32.mrf.mxu0
    %v5433 = vadd.f32 %v5380, %v5432
    %5434 = vdwg.mxu0
    %5435 = vmatpush.msra.mxu0 0.0
    %5436 = vmatpush.msra.mxu0 0.0
    %5437 = vmatpush.msra.mxu0 0.0
    %5438 = vmatpush.msra.mxu0 0.0
    %5439 = vmatpush.msra.mxu0 0.0
    %5440 = vmatpush.msra.mxu0 0.0
    %5441 = vmatpush.msra.mxu0 0.0
    %5442 = vmatpush.msra.mxu0 0.0
    %5443 = vmatpush.msra.mxu0 0.0
    %5444 = vmatpush.msra.mxu0 0.0
    %5445 = vmatpush.msra.mxu0 0.0
    %5446 = vmatpush.msra.mxu0 0.0
    %v5447 = vand.u32 %v4739, 4294901760
    %v5448 = vsub.f32 %v4739, %v5447
    %5449 = vmatpush.msra.mxu0 %v5448
    %v5450 = vand.u32 %v4736, 4294901760
    %v5451 = vsub.f32 %v4736, %v5450
    %5452 = vmatpush.msra.mxu0 %v5451
    %v5453 = vand.u32 %v4733, 4294901760
    %v5454 = vsub.f32 %v4733, %v5453
    %5455 = vmatpush.msra.mxu0 %v5454
    %v5456 = vand.u32 %v4730, 4294901760
    %v5457 = vsub.f32 %v4730, %v5456
    %5458 = vmatpush.msra.mxu0 %v5457
    %v5459 = vand.u32 %v4765, 4294901760
    %v5460 = vsub.f32 %v4765, %v5459
    %5461 = vmatmul.f32.gmra.mxu0 %v5460
    %v5462 = vpop.f32.mrf.mxu0
    %v5463 = vadd.f32 %v5421, %v5462
    %v5464 = vand.u32 %v4767, 4294901760
    %v5465 = vsub.f32 %v4767, %v5464
    %5466 = vmatmul.f32.gmra.mxu0 %v5465
    %v5467 = vpop.f32.mrf.mxu0
    %v5468 = vadd.f32 %v5425, %v5467
    %v5469 = vand.u32 %v4769, 4294901760
    %v5470 = vsub.f32 %v4769, %v5469
    %5471 = vmatmul.f32.gmra.mxu0 %v5470
    %v5472 = vpop.f32.mrf.mxu0
    %v5473 = vadd.f32 %v5429, %v5472
    %v5474 = vand.u32 %v4771, 4294901760
    %v5475 = vsub.f32 %v4771, %v5474
    %5476 = vmatmul.f32.gmra.mxu0 %v5475
    %v5477 = vpop.f32.mrf.mxu0
    %v5478 = vadd.f32 %v5433, %v5477
    %5479 = vdwg.mxu0
    %5480 = vmatpush.msra.mxu0 0.0
    %5481 = vmatpush.msra.mxu0 0.0
    %5482 = vmatpush.msra.mxu0 0.0
    %5483 = vmatpush.msra.mxu0 0.0
    %5484 = vmatpush.msra.mxu0 0.0
    %5485 = vmatpush.msra.mxu0 0.0
    %5486 = vmatpush.msra.mxu0 0.0
    %5487 = vmatpush.msra.mxu0 0.0
    %5488 = vmatpush.msra.mxu0 0.0
    %5489 = vmatpush.msra.mxu0 0.0
    %5490 = vmatpush.msra.mxu0 0.0
    %5491 = vmatpush.msra.mxu0 0.0
    %v5492 = vand.u32 %v4739, 4294901760
    %5493 = vmatpush.msra.mxu0 %v5492
    %v5494 = vand.u32 %v4736, 4294901760
    %5495 = vmatpush.msra.mxu0 %v5494
    %v5496 = vand.u32 %v4733, 4294901760
    %5497 = vmatpush.msra.mxu0 %v5496
    %v5498 = vand.u32 %v4730, 4294901760
    %5499 = vmatpush.msra.mxu0 %v5498
    %v5500 = vand.u32 %v4765, 4294901760
    %v5501 = vsub.f32 %v4765, %v5500
    %v5502 = vand.u32 %v5501, 4294901760
    %5503 = vmatmul.f32.gmra.mxu0 %v5502
    %v5504 = vpop.f32.mrf.mxu0
    %v5505 = vadd.f32 %v5463, %v5504
    %v5506 = vand.u32 %v4767, 4294901760
    %v5507 = vsub.f32 %v4767, %v5506
    %v5508 = vand.u32 %v5507, 4294901760
    %5509 = vmatmul.f32.gmra.mxu0 %v5508
    %v5510 = vpop.f32.mrf.mxu0
    %v5511 = vadd.f32 %v5468, %v5510
    %v5512 = vand.u32 %v4769, 4294901760
    %v5513 = vsub.f32 %v4769, %v5512
    %v5514 = vand.u32 %v5513, 4294901760
    %5515 = vmatmul.f32.gmra.mxu0 %v5514
    %v5516 = vpop.f32.mrf.mxu0
    %v5517 = vadd.f32 %v5473, %v5516
    %v5518 = vand.u32 %v4771, 4294901760
    %v5519 = vsub.f32 %v4771, %v5518
    %v5520 = vand.u32 %v5519, 4294901760
    %5521 = vmatmul.f32.gmra.mxu0 %v5520
    %v5522 = vpop.f32.mrf.mxu0
    %v5523 = vadd.f32 %v5478, %v5522
    %5524 = vdwg.mxu0
    %5525 = vmatpush.msra.mxu0 0.0
    %5526 = vmatpush.msra.mxu0 0.0
    %5527 = vmatpush.msra.mxu0 0.0
    %5528 = vmatpush.msra.mxu0 0.0
    %5529 = vmatpush.msra.mxu0 0.0
    %5530 = vmatpush.msra.mxu0 0.0
    %5531 = vmatpush.msra.mxu0 0.0
    %5532 = vmatpush.msra.mxu0 0.0
    %5533 = vmatpush.msra.mxu0 0.0
    %5534 = vmatpush.msra.mxu0 0.0
    %5535 = vmatpush.msra.mxu0 0.0
    %5536 = vmatpush.msra.mxu0 0.0
    %v5537 = vand.u32 %v4739, 4294901760
    %v5538 = vsub.f32 %v4739, %v5537
    %v5539 = vand.u32 %v5538, 4294901760
    %5540 = vmatpush.msra.mxu0 %v5539
    %v5541 = vand.u32 %v4736, 4294901760
    %v5542 = vsub.f32 %v4736, %v5541
    %v5543 = vand.u32 %v5542, 4294901760
    %5544 = vmatpush.msra.mxu0 %v5543
    %v5545 = vand.u32 %v4733, 4294901760
    %v5546 = vsub.f32 %v4733, %v5545
    %v5547 = vand.u32 %v5546, 4294901760
    %5548 = vmatpush.msra.mxu0 %v5547
    %v5549 = vand.u32 %v4730, 4294901760
    %v5550 = vsub.f32 %v4730, %v5549
    %v5551 = vand.u32 %v5550, 4294901760
    %5552 = vmatpush.msra.mxu0 %v5551
    %v5553 = vand.u32 %v4765, 4294901760
    %5554 = vmatmul.f32.gmra.mxu0 %v5553
    %v5555 = vpop.f32.mrf.mxu0
    %v5556 = vadd.f32 %v5505, %v5555
    %v5557 = vand.u32 %v4767, 4294901760
    %5558 = vmatmul.f32.gmra.mxu0 %v5557
    %v5559 = vpop.f32.mrf.mxu0
    %v5560 = vadd.f32 %v5511, %v5559
    %v5561 = vand.u32 %v4769, 4294901760
    %5562 = vmatmul.f32.gmra.mxu0 %v5561
    %v5563 = vpop.f32.mrf.mxu0
    %v5564 = vadd.f32 %v5517, %v5563
    %v5565 = vand.u32 %v4771, 4294901760
    %5566 = vmatmul.f32.gmra.mxu0 %v5565
    %v5567 = vpop.f32.mrf.mxu0
    %v5568 = vadd.f32 %v5523, %v5567
    %5569 = vdwg.mxu0
    %5570 = vmatpush.msra.mxu0 0.0
    %5571 = vmatpush.msra.mxu0 0.0
    %5572 = vmatpush.msra.mxu0 0.0
    %5573 = vmatpush.msra.mxu0 0.0
    %5574 = vmatpush.msra.mxu0 0.0
    %5575 = vmatpush.msra.mxu0 0.0
    %5576 = vmatpush.msra.mxu0 0.0
    %5577 = vmatpush.msra.mxu0 0.0
    %5578 = vmatpush.msra.mxu0 0.0
    %5579 = vmatpush.msra.mxu0 0.0
    %5580 = vmatpush.msra.mxu0 0.0
    %5581 = vmatpush.msra.mxu0 0.0
    %v5582 = vand.u32 %v4739, 4294901760
    %5583 = vmatpush.msra.mxu0 %v5582
    %v5584 = vand.u32 %v4736, 4294901760
    %5585 = vmatpush.msra.mxu0 %v5584
    %v5586 = vand.u32 %v4733, 4294901760
    %5587 = vmatpush.msra.mxu0 %v5586
    %v5588 = vand.u32 %v4730, 4294901760
    %5589 = vmatpush.msra.mxu0 %v5588
    %v5590 = vand.u32 %v4765, 4294901760
    %5591 = vmatmul.f32.gmra.mxu0 %v5590
    %v5592 = vpop.f32.mrf.mxu0
    %v5593 = vadd.f32 %v5556, %v5592
    %v5594 = vand.u32 %v4767, 4294901760
    %5595 = vmatmul.f32.gmra.mxu0 %v5594
    %v5596 = vpop.f32.mrf.mxu0
    %v5597 = vadd.f32 %v5560, %v5596
    %v5598 = vand.u32 %v4769, 4294901760
    %5599 = vmatmul.f32.gmra.mxu0 %v5598
    %v5600 = vpop.f32.mrf.mxu0
    %v5601 = vadd.f32 %v5564, %v5600
    %v5602 = vand.u32 %v4771, 4294901760
    %5603 = vmatmul.f32.gmra.mxu0 %v5602
    %v5604 = vpop.f32.mrf.mxu0
    %v5605 = vadd.f32 %v5568, %v5604
    %5606 = vdwg.mxu0
    %v5607 = vtanh.pop %v5037
    %v5608 = vtanh.pop %v5315
    %v5609 = vtanh.pop %v5593
    %v5610 = vtanh.pop %v5041
    %v5611 = vtanh.pop %v5319
    %v5612 = vtanh.pop %v5597
    %v5613 = vtanh.pop %v5045
    %v5614 = vtanh.pop %v5323
    %v5615 = vtanh.pop %v5601
    %v5616 = vtanh.pop %v5049
    %v5617 = vtanh.pop %v5327
    %v5618 = vtanh.pop %v5605
    %s5619 = scalar_lea.vmem [#allocation2], 64
    %v5620 = vld [vmem:[%s5619] sm:$0xff]
    %v5621 = vld [vmem:[%s5619 + $0x8] sm:$0xff]
    %v5622 = vld [vmem:[%s5619 + $0x10] sm:$0xff]
    %v5623 = vld [vmem:[%s5619 + $0x18] sm:$0xff]
    %5625 = vset.pattern.permute.xlu0 32
    %5626 = vperm.xlu0 %5625, %v5620
    %v5627 = vpop.permute.xlu0 %5626
    %5630 = vset.pattern.permute.xlu0 32
    %5631 = vperm.xlu0 %5630, %v5621
    %v5632 = vpop.permute.xlu0 %5631
    %5635 = vset.pattern.permute.xlu0 32
    %5636 = vperm.xlu0 %5635, %v5622
    %v5637 = vpop.permute.xlu0 %5636
    %5640 = vset.pattern.permute.xlu0 32
    %5641 = vperm.xlu0 %5640, %v5623
    %v5642 = vpop.permute.xlu0 %5641
    %v5644 = vsel %vm3885, %v5620, 0
    %v5646 = vsel %vm3885, %v5621, 0
    %v5648 = vsel %vm3885, %v5622, 0
    %v5650 = vsel %vm3885, %v5623, 0
    %5652 = vmatpush.msra.mxu0 0.0
    %5653 = vmatpush.msra.mxu0 0.0
    %5654 = vmatpush.msra.mxu0 0.0
    %5655 = vmatpush.msra.mxu0 0.0
    %5656 = vmatpush.msra.mxu0 0.0
    %5657 = vmatpush.msra.mxu0 0.0
    %5658 = vmatpush.msra.mxu0 0.0
    %5659 = vmatpush.msra.mxu0 0.0
    %5660 = vmatpush.msra.mxu0 0.0
    %5661 = vmatpush.msra.mxu0 0.0
    %5662 = vmatpush.msra.mxu0 0.0
    %5663 = vmatpush.msra.mxu0 0.0
    %v5664 = vand.u32 %v5616, 4294901760
    %5665 = vmatpush.msra.mxu0 %v5664
    %v5666 = vand.u32 %v5613, 4294901760
    %5667 = vmatpush.msra.mxu0 %v5666
    %v5668 = vand.u32 %v5610, 4294901760
    %5669 = vmatpush.msra.mxu0 %v5668
    %v5670 = vand.u32 %v5607, 4294901760
    %5671 = vmatpush.msra.mxu0 %v5670
    %v5672 = vand.u32 %v5644, 4294901760
    %v5673 = vsub.f32 %v5644, %v5672
    %v5674 = vand.u32 %v5673, 4294901760
    %v5675 = vsub.f32 %v5673, %v5674
    %v5676 = vand.u32 %v5675, 4294901760
    %5677 = vmatmul.f32.gmra.mxu0 %v5676
    %v5678 = vpop.f32.mrf.mxu0
    %v5679 = vadd.f32 %v5627, %v5678
    %v5680 = vand.u32 %v5646, 4294901760
    %v5681 = vsub.f32 %v5646, %v5680
    %v5682 = vand.u32 %v5681, 4294901760
    %v5683 = vsub.f32 %v5681, %v5682
    %v5684 = vand.u32 %v5683, 4294901760
    %5685 = vmatmul.f32.gmra.mxu0 %v5684
    %v5686 = vpop.f32.mrf.mxu0
    %v5687 = vadd.f32 %v5632, %v5686
    %v5688 = vand.u32 %v5648, 4294901760
    %v5689 = vsub.f32 %v5648, %v5688
    %v5690 = vand.u32 %v5689, 4294901760
    %v5691 = vsub.f32 %v5689, %v5690
    %v5692 = vand.u32 %v5691, 4294901760
    %5693 = vmatmul.f32.gmra.mxu0 %v5692
    %v5694 = vpop.f32.mrf.mxu0
    %v5695 = vadd.f32 %v5637, %v5694
    %v5696 = vand.u32 %v5650, 4294901760
    %v5697 = vsub.f32 %v5650, %v5696
    %v5698 = vand.u32 %v5697, 4294901760
    %v5699 = vsub.f32 %v5697, %v5698
    %v5700 = vand.u32 %v5699, 4294901760
    %5701 = vmatmul.f32.gmra.mxu0 %v5700
    %v5702 = vpop.f32.mrf.mxu0
    %v5703 = vadd.f32 %v5642, %v5702
    %5704 = vdwg.mxu0
    %5705 = vmatpush.msra.mxu0 0.0
    %5706 = vmatpush.msra.mxu0 0.0
    %5707 = vmatpush.msra.mxu0 0.0
    %5708 = vmatpush.msra.mxu0 0.0
    %5709 = vmatpush.msra.mxu0 0.0
    %5710 = vmatpush.msra.mxu0 0.0
    %5711 = vmatpush.msra.mxu0 0.0
    %5712 = vmatpush.msra.mxu0 0.0
    %5713 = vmatpush.msra.mxu0 0.0
    %5714 = vmatpush.msra.mxu0 0.0
    %5715 = vmatpush.msra.mxu0 0.0
    %5716 = vmatpush.msra.mxu0 0.0
    %v5717 = vand.u32 %v5616, 4294901760
    %v5718 = vsub.f32 %v5616, %v5717
    %v5719 = vand.u32 %v5718, 4294901760
    %v5720 = vsub.f32 %v5718, %v5719
    %v5721 = vand.u32 %v5720, 4294901760
    %5722 = vmatpush.msra.mxu0 %v5721
    %v5723 = vand.u32 %v5613, 4294901760
    %v5724 = vsub.f32 %v5613, %v5723
    %v5725 = vand.u32 %v5724, 4294901760
    %v5726 = vsub.f32 %v5724, %v5725
    %v5727 = vand.u32 %v5726, 4294901760
    %5728 = vmatpush.msra.mxu0 %v5727
    %v5729 = vand.u32 %v5610, 4294901760
    %v5730 = vsub.f32 %v5610, %v5729
    %v5731 = vand.u32 %v5730, 4294901760
    %v5732 = vsub.f32 %v5730, %v5731
    %v5733 = vand.u32 %v5732, 4294901760
    %5734 = vmatpush.msra.mxu0 %v5733
    %v5735 = vand.u32 %v5607, 4294901760
    %v5736 = vsub.f32 %v5607, %v5735
    %v5737 = vand.u32 %v5736, 4294901760
    %v5738 = vsub.f32 %v5736, %v5737
    %v5739 = vand.u32 %v5738, 4294901760
    %5740 = vmatpush.msra.mxu0 %v5739
    %v5741 = vand.u32 %v5644, 4294901760
    %5742 = vmatmul.f32.gmra.mxu0 %v5741
    %v5743 = vpop.f32.mrf.mxu0
    %v5744 = vadd.f32 %v5679, %v5743
    %v5745 = vand.u32 %v5646, 4294901760
    %5746 = vmatmul.f32.gmra.mxu0 %v5745
    %v5747 = vpop.f32.mrf.mxu0
    %v5748 = vadd.f32 %v5687, %v5747
    %v5749 = vand.u32 %v5648, 4294901760
    %5750 = vmatmul.f32.gmra.mxu0 %v5749
    %v5751 = vpop.f32.mrf.mxu0
    %v5752 = vadd.f32 %v5695, %v5751
    %v5753 = vand.u32 %v5650, 4294901760
    %5754 = vmatmul.f32.gmra.mxu0 %v5753
    %v5755 = vpop.f32.mrf.mxu0
    %v5756 = vadd.f32 %v5703, %v5755
    %5757 = vdwg.mxu0
    %5758 = vmatpush.msra.mxu0 0.0
    %5759 = vmatpush.msra.mxu0 0.0
    %5760 = vmatpush.msra.mxu0 0.0
    %5761 = vmatpush.msra.mxu0 0.0
    %5762 = vmatpush.msra.mxu0 0.0
    %5763 = vmatpush.msra.mxu0 0.0
    %5764 = vmatpush.msra.mxu0 0.0
    %5765 = vmatpush.msra.mxu0 0.0
    %5766 = vmatpush.msra.mxu0 0.0
    %5767 = vmatpush.msra.mxu0 0.0
    %5768 = vmatpush.msra.mxu0 0.0
    %5769 = vmatpush.msra.mxu0 0.0
    %v5770 = vand.u32 %v5616, 4294901760
    %v5771 = vsub.f32 %v5616, %v5770
    %5772 = vmatpush.msra.mxu0 %v5771
    %v5773 = vand.u32 %v5613, 4294901760
    %v5774 = vsub.f32 %v5613, %v5773
    %5775 = vmatpush.msra.mxu0 %v5774
    %v5776 = vand.u32 %v5610, 4294901760
    %v5777 = vsub.f32 %v5610, %v5776
    %5778 = vmatpush.msra.mxu0 %v5777
    %v5779 = vand.u32 %v5607, 4294901760
    %v5780 = vsub.f32 %v5607, %v5779
    %5781 = vmatpush.msra.mxu0 %v5780
    %v5782 = vand.u32 %v5644, 4294901760
    %v5783 = vsub.f32 %v5644, %v5782
    %5784 = vmatmul.f32.gmra.mxu0 %v5783
    %v5785 = vpop.f32.mrf.mxu0
    %v5786 = vadd.f32 %v5744, %v5785
    %v5787 = vand.u32 %v5646, 4294901760
    %v5788 = vsub.f32 %v5646, %v5787
    %5789 = vmatmul.f32.gmra.mxu0 %v5788
    %v5790 = vpop.f32.mrf.mxu0
    %v5791 = vadd.f32 %v5748, %v5790
    %v5792 = vand.u32 %v5648, 4294901760
    %v5793 = vsub.f32 %v5648, %v5792
    %5794 = vmatmul.f32.gmra.mxu0 %v5793
    %v5795 = vpop.f32.mrf.mxu0
    %v5796 = vadd.f32 %v5752, %v5795
    %v5797 = vand.u32 %v5650, 4294901760
    %v5798 = vsub.f32 %v5650, %v5797
    %5799 = vmatmul.f32.gmra.mxu0 %v5798
    %v5800 = vpop.f32.mrf.mxu0
    %v5801 = vadd.f32 %v5756, %v5800
    %5802 = vdwg.mxu0
    %5803 = vmatpush.msra.mxu0 0.0
    %5804 = vmatpush.msra.mxu0 0.0
    %5805 = vmatpush.msra.mxu0 0.0
    %5806 = vmatpush.msra.mxu0 0.0
    %5807 = vmatpush.msra.mxu0 0.0
    %5808 = vmatpush.msra.mxu0 0.0
    %5809 = vmatpush.msra.mxu0 0.0
    %5810 = vmatpush.msra.mxu0 0.0
    %5811 = vmatpush.msra.mxu0 0.0
    %5812 = vmatpush.msra.mxu0 0.0
    %5813 = vmatpush.msra.mxu0 0.0
    %5814 = vmatpush.msra.mxu0 0.0
    %v5815 = vand.u32 %v5616, 4294901760
    %5816 = vmatpush.msra.mxu0 %v5815
    %v5817 = vand.u32 %v5613, 4294901760
    %5818 = vmatpush.msra.mxu0 %v5817
    %v5819 = vand.u32 %v5610, 4294901760
    %5820 = vmatpush.msra.mxu0 %v5819
    %v5821 = vand.u32 %v5607, 4294901760
    %5822 = vmatpush.msra.mxu0 %v5821
    %v5823 = vand.u32 %v5644, 4294901760
    %v5824 = vsub.f32 %v5644, %v5823
    %v5825 = vand.u32 %v5824, 4294901760
    %5826 = vmatmul.f32.gmra.mxu0 %v5825
    %v5827 = vpop.f32.mrf.mxu0
    %v5828 = vadd.f32 %v5786, %v5827
    %v5829 = vand.u32 %v5646, 4294901760
    %v5830 = vsub.f32 %v5646, %v5829
    %v5831 = vand.u32 %v5830, 4294901760
    %5832 = vmatmul.f32.gmra.mxu0 %v5831
    %v5833 = vpop.f32.mrf.mxu0
    %v5834 = vadd.f32 %v5791, %v5833
    %v5835 = vand.u32 %v5648, 4294901760
    %v5836 = vsub.f32 %v5648, %v5835
    %v5837 = vand.u32 %v5836, 4294901760
    %5838 = vmatmul.f32.gmra.mxu0 %v5837
    %v5839 = vpop.f32.mrf.mxu0
    %v5840 = vadd.f32 %v5796, %v5839
    %v5841 = vand.u32 %v5650, 4294901760
    %v5842 = vsub.f32 %v5650, %v5841
    %v5843 = vand.u32 %v5842, 4294901760
    %5844 = vmatmul.f32.gmra.mxu0 %v5843
    %v5845 = vpop.f32.mrf.mxu0
    %v5846 = vadd.f32 %v5801, %v5845
    %5847 = vdwg.mxu0
    %5848 = vmatpush.msra.mxu0 0.0
    %5849 = vmatpush.msra.mxu0 0.0
    %5850 = vmatpush.msra.mxu0 0.0
    %5851 = vmatpush.msra.mxu0 0.0
    %5852 = vmatpush.msra.mxu0 0.0
    %5853 = vmatpush.msra.mxu0 0.0
    %5854 = vmatpush.msra.mxu0 0.0
    %5855 = vmatpush.msra.mxu0 0.0
    %5856 = vmatpush.msra.mxu0 0.0
    %5857 = vmatpush.msra.mxu0 0.0
    %5858 = vmatpush.msra.mxu0 0.0
    %5859 = vmatpush.msra.mxu0 0.0
    %v5860 = vand.u32 %v5616, 4294901760
    %v5861 = vsub.f32 %v5616, %v5860
    %v5862 = vand.u32 %v5861, 4294901760
    %5863 = vmatpush.msra.mxu0 %v5862
    %v5864 = vand.u32 %v5613, 4294901760
    %v5865 = vsub.f32 %v5613, %v5864
    %v5866 = vand.u32 %v5865, 4294901760
    %5867 = vmatpush.msra.mxu0 %v5866
    %v5868 = vand.u32 %v5610, 4294901760
    %v5869 = vsub.f32 %v5610, %v5868
    %v5870 = vand.u32 %v5869, 4294901760
    %5871 = vmatpush.msra.mxu0 %v5870
    %v5872 = vand.u32 %v5607, 4294901760
    %v5873 = vsub.f32 %v5607, %v5872
    %v5874 = vand.u32 %v5873, 4294901760
    %5875 = vmatpush.msra.mxu0 %v5874
    %v5876 = vand.u32 %v5644, 4294901760
    %5877 = vmatmul.f32.gmra.mxu0 %v5876
    %v5878 = vpop.f32.mrf.mxu0
    %v5879 = vadd.f32 %v5828, %v5878
    %v5880 = vand.u32 %v5646, 4294901760
    %5881 = vmatmul.f32.gmra.mxu0 %v5880
    %v5882 = vpop.f32.mrf.mxu0
    %v5883 = vadd.f32 %v5834, %v5882
    %v5884 = vand.u32 %v5648, 4294901760
    %5885 = vmatmul.f32.gmra.mxu0 %v5884
    %v5886 = vpop.f32.mrf.mxu0
    %v5887 = vadd.f32 %v5840, %v5886
    %v5888 = vand.u32 %v5650, 4294901760
    %5889 = vmatmul.f32.gmra.mxu0 %v5888
    %v5890 = vpop.f32.mrf.mxu0
    %v5891 = vadd.f32 %v5846, %v5890
    %5892 = vdwg.mxu0
    %5893 = vmatpush.msra.mxu0 0.0
    %5894 = vmatpush.msra.mxu0 0.0
    %5895 = vmatpush.msra.mxu0 0.0
    %5896 = vmatpush.msra.mxu0 0.0
    %5897 = vmatpush.msra.mxu0 0.0
    %5898 = vmatpush.msra.mxu0 0.0
    %5899 = vmatpush.msra.mxu0 0.0
    %5900 = vmatpush.msra.mxu0 0.0
    %5901 = vmatpush.msra.mxu0 0.0
    %5902 = vmatpush.msra.mxu0 0.0
    %5903 = vmatpush.msra.mxu0 0.0
    %5904 = vmatpush.msra.mxu0 0.0
    %v5905 = vand.u32 %v5616, 4294901760
    %5906 = vmatpush.msra.mxu0 %v5905
    %v5907 = vand.u32 %v5613, 4294901760
    %5908 = vmatpush.msra.mxu0 %v5907
    %v5909 = vand.u32 %v5610, 4294901760
    %5910 = vmatpush.msra.mxu0 %v5909
    %v5911 = vand.u32 %v5607, 4294901760
    %5912 = vmatpush.msra.mxu0 %v5911
    %v5913 = vand.u32 %v5644, 4294901760
    %5914 = vmatmul.f32.gmra.mxu0 %v5913
    %v5915 = vpop.f32.mrf.mxu0
    %v5916 = vadd.f32 %v5879, %v5915
    %v5917 = vand.u32 %v5646, 4294901760
    %5918 = vmatmul.f32.gmra.mxu0 %v5917
    %v5919 = vpop.f32.mrf.mxu0
    %v5920 = vadd.f32 %v5883, %v5919
    %v5921 = vand.u32 %v5648, 4294901760
    %5922 = vmatmul.f32.gmra.mxu0 %v5921
    %v5923 = vpop.f32.mrf.mxu0
    %v5924 = vadd.f32 %v5887, %v5923
    %v5925 = vand.u32 %v5650, 4294901760
    %5926 = vmatmul.f32.gmra.mxu0 %v5925
    %v5927 = vpop.f32.mrf.mxu0
    %v5928 = vadd.f32 %v5891, %v5927
    %5929 = vdwg.mxu0
    %5930 = vmatpush.msra.mxu0 0.0
    %5931 = vmatpush.msra.mxu0 0.0
    %5932 = vmatpush.msra.mxu0 0.0
    %5933 = vmatpush.msra.mxu0 0.0
    %5934 = vmatpush.msra.mxu0 0.0
    %5935 = vmatpush.msra.mxu0 0.0
    %5936 = vmatpush.msra.mxu0 0.0
    %5937 = vmatpush.msra.mxu0 0.0
    %5938 = vmatpush.msra.mxu0 0.0
    %5939 = vmatpush.msra.mxu0 0.0
    %5940 = vmatpush.msra.mxu0 0.0
    %5941 = vmatpush.msra.mxu0 0.0
    %v5942 = vand.u32 %v5617, 4294901760
    %5943 = vmatpush.msra.mxu0 %v5942
    %v5944 = vand.u32 %v5614, 4294901760
    %5945 = vmatpush.msra.mxu0 %v5944
    %v5946 = vand.u32 %v5611, 4294901760
    %5947 = vmatpush.msra.mxu0 %v5946
    %v5948 = vand.u32 %v5608, 4294901760
    %5949 = vmatpush.msra.mxu0 %v5948
    %v5950 = vand.u32 %v5644, 4294901760
    %v5951 = vsub.f32 %v5644, %v5950
    %v5952 = vand.u32 %v5951, 4294901760
    %v5953 = vsub.f32 %v5951, %v5952
    %v5954 = vand.u32 %v5953, 4294901760
    %5955 = vmatmul.f32.gmra.mxu0 %v5954
    %v5956 = vpop.f32.mrf.mxu0
    %v5957 = vadd.f32 %v5627, %v5956
    %v5958 = vand.u32 %v5646, 4294901760
    %v5959 = vsub.f32 %v5646, %v5958
    %v5960 = vand.u32 %v5959, 4294901760
    %v5961 = vsub.f32 %v5959, %v5960
    %v5962 = vand.u32 %v5961, 4294901760
    %5963 = vmatmul.f32.gmra.mxu0 %v5962
    %v5964 = vpop.f32.mrf.mxu0
    %v5965 = vadd.f32 %v5632, %v5964
    %v5966 = vand.u32 %v5648, 4294901760
    %v5967 = vsub.f32 %v5648, %v5966
    %v5968 = vand.u32 %v5967, 4294901760
    %v5969 = vsub.f32 %v5967, %v5968
    %v5970 = vand.u32 %v5969, 4294901760
    %5971 = vmatmul.f32.gmra.mxu0 %v5970
    %v5972 = vpop.f32.mrf.mxu0
    %v5973 = vadd.f32 %v5637, %v5972
    %v5974 = vand.u32 %v5650, 4294901760
    %v5975 = vsub.f32 %v5650, %v5974
    %v5976 = vand.u32 %v5975, 4294901760
    %v5977 = vsub.f32 %v5975, %v5976
    %v5978 = vand.u32 %v5977, 4294901760
    %5979 = vmatmul.f32.gmra.mxu0 %v5978
    %v5980 = vpop.f32.mrf.mxu0
    %v5981 = vadd.f32 %v5642, %v5980
    %5982 = vdwg.mxu0
    %5983 = vmatpush.msra.mxu0 0.0
    %5984 = vmatpush.msra.mxu0 0.0
    %5985 = vmatpush.msra.mxu0 0.0
    %5986 = vmatpush.msra.mxu0 0.0
    %5987 = vmatpush.msra.mxu0 0.0
    %5988 = vmatpush.msra.mxu0 0.0
    %5989 = vmatpush.msra.mxu0 0.0
    %5990 = vmatpush.msra.mxu0 0.0
    %5991 = vmatpush.msra.mxu0 0.0
    %5992 = vmatpush.msra.mxu0 0.0
    %5993 = vmatpush.msra.mxu0 0.0
    %5994 = vmatpush.msra.mxu0 0.0
    %v5995 = vand.u32 %v5617, 4294901760
    %v5996 = vsub.f32 %v5617, %v5995
    %v5997 = vand.u32 %v5996, 4294901760
    %v5998 = vsub.f32 %v5996, %v5997
    %v5999 = vand.u32 %v5998, 4294901760
    %6000 = vmatpush.msra.mxu0 %v5999
    %v6001 = vand.u32 %v5614, 4294901760
    %v6002 = vsub.f32 %v5614, %v6001
    %v6003 = vand.u32 %v6002, 4294901760
    %v6004 = vsub.f32 %v6002, %v6003
    %v6005 = vand.u32 %v6004, 4294901760
    %6006 = vmatpush.msra.mxu0 %v6005
    %v6007 = vand.u32 %v5611, 4294901760
    %v6008 = vsub.f32 %v5611, %v6007
    %v6009 = vand.u32 %v6008, 4294901760
    %v6010 = vsub.f32 %v6008, %v6009
    %v6011 = vand.u32 %v6010, 4294901760
    %6012 = vmatpush.msra.mxu0 %v6011
    %v6013 = vand.u32 %v5608, 4294901760
    %v6014 = vsub.f32 %v5608, %v6013
    %v6015 = vand.u32 %v6014, 4294901760
    %v6016 = vsub.f32 %v6014, %v6015
    %v6017 = vand.u32 %v6016, 4294901760
    %6018 = vmatpush.msra.mxu0 %v6017
    %v6019 = vand.u32 %v5644, 4294901760
    %6020 = vmatmul.f32.gmra.mxu0 %v6019
    %v6021 = vpop.f32.mrf.mxu0
    %v6022 = vadd.f32 %v5957, %v6021
    %v6023 = vand.u32 %v5646, 4294901760
    %6024 = vmatmul.f32.gmra.mxu0 %v6023
    %v6025 = vpop.f32.mrf.mxu0
    %v6026 = vadd.f32 %v5965, %v6025
    %v6027 = vand.u32 %v5648, 4294901760
    %6028 = vmatmul.f32.gmra.mxu0 %v6027
    %v6029 = vpop.f32.mrf.mxu0
    %v6030 = vadd.f32 %v5973, %v6029
    %v6031 = vand.u32 %v5650, 4294901760
    %6032 = vmatmul.f32.gmra.mxu0 %v6031
    %v6033 = vpop.f32.mrf.mxu0
    %v6034 = vadd.f32 %v5981, %v6033
    %6035 = vdwg.mxu0
    %6036 = vmatpush.msra.mxu0 0.0
    %6037 = vmatpush.msra.mxu0 0.0
    %6038 = vmatpush.msra.mxu0 0.0
    %6039 = vmatpush.msra.mxu0 0.0
    %6040 = vmatpush.msra.mxu0 0.0
    %6041 = vmatpush.msra.mxu0 0.0
    %6042 = vmatpush.msra.mxu0 0.0
    %6043 = vmatpush.msra.mxu0 0.0
    %6044 = vmatpush.msra.mxu0 0.0
    %6045 = vmatpush.msra.mxu0 0.0
    %6046 = vmatpush.msra.mxu0 0.0
    %6047 = vmatpush.msra.mxu0 0.0
    %v6048 = vand.u32 %v5617, 4294901760
    %v6049 = vsub.f32 %v5617, %v6048
    %6050 = vmatpush.msra.mxu0 %v6049
    %v6051 = vand.u32 %v5614, 4294901760
    %v6052 = vsub.f32 %v5614, %v6051
    %6053 = vmatpush.msra.mxu0 %v6052
    %v6054 = vand.u32 %v5611, 4294901760
    %v6055 = vsub.f32 %v5611, %v6054
    %6056 = vmatpush.msra.mxu0 %v6055
    %v6057 = vand.u32 %v5608, 4294901760
    %v6058 = vsub.f32 %v5608, %v6057
    %6059 = vmatpush.msra.mxu0 %v6058
    %v6060 = vand.u32 %v5644, 4294901760
    %v6061 = vsub.f32 %v5644, %v6060
    %6062 = vmatmul.f32.gmra.mxu0 %v6061
    %v6063 = vpop.f32.mrf.mxu0
    %v6064 = vadd.f32 %v6022, %v6063
    %v6065 = vand.u32 %v5646, 4294901760
    %v6066 = vsub.f32 %v5646, %v6065
    %6067 = vmatmul.f32.gmra.mxu0 %v6066
    %v6068 = vpop.f32.mrf.mxu0
    %v6069 = vadd.f32 %v6026, %v6068
    %v6070 = vand.u32 %v5648, 4294901760
    %v6071 = vsub.f32 %v5648, %v6070
    %6072 = vmatmul.f32.gmra.mxu0 %v6071
    %v6073 = vpop.f32.mrf.mxu0
    %v6074 = vadd.f32 %v6030, %v6073
    %v6075 = vand.u32 %v5650, 4294901760
    %v6076 = vsub.f32 %v5650, %v6075
    %6077 = vmatmul.f32.gmra.mxu0 %v6076
    %v6078 = vpop.f32.mrf.mxu0
    %v6079 = vadd.f32 %v6034, %v6078
    %6080 = vdwg.mxu0
    %6081 = vmatpush.msra.mxu0 0.0
    %6082 = vmatpush.msra.mxu0 0.0
    %6083 = vmatpush.msra.mxu0 0.0
    %6084 = vmatpush.msra.mxu0 0.0
    %6085 = vmatpush.msra.mxu0 0.0
    %6086 = vmatpush.msra.mxu0 0.0
    %6087 = vmatpush.msra.mxu0 0.0
    %6088 = vmatpush.msra.mxu0 0.0
    %6089 = vmatpush.msra.mxu0 0.0
    %6090 = vmatpush.msra.mxu0 0.0
    %6091 = vmatpush.msra.mxu0 0.0
    %6092 = vmatpush.msra.mxu0 0.0
    %v6093 = vand.u32 %v5617, 4294901760
    %6094 = vmatpush.msra.mxu0 %v6093
    %v6095 = vand.u32 %v5614, 4294901760
    %6096 = vmatpush.msra.mxu0 %v6095
    %v6097 = vand.u32 %v5611, 4294901760
    %6098 = vmatpush.msra.mxu0 %v6097
    %v6099 = vand.u32 %v5608, 4294901760
    %6100 = vmatpush.msra.mxu0 %v6099
    %v6101 = vand.u32 %v5644, 4294901760
    %v6102 = vsub.f32 %v5644, %v6101
    %v6103 = vand.u32 %v6102, 4294901760
    %6104 = vmatmul.f32.gmra.mxu0 %v6103
    %v6105 = vpop.f32.mrf.mxu0
    %v6106 = vadd.f32 %v6064, %v6105
    %v6107 = vand.u32 %v5646, 4294901760
    %v6108 = vsub.f32 %v5646, %v6107
    %v6109 = vand.u32 %v6108, 4294901760
    %6110 = vmatmul.f32.gmra.mxu0 %v6109
    %v6111 = vpop.f32.mrf.mxu0
    %v6112 = vadd.f32 %v6069, %v6111
    %v6113 = vand.u32 %v5648, 4294901760
    %v6114 = vsub.f32 %v5648, %v6113
    %v6115 = vand.u32 %v6114, 4294901760
    %6116 = vmatmul.f32.gmra.mxu0 %v6115
    %v6117 = vpop.f32.mrf.mxu0
    %v6118 = vadd.f32 %v6074, %v6117
    %v6119 = vand.u32 %v5650, 4294901760
    %v6120 = vsub.f32 %v5650, %v6119
    %v6121 = vand.u32 %v6120, 4294901760
    %6122 = vmatmul.f32.gmra.mxu0 %v6121
    %v6123 = vpop.f32.mrf.mxu0
    %v6124 = vadd.f32 %v6079, %v6123
    %6125 = vdwg.mxu0
    %6126 = vmatpush.msra.mxu0 0.0
    %6127 = vmatpush.msra.mxu0 0.0
    %6128 = vmatpush.msra.mxu0 0.0
    %6129 = vmatpush.msra.mxu0 0.0
    %6130 = vmatpush.msra.mxu0 0.0
    %6131 = vmatpush.msra.mxu0 0.0
    %6132 = vmatpush.msra.mxu0 0.0
    %6133 = vmatpush.msra.mxu0 0.0
    %6134 = vmatpush.msra.mxu0 0.0
    %6135 = vmatpush.msra.mxu0 0.0
    %6136 = vmatpush.msra.mxu0 0.0
    %6137 = vmatpush.msra.mxu0 0.0
    %v6138 = vand.u32 %v5617, 4294901760
    %v6139 = vsub.f32 %v5617, %v6138
    %v6140 = vand.u32 %v6139, 4294901760
    %6141 = vmatpush.msra.mxu0 %v6140
    %v6142 = vand.u32 %v5614, 4294901760
    %v6143 = vsub.f32 %v5614, %v6142
    %v6144 = vand.u32 %v6143, 4294901760
    %6145 = vmatpush.msra.mxu0 %v6144
    %v6146 = vand.u32 %v5611, 4294901760
    %v6147 = vsub.f32 %v5611, %v6146
    %v6148 = vand.u32 %v6147, 4294901760
    %6149 = vmatpush.msra.mxu0 %v6148
    %v6150 = vand.u32 %v5608, 4294901760
    %v6151 = vsub.f32 %v5608, %v6150
    %v6152 = vand.u32 %v6151, 4294901760
    %6153 = vmatpush.msra.mxu0 %v6152
    %v6154 = vand.u32 %v5644, 4294901760
    %6155 = vmatmul.f32.gmra.mxu0 %v6154
    %v6156 = vpop.f32.mrf.mxu0
    %v6157 = vadd.f32 %v6106, %v6156
    %v6158 = vand.u32 %v5646, 4294901760
    %6159 = vmatmul.f32.gmra.mxu0 %v6158
    %v6160 = vpop.f32.mrf.mxu0
    %v6161 = vadd.f32 %v6112, %v6160
    %v6162 = vand.u32 %v5648, 4294901760
    %6163 = vmatmul.f32.gmra.mxu0 %v6162
    %v6164 = vpop.f32.mrf.mxu0
    %v6165 = vadd.f32 %v6118, %v6164
    %v6166 = vand.u32 %v5650, 4294901760
    %6167 = vmatmul.f32.gmra.mxu0 %v6166
    %v6168 = vpop.f32.mrf.mxu0
    %v6169 = vadd.f32 %v6124, %v6168
    %6170 = vdwg.mxu0
    %6171 = vmatpush.msra.mxu0 0.0
    %6172 = vmatpush.msra.mxu0 0.0
    %6173 = vmatpush.msra.mxu0 0.0
    %6174 = vmatpush.msra.mxu0 0.0
    %6175 = vmatpush.msra.mxu0 0.0
    %6176 = vmatpush.msra.mxu0 0.0
    %6177 = vmatpush.msra.mxu0 0.0
    %6178 = vmatpush.msra.mxu0 0.0
    %6179 = vmatpush.msra.mxu0 0.0
    %6180 = vmatpush.msra.mxu0 0.0
    %6181 = vmatpush.msra.mxu0 0.0
    %6182 = vmatpush.msra.mxu0 0.0
    %v6183 = vand.u32 %v5617, 4294901760
    %6184 = vmatpush.msra.mxu0 %v6183
    %v6185 = vand.u32 %v5614, 4294901760
    %6186 = vmatpush.msra.mxu0 %v6185
    %v6187 = vand.u32 %v5611, 4294901760
    %6188 = vmatpush.msra.mxu0 %v6187
    %v6189 = vand.u32 %v5608, 4294901760
    %6190 = vmatpush.msra.mxu0 %v6189
    %v6191 = vand.u32 %v5644, 4294901760
    %6192 = vmatmul.f32.gmra.mxu0 %v6191
    %v6193 = vpop.f32.mrf.mxu0
    %v6194 = vadd.f32 %v6157, %v6193
    %v6195 = vand.u32 %v5646, 4294901760
    %6196 = vmatmul.f32.gmra.mxu0 %v6195
    %v6197 = vpop.f32.mrf.mxu0
    %v6198 = vadd.f32 %v6161, %v6197
    %v6199 = vand.u32 %v5648, 4294901760
    %6200 = vmatmul.f32.gmra.mxu0 %v6199
    %v6201 = vpop.f32.mrf.mxu0
    %v6202 = vadd.f32 %v6165, %v6201
    %v6203 = vand.u32 %v5650, 4294901760
    %6204 = vmatmul.f32.gmra.mxu0 %v6203
    %v6205 = vpop.f32.mrf.mxu0
    %v6206 = vadd.f32 %v6169, %v6205
    %6207 = vdwg.mxu0
    %6208 = vmatpush.msra.mxu0 0.0
    %6209 = vmatpush.msra.mxu0 0.0
    %6210 = vmatpush.msra.mxu0 0.0
    %6211 = vmatpush.msra.mxu0 0.0
    %6212 = vmatpush.msra.mxu0 0.0
    %6213 = vmatpush.msra.mxu0 0.0
    %6214 = vmatpush.msra.mxu0 0.0
    %6215 = vmatpush.msra.mxu0 0.0
    %6216 = vmatpush.msra.mxu0 0.0
    %6217 = vmatpush.msra.mxu0 0.0
    %6218 = vmatpush.msra.mxu0 0.0
    %6219 = vmatpush.msra.mxu0 0.0
    %v6220 = vand.u32 %v5618, 4294901760
    %6221 = vmatpush.msra.mxu0 %v6220
    %v6222 = vand.u32 %v5615, 4294901760
    %6223 = vmatpush.msra.mxu0 %v6222
    %v6224 = vand.u32 %v5612, 4294901760
    %6225 = vmatpush.msra.mxu0 %v6224
    %v6226 = vand.u32 %v5609, 4294901760
    %6227 = vmatpush.msra.mxu0 %v6226
    %v6228 = vand.u32 %v5644, 4294901760
    %v6229 = vsub.f32 %v5644, %v6228
    %v6230 = vand.u32 %v6229, 4294901760
    %v6231 = vsub.f32 %v6229, %v6230
    %v6232 = vand.u32 %v6231, 4294901760
    %6233 = vmatmul.f32.gmra.mxu0 %v6232
    %v6234 = vpop.f32.mrf.mxu0
    %v6235 = vadd.f32 %v5627, %v6234
    %v6236 = vand.u32 %v5646, 4294901760
    %v6237 = vsub.f32 %v5646, %v6236
    %v6238 = vand.u32 %v6237, 4294901760
    %v6239 = vsub.f32 %v6237, %v6238
    %v6240 = vand.u32 %v6239, 4294901760
    %6241 = vmatmul.f32.gmra.mxu0 %v6240
    %v6242 = vpop.f32.mrf.mxu0
    %v6243 = vadd.f32 %v5632, %v6242
    %v6244 = vand.u32 %v5648, 4294901760
    %v6245 = vsub.f32 %v5648, %v6244
    %v6246 = vand.u32 %v6245, 4294901760
    %v6247 = vsub.f32 %v6245, %v6246
    %v6248 = vand.u32 %v6247, 4294901760
    %6249 = vmatmul.f32.gmra.mxu0 %v6248
    %v6250 = vpop.f32.mrf.mxu0
    %v6251 = vadd.f32 %v5637, %v6250
    %v6252 = vand.u32 %v5650, 4294901760
    %v6253 = vsub.f32 %v5650, %v6252
    %v6254 = vand.u32 %v6253, 4294901760
    %v6255 = vsub.f32 %v6253, %v6254
    %v6256 = vand.u32 %v6255, 4294901760
    %6257 = vmatmul.f32.gmra.mxu0 %v6256
    %v6258 = vpop.f32.mrf.mxu0
    %v6259 = vadd.f32 %v5642, %v6258
    %6260 = vdwg.mxu0
    %6261 = vmatpush.msra.mxu0 0.0
    %6262 = vmatpush.msra.mxu0 0.0
    %6263 = vmatpush.msra.mxu0 0.0
    %6264 = vmatpush.msra.mxu0 0.0
    %6265 = vmatpush.msra.mxu0 0.0
    %6266 = vmatpush.msra.mxu0 0.0
    %6267 = vmatpush.msra.mxu0 0.0
    %6268 = vmatpush.msra.mxu0 0.0
    %6269 = vmatpush.msra.mxu0 0.0
    %6270 = vmatpush.msra.mxu0 0.0
    %6271 = vmatpush.msra.mxu0 0.0
    %6272 = vmatpush.msra.mxu0 0.0
    %v6273 = vand.u32 %v5618, 4294901760
    %v6274 = vsub.f32 %v5618, %v6273
    %v6275 = vand.u32 %v6274, 4294901760
    %v6276 = vsub.f32 %v6274, %v6275
    %v6277 = vand.u32 %v6276, 4294901760
    %6278 = vmatpush.msra.mxu0 %v6277
    %v6279 = vand.u32 %v5615, 4294901760
    %v6280 = vsub.f32 %v5615, %v6279
    %v6281 = vand.u32 %v6280, 4294901760
    %v6282 = vsub.f32 %v6280, %v6281
    %v6283 = vand.u32 %v6282, 4294901760
    %6284 = vmatpush.msra.mxu0 %v6283
    %v6285 = vand.u32 %v5612, 4294901760
    %v6286 = vsub.f32 %v5612, %v6285
    %v6287 = vand.u32 %v6286, 4294901760
    %v6288 = vsub.f32 %v6286, %v6287
    %v6289 = vand.u32 %v6288, 4294901760
    %6290 = vmatpush.msra.mxu0 %v6289
    %v6291 = vand.u32 %v5609, 4294901760
    %v6292 = vsub.f32 %v5609, %v6291
    %v6293 = vand.u32 %v6292, 4294901760
    %v6294 = vsub.f32 %v6292, %v6293
    %v6295 = vand.u32 %v6294, 4294901760
    %6296 = vmatpush.msra.mxu0 %v6295
    %v6297 = vand.u32 %v5644, 4294901760
    %6298 = vmatmul.f32.gmra.mxu0 %v6297
    %v6299 = vpop.f32.mrf.mxu0
    %v6300 = vadd.f32 %v6235, %v6299
    %v6301 = vand.u32 %v5646, 4294901760
    %6302 = vmatmul.f32.gmra.mxu0 %v6301
    %v6303 = vpop.f32.mrf.mxu0
    %v6304 = vadd.f32 %v6243, %v6303
    %v6305 = vand.u32 %v5648, 4294901760
    %6306 = vmatmul.f32.gmra.mxu0 %v6305
    %v6307 = vpop.f32.mrf.mxu0
    %v6308 = vadd.f32 %v6251, %v6307
    %v6309 = vand.u32 %v5650, 4294901760
    %6310 = vmatmul.f32.gmra.mxu0 %v6309
    %v6311 = vpop.f32.mrf.mxu0
    %v6312 = vadd.f32 %v6259, %v6311
    %6313 = vdwg.mxu0
    %6314 = vmatpush.msra.mxu0 0.0
    %6315 = vmatpush.msra.mxu0 0.0
    %6316 = vmatpush.msra.mxu0 0.0
    %6317 = vmatpush.msra.mxu0 0.0
    %6318 = vmatpush.msra.mxu0 0.0
    %6319 = vmatpush.msra.mxu0 0.0
    %6320 = vmatpush.msra.mxu0 0.0
    %6321 = vmatpush.msra.mxu0 0.0
    %6322 = vmatpush.msra.mxu0 0.0
    %6323 = vmatpush.msra.mxu0 0.0
    %6324 = vmatpush.msra.mxu0 0.0
    %6325 = vmatpush.msra.mxu0 0.0
    %v6326 = vand.u32 %v5618, 4294901760
    %v6327 = vsub.f32 %v5618, %v6326
    %6328 = vmatpush.msra.mxu0 %v6327
    %v6329 = vand.u32 %v5615, 4294901760
    %v6330 = vsub.f32 %v5615, %v6329
    %6331 = vmatpush.msra.mxu0 %v6330
    %v6332 = vand.u32 %v5612, 4294901760
    %v6333 = vsub.f32 %v5612, %v6332
    %6334 = vmatpush.msra.mxu0 %v6333
    %v6335 = vand.u32 %v5609, 4294901760
    %v6336 = vsub.f32 %v5609, %v6335
    %6337 = vmatpush.msra.mxu0 %v6336
    %v6338 = vand.u32 %v5644, 4294901760
    %v6339 = vsub.f32 %v5644, %v6338
    %6340 = vmatmul.f32.gmra.mxu0 %v6339
    %v6341 = vpop.f32.mrf.mxu0
    %v6342 = vadd.f32 %v6300, %v6341
    %v6343 = vand.u32 %v5646, 4294901760
    %v6344 = vsub.f32 %v5646, %v6343
    %6345 = vmatmul.f32.gmra.mxu0 %v6344
    %v6346 = vpop.f32.mrf.mxu0
    %v6347 = vadd.f32 %v6304, %v6346
    %v6348 = vand.u32 %v5648, 4294901760
    %v6349 = vsub.f32 %v5648, %v6348
    %6350 = vmatmul.f32.gmra.mxu0 %v6349
    %v6351 = vpop.f32.mrf.mxu0
    %v6352 = vadd.f32 %v6308, %v6351
    %v6353 = vand.u32 %v5650, 4294901760
    %v6354 = vsub.f32 %v5650, %v6353
    %6355 = vmatmul.f32.gmra.mxu0 %v6354
    %v6356 = vpop.f32.mrf.mxu0
    %v6357 = vadd.f32 %v6312, %v6356
    %6358 = vdwg.mxu0
    %6359 = vmatpush.msra.mxu0 0.0
    %6360 = vmatpush.msra.mxu0 0.0
    %6361 = vmatpush.msra.mxu0 0.0
    %6362 = vmatpush.msra.mxu0 0.0
    %6363 = vmatpush.msra.mxu0 0.0
    %6364 = vmatpush.msra.mxu0 0.0
    %6365 = vmatpush.msra.mxu0 0.0
    %6366 = vmatpush.msra.mxu0 0.0
    %6367 = vmatpush.msra.mxu0 0.0
    %6368 = vmatpush.msra.mxu0 0.0
    %6369 = vmatpush.msra.mxu0 0.0
    %6370 = vmatpush.msra.mxu0 0.0
    %v6371 = vand.u32 %v5618, 4294901760
    %6372 = vmatpush.msra.mxu0 %v6371
    %v6373 = vand.u32 %v5615, 4294901760
    %6374 = vmatpush.msra.mxu0 %v6373
    %v6375 = vand.u32 %v5612, 4294901760
    %6376 = vmatpush.msra.mxu0 %v6375
    %v6377 = vand.u32 %v5609, 4294901760
    %6378 = vmatpush.msra.mxu0 %v6377
    %v6379 = vand.u32 %v5644, 4294901760
    %v6380 = vsub.f32 %v5644, %v6379
    %v6381 = vand.u32 %v6380, 4294901760
    %6382 = vmatmul.f32.gmra.mxu0 %v6381
    %v6383 = vpop.f32.mrf.mxu0
    %v6384 = vadd.f32 %v6342, %v6383
    %v6385 = vand.u32 %v5646, 4294901760
    %v6386 = vsub.f32 %v5646, %v6385
    %v6387 = vand.u32 %v6386, 4294901760
    %6388 = vmatmul.f32.gmra.mxu0 %v6387
    %v6389 = vpop.f32.mrf.mxu0
    %v6390 = vadd.f32 %v6347, %v6389
    %v6391 = vand.u32 %v5648, 4294901760
    %v6392 = vsub.f32 %v5648, %v6391
    %v6393 = vand.u32 %v6392, 4294901760
    %6394 = vmatmul.f32.gmra.mxu0 %v6393
    %v6395 = vpop.f32.mrf.mxu0
    %v6396 = vadd.f32 %v6352, %v6395
    %v6397 = vand.u32 %v5650, 4294901760
    %v6398 = vsub.f32 %v5650, %v6397
    %v6399 = vand.u32 %v6398, 4294901760
    %6400 = vmatmul.f32.gmra.mxu0 %v6399
    %v6401 = vpop.f32.mrf.mxu0
    %v6402 = vadd.f32 %v6357, %v6401
    %6403 = vdwg.mxu0
    %6404 = vmatpush.msra.mxu0 0.0
    %6405 = vmatpush.msra.mxu0 0.0
    %6406 = vmatpush.msra.mxu0 0.0
    %6407 = vmatpush.msra.mxu0 0.0
    %6408 = vmatpush.msra.mxu0 0.0
    %6409 = vmatpush.msra.mxu0 0.0
    %6410 = vmatpush.msra.mxu0 0.0
    %6411 = vmatpush.msra.mxu0 0.0
    %6412 = vmatpush.msra.mxu0 0.0
    %6413 = vmatpush.msra.mxu0 0.0
    %6414 = vmatpush.msra.mxu0 0.0
    %6415 = vmatpush.msra.mxu0 0.0
    %v6416 = vand.u32 %v5618, 4294901760
    %v6417 = vsub.f32 %v5618, %v6416
    %v6418 = vand.u32 %v6417, 4294901760
    %6419 = vmatpush.msra.mxu0 %v6418
    %v6420 = vand.u32 %v5615, 4294901760
    %v6421 = vsub.f32 %v5615, %v6420
    %v6422 = vand.u32 %v6421, 4294901760
    %6423 = vmatpush.msra.mxu0 %v6422
    %v6424 = vand.u32 %v5612, 4294901760
    %v6425 = vsub.f32 %v5612, %v6424
    %v6426 = vand.u32 %v6425, 4294901760
    %6427 = vmatpush.msra.mxu0 %v6426
    %v6428 = vand.u32 %v5609, 4294901760
    %v6429 = vsub.f32 %v5609, %v6428
    %v6430 = vand.u32 %v6429, 4294901760
    %6431 = vmatpush.msra.mxu0 %v6430
    %v6432 = vand.u32 %v5644, 4294901760
    %6433 = vmatmul.f32.gmra.mxu0 %v6432
    %v6434 = vpop.f32.mrf.mxu0
    %v6435 = vadd.f32 %v6384, %v6434
    %v6436 = vand.u32 %v5646, 4294901760
    %6437 = vmatmul.f32.gmra.mxu0 %v6436
    %v6438 = vpop.f32.mrf.mxu0
    %v6439 = vadd.f32 %v6390, %v6438
    %v6440 = vand.u32 %v5648, 4294901760
    %6441 = vmatmul.f32.gmra.mxu0 %v6440
    %v6442 = vpop.f32.mrf.mxu0
    %v6443 = vadd.f32 %v6396, %v6442
    %v6444 = vand.u32 %v5650, 4294901760
    %6445 = vmatmul.f32.gmra.mxu0 %v6444
    %v6446 = vpop.f32.mrf.mxu0
    %v6447 = vadd.f32 %v6402, %v6446
    %6448 = vdwg.mxu0
    %6449 = vmatpush.msra.mxu0 0.0
    %6450 = vmatpush.msra.mxu0 0.0
    %6451 = vmatpush.msra.mxu0 0.0
    %6452 = vmatpush.msra.mxu0 0.0
    %6453 = vmatpush.msra.mxu0 0.0
    %6454 = vmatpush.msra.mxu0 0.0
    %6455 = vmatpush.msra.mxu0 0.0
    %6456 = vmatpush.msra.mxu0 0.0
    %6457 = vmatpush.msra.mxu0 0.0
    %6458 = vmatpush.msra.mxu0 0.0
    %6459 = vmatpush.msra.mxu0 0.0
    %6460 = vmatpush.msra.mxu0 0.0
    %v6461 = vand.u32 %v5618, 4294901760
    %6462 = vmatpush.msra.mxu0 %v6461
    %v6463 = vand.u32 %v5615, 4294901760
    %6464 = vmatpush.msra.mxu0 %v6463
    %v6465 = vand.u32 %v5612, 4294901760
    %6466 = vmatpush.msra.mxu0 %v6465
    %v6467 = vand.u32 %v5609, 4294901760
    %6468 = vmatpush.msra.mxu0 %v6467
    %v6469 = vand.u32 %v5644, 4294901760
    %6470 = vmatmul.f32.gmra.mxu0 %v6469
    %v6471 = vpop.f32.mrf.mxu0
    %v6472 = vadd.f32 %v6435, %v6471
    %v6473 = vand.u32 %v5646, 4294901760
    %6474 = vmatmul.f32.gmra.mxu0 %v6473
    %v6475 = vpop.f32.mrf.mxu0
    %v6476 = vadd.f32 %v6439, %v6475
    %v6477 = vand.u32 %v5648, 4294901760
    %6478 = vmatmul.f32.gmra.mxu0 %v6477
    %v6479 = vpop.f32.mrf.mxu0
    %v6480 = vadd.f32 %v6443, %v6479
    %v6481 = vand.u32 %v5650, 4294901760
    %6482 = vmatmul.f32.gmra.mxu0 %v6481
    %v6483 = vpop.f32.mrf.mxu0
    %v6484 = vadd.f32 %v6447, %v6483
    %6485 = vdwg.mxu0
    %v6486 = vtanh.pop %v5916
    %v6487 = vtanh.pop %v6194
    %v6488 = vtanh.pop %v6472
    %v6489 = vtanh.pop %v5920
    %v6490 = vtanh.pop %v6198
    %v6491 = vtanh.pop %v6476
    %v6492 = vtanh.pop %v5924
    %v6493 = vtanh.pop %v6202
    %v6494 = vtanh.pop %v6480
    %v6495 = vtanh.pop %v5928
    %v6496 = vtanh.pop %v6206
    %v6497 = vtanh.pop %v6484
    %v6498 = vld [vmem:[%s4] sm:$0x3]
    %6500 = vset.pattern.permute.xlu0 32
    %6501 = vperm.xlu0 %6500, %v6498
    %v6502 = vpop.permute.xlu0 %6501
    %v6504 = vsel %vm3885, %v6498, 0
    %6506 = vmatpush.msra.mxu0 0.0
    %6507 = vmatpush.msra.mxu0 0.0
    %6508 = vmatpush.msra.mxu0 0.0
    %6509 = vmatpush.msra.mxu0 0.0
    %6510 = vmatpush.msra.mxu0 0.0
    %6511 = vmatpush.msra.mxu0 0.0
    %6512 = vmatpush.msra.mxu0 0.0
    %6513 = vmatpush.msra.mxu0 0.0
    %6514 = vmatpush.msra.mxu0 0.0
    %6515 = vmatpush.msra.mxu0 0.0
    %6516 = vmatpush.msra.mxu0 0.0
    %6517 = vmatpush.msra.mxu0 0.0
    %v6518 = vand.u32 %v6495, 4294901760
    %6519 = vmatpush.msra.mxu0 %v6518
    %v6520 = vand.u32 %v6492, 4294901760
    %6521 = vmatpush.msra.mxu0 %v6520
    %v6522 = vand.u32 %v6489, 4294901760
    %6523 = vmatpush.msra.mxu0 %v6522
    %v6524 = vand.u32 %v6486, 4294901760
    %6525 = vmatpush.msra.mxu0 %v6524
    %v6526 = vand.u32 %v6504, 4294901760
    %v6527 = vsub.f32 %v6504, %v6526
    %v6528 = vand.u32 %v6527, 4294901760
    %v6529 = vsub.f32 %v6527, %v6528
    %v6530 = vand.u32 %v6529, 4294901760
    %6531 = vmatmul.f32.gmra.mxu0 %v6530
    %v6532 = vpop.f32.mrf.mxu0
    %v6533 = vadd.f32 %v6502, %v6532
    %6534 = vdwg.mxu0
    %6535 = vmatpush.msra.mxu0 0.0
    %6536 = vmatpush.msra.mxu0 0.0
    %6537 = vmatpush.msra.mxu0 0.0
    %6538 = vmatpush.msra.mxu0 0.0
    %6539 = vmatpush.msra.mxu0 0.0
    %6540 = vmatpush.msra.mxu0 0.0
    %6541 = vmatpush.msra.mxu0 0.0
    %6542 = vmatpush.msra.mxu0 0.0
    %6543 = vmatpush.msra.mxu0 0.0
    %6544 = vmatpush.msra.mxu0 0.0
    %6545 = vmatpush.msra.mxu0 0.0
    %6546 = vmatpush.msra.mxu0 0.0
    %v6547 = vand.u32 %v6495, 4294901760
    %v6548 = vsub.f32 %v6495, %v6547
    %v6549 = vand.u32 %v6548, 4294901760
    %v6550 = vsub.f32 %v6548, %v6549
    %v6551 = vand.u32 %v6550, 4294901760
    %6552 = vmatpush.msra.mxu0 %v6551
    %v6553 = vand.u32 %v6492, 4294901760
    %v6554 = vsub.f32 %v6492, %v6553
    %v6555 = vand.u32 %v6554, 4294901760
    %v6556 = vsub.f32 %v6554, %v6555
    %v6557 = vand.u32 %v6556, 4294901760
    %6558 = vmatpush.msra.mxu0 %v6557
    %v6559 = vand.u32 %v6489, 4294901760
    %v6560 = vsub.f32 %v6489, %v6559
    %v6561 = vand.u32 %v6560, 4294901760
    %v6562 = vsub.f32 %v6560, %v6561
    %v6563 = vand.u32 %v6562, 4294901760
    %6564 = vmatpush.msra.mxu0 %v6563
    %v6565 = vand.u32 %v6486, 4294901760
    %v6566 = vsub.f32 %v6486, %v6565
    %v6567 = vand.u32 %v6566, 4294901760
    %v6568 = vsub.f32 %v6566, %v6567
    %v6569 = vand.u32 %v6568, 4294901760
    %6570 = vmatpush.msra.mxu0 %v6569
    %v6571 = vand.u32 %v6504, 4294901760
    %6572 = vmatmul.f32.gmra.mxu0 %v6571
    %v6573 = vpop.f32.mrf.mxu0
    %v6574 = vadd.f32 %v6533, %v6573
    %6575 = vdwg.mxu0
    %6576 = vmatpush.msra.mxu0 0.0
    %6577 = vmatpush.msra.mxu0 0.0
    %6578 = vmatpush.msra.mxu0 0.0
    %6579 = vmatpush.msra.mxu0 0.0
    %6580 = vmatpush.msra.mxu0 0.0
    %6581 = vmatpush.msra.mxu0 0.0
    %6582 = vmatpush.msra.mxu0 0.0
    %6583 = vmatpush.msra.mxu0 0.0
    %6584 = vmatpush.msra.mxu0 0.0
    %6585 = vmatpush.msra.mxu0 0.0
    %6586 = vmatpush.msra.mxu0 0.0
    %6587 = vmatpush.msra.mxu0 0.0
    %v6588 = vand.u32 %v6495, 4294901760
    %v6589 = vsub.f32 %v6495, %v6588
    %6590 = vmatpush.msra.mxu0 %v6589
    %v6591 = vand.u32 %v6492, 4294901760
    %v6592 = vsub.f32 %v6492, %v6591
    %6593 = vmatpush.msra.mxu0 %v6592
    %v6594 = vand.u32 %v6489, 4294901760
    %v6595 = vsub.f32 %v6489, %v6594
    %6596 = vmatpush.msra.mxu0 %v6595
    %v6597 = vand.u32 %v6486, 4294901760
    %v6598 = vsub.f32 %v6486, %v6597
    %6599 = vmatpush.msra.mxu0 %v6598
    %v6600 = vand.u32 %v6504, 4294901760
    %v6601 = vsub.f32 %v6504, %v6600
    %6602 = vmatmul.f32.gmra.mxu0 %v6601
    %v6603 = vpop.f32.mrf.mxu0
    %v6604 = vadd.f32 %v6574, %v6603
    %6605 = vdwg.mxu0
    %6606 = vmatpush.msra.mxu0 0.0
    %6607 = vmatpush.msra.mxu0 0.0
    %6608 = vmatpush.msra.mxu0 0.0
    %6609 = vmatpush.msra.mxu0 0.0
    %6610 = vmatpush.msra.mxu0 0.0
    %6611 = vmatpush.msra.mxu0 0.0
    %6612 = vmatpush.msra.mxu0 0.0
    %6613 = vmatpush.msra.mxu0 0.0
    %6614 = vmatpush.msra.mxu0 0.0
    %6615 = vmatpush.msra.mxu0 0.0
    %6616 = vmatpush.msra.mxu0 0.0
    %6617 = vmatpush.msra.mxu0 0.0
    %v6618 = vand.u32 %v6495, 4294901760
    %6619 = vmatpush.msra.mxu0 %v6618
    %v6620 = vand.u32 %v6492, 4294901760
    %6621 = vmatpush.msra.mxu0 %v6620
    %v6622 = vand.u32 %v6489, 4294901760
    %6623 = vmatpush.msra.mxu0 %v6622
    %v6624 = vand.u32 %v6486, 4294901760
    %6625 = vmatpush.msra.mxu0 %v6624
    %v6626 = vand.u32 %v6504, 4294901760
    %v6627 = vsub.f32 %v6504, %v6626
    %v6628 = vand.u32 %v6627, 4294901760
    %6629 = vmatmul.f32.gmra.mxu0 %v6628
    %v6630 = vpop.f32.mrf.mxu0
    %v6631 = vadd.f32 %v6604, %v6630
    %6632 = vdwg.mxu0
    %6633 = vmatpush.msra.mxu0 0.0
    %6634 = vmatpush.msra.mxu0 0.0
    %6635 = vmatpush.msra.mxu0 0.0
    %6636 = vmatpush.msra.mxu0 0.0
    %6637 = vmatpush.msra.mxu0 0.0
    %6638 = vmatpush.msra.mxu0 0.0
    %6639 = vmatpush.msra.mxu0 0.0
    %6640 = vmatpush.msra.mxu0 0.0
    %6641 = vmatpush.msra.mxu0 0.0
    %6642 = vmatpush.msra.mxu0 0.0
    %6643 = vmatpush.msra.mxu0 0.0
    %6644 = vmatpush.msra.mxu0 0.0
    %v6645 = vand.u32 %v6495, 4294901760
    %v6646 = vsub.f32 %v6495, %v6645
    %v6647 = vand.u32 %v6646, 4294901760
    %6648 = vmatpush.msra.mxu0 %v6647
    %v6649 = vand.u32 %v6492, 4294901760
    %v6650 = vsub.f32 %v6492, %v6649
    %v6651 = vand.u32 %v6650, 4294901760
    %6652 = vmatpush.msra.mxu0 %v6651
    %v6653 = vand.u32 %v6489, 4294901760
    %v6654 = vsub.f32 %v6489, %v6653
    %v6655 = vand.u32 %v6654, 4294901760
    %6656 = vmatpush.msra.mxu0 %v6655
    %v6657 = vand.u32 %v6486, 4294901760
    %v6658 = vsub.f32 %v6486, %v6657
    %v6659 = vand.u32 %v6658, 4294901760
    %6660 = vmatpush.msra.mxu0 %v6659
    %v6661 = vand.u32 %v6504, 4294901760
    %6662 = vmatmul.f32.gmra.mxu0 %v6661
    %v6663 = vpop.f32.mrf.mxu0
    %v6664 = vadd.f32 %v6631, %v6663
    %6665 = vdwg.mxu0
    %6666 = vmatpush.msra.mxu0 0.0
    %6667 = vmatpush.msra.mxu0 0.0
    %6668 = vmatpush.msra.mxu0 0.0
    %6669 = vmatpush.msra.mxu0 0.0
    %6670 = vmatpush.msra.mxu0 0.0
    %6671 = vmatpush.msra.mxu0 0.0
    %6672 = vmatpush.msra.mxu0 0.0
    %6673 = vmatpush.msra.mxu0 0.0
    %6674 = vmatpush.msra.mxu0 0.0
    %6675 = vmatpush.msra.mxu0 0.0
    %6676 = vmatpush.msra.mxu0 0.0
    %6677 = vmatpush.msra.mxu0 0.0
    %v6678 = vand.u32 %v6495, 4294901760
    %6679 = vmatpush.msra.mxu0 %v6678
    %v6680 = vand.u32 %v6492, 4294901760
    %6681 = vmatpush.msra.mxu0 %v6680
    %v6682 = vand.u32 %v6489, 4294901760
    %6683 = vmatpush.msra.mxu0 %v6682
    %v6684 = vand.u32 %v6486, 4294901760
    %6685 = vmatpush.msra.mxu0 %v6684
    %v6686 = vand.u32 %v6504, 4294901760
    %6687 = vmatmul.f32.gmra.mxu0 %v6686
    %v6688 = vpop.f32.mrf.mxu0
    %v6689 = vadd.f32 %v6664, %v6688
    %6690 = vdwg.mxu0
    %6691 = vmatpush.msra.mxu0 0.0
    %6692 = vmatpush.msra.mxu0 0.0
    %6693 = vmatpush.msra.mxu0 0.0
    %6694 = vmatpush.msra.mxu0 0.0
    %6695 = vmatpush.msra.mxu0 0.0
    %6696 = vmatpush.msra.mxu0 0.0
    %6697 = vmatpush.msra.mxu0 0.0
    %6698 = vmatpush.msra.mxu0 0.0
    %6699 = vmatpush.msra.mxu0 0.0
    %6700 = vmatpush.msra.mxu0 0.0
    %6701 = vmatpush.msra.mxu0 0.0
    %6702 = vmatpush.msra.mxu0 0.0
    %v6703 = vand.u32 %v6496, 4294901760
    %6704 = vmatpush.msra.mxu0 %v6703
    %v6705 = vand.u32 %v6493, 4294901760
    %6706 = vmatpush.msra.mxu0 %v6705
    %v6707 = vand.u32 %v6490, 4294901760
    %6708 = vmatpush.msra.mxu0 %v6707
    %v6709 = vand.u32 %v6487, 4294901760
    %6710 = vmatpush.msra.mxu0 %v6709
    %v6711 = vand.u32 %v6504, 4294901760
    %v6712 = vsub.f32 %v6504, %v6711
    %v6713 = vand.u32 %v6712, 4294901760
    %v6714 = vsub.f32 %v6712, %v6713
    %v6715 = vand.u32 %v6714, 4294901760
    %6716 = vmatmul.f32.gmra.mxu0 %v6715
    %v6717 = vpop.f32.mrf.mxu0
    %v6718 = vadd.f32 %v6502, %v6717
    %6719 = vdwg.mxu0
    %6720 = vmatpush.msra.mxu0 0.0
    %6721 = vmatpush.msra.mxu0 0.0
    %6722 = vmatpush.msra.mxu0 0.0
    %6723 = vmatpush.msra.mxu0 0.0
    %6724 = vmatpush.msra.mxu0 0.0
    %6725 = vmatpush.msra.mxu0 0.0
    %6726 = vmatpush.msra.mxu0 0.0
    %6727 = vmatpush.msra.mxu0 0.0
    %6728 = vmatpush.msra.mxu0 0.0
    %6729 = vmatpush.msra.mxu0 0.0
    %6730 = vmatpush.msra.mxu0 0.0
    %6731 = vmatpush.msra.mxu0 0.0
    %v6732 = vand.u32 %v6496, 4294901760
    %v6733 = vsub.f32 %v6496, %v6732
    %v6734 = vand.u32 %v6733, 4294901760
    %v6735 = vsub.f32 %v6733, %v6734
    %v6736 = vand.u32 %v6735, 4294901760
    %6737 = vmatpush.msra.mxu0 %v6736
    %v6738 = vand.u32 %v6493, 4294901760
    %v6739 = vsub.f32 %v6493, %v6738
    %v6740 = vand.u32 %v6739, 4294901760
    %v6741 = vsub.f32 %v6739, %v6740
    %v6742 = vand.u32 %v6741, 4294901760
    %6743 = vmatpush.msra.mxu0 %v6742
    %v6744 = vand.u32 %v6490, 4294901760
    %v6745 = vsub.f32 %v6490, %v6744
    %v6746 = vand.u32 %v6745, 4294901760
    %v6747 = vsub.f32 %v6745, %v6746
    %v6748 = vand.u32 %v6747, 4294901760
    %6749 = vmatpush.msra.mxu0 %v6748
    %v6750 = vand.u32 %v6487, 4294901760
    %v6751 = vsub.f32 %v6487, %v6750
    %v6752 = vand.u32 %v6751, 4294901760
    %v6753 = vsub.f32 %v6751, %v6752
    %v6754 = vand.u32 %v6753, 4294901760
    %6755 = vmatpush.msra.mxu0 %v6754
    %v6756 = vand.u32 %v6504, 4294901760
    %6757 = vmatmul.f32.gmra.mxu0 %v6756
    %v6758 = vpop.f32.mrf.mxu0
    %v6759 = vadd.f32 %v6718, %v6758
    %6760 = vdwg.mxu0
    %6761 = vmatpush.msra.mxu0 0.0
    %6762 = vmatpush.msra.mxu0 0.0
    %6763 = vmatpush.msra.mxu0 0.0
    %6764 = vmatpush.msra.mxu0 0.0
    %6765 = vmatpush.msra.mxu0 0.0
    %6766 = vmatpush.msra.mxu0 0.0
    %6767 = vmatpush.msra.mxu0 0.0
    %6768 = vmatpush.msra.mxu0 0.0
    %6769 = vmatpush.msra.mxu0 0.0
    %6770 = vmatpush.msra.mxu0 0.0
    %6771 = vmatpush.msra.mxu0 0.0
    %6772 = vmatpush.msra.mxu0 0.0
    %v6773 = vand.u32 %v6496, 4294901760
    %v6774 = vsub.f32 %v6496, %v6773
    %6775 = vmatpush.msra.mxu0 %v6774
    %v6776 = vand.u32 %v6493, 4294901760
    %v6777 = vsub.f32 %v6493, %v6776
    %6778 = vmatpush.msra.mxu0 %v6777
    %v6779 = vand.u32 %v6490, 4294901760
    %v6780 = vsub.f32 %v6490, %v6779
    %6781 = vmatpush.msra.mxu0 %v6780
    %v6782 = vand.u32 %v6487, 4294901760
    %v6783 = vsub.f32 %v6487, %v6782
    %6784 = vmatpush.msra.mxu0 %v6783
    %v6785 = vand.u32 %v6504, 4294901760
    %v6786 = vsub.f32 %v6504, %v6785
    %6787 = vmatmul.f32.gmra.mxu0 %v6786
    %v6788 = vpop.f32.mrf.mxu0
    %v6789 = vadd.f32 %v6759, %v6788
    %6790 = vdwg.mxu0
    %6791 = vmatpush.msra.mxu0 0.0
    %6792 = vmatpush.msra.mxu0 0.0
    %6793 = vmatpush.msra.mxu0 0.0
    %6794 = vmatpush.msra.mxu0 0.0
    %6795 = vmatpush.msra.mxu0 0.0
    %6796 = vmatpush.msra.mxu0 0.0
    %6797 = vmatpush.msra.mxu0 0.0
    %6798 = vmatpush.msra.mxu0 0.0
    %6799 = vmatpush.msra.mxu0 0.0
    %6800 = vmatpush.msra.mxu0 0.0
    %6801 = vmatpush.msra.mxu0 0.0
    %6802 = vmatpush.msra.mxu0 0.0
    %v6803 = vand.u32 %v6496, 4294901760
    %6804 = vmatpush.msra.mxu0 %v6803
    %v6805 = vand.u32 %v6493, 4294901760
    %6806 = vmatpush.msra.mxu0 %v6805
    %v6807 = vand.u32 %v6490, 4294901760
    %6808 = vmatpush.msra.mxu0 %v6807
    %v6809 = vand.u32 %v6487, 4294901760
    %6810 = vmatpush.msra.mxu0 %v6809
    %v6811 = vand.u32 %v6504, 4294901760
    %v6812 = vsub.f32 %v6504, %v6811
    %v6813 = vand.u32 %v6812, 4294901760
    %6814 = vmatmul.f32.gmra.mxu0 %v6813
    %v6815 = vpop.f32.mrf.mxu0
    %v6816 = vadd.f32 %v6789, %v6815
    %6817 = vdwg.mxu0
    %6818 = vmatpush.msra.mxu0 0.0
    %6819 = vmatpush.msra.mxu0 0.0
    %6820 = vmatpush.msra.mxu0 0.0
    %6821 = vmatpush.msra.mxu0 0.0
    %6822 = vmatpush.msra.mxu0 0.0
    %6823 = vmatpush.msra.mxu0 0.0
    %6824 = vmatpush.msra.mxu0 0.0
    %6825 = vmatpush.msra.mxu0 0.0
    %6826 = vmatpush.msra.mxu0 0.0
    %6827 = vmatpush.msra.mxu0 0.0
    %6828 = vmatpush.msra.mxu0 0.0
    %6829 = vmatpush.msra.mxu0 0.0
    %v6830 = vand.u32 %v6496, 4294901760
    %v6831 = vsub.f32 %v6496, %v6830
    %v6832 = vand.u32 %v6831, 4294901760
    %6833 = vmatpush.msra.mxu0 %v6832
    %v6834 = vand.u32 %v6493, 4294901760
    %v6835 = vsub.f32 %v6493, %v6834
    %v6836 = vand.u32 %v6835, 4294901760
    %6837 = vmatpush.msra.mxu0 %v6836
    %v6838 = vand.u32 %v6490, 4294901760
    %v6839 = vsub.f32 %v6490, %v6838
    %v6840 = vand.u32 %v6839, 4294901760
    %6841 = vmatpush.msra.mxu0 %v6840
    %v6842 = vand.u32 %v6487, 4294901760
    %v6843 = vsub.f32 %v6487, %v6842
    %v6844 = vand.u32 %v6843, 4294901760
    %6845 = vmatpush.msra.mxu0 %v6844
    %v6846 = vand.u32 %v6504, 4294901760
    %6847 = vmatmul.f32.gmra.mxu0 %v6846
    %v6848 = vpop.f32.mrf.mxu0
    %v6849 = vadd.f32 %v6816, %v6848
    %6850 = vdwg.mxu0
    %6851 = vmatpush.msra.mxu0 0.0
    %6852 = vmatpush.msra.mxu0 0.0
    %6853 = vmatpush.msra.mxu0 0.0
    %6854 = vmatpush.msra.mxu0 0.0
    %6855 = vmatpush.msra.mxu0 0.0
    %6856 = vmatpush.msra.mxu0 0.0
    %6857 = vmatpush.msra.mxu0 0.0
    %6858 = vmatpush.msra.mxu0 0.0
    %6859 = vmatpush.msra.mxu0 0.0
    %6860 = vmatpush.msra.mxu0 0.0
    %6861 = vmatpush.msra.mxu0 0.0
    %6862 = vmatpush.msra.mxu0 0.0
    %v6863 = vand.u32 %v6496, 4294901760
    %6864 = vmatpush.msra.mxu0 %v6863
    %v6865 = vand.u32 %v6493, 4294901760
    %6866 = vmatpush.msra.mxu0 %v6865
    %v6867 = vand.u32 %v6490, 4294901760
    %6868 = vmatpush.msra.mxu0 %v6867
    %v6869 = vand.u32 %v6487, 4294901760
    %6870 = vmatpush.msra.mxu0 %v6869
    %v6871 = vand.u32 %v6504, 4294901760
    %6872 = vmatmul.f32.gmra.mxu0 %v6871
    %v6873 = vpop.f32.mrf.mxu0
    %v6874 = vadd.f32 %v6849, %v6873
    %6875 = vdwg.mxu0
    %6876 = vmatpush.msra.mxu0 0.0
    %6877 = vmatpush.msra.mxu0 0.0
    %6878 = vmatpush.msra.mxu0 0.0
    %6879 = vmatpush.msra.mxu0 0.0
    %6880 = vmatpush.msra.mxu0 0.0
    %6881 = vmatpush.msra.mxu0 0.0
    %6882 = vmatpush.msra.mxu0 0.0
    %6883 = vmatpush.msra.mxu0 0.0
    %6884 = vmatpush.msra.mxu0 0.0
    %6885 = vmatpush.msra.mxu0 0.0
    %6886 = vmatpush.msra.mxu0 0.0
    %6887 = vmatpush.msra.mxu0 0.0
    %v6888 = vand.u32 %v6497, 4294901760
    %6889 = vmatpush.msra.mxu0 %v6888
    %v6890 = vand.u32 %v6494, 4294901760
    %6891 = vmatpush.msra.mxu0 %v6890
    %v6892 = vand.u32 %v6491, 4294901760
    %6893 = vmatpush.msra.mxu0 %v6892
    %v6894 = vand.u32 %v6488, 4294901760
    %6895 = vmatpush.msra.mxu0 %v6894
    %v6896 = vand.u32 %v6504, 4294901760
    %v6897 = vsub.f32 %v6504, %v6896
    %v6898 = vand.u32 %v6897, 4294901760
    %v6899 = vsub.f32 %v6897, %v6898
    %v6900 = vand.u32 %v6899, 4294901760
    %6901 = vmatmul.f32.gmra.mxu0 %v6900
    %v6902 = vpop.f32.mrf.mxu0
    %v6903 = vadd.f32 %v6502, %v6902
    %6904 = vdwg.mxu0
    %6905 = vmatpush.msra.mxu0 0.0
    %6906 = vmatpush.msra.mxu0 0.0
    %6907 = vmatpush.msra.mxu0 0.0
    %6908 = vmatpush.msra.mxu0 0.0
    %6909 = vmatpush.msra.mxu0 0.0
    %6910 = vmatpush.msra.mxu0 0.0
    %6911 = vmatpush.msra.mxu0 0.0
    %6912 = vmatpush.msra.mxu0 0.0
    %6913 = vmatpush.msra.mxu0 0.0
    %6914 = vmatpush.msra.mxu0 0.0
    %6915 = vmatpush.msra.mxu0 0.0
    %6916 = vmatpush.msra.mxu0 0.0
    %v6917 = vand.u32 %v6497, 4294901760
    %v6918 = vsub.f32 %v6497, %v6917
    %v6919 = vand.u32 %v6918, 4294901760
    %v6920 = vsub.f32 %v6918, %v6919
    %v6921 = vand.u32 %v6920, 4294901760
    %6922 = vmatpush.msra.mxu0 %v6921
    %v6923 = vand.u32 %v6494, 4294901760
    %v6924 = vsub.f32 %v6494, %v6923
    %v6925 = vand.u32 %v6924, 4294901760
    %v6926 = vsub.f32 %v6924, %v6925
    %v6927 = vand.u32 %v6926, 4294901760
    %6928 = vmatpush.msra.mxu0 %v6927
    %v6929 = vand.u32 %v6491, 4294901760
    %v6930 = vsub.f32 %v6491, %v6929
    %v6931 = vand.u32 %v6930, 4294901760
    %v6932 = vsub.f32 %v6930, %v6931
    %v6933 = vand.u32 %v6932, 4294901760
    %6934 = vmatpush.msra.mxu0 %v6933
    %v6935 = vand.u32 %v6488, 4294901760
    %v6936 = vsub.f32 %v6488, %v6935
    %v6937 = vand.u32 %v6936, 4294901760
    %v6938 = vsub.f32 %v6936, %v6937
    %v6939 = vand.u32 %v6938, 4294901760
    %6940 = vmatpush.msra.mxu0 %v6939
    %v6941 = vand.u32 %v6504, 4294901760
    %6942 = vmatmul.f32.gmra.mxu0 %v6941
    %v6943 = vpop.f32.mrf.mxu0
    %v6944 = vadd.f32 %v6903, %v6943
    %6945 = vdwg.mxu0
    %6946 = vmatpush.msra.mxu0 0.0
    %6947 = vmatpush.msra.mxu0 0.0
    %6948 = vmatpush.msra.mxu0 0.0
    %6949 = vmatpush.msra.mxu0 0.0
    %6950 = vmatpush.msra.mxu0 0.0
    %6951 = vmatpush.msra.mxu0 0.0
    %6952 = vmatpush.msra.mxu0 0.0
    %6953 = vmatpush.msra.mxu0 0.0
    %6954 = vmatpush.msra.mxu0 0.0
    %6955 = vmatpush.msra.mxu0 0.0
    %6956 = vmatpush.msra.mxu0 0.0
    %6957 = vmatpush.msra.mxu0 0.0
    %v6958 = vand.u32 %v6497, 4294901760
    %v6959 = vsub.f32 %v6497, %v6958
    %6960 = vmatpush.msra.mxu0 %v6959
    %v6961 = vand.u32 %v6494, 4294901760
    %v6962 = vsub.f32 %v6494, %v6961
    %6963 = vmatpush.msra.mxu0 %v6962
    %v6964 = vand.u32 %v6491, 4294901760
    %v6965 = vsub.f32 %v6491, %v6964
    %6966 = vmatpush.msra.mxu0 %v6965
    %v6967 = vand.u32 %v6488, 4294901760
    %v6968 = vsub.f32 %v6488, %v6967
    %6969 = vmatpush.msra.mxu0 %v6968
    %v6970 = vand.u32 %v6504, 4294901760
    %v6971 = vsub.f32 %v6504, %v6970
    %6972 = vmatmul.f32.gmra.mxu0 %v6971
    %v6973 = vpop.f32.mrf.mxu0
    %v6974 = vadd.f32 %v6944, %v6973
    %6975 = vdwg.mxu0
    %6976 = vmatpush.msra.mxu0 0.0
    %6977 = vmatpush.msra.mxu0 0.0
    %6978 = vmatpush.msra.mxu0 0.0
    %6979 = vmatpush.msra.mxu0 0.0
    %6980 = vmatpush.msra.mxu0 0.0
    %6981 = vmatpush.msra.mxu0 0.0
    %6982 = vmatpush.msra.mxu0 0.0
    %6983 = vmatpush.msra.mxu0 0.0
    %6984 = vmatpush.msra.mxu0 0.0
    %6985 = vmatpush.msra.mxu0 0.0
    %6986 = vmatpush.msra.mxu0 0.0
    %6987 = vmatpush.msra.mxu0 0.0
    %v6988 = vand.u32 %v6497, 4294901760
    %6989 = vmatpush.msra.mxu0 %v6988
    %v6990 = vand.u32 %v6494, 4294901760
    %6991 = vmatpush.msra.mxu0 %v6990
    %v6992 = vand.u32 %v6491, 4294901760
    %6993 = vmatpush.msra.mxu0 %v6992
    %v6994 = vand.u32 %v6488, 4294901760
    %6995 = vmatpush.msra.mxu0 %v6994
    %v6996 = vand.u32 %v6504, 4294901760
    %v6997 = vsub.f32 %v6504, %v6996
    %v6998 = vand.u32 %v6997, 4294901760
    %6999 = vmatmul.f32.gmra.mxu0 %v6998
    %v7000 = vpop.f32.mrf.mxu0
    %v7001 = vadd.f32 %v6974, %v7000
    %7002 = vdwg.mxu0
    %7003 = vmatpush.msra.mxu0 0.0
    %7004 = vmatpush.msra.mxu0 0.0
    %7005 = vmatpush.msra.mxu0 0.0
    %7006 = vmatpush.msra.mxu0 0.0
    %7007 = vmatpush.msra.mxu0 0.0
    %7008 = vmatpush.msra.mxu0 0.0
    %7009 = vmatpush.msra.mxu0 0.0
    %7010 = vmatpush.msra.mxu0 0.0
    %7011 = vmatpush.msra.mxu0 0.0
    %7012 = vmatpush.msra.mxu0 0.0
    %7013 = vmatpush.msra.mxu0 0.0
    %7014 = vmatpush.msra.mxu0 0.0
    %v7015 = vand.u32 %v6497, 4294901760
    %v7016 = vsub.f32 %v6497, %v7015
    %v7017 = vand.u32 %v7016, 4294901760
    %7018 = vmatpush.msra.mxu0 %v7017
    %v7019 = vand.u32 %v6494, 4294901760
    %v7020 = vsub.f32 %v6494, %v7019
    %v7021 = vand.u32 %v7020, 4294901760
    %7022 = vmatpush.msra.mxu0 %v7021
    %v7023 = vand.u32 %v6491, 4294901760
    %v7024 = vsub.f32 %v6491, %v7023
    %v7025 = vand.u32 %v7024, 4294901760
    %7026 = vmatpush.msra.mxu0 %v7025
    %v7027 = vand.u32 %v6488, 4294901760
    %v7028 = vsub.f32 %v6488, %v7027
    %v7029 = vand.u32 %v7028, 4294901760
    %7030 = vmatpush.msra.mxu0 %v7029
    %v7031 = vand.u32 %v6504, 4294901760
    %7032 = vmatmul.f32.gmra.mxu0 %v7031
    %v7033 = vpop.f32.mrf.mxu0
    %v7034 = vadd.f32 %v7001, %v7033
    %7035 = vdwg.mxu0
    %7036 = vmatpush.msra.mxu0 0.0
    %7037 = vmatpush.msra.mxu0 0.0
    %7038 = vmatpush.msra.mxu0 0.0
    %7039 = vmatpush.msra.mxu0 0.0
    %7040 = vmatpush.msra.mxu0 0.0
    %7041 = vmatpush.msra.mxu0 0.0
    %7042 = vmatpush.msra.mxu0 0.0
    %7043 = vmatpush.msra.mxu0 0.0
    %7044 = vmatpush.msra.mxu0 0.0
    %7045 = vmatpush.msra.mxu0 0.0
    %7046 = vmatpush.msra.mxu0 0.0
    %7047 = vmatpush.msra.mxu0 0.0
    %v7048 = vand.u32 %v6497, 4294901760
    %7049 = vmatpush.msra.mxu0 %v7048
    %v7050 = vand.u32 %v6494, 4294901760
    %7051 = vmatpush.msra.mxu0 %v7050
    %v7052 = vand.u32 %v6491, 4294901760
    %7053 = vmatpush.msra.mxu0 %v7052
    %v7054 = vand.u32 %v6488, 4294901760
    %7055 = vmatpush.msra.mxu0 %v7054
    %v7056 = vand.u32 %v6504, 4294901760
    %7057 = vmatmul.f32.gmra.mxu0 %v7056
    %v7058 = vpop.f32.mrf.mxu0
    %v7059 = vadd.f32 %v7034, %v7058
    %7060 = vdwg.mxu0
    %v7064 = vrot.slane %v6874, 6
    %v7065 = vrot.slane %v7059, 4
    %vm7066 = vcmask 1041408
    %v7067 = vsel %vm7066, %v6689, %v7064
    %vm7068 = vcmask 1043456
    %v7069 = vsel %vm7068, %v7067, %v7065
    %7071 = vst [vmem:[%s5] sm:$0x3f] %v7069
    // Predicated region
    $region26: #{pinn_forward_pallas.1} parent=1 // pred_check
      _
    $region27: #{pinn_forward_pallas.1} parent=1 // pred_check_branch
      %7073 = sbr.rel (0) target = $region29
    $region28: #{pinn_forward_pallas.1} parent=1 // pred_region
      _
    $region29: #{pinn_forward_pallas.1} parent=1 // pred_fallthru
      _
    // Predicated region
    $region30: #{pinn_forward_pallas.1} parent=1 // pred_check
      _
    $region31: #{pinn_forward_pallas.1} parent=1 // pred_check_branch
      %7075 = sbr.rel (0) target = $region33
    $region32: #{pinn_forward_pallas.1} parent=1 // pred_region
      _
    $region33: #{pinn_forward_pallas.1} parent=1 // pred_fallthru
      _
    %7076 = vsyncpa [#allocation3], 1

</llo_original>
